<compile_context>
chip_gen: v6e
topology: v6e:2x2x1
jax: 0.10.0
libtpu: 0.0.40
codegen_flags: <defaults>
</compile_context>

<pallas_src>
import jax
import jax.numpy as jnp
from jax import lax
from jax.experimental import pallas as pl
from jax.experimental.pallas import tpu as pltpu

H = W = 4            # board spatial size
HW = H * W           # 16 spatial positions
C = 128              # conv channels
FC = 512             # fc width
NACT = 4             # actions
NPAD = 128           # lane-padded fc3 width
PH = H + 2           # zero-padded spatial extent (6)
KK = 9               # 3x3 taps


# ------------------------------ fused kernel ------------------------------ #

def _dqn_kernel(x_ref, w1_ref, b1_ref, w2_ref, b2_ref,
                wf1_hbm, bf1_ref, wf2_ref, bf2_ref, wf3_ref, bf3_ref,
                o_ref,
                pad0_ref, pad1_ref, h2_ref, wf1_vmem, dma_sem):
    """Fused conv1 -> conv2 -> fc1 -> fc2 -> fc3 forward pass.

    Conv activations are (rows = spatial position, lanes = channels).  The
    fc1 weight (largest operand) lives in HBM (memory_space=ANY) and is pulled
    into VMEM with a manual async copy that overlaps the conv phase.
    """
    f32 = jnp.float32

    # Kick off the dominant weight transfer so it overlaps the conv compute.
    wf1_copy = pltpu.make_async_copy(wf1_hbm, wf1_vmem, dma_sem)
    wf1_copy.start()

    # ---- conv1: 1 -> 128 channels, 3x3, pad 1 (VPU broadcast-MACs) -------- #
    # Zero-padded input, laid out (padded_h, padded_w, 1).
    pad0_ref[...] = jnp.zeros_like(pad0_ref)
    for h in range(H):
        pad0_ref[h + 1, 1:1 + W, :] = x_ref[h * W:(h + 1) * W, :]

    # conv1 output is written straight into conv2's zero-padded input scratch.
    pad1_ref[...] = jnp.zeros_like(pad1_ref)
    b1 = b1_ref[...]                                        # (1, C)
    for h in range(H):
        acc = jnp.zeros((W, C), f32)
        for kh in range(3):
            for kw in range(3):
                t = kh * 3 + kw
                col = pad0_ref[h + kh, kw:kw + W, :]        # (4, 1)
                acc = acc + col * w1_ref[t:t + 1, :]        # (4, C) VPU MAC
        pad1_ref[h + 1, 1:1 + W, :] = jnp.maximum(acc + b1, 0.0)

    # ---- conv2: 128 -> 128 channels, 3x3, pad 1 (small MXU matmuls) ------- #
    b2 = b2_ref[...]                                        # (1, C)
    for h in range(H):
        acc = jnp.zeros((W, C), f32)
        for kh in range(3):
            for kw in range(3):
                t = kh * 3 + kw
                tap = pad1_ref[h + kh, kw:kw + W, :]        # (4, C)
                acc = acc + jnp.dot(tap, w2_ref[t],
                                    preferred_element_type=f32)
        h2_ref[h * W:(h + 1) * W, :] = jnp.maximum(acc + b2, 0.0)

    # ---- fc1: (hw, c)-ordered 2048 -> 512 --------------------------------- #
    # The torch (C,H,W)-flatten permutation is folded into wf1's row order,
    # so no activation transpose/reshape is needed here.
    wf1_copy.wait()
    f1 = bf1_ref[...]                                       # (1, FC)
    for hw in range(HW):
        f1 = f1 + jnp.dot(h2_ref[hw:hw + 1, :], wf1_vmem[hw],
                          preferred_element_type=f32)
    f1 = jnp.maximum(f1, 0.0)

    # ---- fc2 + fc3 (fc3 lane-padded to 128 outputs) ----------------------- #
    f2 = jnp.maximum(
        jnp.dot(f1, wf2_ref[...], preferred_element_type=f32) + bf2_ref[...],
        0.0)
    o_ref[...] = (jnp.dot(f2, wf3_ref[...], preferred_element_type=f32)
                  + bf3_ref[...])


def _full(shape):
    """BlockSpec covering the whole array (grid=(1,))."""
    return pl.BlockSpec(shape, lambda i, _n=len(shape): (0,) * _n)


def dqn2048_pallas(x_nchw, pp):
    """x_nchw: (1, 1, 4, 4) float32 -> (1, 4) float32 Q-values."""
    x_col = x_nchw.reshape(HW, 1)          # row = h*W + w, single channel
    out = pl.pallas_call(
        _dqn_kernel,
        out_shape=jax.ShapeDtypeStruct((1, NPAD), jnp.float32),
        grid=(1,),
        in_specs=[
            _full((HW, 1)),                          # x
            _full((KK, C)),                          # conv1 weight (tap, co)
            _full((1, C)),                           # conv1 bias
            _full((KK, C, C)),                       # conv2 weight (tap, ci, co)
            _full((1, C)),                           # conv2 bias
            pl.BlockSpec(memory_space=pl.ANY),       # fc1 weight (manual DMA)
            _full((1, FC)),                          # fc1 bias
            _full((FC, FC)),                         # fc2 weight
            _full((1, FC)),                          # fc2 bias
            _full((FC, NPAD)),                       # fc3 weight (lane-padded)
            _full((1, NPAD)),                        # fc3 bias (lane-padded)
        ],
        out_specs=_full((1, NPAD)),
        scratch_shapes=[
            pltpu.VMEM((PH, PH, 1), jnp.float32),    # padded conv1 input
            pltpu.VMEM((PH, PH, C), jnp.float32),    # padded conv1 output
            pltpu.VMEM((HW, C), jnp.float32),        # conv2 output
            pltpu.VMEM((HW, C, FC), jnp.float32),    # fc1 weight landing buffer
            pltpu.SemaphoreType.DMA,                 # fc1 weight DMA semaphore
        ],
        compiler_params=pltpu.CompilerParams(
            dimension_semantics=("arbitrary",),
            vmem_limit_bytes=32 * 1024 * 1024,       # explicit for v5e's 16 MiB default
        ),
    )(x_col, pp['conv1_w'], pp['conv1_b'], pp['conv2_w'], pp['conv2_b'],
      pp['fc1_w'], pp['fc1_b'], pp['fc2_w'], pp['fc2_b'],
      pp['fc3_w'], pp['fc3_b'])
    return out[:, :NACT]


# ---------------------- parameters & one-time re-layout -------------------- #

def init_params(key):
    """Deterministic synthetic parameters with PyTorch-convention shapes."""
    ks = jax.random.split(key, 10)
    s = 0.05
    return dict(
        conv1_w=s * jax.random.normal(ks[0], (C, 1, 3, 3), jnp.float32),
        conv1_b=s * jax.random.normal(ks[1], (C,), jnp.float32),
        conv2_w=s * jax.random.normal(ks[2], (C, C, 3, 3), jnp.float32),
        conv2_b=s * jax.random.normal(ks[3], (C,), jnp.float32),
        fc1_w=s * jax.random.normal(ks[4], (FC, C * HW), jnp.float32),
        fc1_b=s * jax.random.normal(ks[5], (FC,), jnp.float32),
        fc2_w=s * jax.random.normal(ks[6], (FC, FC), jnp.float32),
        fc2_b=s * jax.random.normal(ks[7], (FC,), jnp.float32),
        fc3_w=s * jax.random.normal(ks[8], (NACT, FC), jnp.float32),
        fc3_b=s * jax.random.normal(ks[9], (NACT,), jnp.float32),
    )


def prepare_params(p):
    """One-time weight re-layout, hoisted off the per-inference hot path."""
    # conv1: (co, 1, kh, kw) -> (kh*kw, co)
    conv1_w = p['conv1_w'].reshape(C, KK).transpose(1, 0)
    # conv2: (co, ci, kh, kw) -> (kh*kw, ci, co)
    conv2_w = p['conv2_w'].transpose(2, 3, 1, 0).reshape(KK, C, C)
    # fc1: torch flattens (C, H, W); our activations are (hw, c) rows.
    # (n, c*HW+hw) -> (hw, c, n): the old activation transpose becomes free.
    fc1_w = p['fc1_w'].reshape(FC, C, HW).transpose(2, 1, 0)
    fc2_w = p['fc2_w'].transpose(1, 0)
    # fc3: zero-pad N from 4 -> 128 so the output store is lane-dense.
    fc3_w = jnp.zeros((FC, NPAD), jnp.float32).at[:, :NACT].set(
        p['fc3_w'].transpose(1, 0))
    fc3_b = jnp.zeros((1, NPAD), jnp.float32).at[0, :NACT].set(p['fc3_b'])
    return dict(
        conv1_w=conv1_w, conv1_b=p['conv1_b'].reshape(1, C),
        conv2_w=conv2_w, conv2_b=p['conv2_b'].reshape(1, C),
        fc1_w=fc1_w, fc1_b=p['fc1_b'].reshape(1, FC),
        fc2_w=fc2_w, fc2_b=p['fc2_b'].reshape(1, FC),
        fc3_w=fc3_w, fc3_b=fc3_b,
    )


# --------------------------- pure-JAX reference ---------------------------- #

def dqn2048_reference(x_nchw, p):
    hp = lax.Precision.HIGHEST
    y = lax.conv_general_dilated(
        x_nchw, p['conv1_w'], (1, 1), 'SAME',
        dimension_numbers=('NCHW', 'OIHW', 'NCHW'),
        precision=hp) + p['conv1_b'][None, :, None, None]
    y = jnp.maximum(y, 0.0)
    y = lax.conv_general_dilated(
        y, p['conv2_w'], (1, 1), 'SAME',
        dimension_numbers=('NCHW', 'OIHW', 'NCHW'),
        precision=hp) + p['conv2_b'][None, :, None, None]
    y = jnp.maximum(y, 0.0)
    flat = y.reshape(1, -1)
    f1 = jnp.maximum(jnp.dot(flat, p['fc1_w'].T, precision=hp) + p['fc1_b'], 0.0)
    f2 = jnp.maximum(jnp.dot(f1, p['fc2_w'].T, precision=hp) + p['fc2_b'], 0.0)
    return jnp.dot(f2, p['fc3_w'].T, precision=hp) + p['fc3_b']


# ----------------------------------- main ---------------------------------- #

if __name__ == "__main__":
    key = jax.random.PRNGKey(0)
    pkey, xkey = jax.random.split(key)
    params = init_params(pkey)
    prepped = prepare_params(params)     # one-time weight re-layout

    # The module's view(1, -1) + fc1(2048) imply batch = 1, input (1, 1, 4, 4).
    x = jax.random.normal(xkey, (1, 1, 4, 4), jnp.float32)

    fwd = jax.jit(dqn2048_pallas)
    out = jax.block_until_ready(fwd(x, prepped))

    ref = dqn2048_reference(x, params)
    assert out.shape == (1, NACT), out.shape
    if not bool(jnp.allclose(out, ref, atol=1e-3, rtol=1e-3)):
        raise AssertionError(f"Pallas output mismatch:\n{out}\nvs reference\n{ref}")

    print("KERNEL_OK")
</pallas_src>

<mosaic_0001>
module attributes {stable_mosaic.version = 11 : i64} {
  func.func @_dqn_kernel(%arg0: i32, %arg1: memref<16x1xf32, #tpu.memory_space<vmem>>, %arg2: memref<9x128xf32, #tpu.memory_space<vmem>>, %arg3: memref<1x128xf32, #tpu.memory_space<vmem>>, %arg4: memref<9x128x128xf32, #tpu.memory_space<vmem>>, %arg5: memref<1x128xf32, #tpu.memory_space<vmem>>, %arg6: memref<16x128x512xf32, #tpu.memory_space<any>>, %arg7: memref<1x512xf32, #tpu.memory_space<vmem>>, %arg8: memref<512x512xf32, #tpu.memory_space<vmem>>, %arg9: memref<1x512xf32, #tpu.memory_space<vmem>>, %arg10: memref<512x128xf32, #tpu.memory_space<vmem>>, %arg11: memref<1x128xf32, #tpu.memory_space<vmem>>, %arg12: memref<1x128xf32, #tpu.memory_space<vmem>>, %arg13: memref<6x6x1xf32, #tpu.memory_space<vmem>>, %arg14: memref<6x6x128xf32, #tpu.memory_space<vmem>>, %arg15: memref<16x128xf32, #tpu.memory_space<vmem>>, %arg16: memref<16x128x512xf32, #tpu.memory_space<vmem>>, %arg17: memref<!tpu.dma_semaphore, #tpu.memory_space<semaphore_mem>>) attributes {dimension_semantics = [#tpu.dimension_semantics<arbitrary>], iteration_bounds = array<i64: 1>, scalar_prefetch = 0 : i64, scratch_operands = 5 : i64, tpu.core_type = #tpu.core_type<tc>, window_params = [{pipeline_mode = #tpu.pipeline_mode<synchronous>, transform_indices = @transform_0, window_bounds = array<i64: 16, 1>}, {pipeline_mode = #tpu.pipeline_mode<synchronous>, transform_indices = @transform_1, window_bounds = array<i64: 9, 128>}, {pipeline_mode = #tpu.pipeline_mode<synchronous>, transform_indices = @transform_2, window_bounds = array<i64: 1, 128>}, {pipeline_mode = #tpu.pipeline_mode<synchronous>, transform_indices = @transform_3, window_bounds = array<i64: 9, 128, 128>}, {pipeline_mode = #tpu.pipeline_mode<synchronous>, transform_indices = @transform_4, window_bounds = array<i64: 1, 128>}, {}, {pipeline_mode = #tpu.pipeline_mode<synchronous>, transform_indices = @transform_6, window_bounds = array<i64: 1, 512>}, {pipeline_mode = #tpu.pipeline_mode<synchronous>, transform_indices = @transform_7, window_bounds = array<i64: 512, 512>}, {pipeline_mode = #tpu.pipeline_mode<synchronous>, transform_indices = @transform_8, window_bounds = array<i64: 1, 512>}, {pipeline_mode = #tpu.pipeline_mode<synchronous>, transform_indices = @transform_9, window_bounds = array<i64: 512, 128>}, {pipeline_mode = #tpu.pipeline_mode<synchronous>, transform_indices = @transform_10, window_bounds = array<i64: 1, 128>}, {pipeline_mode = #tpu.pipeline_mode<synchronous>, transform_indices = @transform_11, window_bounds = array<i64: 1, 128>}]} {
    tpu.enqueue_dma source(%arg6 : memref<16x128x512xf32, #tpu.memory_space<any>>) target(%arg16 : memref<16x128x512xf32, #tpu.memory_space<vmem>>) target_semaphore(%arg17 : memref<!tpu.dma_semaphore, #tpu.memory_space<semaphore_mem>>)
    %cst = arith.constant 0.000000e+00 : f32
    %0 = vector.broadcast %cst : f32 to vector<6x6x1xf32>
    %c0 = arith.constant 0 : index
    %c0_0 = arith.constant 0 : index
    %c0_1 = arith.constant 0 : index
    %1 = vector.load %arg13[%c0, %c0_0, %c0_1] : memref<6x6x1xf32, #tpu.memory_space<vmem>>, vector<6x6x1xf32>
    tpu.vector_store %arg13[%c0, %c0_0, %c0_1], %0 {strides = array<i32>} : memref<6x6x1xf32, #tpu.memory_space<vmem>>, vector<6x6x1xf32>,
    %c0_2 = arith.constant 0 : index
    %c0_3 = arith.constant 0 : index
    %2 = vector.load %arg1[%c0_2, %c0_3] : memref<16x1xf32, #tpu.memory_space<vmem>>, vector<4x1xf32>
    %c1 = arith.constant 1 : index
    %c1_4 = arith.constant 1 : index
    %c0_5 = arith.constant 0 : index
    %3 = vector.load %arg13[%c1, %c1_4, %c0_5] : memref<6x6x1xf32, #tpu.memory_space<vmem>>, vector<1x4x1xf32>
    %4 = vector.shape_cast %3 : vector<1x4x1xf32> to vector<4x1xf32>
    %5 = vector.shape_cast %2 : vector<4x1xf32> to vector<1x4x1xf32>
    tpu.vector_store %arg13[%c1, %c1_4, %c0_5], %5 {strides = array<i32>} : memref<6x6x1xf32, #tpu.memory_space<vmem>>, vector<1x4x1xf32>,
    %c4 = arith.constant 4 : index
    %c0_6 = arith.constant 0 : index
    %6 = vector.load %arg1[%c4, %c0_6] : memref<16x1xf32, #tpu.memory_space<vmem>>, vector<4x1xf32>
    %c2 = arith.constant 2 : index
    %c1_7 = arith.constant 1 : index
    %c0_8 = arith.constant 0 : index
    %7 = vector.load %arg13[%c2, %c1_7, %c0_8] : memref<6x6x1xf32, #tpu.memory_space<vmem>>, vector<1x4x1xf32>
    %8 = vector.shape_cast %7 : vector<1x4x1xf32> to vector<4x1xf32>
    %9 = vector.shape_cast %6 : vector<4x1xf32> to vector<1x4x1xf32>
    tpu.vector_store %arg13[%c2, %c1_7, %c0_8], %9 {strides = array<i32>} : memref<6x6x1xf32, #tpu.memory_space<vmem>>, vector<1x4x1xf32>,
    %c8 = arith.constant 8 : index
    %c0_9 = arith.constant 0 : index
    %10 = vector.load %arg1[%c8, %c0_9] : memref<16x1xf32, #tpu.memory_space<vmem>>, vector<4x1xf32>
    %c3 = arith.constant 3 : index
    %c1_10 = arith.constant 1 : index
    %c0_11 = arith.constant 0 : index
    %11 = vector.load %arg13[%c3, %c1_10, %c0_11] : memref<6x6x1xf32, #tpu.memory_space<vmem>>, vector<1x4x1xf32>
    %12 = vector.shape_cast %11 : vector<1x4x1xf32> to vector<4x1xf32>
    %13 = vector.shape_cast %10 : vector<4x1xf32> to vector<1x4x1xf32>
    tpu.vector_store %arg13[%c3, %c1_10, %c0_11], %13 {strides = array<i32>} : memref<6x6x1xf32, #tpu.memory_space<vmem>>, vector<1x4x1xf32>,
    %c12 = arith.constant 12 : index
    %c0_12 = arith.constant 0 : index
    %14 = vector.load %arg1[%c12, %c0_12] : memref<16x1xf32, #tpu.memory_space<vmem>>, vector<4x1xf32>
    %c4_13 = arith.constant 4 : index
    %c1_14 = arith.constant 1 : index
    %c0_15 = arith.constant 0 : index
    %15 = vector.load %arg13[%c4_13, %c1_14, %c0_15] : memref<6x6x1xf32, #tpu.memory_space<vmem>>, vector<1x4x1xf32>
    %16 = vector.shape_cast %15 : vector<1x4x1xf32> to vector<4x1xf32>
    %17 = vector.shape_cast %14 : vector<4x1xf32> to vector<1x4x1xf32>
    tpu.vector_store %arg13[%c4_13, %c1_14, %c0_15], %17 {strides = array<i32>} : memref<6x6x1xf32, #tpu.memory_space<vmem>>, vector<1x4x1xf32>,
    %cst_16 = arith.constant 0.000000e+00 : f32
    %18 = vector.broadcast %cst_16 : f32 to vector<6x6x128xf32>
    %c0_17 = arith.constant 0 : index
    %c0_18 = arith.constant 0 : index
    %c0_19 = arith.constant 0 : index
    %19 = vector.load %arg14[%c0_17, %c0_18, %c0_19] : memref<6x6x128xf32, #tpu.memory_space<vmem>>, vector<6x6x128xf32>
    tpu.vector_store %arg14[%c0_17, %c0_18, %c0_19], %18 {strides = array<i32>} : memref<6x6x128xf32, #tpu.memory_space<vmem>>, vector<6x6x128xf32>,
    %c0_20 = arith.constant 0 : index
    %c0_21 = arith.constant 0 : index
    %20 = vector.load %arg3[%c0_20, %c0_21] : memref<1x128xf32, #tpu.memory_space<vmem>>, vector<1x128xf32>
    %cst_22 = arith.constant 0.000000e+00 : f32
    %21 = vector.broadcast %cst_22 : f32 to vector<4x128xf32>
    %c0_23 = arith.constant 0 : index
    %c0_24 = arith.constant 0 : index
    %c0_25 = arith.constant 0 : index
    %22 = vector.load %arg13[%c0_23, %c0_24, %c0_25] : memref<6x6x1xf32, #tpu.memory_space<vmem>>, vector<1x4x1xf32>
    %23 = vector.shape_cast %22 : vector<1x4x1xf32> to vector<4x1xf32>
    %c0_26 = arith.constant 0 : index
    %c0_27 = arith.constant 0 : index
    %24 = vector.load %arg2[%c0_26, %c0_27] : memref<9x128xf32, #tpu.memory_space<vmem>>, vector<1x128xf32>
    %25 = vector.broadcast %23 : vector<4x1xf32> to vector<4x128xf32>
    %26 = vector.broadcast %24 : vector<1x128xf32> to vector<4x128xf32>
    %27 = arith.mulf %25, %26 : vector<4x128xf32>
    %28 = arith.addf %21, %27 : vector<4x128xf32>
    %c0_28 = arith.constant 0 : index
    %c1_29 = arith.constant 1 : index
    %c0_30 = arith.constant 0 : index
    %29 = vector.load %arg13[%c0_28, %c1_29, %c0_30] : memref<6x6x1xf32, #tpu.memory_space<vmem>>, vector<1x4x1xf32>
    %30 = vector.shape_cast %29 : vector<1x4x1xf32> to vector<4x1xf32>
    %c1_31 = arith.constant 1 : index
    %c0_32 = arith.constant 0 : index
    %31 = vector.load %arg2[%c1_31, %c0_32] : memref<9x128xf32, #tpu.memory_space<vmem>>, vector<1x128xf32>
    %32 = vector.broadcast %30 : vector<4x1xf32> to vector<4x128xf32>
    %33 = vector.broadcast %31 : vector<1x128xf32> to vector<4x128xf32>
    %34 = arith.mulf %32, %33 : vector<4x128xf32>
    %35 = arith.addf %28, %34 : vector<4x128xf32>
    %c0_33 = arith.constant 0 : index
    %c2_34 = arith.constant 2 : index
    %c0_35 = arith.constant 0 : index
    %36 = vector.load %arg13[%c0_33, %c2_34, %c0_35] : memref<6x6x1xf32, #tpu.memory_space<vmem>>, vector<1x4x1xf32>
    %37 = vector.shape_cast %36 : vector<1x4x1xf32> to vector<4x1xf32>
    %c2_36 = arith.constant 2 : index
    %c0_37 = arith.constant 0 : index
    %38 = vector.load %arg2[%c2_36, %c0_37] : memref<9x128xf32, #tpu.memory_space<vmem>>, vector<1x128xf32>
    %39 = vector.broadcast %37 : vector<4x1xf32> to vector<4x128xf32>
    %40 = vector.broadcast %38 : vector<1x128xf32> to vector<4x128xf32>
    %41 = arith.mulf %39, %40 : vector<4x128xf32>
    %42 = arith.addf %35, %41 : vector<4x128xf32>
    %c1_38 = arith.constant 1 : index
    %c0_39 = arith.constant 0 : index
    %c0_40 = arith.constant 0 : index
    %43 = vector.load %arg13[%c1_38, %c0_39, %c0_40] : memref<6x6x1xf32, #tpu.memory_space<vmem>>, vector<1x4x1xf32>
    %44 = vector.shape_cast %43 : vector<1x4x1xf32> to vector<4x1xf32>
    %c3_41 = arith.constant 3 : index
    %c0_42 = arith.constant 0 : index
    %45 = vector.load %arg2[%c3_41, %c0_42] : memref<9x128xf32, #tpu.memory_space<vmem>>, vector<1x128xf32>
    %46 = vector.broadcast %44 : vector<4x1xf32> to vector<4x128xf32>
    %47 = vector.broadcast %45 : vector<1x128xf32> to vector<4x128xf32>
    %48 = arith.mulf %46, %47 : vector<4x128xf32>
    %49 = arith.addf %42, %48 : vector<4x128xf32>
    %c1_43 = arith.constant 1 : index
    %c1_44 = arith.constant 1 : index
    %c0_45 = arith.constant 0 : index
    %50 = vector.load %arg13[%c1_43, %c1_44, %c0_45] : memref<6x6x1xf32, #tpu.memory_space<vmem>>, vector<1x4x1xf32>
    %51 = vector.shape_cast %50 : vector<1x4x1xf32> to vector<4x1xf32>
    %c4_46 = arith.constant 4 : index
    %c0_47 = arith.constant 0 : index
    %52 = vector.load %arg2[%c4_46, %c0_47] : memref<9x128xf32, #tpu.memory_space<vmem>>, vector<1x128xf32>
    %53 = vector.broadcast %51 : vector<4x1xf32> to vector<4x128xf32>
    %54 = vector.broadcast %52 : vector<1x128xf32> to vector<4x128xf32>
    %55 = arith.mulf %53, %54 : vector<4x128xf32>
    %56 = arith.addf %49, %55 : vector<4x128xf32>
    %c1_48 = arith.constant 1 : index
    %c2_49 = arith.constant 2 : index
    %c0_50 = arith.constant 0 : index
    %57 = vector.load %arg13[%c1_48, %c2_49, %c0_50] : memref<6x6x1xf32, #tpu.memory_space<vmem>>, vector<1x4x1xf32>
    %58 = vector.shape_cast %57 : vector<1x4x1xf32> to vector<4x1xf32>
    %c5 = arith.constant 5 : index
    %c0_51 = arith.constant 0 : index
    %59 = vector.load %arg2[%c5, %c0_51] : memref<9x128xf32, #tpu.memory_space<vmem>>, vector<1x128xf32>
    %60 = vector.broadcast %58 : vector<4x1xf32> to vector<4x128xf32>
    %61 = vector.broadcast %59 : vector<1x128xf32> to vector<4x128xf32>
    %62 = arith.mulf %60, %61 : vector<4x128xf32>
    %63 = arith.addf %56, %62 : vector<4x128xf32>
    %c2_52 = arith.constant 2 : index
    %c0_53 = arith.constant 0 : index
    %c0_54 = arith.constant 0 : index
    %64 = vector.load %arg13[%c2_52, %c0_53, %c0_54] : memref<6x6x1xf32, #tpu.memory_space<vmem>>, vector<1x4x1xf32>
    %65 = vector.shape_cast %64 : vector<1x4x1xf32> to vector<4x1xf32>
    %c6 = arith.constant 6 : index
    %c0_55 = arith.constant 0 : index
    %66 = vector.load %arg2[%c6, %c0_55] : memref<9x128xf32, #tpu.memory_space<vmem>>, vector<1x128xf32>
    %67 = vector.broadcast %65 : vector<4x1xf32> to vector<4x128xf32>
    %68 = vector.broadcast %66 : vector<1x128xf32> to vector<4x128xf32>
    %69 = arith.mulf %67, %68 : vector<4x128xf32>
    %70 = arith.addf %63, %69 : vector<4x128xf32>
    %c2_56 = arith.constant 2 : index
    %c1_57 = arith.constant 1 : index
    %c0_58 = arith.constant 0 : index
    %71 = vector.load %arg13[%c2_56, %c1_57, %c0_58] : memref<6x6x1xf32, #tpu.memory_space<vmem>>, vector<1x4x1xf32>
    %72 = vector.shape_cast %71 : vector<1x4x1xf32> to vector<4x1xf32>
    %c7 = arith.constant 7 : index
    %c0_59 = arith.constant 0 : index
    %73 = vector.load %arg2[%c7, %c0_59] : memref<9x128xf32, #tpu.memory_space<vmem>>, vector<1x128xf32>
    %74 = vector.broadcast %72 : vector<4x1xf32> to vector<4x128xf32>
    %75 = vector.broadcast %73 : vector<1x128xf32> to vector<4x128xf32>
    %76 = arith.mulf %74, %75 : vector<4x128xf32>
    %77 = arith.addf %70, %76 : vector<4x128xf32>
    %c2_60 = arith.constant 2 : index
    %c2_61 = arith.constant 2 : index
    %c0_62 = arith.constant 0 : index
    %78 = vector.load %arg13[%c2_60, %c2_61, %c0_62] : memref<6x6x1xf32, #tpu.memory_space<vmem>>, vector<1x4x1xf32>
    %79 = vector.shape_cast %78 : vector<1x4x1xf32> to vector<4x1xf32>
    %c8_63 = arith.constant 8 : index
    %c0_64 = arith.constant 0 : index
    %80 = vector.load %arg2[%c8_63, %c0_64] : memref<9x128xf32, #tpu.memory_space<vmem>>, vector<1x128xf32>
    %81 = vector.broadcast %79 : vector<4x1xf32> to vector<4x128xf32>
    %82 = vector.broadcast %80 : vector<1x128xf32> to vector<4x128xf32>
    %83 = arith.mulf %81, %82 : vector<4x128xf32>
    %84 = arith.addf %77, %83 : vector<4x128xf32>
    %85 = vector.broadcast %20 : vector<1x128xf32> to vector<4x128xf32>
    %86 = arith.addf %84, %85 : vector<4x128xf32>
    %cst_65 = arith.constant 0.000000e+00 : f32
    %87 = vector.broadcast %cst_65 : f32 to vector<4x128xf32>
    %88 = arith.maximumf %86, %87 : vector<4x128xf32>
    %c1_66 = arith.constant 1 : index
    %c1_67 = arith.constant 1 : index
    %c0_68 = arith.constant 0 : index
    %89 = vector.load %arg14[%c1_66, %c1_67, %c0_68] : memref<6x6x128xf32, #tpu.memory_space<vmem>>, vector<1x4x128xf32>
    %90 = vector.shape_cast %89 : vector<1x4x128xf32> to vector<4x128xf32>
    %91 = vector.shape_cast %88 : vector<4x128xf32> to vector<1x4x128xf32>
    tpu.vector_store %arg14[%c1_66, %c1_67, %c0_68], %91 {strides = array<i32>} : memref<6x6x128xf32, #tpu.memory_space<vmem>>, vector<1x4x128xf32>,
    %cst_69 = arith.constant 0.000000e+00 : f32
    %92 = vector.broadcast %cst_69 : f32 to vector<4x128xf32>
    %c1_70 = arith.constant 1 : index
    %c0_71 = arith.constant 0 : index
    %c0_72 = arith.constant 0 : index
    %93 = vector.load %arg13[%c1_70, %c0_71, %c0_72] : memref<6x6x1xf32, #tpu.memory_space<vmem>>, vector<1x4x1xf32>
    %94 = vector.shape_cast %93 : vector<1x4x1xf32> to vector<4x1xf32>
    %c0_73 = arith.constant 0 : index
    %c0_74 = arith.constant 0 : index
    %95 = vector.load %arg2[%c0_73, %c0_74] : memref<9x128xf32, #tpu.memory_space<vmem>>, vector<1x128xf32>
    %96 = vector.broadcast %94 : vector<4x1xf32> to vector<4x128xf32>
    %97 = vector.broadcast %95 : vector<1x128xf32> to vector<4x128xf32>
    %98 = arith.mulf %96, %97 : vector<4x128xf32>
    %99 = arith.addf %92, %98 : vector<4x128xf32>
    %c1_75 = arith.constant 1 : index
    %c1_76 = arith.constant 1 : index
    %c0_77 = arith.constant 0 : index
    %100 = vector.load %arg13[%c1_75, %c1_76, %c0_77] : memref<6x6x1xf32, #tpu.memory_space<vmem>>, vector<1x4x1xf32>
    %101 = vector.shape_cast %100 : vector<1x4x1xf32> to vector<4x1xf32>
    %c1_78 = arith.constant 1 : index
    %c0_79 = arith.constant 0 : index
    %102 = vector.load %arg2[%c1_78, %c0_79] : memref<9x128xf32, #tpu.memory_space<vmem>>, vector<1x128xf32>
    %103 = vector.broadcast %101 : vector<4x1xf32> to vector<4x128xf32>
    %104 = vector.broadcast %102 : vector<1x128xf32> to vector<4x128xf32>
    %105 = arith.mulf %103, %104 : vector<4x128xf32>
    %106 = arith.addf %99, %105 : vector<4x128xf32>
    %c1_80 = arith.constant 1 : index
    %c2_81 = arith.constant 2 : index
    %c0_82 = arith.constant 0 : index
    %107 = vector.load %arg13[%c1_80, %c2_81, %c0_82] : memref<6x6x1xf32, #tpu.memory_space<vmem>>, vector<1x4x1xf32>
    %108 = vector.shape_cast %107 : vector<1x4x1xf32> to vector<4x1xf32>
    %c2_83 = arith.constant 2 : index
    %c0_84 = arith.constant 0 : index
    %109 = vector.load %arg2[%c2_83, %c0_84] : memref<9x128xf32, #tpu.memory_space<vmem>>, vector<1x128xf32>
    %110 = vector.broadcast %108 : vector<4x1xf32> to vector<4x128xf32>
    %111 = vector.broadcast %109 : vector<1x128xf32> to vector<4x128xf32>
    %112 = arith.mulf %110, %111 : vector<4x128xf32>
    %113 = arith.addf %106, %112 : vector<4x128xf32>
    %c2_85 = arith.constant 2 : index
    %c0_86 = arith.constant 0 : index
    %c0_87 = arith.constant 0 : index
    %114 = vector.load %arg13[%c2_85, %c0_86, %c0_87] : memref<6x6x1xf32, #tpu.memory_space<vmem>>, vector<1x4x1xf32>
    %115 = vector.shape_cast %114 : vector<1x4x1xf32> to vector<4x1xf32>
    %c3_88 = arith.constant 3 : index
    %c0_89 = arith.constant 0 : index
    %116 = vector.load %arg2[%c3_88, %c0_89] : memref<9x128xf32, #tpu.memory_space<vmem>>, vector<1x128xf32>
    %117 = vector.broadcast %115 : vector<4x1xf32> to vector<4x128xf32>
    %118 = vector.broadcast %116 : vector<1x128xf32> to vector<4x128xf32>
    %119 = arith.mulf %117, %118 : vector<4x128xf32>
    %120 = arith.addf %113, %119 : vector<4x128xf32>
    %c2_90 = arith.constant 2 : index
    %c1_91 = arith.constant 1 : index
    %c0_92 = arith.constant 0 : index
    %121 = vector.load %arg13[%c2_90, %c1_91, %c0_92] : memref<6x6x1xf32, #tpu.memory_space<vmem>>, vector<1x4x1xf32>
    %122 = vector.shape_cast %121 : vector<1x4x1xf32> to vector<4x1xf32>
    %c4_93 = arith.constant 4 : index
    %c0_94 = arith.constant 0 : index
    %123 = vector.load %arg2[%c4_93, %c0_94] : memref<9x128xf32, #tpu.memory_space<vmem>>, vector<1x128xf32>
    %124 = vector.broadcast %122 : vector<4x1xf32> to vector<4x128xf32>
    %125 = vector.broadcast %123 : vector<1x128xf32> to vector<4x128xf32>
    %126 = arith.mulf %124, %125 : vector<4x128xf32>
    %127 = arith.addf %120, %126 : vector<4x128xf32>
    %c2_95 = arith.constant 2 : index
    %c2_96 = arith.constant 2 : index
    %c0_97 = arith.constant 0 : index
    %128 = vector.load %arg13[%c2_95, %c2_96, %c0_97] : memref<6x6x1xf32, #tpu.memory_space<vmem>>, vector<1x4x1xf32>
    %129 = vector.shape_cast %128 : vector<1x4x1xf32> to vector<4x1xf32>
    %c5_98 = arith.constant 5 : index
    %c0_99 = arith.constant 0 : index
    %130 = vector.load %arg2[%c5_98, %c0_99] : memref<9x128xf32, #tpu.memory_space<vmem>>, vector<1x128xf32>
    %131 = vector.broadcast %129 : vector<4x1xf32> to vector<4x128xf32>
    %132 = vector.broadcast %130 : vector<1x128xf32> to vector<4x128xf32>
    %133 = arith.mulf %131, %132 : vector<4x128xf32>
    %134 = arith.addf %127, %133 : vector<4x128xf32>
    %c3_100 = arith.constant 3 : index
    %c0_101 = arith.constant 0 : index
    %c0_102 = arith.constant 0 : index
    %135 = vector.load %arg13[%c3_100, %c0_101, %c0_102] : memref<6x6x1xf32, #tpu.memory_space<vmem>>, vector<1x4x1xf32>
    %136 = vector.shape_cast %135 : vector<1x4x1xf32> to vector<4x1xf32>
    %c6_103 = arith.constant 6 : index
    %c0_104 = arith.constant 0 : index
    %137 = vector.load %arg2[%c6_103, %c0_104] : memref<9x128xf32, #tpu.memory_space<vmem>>, vector<1x128xf32>
    %138 = vector.broadcast %136 : vector<4x1xf32> to vector<4x128xf32>
    %139 = vector.broadcast %137 : vector<1x128xf32> to vector<4x128xf32>
    %140 = arith.mulf %138, %139 : vector<4x128xf32>
    %141 = arith.addf %134, %140 : vector<4x128xf32>
    %c3_105 = arith.constant 3 : index
    %c1_106 = arith.constant 1 : index
    %c0_107 = arith.constant 0 : index
    %142 = vector.load %arg13[%c3_105, %c1_106, %c0_107] : memref<6x6x1xf32, #tpu.memory_space<vmem>>, vector<1x4x1xf32>
    %143 = vector.shape_cast %142 : vector<1x4x1xf32> to vector<4x1xf32>
    %c7_108 = arith.constant 7 : index
    %c0_109 = arith.constant 0 : index
    %144 = vector.load %arg2[%c7_108, %c0_109] : memref<9x128xf32, #tpu.memory_space<vmem>>, vector<1x128xf32>
    %145 = vector.broadcast %143 : vector<4x1xf32> to vector<4x128xf32>
    %146 = vector.broadcast %144 : vector<1x128xf32> to vector<4x128xf32>
    %147 = arith.mulf %145, %146 : vector<4x128xf32>
    %148 = arith.addf %141, %147 : vector<4x128xf32>
    %c3_110 = arith.constant 3 : index
    %c2_111 = arith.constant 2 : index
    %c0_112 = arith.constant 0 : index
    %149 = vector.load %arg13[%c3_110, %c2_111, %c0_112] : memref<6x6x1xf32, #tpu.memory_space<vmem>>, vector<1x4x1xf32>
    %150 = vector.shape_cast %149 : vector<1x4x1xf32> to vector<4x1xf32>
    %c8_113 = arith.constant 8 : index
    %c0_114 = arith.constant 0 : index
    %151 = vector.load %arg2[%c8_113, %c0_114] : memref<9x128xf32, #tpu.memory_space<vmem>>, vector<1x128xf32>
    %152 = vector.broadcast %150 : vector<4x1xf32> to vector<4x128xf32>
    %153 = vector.broadcast %151 : vector<1x128xf32> to vector<4x128xf32>
    %154 = arith.mulf %152, %153 : vector<4x128xf32>
    %155 = arith.addf %148, %154 : vector<4x128xf32>
    %156 = vector.broadcast %20 : vector<1x128xf32> to vector<4x128xf32>
    %157 = arith.addf %155, %156 : vector<4x128xf32>
    %cst_115 = arith.constant 0.000000e+00 : f32
    %158 = vector.broadcast %cst_115 : f32 to vector<4x128xf32>
    %159 = arith.maximumf %157, %158 : vector<4x128xf32>
    %c2_116 = arith.constant 2 : index
    %c1_117 = arith.constant 1 : index
    %c0_118 = arith.constant 0 : index
    %160 = vector.load %arg14[%c2_116, %c1_117, %c0_118] : memref<6x6x128xf32, #tpu.memory_space<vmem>>, vector<1x4x128xf32>
    %161 = vector.shape_cast %160 : vector<1x4x128xf32> to vector<4x128xf32>
    %162 = vector.shape_cast %159 : vector<4x128xf32> to vector<1x4x128xf32>
    tpu.vector_store %arg14[%c2_116, %c1_117, %c0_118], %162 {strides = array<i32>} : memref<6x6x128xf32, #tpu.memory_space<vmem>>, vector<1x4x128xf32>,
    %cst_119 = arith.constant 0.000000e+00 : f32
    %163 = vector.broadcast %cst_119 : f32 to vector<4x128xf32>
    %c2_120 = arith.constant 2 : index
    %c0_121 = arith.constant 0 : index
    %c0_122 = arith.constant 0 : index
    %164 = vector.load %arg13[%c2_120, %c0_121, %c0_122] : memref<6x6x1xf32, #tpu.memory_space<vmem>>, vector<1x4x1xf32>
    %165 = vector.shape_cast %164 : vector<1x4x1xf32> to vector<4x1xf32>
    %c0_123 = arith.constant 0 : index
    %c0_124 = arith.constant 0 : index
    %166 = vector.load %arg2[%c0_123, %c0_124] : memref<9x128xf32, #tpu.memory_space<vmem>>, vector<1x128xf32>
    %167 = vector.broadcast %165 : vector<4x1xf32> to vector<4x128xf32>
    %168 = vector.broadcast %166 : vector<1x128xf32> to vector<4x128xf32>
    %169 = arith.mulf %167, %168 : vector<4x128xf32>
    %170 = arith.addf %163, %169 : vector<4x128xf32>
    %c2_125 = arith.constant 2 : index
    %c1_126 = arith.constant 1 : index
    %c0_127 = arith.constant 0 : index
    %171 = vector.load %arg13[%c2_125, %c1_126, %c0_127] : memref<6x6x1xf32, #tpu.memory_space<vmem>>, vector<1x4x1xf32>
    %172 = vector.shape_cast %171 : vector<1x4x1xf32> to vector<4x1xf32>
    %c1_128 = arith.constant 1 : index
    %c0_129 = arith.constant 0 : index
    %173 = vector.load %arg2[%c1_128, %c0_129] : memref<9x128xf32, #tpu.memory_space<vmem>>, vector<1x128xf32>
    %174 = vector.broadcast %172 : vector<4x1xf32> to vector<4x128xf32>
    %175 = vector.broadcast %173 : vector<1x128xf32> to vector<4x128xf32>
    %176 = arith.mulf %174, %175 : vector<4x128xf32>
    %177 = arith.addf %170, %176 : vector<4x128xf32>
    %c2_130 = arith.constant 2 : index
    %c2_131 = arith.constant 2 : index
    %c0_132 = arith.constant 0 : index
    %178 = vector.load %arg13[%c2_130, %c2_131, %c0_132] : memref<6x6x1xf32, #tpu.memory_space<vmem>>, vector<1x4x1xf32>
    %179 = vector.shape_cast %178 : vector<1x4x1xf32> to vector<4x1xf32>
    %c2_133 = arith.constant 2 : index
    %c0_134 = arith.constant 0 : index
    %180 = vector.load %arg2[%c2_133, %c0_134] : memref<9x128xf32, #tpu.memory_space<vmem>>, vector<1x128xf32>
    %181 = vector.broadcast %179 : vector<4x1xf32> to vector<4x128xf32>
    %182 = vector.broadcast %180 : vector<1x128xf32> to vector<4x128xf32>
    %183 = arith.mulf %181, %182 : vector<4x128xf32>
    %184 = arith.addf %177, %183 : vector<4x128xf32>
    %c3_135 = arith.constant 3 : index
    %c0_136 = arith.constant 0 : index
    %c0_137 = arith.constant 0 : index
    %185 = vector.load %arg13[%c3_135, %c0_136, %c0_137] : memref<6x6x1xf32, #tpu.memory_space<vmem>>, vector<1x4x1xf32>
    %186 = vector.shape_cast %185 : vector<1x4x1xf32> to vector<4x1xf32>
    %c3_138 = arith.constant 3 : index
    %c0_139 = arith.constant 0 : index
    %187 = vector.load %arg2[%c3_138, %c0_139] : memref<9x128xf32, #tpu.memory_space<vmem>>, vector<1x128xf32>
    %188 = vector.broadcast %186 : vector<4x1xf32> to vector<4x128xf32>
    %189 = vector.broadcast %187 : vector<1x128xf32> to vector<4x128xf32>
    %190 = arith.mulf %188, %189 : vector<4x128xf32>
    %191 = arith.addf %184, %190 : vector<4x128xf32>
    %c3_140 = arith.constant 3 : index
    %c1_141 = arith.constant 1 : index
    %c0_142 = arith.constant 0 : index
    %192 = vector.load %arg13[%c3_140, %c1_141, %c0_142] : memref<6x6x1xf32, #tpu.memory_space<vmem>>, vector<1x4x1xf32>
    %193 = vector.shape_cast %192 : vector<1x4x1xf32> to vector<4x1xf32>
    %c4_143 = arith.constant 4 : index
    %c0_144 = arith.constant 0 : index
    %194 = vector.load %arg2[%c4_143, %c0_144] : memref<9x128xf32, #tpu.memory_space<vmem>>, vector<1x128xf32>
    %195 = vector.broadcast %193 : vector<4x1xf32> to vector<4x128xf32>
    %196 = vector.broadcast %194 : vector<1x128xf32> to vector<4x128xf32>
    %197 = arith.mulf %195, %196 : vector<4x128xf32>
    %198 = arith.addf %191, %197 : vector<4x128xf32>
    %c3_145 = arith.constant 3 : index
    %c2_146 = arith.constant 2 : index
    %c0_147 = arith.constant 0 : index
    %199 = vector.load %arg13[%c3_145, %c2_146, %c0_147] : memref<6x6x1xf32, #tpu.memory_space<vmem>>, vector<1x4x1xf32>
    %200 = vector.shape_cast %199 : vector<1x4x1xf32> to vector<4x1xf32>
    %c5_148 = arith.constant 5 : index
    %c0_149 = arith.constant 0 : index
    %201 = vector.load %arg2[%c5_148, %c0_149] : memref<9x128xf32, #tpu.memory_space<vmem>>, vector<1x128xf32>
    %202 = vector.broadcast %200 : vector<4x1xf32> to vector<4x128xf32>
    %203 = vector.broadcast %201 : vector<1x128xf32> to vector<4x128xf32>
    %204 = arith.mulf %202, %203 : vector<4x128xf32>
    %205 = arith.addf %198, %204 : vector<4x128xf32>
    %c4_150 = arith.constant 4 : index
    %c0_151 = arith.constant 0 : index
    %c0_152 = arith.constant 0 : index
    %206 = vector.load %arg13[%c4_150, %c0_151, %c0_152] : memref<6x6x1xf32, #tpu.memory_space<vmem>>, vector<1x4x1xf32>
    %207 = vector.shape_cast %206 : vector<1x4x1xf32> to vector<4x1xf32>
    %c6_153 = arith.constant 6 : index
    %c0_154 = arith.constant 0 : index
    %208 = vector.load %arg2[%c6_153, %c0_154] : memref<9x128xf32, #tpu.memory_space<vmem>>, vector<1x128xf32>
    %209 = vector.broadcast %207 : vector<4x1xf32> to vector<4x128xf32>
    %210 = vector.broadcast %208 : vector<1x128xf32> to vector<4x128xf32>
    %211 = arith.mulf %209, %210 : vector<4x128xf32>
    %212 = arith.addf %205, %211 : vector<4x128xf32>
    %c4_155 = arith.constant 4 : index
    %c1_156 = arith.constant 1 : index
    %c0_157 = arith.constant 0 : index
    %213 = vector.load %arg13[%c4_155, %c1_156, %c0_157] : memref<6x6x1xf32, #tpu.memory_space<vmem>>, vector<1x4x1xf32>
    %214 = vector.shape_cast %213 : vector<1x4x1xf32> to vector<4x1xf32>
    %c7_158 = arith.constant 7 : index
    %c0_159 = arith.constant 0 : index
    %215 = vector.load %arg2[%c7_158, %c0_159] : memref<9x128xf32, #tpu.memory_space<vmem>>, vector<1x128xf32>
    %216 = vector.broadcast %214 : vector<4x1xf32> to vector<4x128xf32>
    %217 = vector.broadcast %215 : vector<1x128xf32> to vector<4x128xf32>
    %218 = arith.mulf %216, %217 : vector<4x128xf32>
    %219 = arith.addf %212, %218 : vector<4x128xf32>
    %c4_160 = arith.constant 4 : index
    %c2_161 = arith.constant 2 : index
    %c0_162 = arith.constant 0 : index
    %220 = vector.load %arg13[%c4_160, %c2_161, %c0_162] : memref<6x6x1xf32, #tpu.memory_space<vmem>>, vector<1x4x1xf32>
    %221 = vector.shape_cast %220 : vector<1x4x1xf32> to vector<4x1xf32>
    %c8_163 = arith.constant 8 : index
    %c0_164 = arith.constant 0 : index
    %222 = vector.load %arg2[%c8_163, %c0_164] : memref<9x128xf32, #tpu.memory_space<vmem>>, vector<1x128xf32>
    %223 = vector.broadcast %221 : vector<4x1xf32> to vector<4x128xf32>
    %224 = vector.broadcast %222 : vector<1x128xf32> to vector<4x128xf32>
    %225 = arith.mulf %223, %224 : vector<4x128xf32>
    %226 = arith.addf %219, %225 : vector<4x128xf32>
    %227 = vector.broadcast %20 : vector<1x128xf32> to vector<4x128xf32>
    %228 = arith.addf %226, %227 : vector<4x128xf32>
    %cst_165 = arith.constant 0.000000e+00 : f32
    %229 = vector.broadcast %cst_165 : f32 to vector<4x128xf32>
    %230 = arith.maximumf %228, %229 : vector<4x128xf32>
    %c3_166 = arith.constant 3 : index
    %c1_167 = arith.constant 1 : index
    %c0_168 = arith.constant 0 : index
    %231 = vector.load %arg14[%c3_166, %c1_167, %c0_168] : memref<6x6x128xf32, #tpu.memory_space<vmem>>, vector<1x4x128xf32>
    %232 = vector.shape_cast %231 : vector<1x4x128xf32> to vector<4x128xf32>
    %233 = vector.shape_cast %230 : vector<4x128xf32> to vector<1x4x128xf32>
    tpu.vector_store %arg14[%c3_166, %c1_167, %c0_168], %233 {strides = array<i32>} : memref<6x6x128xf32, #tpu.memory_space<vmem>>, vector<1x4x128xf32>,
    %cst_169 = arith.constant 0.000000e+00 : f32
    %234 = vector.broadcast %cst_169 : f32 to vector<4x128xf32>
    %c3_170 = arith.constant 3 : index
    %c0_171 = arith.constant 0 : index
    %c0_172 = arith.constant 0 : index
    %235 = vector.load %arg13[%c3_170, %c0_171, %c0_172] : memref<6x6x1xf32, #tpu.memory_space<vmem>>, vector<1x4x1xf32>
    %236 = vector.shape_cast %235 : vector<1x4x1xf32> to vector<4x1xf32>
    %c0_173 = arith.constant 0 : index
    %c0_174 = arith.constant 0 : index
    %237 = vector.load %arg2[%c0_173, %c0_174] : memref<9x128xf32, #tpu.memory_space<vmem>>, vector<1x128xf32>
    %238 = vector.broadcast %236 : vector<4x1xf32> to vector<4x128xf32>
    %239 = vector.broadcast %237 : vector<1x128xf32> to vector<4x128xf32>
    %240 = arith.mulf %238, %239 : vector<4x128xf32>
    %241 = arith.addf %234, %240 : vector<4x128xf32>
    %c3_175 = arith.constant 3 : index
    %c1_176 = arith.constant 1 : index
    %c0_177 = arith.constant 0 : index
    %242 = vector.load %arg13[%c3_175, %c1_176, %c0_177] : memref<6x6x1xf32, #tpu.memory_space<vmem>>, vector<1x4x1xf32>
    %243 = vector.shape_cast %242 : vector<1x4x1xf32> to vector<4x1xf32>
    %c1_178 = arith.constant 1 : index
    %c0_179 = arith.constant 0 : index
    %244 = vector.load %arg2[%c1_178, %c0_179] : memref<9x128xf32, #tpu.memory_space<vmem>>, vector<1x128xf32>
    %245 = vector.broadcast %243 : vector<4x1xf32> to vector<4x128xf32>
    %246 = vector.broadcast %244 : vector<1x128xf32> to vector<4x128xf32>
    %247 = arith.mulf %245, %246 : vector<4x128xf32>
    %248 = arith.addf %241, %247 : vector<4x128xf32>
    %c3_180 = arith.constant 3 : index
    %c2_181 = arith.constant 2 : index
    %c0_182 = arith.constant 0 : index
    %249 = vector.load %arg13[%c3_180, %c2_181, %c0_182] : memref<6x6x1xf32, #tpu.memory_space<vmem>>, vector<1x4x1xf32>
    %250 = vector.shape_cast %249 : vector<1x4x1xf32> to vector<4x1xf32>
    %c2_183 = arith.constant 2 : index
    %c0_184 = arith.constant 0 : index
    %251 = vector.load %arg2[%c2_183, %c0_184] : memref<9x128xf32, #tpu.memory_space<vmem>>, vector<1x128xf32>
    %252 = vector.broadcast %250 : vector<4x1xf32> to vector<4x128xf32>
    %253 = vector.broadcast %251 : vector<1x128xf32> to vector<4x128xf32>
    %254 = arith.mulf %252, %253 : vector<4x128xf32>
    %255 = arith.addf %248, %254 : vector<4x128xf32>
    %c4_185 = arith.constant 4 : index
    %c0_186 = arith.constant 0 : index
    %c0_187 = arith.constant 0 : index
    %256 = vector.load %arg13[%c4_185, %c0_186, %c0_187] : memref<6x6x1xf32, #tpu.memory_space<vmem>>, vector<1x4x1xf32>
    %257 = vector.shape_cast %256 : vector<1x4x1xf32> to vector<4x1xf32>
    %c3_188 = arith.constant 3 : index
    %c0_189 = arith.constant 0 : index
    %258 = vector.load %arg2[%c3_188, %c0_189] : memref<9x128xf32, #tpu.memory_space<vmem>>, vector<1x128xf32>
    %259 = vector.broadcast %257 : vector<4x1xf32> to vector<4x128xf32>
    %260 = vector.broadcast %258 : vector<1x128xf32> to vector<4x128xf32>
    %261 = arith.mulf %259, %260 : vector<4x128xf32>
    %262 = arith.addf %255, %261 : vector<4x128xf32>
    %c4_190 = arith.constant 4 : index
    %c1_191 = arith.constant 1 : index
    %c0_192 = arith.constant 0 : index
    %263 = vector.load %arg13[%c4_190, %c1_191, %c0_192] : memref<6x6x1xf32, #tpu.memory_space<vmem>>, vector<1x4x1xf32>
    %264 = vector.shape_cast %263 : vector<1x4x1xf32> to vector<4x1xf32>
    %c4_193 = arith.constant 4 : index
    %c0_194 = arith.constant 0 : index
    %265 = vector.load %arg2[%c4_193, %c0_194] : memref<9x128xf32, #tpu.memory_space<vmem>>, vector<1x128xf32>
    %266 = vector.broadcast %264 : vector<4x1xf32> to vector<4x128xf32>
    %267 = vector.broadcast %265 : vector<1x128xf32> to vector<4x128xf32>
    %268 = arith.mulf %266, %267 : vector<4x128xf32>
    %269 = arith.addf %262, %268 : vector<4x128xf32>
    %c4_195 = arith.constant 4 : index
    %c2_196 = arith.constant 2 : index
    %c0_197 = arith.constant 0 : index
    %270 = vector.load %arg13[%c4_195, %c2_196, %c0_197] : memref<6x6x1xf32, #tpu.memory_space<vmem>>, vector<1x4x1xf32>
    %271 = vector.shape_cast %270 : vector<1x4x1xf32> to vector<4x1xf32>
    %c5_198 = arith.constant 5 : index
    %c0_199 = arith.constant 0 : index
    %272 = vector.load %arg2[%c5_198, %c0_199] : memref<9x128xf32, #tpu.memory_space<vmem>>, vector<1x128xf32>
    %273 = vector.broadcast %271 : vector<4x1xf32> to vector<4x128xf32>
    %274 = vector.broadcast %272 : vector<1x128xf32> to vector<4x128xf32>
    %275 = arith.mulf %273, %274 : vector<4x128xf32>
    %276 = arith.addf %269, %275 : vector<4x128xf32>
    %c5_200 = arith.constant 5 : index
    %c0_201 = arith.constant 0 : index
    %c0_202 = arith.constant 0 : index
    %277 = vector.load %arg13[%c5_200, %c0_201, %c0_202] : memref<6x6x1xf32, #tpu.memory_space<vmem>>, vector<1x4x1xf32>
    %278 = vector.shape_cast %277 : vector<1x4x1xf32> to vector<4x1xf32>
    %c6_203 = arith.constant 6 : index
    %c0_204 = arith.constant 0 : index
    %279 = vector.load %arg2[%c6_203, %c0_204] : memref<9x128xf32, #tpu.memory_space<vmem>>, vector<1x128xf32>
    %280 = vector.broadcast %278 : vector<4x1xf32> to vector<4x128xf32>
    %281 = vector.broadcast %279 : vector<1x128xf32> to vector<4x128xf32>
    %282 = arith.mulf %280, %281 : vector<4x128xf32>
    %283 = arith.addf %276, %282 : vector<4x128xf32>
    %c5_205 = arith.constant 5 : index
    %c1_206 = arith.constant 1 : index
    %c0_207 = arith.constant 0 : index
    %284 = vector.load %arg13[%c5_205, %c1_206, %c0_207] : memref<6x6x1xf32, #tpu.memory_space<vmem>>, vector<1x4x1xf32>
    %285 = vector.shape_cast %284 : vector<1x4x1xf32> to vector<4x1xf32>
    %c7_208 = arith.constant 7 : index
    %c0_209 = arith.constant 0 : index
    %286 = vector.load %arg2[%c7_208, %c0_209] : memref<9x128xf32, #tpu.memory_space<vmem>>, vector<1x128xf32>
    %287 = vector.broadcast %285 : vector<4x1xf32> to vector<4x128xf32>
    %288 = vector.broadcast %286 : vector<1x128xf32> to vector<4x128xf32>
    %289 = arith.mulf %287, %288 : vector<4x128xf32>
    %290 = arith.addf %283, %289 : vector<4x128xf32>
    %c5_210 = arith.constant 5 : index
    %c2_211 = arith.constant 2 : index
    %c0_212 = arith.constant 0 : index
    %291 = vector.load %arg13[%c5_210, %c2_211, %c0_212] : memref<6x6x1xf32, #tpu.memory_space<vmem>>, vector<1x4x1xf32>
    %292 = vector.shape_cast %291 : vector<1x4x1xf32> to vector<4x1xf32>
    %c8_213 = arith.constant 8 : index
    %c0_214 = arith.constant 0 : index
    %293 = vector.load %arg2[%c8_213, %c0_214] : memref<9x128xf32, #tpu.memory_space<vmem>>, vector<1x128xf32>
    %294 = vector.broadcast %292 : vector<4x1xf32> to vector<4x128xf32>
    %295 = vector.broadcast %293 : vector<1x128xf32> to vector<4x128xf32>
    %296 = arith.mulf %294, %295 : vector<4x128xf32>
    %297 = arith.addf %290, %296 : vector<4x128xf32>
    %298 = vector.broadcast %20 : vector<1x128xf32> to vector<4x128xf32>
    %299 = arith.addf %297, %298 : vector<4x128xf32>
    %cst_215 = arith.constant 0.000000e+00 : f32
    %300 = vector.broadcast %cst_215 : f32 to vector<4x128xf32>
    %301 = arith.maximumf %299, %300 : vector<4x128xf32>
    %c4_216 = arith.constant 4 : index
    %c1_217 = arith.constant 1 : index
    %c0_218 = arith.constant 0 : index
    %302 = vector.load %arg14[%c4_216, %c1_217, %c0_218] : memref<6x6x128xf32, #tpu.memory_space<vmem>>, vector<1x4x128xf32>
    %303 = vector.shape_cast %302 : vector<1x4x128xf32> to vector<4x128xf32>
    %304 = vector.shape_cast %301 : vector<4x128xf32> to vector<1x4x128xf32>
    tpu.vector_store %arg14[%c4_216, %c1_217, %c0_218], %304 {strides = array<i32>} : memref<6x6x128xf32, #tpu.memory_space<vmem>>, vector<1x4x128xf32>,
    %c0_219 = arith.constant 0 : index
    %c0_220 = arith.constant 0 : index
    %305 = vector.load %arg5[%c0_219, %c0_220] : memref<1x128xf32, #tpu.memory_space<vmem>>, vector<1x128xf32>
    %cst_221 = arith.constant 0.000000e+00 : f32
    %306 = vector.broadcast %cst_221 : f32 to vector<4x128xf32>
    %c0_222 = arith.constant 0 : index
    %c0_223 = arith.constant 0 : index
    %c0_224 = arith.constant 0 : index
    %307 = vector.load %arg14[%c0_222, %c0_223, %c0_224] : memref<6x6x128xf32, #tpu.memory_space<vmem>>, vector<1x4x128xf32>
    %308 = vector.shape_cast %307 : vector<1x4x128xf32> to vector<4x128xf32>
    %c0_225 = arith.constant 0 : index
    %c0_226 = arith.constant 0 : index
    %c0_227 = arith.constant 0 : index
    %309 = vector.load %arg4[%c0_225, %c0_226, %c0_227] : memref<9x128x128xf32, #tpu.memory_space<vmem>>, vector<1x128x128xf32>
    %310 = vector.shape_cast %309 : vector<1x128x128xf32> to vector<128x128xf32>
    %cst_228 = arith.constant dense<0.000000e+00> : vector<4x128xf32>
    %311 = tpu.matmul %308, %310, %cst_228 {dimension_numbers = #tpu.dot_dimension_numbers<[1], [0], [0], [1], [0, 0, 1, 1], [], []>} : vector<4x128xf32>, vector<128x128xf32>, vector<4x128xf32> -> vector<4x128xf32>
    %312 = arith.addf %306, %311 : vector<4x128xf32>
    %c0_229 = arith.constant 0 : index
    %c1_230 = arith.constant 1 : index
    %c0_231 = arith.constant 0 : index
    %313 = vector.load %arg14[%c0_229, %c1_230, %c0_231] : memref<6x6x128xf32, #tpu.memory_space<vmem>>, vector<1x4x128xf32>
    %314 = vector.shape_cast %313 : vector<1x4x128xf32> to vector<4x128xf32>
    %c1_232 = arith.constant 1 : index
    %c0_233 = arith.constant 0 : index
    %c0_234 = arith.constant 0 : index
    %315 = vector.load %arg4[%c1_232, %c0_233, %c0_234] : memref<9x128x128xf32, #tpu.memory_space<vmem>>, vector<1x128x128xf32>
    %316 = vector.shape_cast %315 : vector<1x128x128xf32> to vector<128x128xf32>
    %cst_235 = arith.constant dense<0.000000e+00> : vector<4x128xf32>
    %317 = tpu.matmul %314, %316, %cst_235 {dimension_numbers = #tpu.dot_dimension_numbers<[1], [0], [0], [1], [0, 0, 1, 1], [], []>} : vector<4x128xf32>, vector<128x128xf32>, vector<4x128xf32> -> vector<4x128xf32>
    %318 = arith.addf %312, %317 : vector<4x128xf32>
    %c0_236 = arith.constant 0 : index
    %c2_237 = arith.constant 2 : index
    %c0_238 = arith.constant 0 : index
    %319 = vector.load %arg14[%c0_236, %c2_237, %c0_238] : memref<6x6x128xf32, #tpu.memory_space<vmem>>, vector<1x4x128xf32>
    %320 = vector.shape_cast %319 : vector<1x4x128xf32> to vector<4x128xf32>
    %c2_239 = arith.constant 2 : index
    %c0_240 = arith.constant 0 : index
    %c0_241 = arith.constant 0 : index
    %321 = vector.load %arg4[%c2_239, %c0_240, %c0_241] : memref<9x128x128xf32, #tpu.memory_space<vmem>>, vector<1x128x128xf32>
    %322 = vector.shape_cast %321 : vector<1x128x128xf32> to vector<128x128xf32>
    %cst_242 = arith.constant dense<0.000000e+00> : vector<4x128xf32>
    %323 = tpu.matmul %320, %322, %cst_242 {dimension_numbers = #tpu.dot_dimension_numbers<[1], [0], [0], [1], [0, 0, 1, 1], [], []>} : vector<4x128xf32>, vector<128x128xf32>, vector<4x128xf32> -> vector<4x128xf32>
    %324 = arith.addf %318, %323 : vector<4x128xf32>
    %c1_243 = arith.constant 1 : index
    %c0_244 = arith.constant 0 : index
    %c0_245 = arith.constant 0 : index
    %325 = vector.load %arg14[%c1_243, %c0_244, %c0_245] : memref<6x6x128xf32, #tpu.memory_space<vmem>>, vector<1x4x128xf32>
    %326 = vector.shape_cast %325 : vector<1x4x128xf32> to vector<4x128xf32>
    %c3_246 = arith.constant 3 : index
    %c0_247 = arith.constant 0 : index
    %c0_248 = arith.constant 0 : index
    %327 = vector.load %arg4[%c3_246, %c0_247, %c0_248] : memref<9x128x128xf32, #tpu.memory_space<vmem>>, vector<1x128x128xf32>
    %328 = vector.shape_cast %327 : vector<1x128x128xf32> to vector<128x128xf32>
    %cst_249 = arith.constant dense<0.000000e+00> : vector<4x128xf32>
    %329 = tpu.matmul %326, %328, %cst_249 {dimension_numbers = #tpu.dot_dimension_numbers<[1], [0], [0], [1], [0, 0, 1, 1], [], []>} : vector<4x128xf32>, vector<128x128xf32>, vector<4x128xf32> -> vector<4x128xf32>
    %330 = arith.addf %324, %329 : vector<4x128xf32>
    %c1_250 = arith.constant 1 : index
    %c1_251 = arith.constant 1 : index
    %c0_252 = arith.constant 0 : index
    %331 = vector.load %arg14[%c1_250, %c1_251, %c0_252] : memref<6x6x128xf32, #tpu.memory_space<vmem>>, vector<1x4x128xf32>
    %332 = vector.shape_cast %331 : vector<1x4x128xf32> to vector<4x128xf32>
    %c4_253 = arith.constant 4 : index
    %c0_254 = arith.constant 0 : index
    %c0_255 = arith.constant 0 : index
    %333 = vector.load %arg4[%c4_253, %c0_254, %c0_255] : memref<9x128x128xf32, #tpu.memory_space<vmem>>, vector<1x128x128xf32>
    %334 = vector.shape_cast %333 : vector<1x128x128xf32> to vector<128x128xf32>
    %cst_256 = arith.constant dense<0.000000e+00> : vector<4x128xf32>
    %335 = tpu.matmul %332, %334, %cst_256 {dimension_numbers = #tpu.dot_dimension_numbers<[1], [0], [0], [1], [0, 0, 1, 1], [], []>} : vector<4x128xf32>, vector<128x128xf32>, vector<4x128xf32> -> vector<4x128xf32>
    %336 = arith.addf %330, %335 : vector<4x128xf32>
    %c1_257 = arith.constant 1 : index
    %c2_258 = arith.constant 2 : index
    %c0_259 = arith.constant 0 : index
    %337 = vector.load %arg14[%c1_257, %c2_258, %c0_259] : memref<6x6x128xf32, #tpu.memory_space<vmem>>, vector<1x4x128xf32>
    %338 = vector.shape_cast %337 : vector<1x4x128xf32> to vector<4x128xf32>
    %c5_260 = arith.constant 5 : index
    %c0_261 = arith.constant 0 : index
    %c0_262 = arith.constant 0 : index
    %339 = vector.load %arg4[%c5_260, %c0_261, %c0_262] : memref<9x128x128xf32, #tpu.memory_space<vmem>>, vector<1x128x128xf32>
    %340 = vector.shape_cast %339 : vector<1x128x128xf32> to vector<128x128xf32>
    %cst_263 = arith.constant dense<0.000000e+00> : vector<4x128xf32>
    %341 = tpu.matmul %338, %340, %cst_263 {dimension_numbers = #tpu.dot_dimension_numbers<[1], [0], [0], [1], [0, 0, 1, 1], [], []>} : vector<4x128xf32>, vector<128x128xf32>, vector<4x128xf32> -> vector<4x128xf32>
    %342 = arith.addf %336, %341 : vector<4x128xf32>
    %c2_264 = arith.constant 2 : index
    %c0_265 = arith.constant 0 : index
    %c0_266 = arith.constant 0 : index
    %343 = vector.load %arg14[%c2_264, %c0_265, %c0_266] : memref<6x6x128xf32, #tpu.memory_space<vmem>>, vector<1x4x128xf32>
    %344 = vector.shape_cast %343 : vector<1x4x128xf32> to vector<4x128xf32>
    %c6_267 = arith.constant 6 : index
    %c0_268 = arith.constant 0 : index
    %c0_269 = arith.constant 0 : index
    %345 = vector.load %arg4[%c6_267, %c0_268, %c0_269] : memref<9x128x128xf32, #tpu.memory_space<vmem>>, vector<1x128x128xf32>
    %346 = vector.shape_cast %345 : vector<1x128x128xf32> to vector<128x128xf32>
    %cst_270 = arith.constant dense<0.000000e+00> : vector<4x128xf32>
    %347 = tpu.matmul %344, %346, %cst_270 {dimension_numbers = #tpu.dot_dimension_numbers<[1], [0], [0], [1], [0, 0, 1, 1], [], []>} : vector<4x128xf32>, vector<128x128xf32>, vector<4x128xf32> -> vector<4x128xf32>
    %348 = arith.addf %342, %347 : vector<4x128xf32>
    %c2_271 = arith.constant 2 : index
    %c1_272 = arith.constant 1 : index
    %c0_273 = arith.constant 0 : index
    %349 = vector.load %arg14[%c2_271, %c1_272, %c0_273] : memref<6x6x128xf32, #tpu.memory_space<vmem>>, vector<1x4x128xf32>
    %350 = vector.shape_cast %349 : vector<1x4x128xf32> to vector<4x128xf32>
    %c7_274 = arith.constant 7 : index
    %c0_275 = arith.constant 0 : index
    %c0_276 = arith.constant 0 : index
    %351 = vector.load %arg4[%c7_274, %c0_275, %c0_276] : memref<9x128x128xf32, #tpu.memory_space<vmem>>, vector<1x128x128xf32>
    %352 = vector.shape_cast %351 : vector<1x128x128xf32> to vector<128x128xf32>
    %cst_277 = arith.constant dense<0.000000e+00> : vector<4x128xf32>
    %353 = tpu.matmul %350, %352, %cst_277 {dimension_numbers = #tpu.dot_dimension_numbers<[1], [0], [0], [1], [0, 0, 1, 1], [], []>} : vector<4x128xf32>, vector<128x128xf32>, vector<4x128xf32> -> vector<4x128xf32>
    %354 = arith.addf %348, %353 : vector<4x128xf32>
    %c2_278 = arith.constant 2 : index
    %c2_279 = arith.constant 2 : index
    %c0_280 = arith.constant 0 : index
    %355 = vector.load %arg14[%c2_278, %c2_279, %c0_280] : memref<6x6x128xf32, #tpu.memory_space<vmem>>, vector<1x4x128xf32>
    %356 = vector.shape_cast %355 : vector<1x4x128xf32> to vector<4x128xf32>
    %c8_281 = arith.constant 8 : index
    %c0_282 = arith.constant 0 : index
    %c0_283 = arith.constant 0 : index
    %357 = vector.load %arg4[%c8_281, %c0_282, %c0_283] : memref<9x128x128xf32, #tpu.memory_space<vmem>>, vector<1x128x128xf32>
    %358 = vector.shape_cast %357 : vector<1x128x128xf32> to vector<128x128xf32>
    %cst_284 = arith.constant dense<0.000000e+00> : vector<4x128xf32>
    %359 = tpu.matmul %356, %358, %cst_284 {dimension_numbers = #tpu.dot_dimension_numbers<[1], [0], [0], [1], [0, 0, 1, 1], [], []>} : vector<4x128xf32>, vector<128x128xf32>, vector<4x128xf32> -> vector<4x128xf32>
    %360 = arith.addf %354, %359 : vector<4x128xf32>
    %361 = vector.broadcast %305 : vector<1x128xf32> to vector<4x128xf32>
    %362 = arith.addf %360, %361 : vector<4x128xf32>
    %cst_285 = arith.constant 0.000000e+00 : f32
    %363 = vector.broadcast %cst_285 : f32 to vector<4x128xf32>
    %364 = arith.maximumf %362, %363 : vector<4x128xf32>
    %c0_286 = arith.constant 0 : index
    %c0_287 = arith.constant 0 : index
    %365 = vector.load %arg15[%c0_286, %c0_287] : memref<16x128xf32, #tpu.memory_space<vmem>>, vector<4x128xf32>
    tpu.vector_store %arg15[%c0_286, %c0_287], %364 {strides = array<i32>} : memref<16x128xf32, #tpu.memory_space<vmem>>, vector<4x128xf32>,
    %cst_288 = arith.constant 0.000000e+00 : f32
    %366 = vector.broadcast %cst_288 : f32 to vector<4x128xf32>
    %c1_289 = arith.constant 1 : index
    %c0_290 = arith.constant 0 : index
    %c0_291 = arith.constant 0 : index
    %367 = vector.load %arg14[%c1_289, %c0_290, %c0_291] : memref<6x6x128xf32, #tpu.memory_space<vmem>>, vector<1x4x128xf32>
    %368 = vector.shape_cast %367 : vector<1x4x128xf32> to vector<4x128xf32>
    %c0_292 = arith.constant 0 : index
    %c0_293 = arith.constant 0 : index
    %c0_294 = arith.constant 0 : index
    %369 = vector.load %arg4[%c0_292, %c0_293, %c0_294] : memref<9x128x128xf32, #tpu.memory_space<vmem>>, vector<1x128x128xf32>
    %370 = vector.shape_cast %369 : vector<1x128x128xf32> to vector<128x128xf32>
    %cst_295 = arith.constant dense<0.000000e+00> : vector<4x128xf32>
    %371 = tpu.matmul %368, %370, %cst_295 {dimension_numbers = #tpu.dot_dimension_numbers<[1], [0], [0], [1], [0, 0, 1, 1], [], []>} : vector<4x128xf32>, vector<128x128xf32>, vector<4x128xf32> -> vector<4x128xf32>
    %372 = arith.addf %366, %371 : vector<4x128xf32>
    %c1_296 = arith.constant 1 : index
    %c1_297 = arith.constant 1 : index
    %c0_298 = arith.constant 0 : index
    %373 = vector.load %arg14[%c1_296, %c1_297, %c0_298] : memref<6x6x128xf32, #tpu.memory_space<vmem>>, vector<1x4x128xf32>
    %374 = vector.shape_cast %373 : vector<1x4x128xf32> to vector<4x128xf32>
    %c1_299 = arith.constant 1 : index
    %c0_300 = arith.constant 0 : index
    %c0_301 = arith.constant 0 : index
    %375 = vector.load %arg4[%c1_299, %c0_300, %c0_301] : memref<9x128x128xf32, #tpu.memory_space<vmem>>, vector<1x128x128xf32>
    %376 = vector.shape_cast %375 : vector<1x128x128xf32> to vector<128x128xf32>
    %cst_302 = arith.constant dense<0.000000e+00> : vector<4x128xf32>
    %377 = tpu.matmul %374, %376, %cst_302 {dimension_numbers = #tpu.dot_dimension_numbers<[1], [0], [0], [1], [0, 0, 1, 1], [], []>} : vector<4x128xf32>, vector<128x128xf32>, vector<4x128xf32> -> vector<4x128xf32>
    %378 = arith.addf %372, %377 : vector<4x128xf32>
    %c1_303 = arith.constant 1 : index
    %c2_304 = arith.constant 2 : index
    %c0_305 = arith.constant 0 : index
    %379 = vector.load %arg14[%c1_303, %c2_304, %c0_305] : memref<6x6x128xf32, #tpu.memory_space<vmem>>, vector<1x4x128xf32>
    %380 = vector.shape_cast %379 : vector<1x4x128xf32> to vector<4x128xf32>
    %c2_306 = arith.constant 2 : index
    %c0_307 = arith.constant 0 : index
    %c0_308 = arith.constant 0 : index
    %381 = vector.load %arg4[%c2_306, %c0_307, %c0_308] : memref<9x128x128xf32, #tpu.memory_space<vmem>>, vector<1x128x128xf32>
    %382 = vector.shape_cast %381 : vector<1x128x128xf32> to vector<128x128xf32>
    %cst_309 = arith.constant dense<0.000000e+00> : vector<4x128xf32>
    %383 = tpu.matmul %380, %382, %cst_309 {dimension_numbers = #tpu.dot_dimension_numbers<[1], [0], [0], [1], [0, 0, 1, 1], [], []>} : vector<4x128xf32>, vector<128x128xf32>, vector<4x128xf32> -> vector<4x128xf32>
    %384 = arith.addf %378, %383 : vector<4x128xf32>
    %c2_310 = arith.constant 2 : index
    %c0_311 = arith.constant 0 : index
    %c0_312 = arith.constant 0 : index
    %385 = vector.load %arg14[%c2_310, %c0_311, %c0_312] : memref<6x6x128xf32, #tpu.memory_space<vmem>>, vector<1x4x128xf32>
    %386 = vector.shape_cast %385 : vector<1x4x128xf32> to vector<4x128xf32>
    %c3_313 = arith.constant 3 : index
    %c0_314 = arith.constant 0 : index
    %c0_315 = arith.constant 0 : index
    %387 = vector.load %arg4[%c3_313, %c0_314, %c0_315] : memref<9x128x128xf32, #tpu.memory_space<vmem>>, vector<1x128x128xf32>
    %388 = vector.shape_cast %387 : vector<1x128x128xf32> to vector<128x128xf32>
    %cst_316 = arith.constant dense<0.000000e+00> : vector<4x128xf32>
    %389 = tpu.matmul %386, %388, %cst_316 {dimension_numbers = #tpu.dot_dimension_numbers<[1], [0], [0], [1], [0, 0, 1, 1], [], []>} : vector<4x128xf32>, vector<128x128xf32>, vector<4x128xf32> -> vector<4x128xf32>
    %390 = arith.addf %384, %389 : vector<4x128xf32>
    %c2_317 = arith.constant 2 : index
    %c1_318 = arith.constant 1 : index
    %c0_319 = arith.constant 0 : index
    %391 = vector.load %arg14[%c2_317, %c1_318, %c0_319] : memref<6x6x128xf32, #tpu.memory_space<vmem>>, vector<1x4x128xf32>
    %392 = vector.shape_cast %391 : vector<1x4x128xf32> to vector<4x128xf32>
    %c4_320 = arith.constant 4 : index
    %c0_321 = arith.constant 0 : index
    %c0_322 = arith.constant 0 : index
    %393 = vector.load %arg4[%c4_320, %c0_321, %c0_322] : memref<9x128x128xf32, #tpu.memory_space<vmem>>, vector<1x128x128xf32>
    %394 = vector.shape_cast %393 : vector<1x128x128xf32> to vector<128x128xf32>
    %cst_323 = arith.constant dense<0.000000e+00> : vector<4x128xf32>
    %395 = tpu.matmul %392, %394, %cst_323 {dimension_numbers = #tpu.dot_dimension_numbers<[1], [0], [0], [1], [0, 0, 1, 1], [], []>} : vector<4x128xf32>, vector<128x128xf32>, vector<4x128xf32> -> vector<4x128xf32>
    %396 = arith.addf %390, %395 : vector<4x128xf32>
    %c2_324 = arith.constant 2 : index
    %c2_325 = arith.constant 2 : index
    %c0_326 = arith.constant 0 : index
    %397 = vector.load %arg14[%c2_324, %c2_325, %c0_326] : memref<6x6x128xf32, #tpu.memory_space<vmem>>, vector<1x4x128xf32>
    %398 = vector.shape_cast %397 : vector<1x4x128xf32> to vector<4x128xf32>
    %c5_327 = arith.constant 5 : index
    %c0_328 = arith.constant 0 : index
    %c0_329 = arith.constant 0 : index
    %399 = vector.load %arg4[%c5_327, %c0_328, %c0_329] : memref<9x128x128xf32, #tpu.memory_space<vmem>>, vector<1x128x128xf32>
    %400 = vector.shape_cast %399 : vector<1x128x128xf32> to vector<128x128xf32>
    %cst_330 = arith.constant dense<0.000000e+00> : vector<4x128xf32>
    %401 = tpu.matmul %398, %400, %cst_330 {dimension_numbers = #tpu.dot_dimension_numbers<[1], [0], [0], [1], [0, 0, 1, 1], [], []>} : vector<4x128xf32>, vector<128x128xf32>, vector<4x128xf32> -> vector<4x128xf32>
    %402 = arith.addf %396, %401 : vector<4x128xf32>
    %c3_331 = arith.constant 3 : index
    %c0_332 = arith.constant 0 : index
    %c0_333 = arith.constant 0 : index
    %403 = vector.load %arg14[%c3_331, %c0_332, %c0_333] : memref<6x6x128xf32, #tpu.memory_space<vmem>>, vector<1x4x128xf32>
    %404 = vector.shape_cast %403 : vector<1x4x128xf32> to vector<4x128xf32>
    %c6_334 = arith.constant 6 : index
    %c0_335 = arith.constant 0 : index
    %c0_336 = arith.constant 0 : index
    %405 = vector.load %arg4[%c6_334, %c0_335, %c0_336] : memref<9x128x128xf32, #tpu.memory_space<vmem>>, vector<1x128x128xf32>
    %406 = vector.shape_cast %405 : vector<1x128x128xf32> to vector<128x128xf32>
    %cst_337 = arith.constant dense<0.000000e+00> : vector<4x128xf32>
    %407 = tpu.matmul %404, %406, %cst_337 {dimension_numbers = #tpu.dot_dimension_numbers<[1], [0], [0], [1], [0, 0, 1, 1], [], []>} : vector<4x128xf32>, vector<128x128xf32>, vector<4x128xf32> -> vector<4x128xf32>
    %408 = arith.addf %402, %407 : vector<4x128xf32>
    %c3_338 = arith.constant 3 : index
    %c1_339 = arith.constant 1 : index
    %c0_340 = arith.constant 0 : index
    %409 = vector.load %arg14[%c3_338, %c1_339, %c0_340] : memref<6x6x128xf32, #tpu.memory_space<vmem>>, vector<1x4x128xf32>
    %410 = vector.shape_cast %409 : vector<1x4x128xf32> to vector<4x128xf32>
    %c7_341 = arith.constant 7 : index
    %c0_342 = arith.constant 0 : index
    %c0_343 = arith.constant 0 : index
    %411 = vector.load %arg4[%c7_341, %c0_342, %c0_343] : memref<9x128x128xf32, #tpu.memory_space<vmem>>, vector<1x128x128xf32>
    %412 = vector.shape_cast %411 : vector<1x128x128xf32> to vector<128x128xf32>
    %cst_344 = arith.constant dense<0.000000e+00> : vector<4x128xf32>
    %413 = tpu.matmul %410, %412, %cst_344 {dimension_numbers = #tpu.dot_dimension_numbers<[1], [0], [0], [1], [0, 0, 1, 1], [], []>} : vector<4x128xf32>, vector<128x128xf32>, vector<4x128xf32> -> vector<4x128xf32>
    %414 = arith.addf %408, %413 : vector<4x128xf32>
    %c3_345 = arith.constant 3 : index
    %c2_346 = arith.constant 2 : index
    %c0_347 = arith.constant 0 : index
    %415 = vector.load %arg14[%c3_345, %c2_346, %c0_347] : memref<6x6x128xf32, #tpu.memory_space<vmem>>, vector<1x4x128xf32>
    %416 = vector.shape_cast %415 : vector<1x4x128xf32> to vector<4x128xf32>
    %c8_348 = arith.constant 8 : index
    %c0_349 = arith.constant 0 : index
    %c0_350 = arith.constant 0 : index
    %417 = vector.load %arg4[%c8_348, %c0_349, %c0_350] : memref<9x128x128xf32, #tpu.memory_space<vmem>>, vector<1x128x128xf32>
    %418 = vector.shape_cast %417 : vector<1x128x128xf32> to vector<128x128xf32>
    %cst_351 = arith.constant dense<0.000000e+00> : vector<4x128xf32>
    %419 = tpu.matmul %416, %418, %cst_351 {dimension_numbers = #tpu.dot_dimension_numbers<[1], [0], [0], [1], [0, 0, 1, 1], [], []>} : vector<4x128xf32>, vector<128x128xf32>, vector<4x128xf32> -> vector<4x128xf32>
    %420 = arith.addf %414, %419 : vector<4x128xf32>
    %421 = vector.broadcast %305 : vector<1x128xf32> to vector<4x128xf32>
    %422 = arith.addf %420, %421 : vector<4x128xf32>
    %cst_352 = arith.constant 0.000000e+00 : f32
    %423 = vector.broadcast %cst_352 : f32 to vector<4x128xf32>
    %424 = arith.maximumf %422, %423 : vector<4x128xf32>
    %c4_353 = arith.constant 4 : index
    %c0_354 = arith.constant 0 : index
    %425 = vector.load %arg15[%c4_353, %c0_354] : memref<16x128xf32, #tpu.memory_space<vmem>>, vector<4x128xf32>
    tpu.vector_store %arg15[%c4_353, %c0_354], %424 {strides = array<i32>} : memref<16x128xf32, #tpu.memory_space<vmem>>, vector<4x128xf32>,
    %cst_355 = arith.constant 0.000000e+00 : f32
    %426 = vector.broadcast %cst_355 : f32 to vector<4x128xf32>
    %c2_356 = arith.constant 2 : index
    %c0_357 = arith.constant 0 : index
    %c0_358 = arith.constant 0 : index
    %427 = vector.load %arg14[%c2_356, %c0_357, %c0_358] : memref<6x6x128xf32, #tpu.memory_space<vmem>>, vector<1x4x128xf32>
    %428 = vector.shape_cast %427 : vector<1x4x128xf32> to vector<4x128xf32>
    %c0_359 = arith.constant 0 : index
    %c0_360 = arith.constant 0 : index
    %c0_361 = arith.constant 0 : index
    %429 = vector.load %arg4[%c0_359, %c0_360, %c0_361] : memref<9x128x128xf32, #tpu.memory_space<vmem>>, vector<1x128x128xf32>
    %430 = vector.shape_cast %429 : vector<1x128x128xf32> to vector<128x128xf32>
    %cst_362 = arith.constant dense<0.000000e+00> : vector<4x128xf32>
    %431 = tpu.matmul %428, %430, %cst_362 {dimension_numbers = #tpu.dot_dimension_numbers<[1], [0], [0], [1], [0, 0, 1, 1], [], []>} : vector<4x128xf32>, vector<128x128xf32>, vector<4x128xf32> -> vector<4x128xf32>
    %432 = arith.addf %426, %431 : vector<4x128xf32>
    %c2_363 = arith.constant 2 : index
    %c1_364 = arith.constant 1 : index
    %c0_365 = arith.constant 0 : index
    %433 = vector.load %arg14[%c2_363, %c1_364, %c0_365] : memref<6x6x128xf32, #tpu.memory_space<vmem>>, vector<1x4x128xf32>
    %434 = vector.shape_cast %433 : vector<1x4x128xf32> to vector<4x128xf32>
    %c1_366 = arith.constant 1 : index
    %c0_367 = arith.constant 0 : index
    %c0_368 = arith.constant 0 : index
    %435 = vector.load %arg4[%c1_366, %c0_367, %c0_368] : memref<9x128x128xf32, #tpu.memory_space<vmem>>, vector<1x128x128xf32>
    %436 = vector.shape_cast %435 : vector<1x128x128xf32> to vector<128x128xf32>
    %cst_369 = arith.constant dense<0.000000e+00> : vector<4x128xf32>
    %437 = tpu.matmul %434, %436, %cst_369 {dimension_numbers = #tpu.dot_dimension_numbers<[1], [0], [0], [1], [0, 0, 1, 1], [], []>} : vector<4x128xf32>, vector<128x128xf32>, vector<4x128xf32> -> vector<4x128xf32>
    %438 = arith.addf %432, %437 : vector<4x128xf32>
    %c2_370 = arith.constant 2 : index
    %c2_371 = arith.constant 2 : index
    %c0_372 = arith.constant 0 : index
    %439 = vector.load %arg14[%c2_370, %c2_371, %c0_372] : memref<6x6x128xf32, #tpu.memory_space<vmem>>, vector<1x4x128xf32>
    %440 = vector.shape_cast %439 : vector<1x4x128xf32> to vector<4x128xf32>
    %c2_373 = arith.constant 2 : index
    %c0_374 = arith.constant 0 : index
    %c0_375 = arith.constant 0 : index
    %441 = vector.load %arg4[%c2_373, %c0_374, %c0_375] : memref<9x128x128xf32, #tpu.memory_space<vmem>>, vector<1x128x128xf32>
    %442 = vector.shape_cast %441 : vector<1x128x128xf32> to vector<128x128xf32>
    %cst_376 = arith.constant dense<0.000000e+00> : vector<4x128xf32>
    %443 = tpu.matmul %440, %442, %cst_376 {dimension_numbers = #tpu.dot_dimension_numbers<[1], [0], [0], [1], [0, 0, 1, 1], [], []>} : vector<4x128xf32>, vector<128x128xf32>, vector<4x128xf32> -> vector<4x128xf32>
    %444 = arith.addf %438, %443 : vector<4x128xf32>
    %c3_377 = arith.constant 3 : index
    %c0_378 = arith.constant 0 : index
    %c0_379 = arith.constant 0 : index
    %445 = vector.load %arg14[%c3_377, %c0_378, %c0_379] : memref<6x6x128xf32, #tpu.memory_space<vmem>>, vector<1x4x128xf32>
    %446 = vector.shape_cast %445 : vector<1x4x128xf32> to vector<4x128xf32>
    %c3_380 = arith.constant 3 : index
    %c0_381 = arith.constant 0 : index
    %c0_382 = arith.constant 0 : index
    %447 = vector.load %arg4[%c3_380, %c0_381, %c0_382] : memref<9x128x128xf32, #tpu.memory_space<vmem>>, vector<1x128x128xf32>
    %448 = vector.shape_cast %447 : vector<1x128x128xf32> to vector<128x128xf32>
    %cst_383 = arith.constant dense<0.000000e+00> : vector<4x128xf32>
    %449 = tpu.matmul %446, %448, %cst_383 {dimension_numbers = #tpu.dot_dimension_numbers<[1], [0], [0], [1], [0, 0, 1, 1], [], []>} : vector<4x128xf32>, vector<128x128xf32>, vector<4x128xf32> -> vector<4x128xf32>
    %450 = arith.addf %444, %449 : vector<4x128xf32>
    %c3_384 = arith.constant 3 : index
    %c1_385 = arith.constant 1 : index
    %c0_386 = arith.constant 0 : index
    %451 = vector.load %arg14[%c3_384, %c1_385, %c0_386] : memref<6x6x128xf32, #tpu.memory_space<vmem>>, vector<1x4x128xf32>
    %452 = vector.shape_cast %451 : vector<1x4x128xf32> to vector<4x128xf32>
    %c4_387 = arith.constant 4 : index
    %c0_388 = arith.constant 0 : index
    %c0_389 = arith.constant 0 : index
    %453 = vector.load %arg4[%c4_387, %c0_388, %c0_389] : memref<9x128x128xf32, #tpu.memory_space<vmem>>, vector<1x128x128xf32>
    %454 = vector.shape_cast %453 : vector<1x128x128xf32> to vector<128x128xf32>
    %cst_390 = arith.constant dense<0.000000e+00> : vector<4x128xf32>
    %455 = tpu.matmul %452, %454, %cst_390 {dimension_numbers = #tpu.dot_dimension_numbers<[1], [0], [0], [1], [0, 0, 1, 1], [], []>} : vector<4x128xf32>, vector<128x128xf32>, vector<4x128xf32> -> vector<4x128xf32>
    %456 = arith.addf %450, %455 : vector<4x128xf32>
    %c3_391 = arith.constant 3 : index
    %c2_392 = arith.constant 2 : index
    %c0_393 = arith.constant 0 : index
    %457 = vector.load %arg14[%c3_391, %c2_392, %c0_393] : memref<6x6x128xf32, #tpu.memory_space<vmem>>, vector<1x4x128xf32>
    %458 = vector.shape_cast %457 : vector<1x4x128xf32> to vector<4x128xf32>
    %c5_394 = arith.constant 5 : index
    %c0_395 = arith.constant 0 : index
    %c0_396 = arith.constant 0 : index
    %459 = vector.load %arg4[%c5_394, %c0_395, %c0_396] : memref<9x128x128xf32, #tpu.memory_space<vmem>>, vector<1x128x128xf32>
    %460 = vector.shape_cast %459 : vector<1x128x128xf32> to vector<128x128xf32>
    %cst_397 = arith.constant dense<0.000000e+00> : vector<4x128xf32>
    %461 = tpu.matmul %458, %460, %cst_397 {dimension_numbers = #tpu.dot_dimension_numbers<[1], [0], [0], [1], [0, 0, 1, 1], [], []>} : vector<4x128xf32>, vector<128x128xf32>, vector<4x128xf32> -> vector<4x128xf32>
    %462 = arith.addf %456, %461 : vector<4x128xf32>
    %c4_398 = arith.constant 4 : index
    %c0_399 = arith.constant 0 : index
    %c0_400 = arith.constant 0 : index
    %463 = vector.load %arg14[%c4_398, %c0_399, %c0_400] : memref<6x6x128xf32, #tpu.memory_space<vmem>>, vector<1x4x128xf32>
    %464 = vector.shape_cast %463 : vector<1x4x128xf32> to vector<4x128xf32>
    %c6_401 = arith.constant 6 : index
    %c0_402 = arith.constant 0 : index
    %c0_403 = arith.constant 0 : index
    %465 = vector.load %arg4[%c6_401, %c0_402, %c0_403] : memref<9x128x128xf32, #tpu.memory_space<vmem>>, vector<1x128x128xf32>
    %466 = vector.shape_cast %465 : vector<1x128x128xf32> to vector<128x128xf32>
    %cst_404 = arith.constant dense<0.000000e+00> : vector<4x128xf32>
    %467 = tpu.matmul %464, %466, %cst_404 {dimension_numbers = #tpu.dot_dimension_numbers<[1], [0], [0], [1], [0, 0, 1, 1], [], []>} : vector<4x128xf32>, vector<128x128xf32>, vector<4x128xf32> -> vector<4x128xf32>
    %468 = arith.addf %462, %467 : vector<4x128xf32>
    %c4_405 = arith.constant 4 : index
    %c1_406 = arith.constant 1 : index
    %c0_407 = arith.constant 0 : index
    %469 = vector.load %arg14[%c4_405, %c1_406, %c0_407] : memref<6x6x128xf32, #tpu.memory_space<vmem>>, vector<1x4x128xf32>
    %470 = vector.shape_cast %469 : vector<1x4x128xf32> to vector<4x128xf32>
    %c7_408 = arith.constant 7 : index
    %c0_409 = arith.constant 0 : index
    %c0_410 = arith.constant 0 : index
    %471 = vector.load %arg4[%c7_408, %c0_409, %c0_410] : memref<9x128x128xf32, #tpu.memory_space<vmem>>, vector<1x128x128xf32>
    %472 = vector.shape_cast %471 : vector<1x128x128xf32> to vector<128x128xf32>
    %cst_411 = arith.constant dense<0.000000e+00> : vector<4x128xf32>
    %473 = tpu.matmul %470, %472, %cst_411 {dimension_numbers = #tpu.dot_dimension_numbers<[1], [0], [0], [1], [0, 0, 1, 1], [], []>} : vector<4x128xf32>, vector<128x128xf32>, vector<4x128xf32> -> vector<4x128xf32>
    %474 = arith.addf %468, %473 : vector<4x128xf32>
    %c4_412 = arith.constant 4 : index
    %c2_413 = arith.constant 2 : index
    %c0_414 = arith.constant 0 : index
    %475 = vector.load %arg14[%c4_412, %c2_413, %c0_414] : memref<6x6x128xf32, #tpu.memory_space<vmem>>, vector<1x4x128xf32>
    %476 = vector.shape_cast %475 : vector<1x4x128xf32> to vector<4x128xf32>
    %c8_415 = arith.constant 8 : index
    %c0_416 = arith.constant 0 : index
    %c0_417 = arith.constant 0 : index
    %477 = vector.load %arg4[%c8_415, %c0_416, %c0_417] : memref<9x128x128xf32, #tpu.memory_space<vmem>>, vector<1x128x128xf32>
    %478 = vector.shape_cast %477 : vector<1x128x128xf32> to vector<128x128xf32>
    %cst_418 = arith.constant dense<0.000000e+00> : vector<4x128xf32>
    %479 = tpu.matmul %476, %478, %cst_418 {dimension_numbers = #tpu.dot_dimension_numbers<[1], [0], [0], [1], [0, 0, 1, 1], [], []>} : vector<4x128xf32>, vector<128x128xf32>, vector<4x128xf32> -> vector<4x128xf32>
    %480 = arith.addf %474, %479 : vector<4x128xf32>
    %481 = vector.broadcast %305 : vector<1x128xf32> to vector<4x128xf32>
    %482 = arith.addf %480, %481 : vector<4x128xf32>
    %cst_419 = arith.constant 0.000000e+00 : f32
    %483 = vector.broadcast %cst_419 : f32 to vector<4x128xf32>
    %484 = arith.maximumf %482, %483 : vector<4x128xf32>
    %c8_420 = arith.constant 8 : index
    %c0_421 = arith.constant 0 : index
    %485 = vector.load %arg15[%c8_420, %c0_421] : memref<16x128xf32, #tpu.memory_space<vmem>>, vector<4x128xf32>
    tpu.vector_store %arg15[%c8_420, %c0_421], %484 {strides = array<i32>} : memref<16x128xf32, #tpu.memory_space<vmem>>, vector<4x128xf32>,
    %cst_422 = arith.constant 0.000000e+00 : f32
    %486 = vector.broadcast %cst_422 : f32 to vector<4x128xf32>
    %c3_423 = arith.constant 3 : index
    %c0_424 = arith.constant 0 : index
    %c0_425 = arith.constant 0 : index
    %487 = vector.load %arg14[%c3_423, %c0_424, %c0_425] : memref<6x6x128xf32, #tpu.memory_space<vmem>>, vector<1x4x128xf32>
    %488 = vector.shape_cast %487 : vector<1x4x128xf32> to vector<4x128xf32>
    %c0_426 = arith.constant 0 : index
    %c0_427 = arith.constant 0 : index
    %c0_428 = arith.constant 0 : index
    %489 = vector.load %arg4[%c0_426, %c0_427, %c0_428] : memref<9x128x128xf32, #tpu.memory_space<vmem>>, vector<1x128x128xf32>
    %490 = vector.shape_cast %489 : vector<1x128x128xf32> to vector<128x128xf32>
    %cst_429 = arith.constant dense<0.000000e+00> : vector<4x128xf32>
    %491 = tpu.matmul %488, %490, %cst_429 {dimension_numbers = #tpu.dot_dimension_numbers<[1], [0], [0], [1], [0, 0, 1, 1], [], []>} : vector<4x128xf32>, vector<128x128xf32>, vector<4x128xf32> -> vector<4x128xf32>
    %492 = arith.addf %486, %491 : vector<4x128xf32>
    %c3_430 = arith.constant 3 : index
    %c1_431 = arith.constant 1 : index
    %c0_432 = arith.constant 0 : index
    %493 = vector.load %arg14[%c3_430, %c1_431, %c0_432] : memref<6x6x128xf32, #tpu.memory_space<vmem>>, vector<1x4x128xf32>
    %494 = vector.shape_cast %493 : vector<1x4x128xf32> to vector<4x128xf32>
    %c1_433 = arith.constant 1 : index
    %c0_434 = arith.constant 0 : index
    %c0_435 = arith.constant 0 : index
    %495 = vector.load %arg4[%c1_433, %c0_434, %c0_435] : memref<9x128x128xf32, #tpu.memory_space<vmem>>, vector<1x128x128xf32>
    %496 = vector.shape_cast %495 : vector<1x128x128xf32> to vector<128x128xf32>
    %cst_436 = arith.constant dense<0.000000e+00> : vector<4x128xf32>
    %497 = tpu.matmul %494, %496, %cst_436 {dimension_numbers = #tpu.dot_dimension_numbers<[1], [0], [0], [1], [0, 0, 1, 1], [], []>} : vector<4x128xf32>, vector<128x128xf32>, vector<4x128xf32> -> vector<4x128xf32>
    %498 = arith.addf %492, %497 : vector<4x128xf32>
    %c3_437 = arith.constant 3 : index
    %c2_438 = arith.constant 2 : index
    %c0_439 = arith.constant 0 : index
    %499 = vector.load %arg14[%c3_437, %c2_438, %c0_439] : memref<6x6x128xf32, #tpu.memory_space<vmem>>, vector<1x4x128xf32>
    %500 = vector.shape_cast %499 : vector<1x4x128xf32> to vector<4x128xf32>
    %c2_440 = arith.constant 2 : index
    %c0_441 = arith.constant 0 : index
    %c0_442 = arith.constant 0 : index
    %501 = vector.load %arg4[%c2_440, %c0_441, %c0_442] : memref<9x128x128xf32, #tpu.memory_space<vmem>>, vector<1x128x128xf32>
    %502 = vector.shape_cast %501 : vector<1x128x128xf32> to vector<128x128xf32>
    %cst_443 = arith.constant dense<0.000000e+00> : vector<4x128xf32>
    %503 = tpu.matmul %500, %502, %cst_443 {dimension_numbers = #tpu.dot_dimension_numbers<[1], [0], [0], [1], [0, 0, 1, 1], [], []>} : vector<4x128xf32>, vector<128x128xf32>, vector<4x128xf32> -> vector<4x128xf32>
    %504 = arith.addf %498, %503 : vector<4x128xf32>
    %c4_444 = arith.constant 4 : index
    %c0_445 = arith.constant 0 : index
    %c0_446 = arith.constant 0 : index
    %505 = vector.load %arg14[%c4_444, %c0_445, %c0_446] : memref<6x6x128xf32, #tpu.memory_space<vmem>>, vector<1x4x128xf32>
    %506 = vector.shape_cast %505 : vector<1x4x128xf32> to vector<4x128xf32>
    %c3_447 = arith.constant 3 : index
    %c0_448 = arith.constant 0 : index
    %c0_449 = arith.constant 0 : index
    %507 = vector.load %arg4[%c3_447, %c0_448, %c0_449] : memref<9x128x128xf32, #tpu.memory_space<vmem>>, vector<1x128x128xf32>
    %508 = vector.shape_cast %507 : vector<1x128x128xf32> to vector<128x128xf32>
    %cst_450 = arith.constant dense<0.000000e+00> : vector<4x128xf32>
    %509 = tpu.matmul %506, %508, %cst_450 {dimension_numbers = #tpu.dot_dimension_numbers<[1], [0], [0], [1], [0, 0, 1, 1], [], []>} : vector<4x128xf32>, vector<128x128xf32>, vector<4x128xf32> -> vector<4x128xf32>
    %510 = arith.addf %504, %509 : vector<4x128xf32>
    %c4_451 = arith.constant 4 : index
    %c1_452 = arith.constant 1 : index
    %c0_453 = arith.constant 0 : index
    %511 = vector.load %arg14[%c4_451, %c1_452, %c0_453] : memref<6x6x128xf32, #tpu.memory_space<vmem>>, vector<1x4x128xf32>
    %512 = vector.shape_cast %511 : vector<1x4x128xf32> to vector<4x128xf32>
    %c4_454 = arith.constant 4 : index
    %c0_455 = arith.constant 0 : index
    %c0_456 = arith.constant 0 : index
    %513 = vector.load %arg4[%c4_454, %c0_455, %c0_456] : memref<9x128x128xf32, #tpu.memory_space<vmem>>, vector<1x128x128xf32>
    %514 = vector.shape_cast %513 : vector<1x128x128xf32> to vector<128x128xf32>
    %cst_457 = arith.constant dense<0.000000e+00> : vector<4x128xf32>
    %515 = tpu.matmul %512, %514, %cst_457 {dimension_numbers = #tpu.dot_dimension_numbers<[1], [0], [0], [1], [0, 0, 1, 1], [], []>} : vector<4x128xf32>, vector<128x128xf32>, vector<4x128xf32> -> vector<4x128xf32>
    %516 = arith.addf %510, %515 : vector<4x128xf32>
    %c4_458 = arith.constant 4 : index
    %c2_459 = arith.constant 2 : index
    %c0_460 = arith.constant 0 : index
    %517 = vector.load %arg14[%c4_458, %c2_459, %c0_460] : memref<6x6x128xf32, #tpu.memory_space<vmem>>, vector<1x4x128xf32>
    %518 = vector.shape_cast %517 : vector<1x4x128xf32> to vector<4x128xf32>
    %c5_461 = arith.constant 5 : index
    %c0_462 = arith.constant 0 : index
    %c0_463 = arith.constant 0 : index
    %519 = vector.load %arg4[%c5_461, %c0_462, %c0_463] : memref<9x128x128xf32, #tpu.memory_space<vmem>>, vector<1x128x128xf32>
    %520 = vector.shape_cast %519 : vector<1x128x128xf32> to vector<128x128xf32>
    %cst_464 = arith.constant dense<0.000000e+00> : vector<4x128xf32>
    %521 = tpu.matmul %518, %520, %cst_464 {dimension_numbers = #tpu.dot_dimension_numbers<[1], [0], [0], [1], [0, 0, 1, 1], [], []>} : vector<4x128xf32>, vector<128x128xf32>, vector<4x128xf32> -> vector<4x128xf32>
    %522 = arith.addf %516, %521 : vector<4x128xf32>
    %c5_465 = arith.constant 5 : index
    %c0_466 = arith.constant 0 : index
    %c0_467 = arith.constant 0 : index
    %523 = vector.load %arg14[%c5_465, %c0_466, %c0_467] : memref<6x6x128xf32, #tpu.memory_space<vmem>>, vector<1x4x128xf32>
    %524 = vector.shape_cast %523 : vector<1x4x128xf32> to vector<4x128xf32>
    %c6_468 = arith.constant 6 : index
    %c0_469 = arith.constant 0 : index
    %c0_470 = arith.constant 0 : index
    %525 = vector.load %arg4[%c6_468, %c0_469, %c0_470] : memref<9x128x128xf32, #tpu.memory_space<vmem>>, vector<1x128x128xf32>
    %526 = vector.shape_cast %525 : vector<1x128x128xf32> to vector<128x128xf32>
    %cst_471 = arith.constant dense<0.000000e+00> : vector<4x128xf32>
    %527 = tpu.matmul %524, %526, %cst_471 {dimension_numbers = #tpu.dot_dimension_numbers<[1], [0], [0], [1], [0, 0, 1, 1], [], []>} : vector<4x128xf32>, vector<128x128xf32>, vector<4x128xf32> -> vector<4x128xf32>
    %528 = arith.addf %522, %527 : vector<4x128xf32>
    %c5_472 = arith.constant 5 : index
    %c1_473 = arith.constant 1 : index
    %c0_474 = arith.constant 0 : index
    %529 = vector.load %arg14[%c5_472, %c1_473, %c0_474] : memref<6x6x128xf32, #tpu.memory_space<vmem>>, vector<1x4x128xf32>
    %530 = vector.shape_cast %529 : vector<1x4x128xf32> to vector<4x128xf32>
    %c7_475 = arith.constant 7 : index
    %c0_476 = arith.constant 0 : index
    %c0_477 = arith.constant 0 : index
    %531 = vector.load %arg4[%c7_475, %c0_476, %c0_477] : memref<9x128x128xf32, #tpu.memory_space<vmem>>, vector<1x128x128xf32>
    %532 = vector.shape_cast %531 : vector<1x128x128xf32> to vector<128x128xf32>
    %cst_478 = arith.constant dense<0.000000e+00> : vector<4x128xf32>
    %533 = tpu.matmul %530, %532, %cst_478 {dimension_numbers = #tpu.dot_dimension_numbers<[1], [0], [0], [1], [0, 0, 1, 1], [], []>} : vector<4x128xf32>, vector<128x128xf32>, vector<4x128xf32> -> vector<4x128xf32>
    %534 = arith.addf %528, %533 : vector<4x128xf32>
    %c5_479 = arith.constant 5 : index
    %c2_480 = arith.constant 2 : index
    %c0_481 = arith.constant 0 : index
    %535 = vector.load %arg14[%c5_479, %c2_480, %c0_481] : memref<6x6x128xf32, #tpu.memory_space<vmem>>, vector<1x4x128xf32>
    %536 = vector.shape_cast %535 : vector<1x4x128xf32> to vector<4x128xf32>
    %c8_482 = arith.constant 8 : index
    %c0_483 = arith.constant 0 : index
    %c0_484 = arith.constant 0 : index
    %537 = vector.load %arg4[%c8_482, %c0_483, %c0_484] : memref<9x128x128xf32, #tpu.memory_space<vmem>>, vector<1x128x128xf32>
    %538 = vector.shape_cast %537 : vector<1x128x128xf32> to vector<128x128xf32>
    %cst_485 = arith.constant dense<0.000000e+00> : vector<4x128xf32>
    %539 = tpu.matmul %536, %538, %cst_485 {dimension_numbers = #tpu.dot_dimension_numbers<[1], [0], [0], [1], [0, 0, 1, 1], [], []>} : vector<4x128xf32>, vector<128x128xf32>, vector<4x128xf32> -> vector<4x128xf32>
    %540 = arith.addf %534, %539 : vector<4x128xf32>
    %541 = vector.broadcast %305 : vector<1x128xf32> to vector<4x128xf32>
    %542 = arith.addf %540, %541 : vector<4x128xf32>
    %cst_486 = arith.constant 0.000000e+00 : f32
    %543 = vector.broadcast %cst_486 : f32 to vector<4x128xf32>
    %544 = arith.maximumf %542, %543 : vector<4x128xf32>
    %c12_487 = arith.constant 12 : index
    %c0_488 = arith.constant 0 : index
    %545 = vector.load %arg15[%c12_487, %c0_488] : memref<16x128xf32, #tpu.memory_space<vmem>>, vector<4x128xf32>
    tpu.vector_store %arg15[%c12_487, %c0_488], %544 {strides = array<i32>} : memref<16x128xf32, #tpu.memory_space<vmem>>, vector<4x128xf32>,
    tpu.wait_dma2 semaphore(%arg17 : memref<!tpu.dma_semaphore, #tpu.memory_space<semaphore_mem>>) src(%arg6 : memref<16x128x512xf32, #tpu.memory_space<any>>) dst(%arg16 : memref<16x128x512xf32, #tpu.memory_space<vmem>>)
    %c0_489 = arith.constant 0 : index
    %c0_490 = arith.constant 0 : index
    %546 = vector.load %arg7[%c0_489, %c0_490] : memref<1x512xf32, #tpu.memory_space<vmem>>, vector<1x512xf32>
    %c0_491 = arith.constant 0 : index
    %c0_492 = arith.constant 0 : index
    %547 = vector.load %arg15[%c0_491, %c0_492] : memref<16x128xf32, #tpu.memory_space<vmem>>, vector<1x128xf32>
    %c0_493 = arith.constant 0 : index
    %c0_494 = arith.constant 0 : index
    %c0_495 = arith.constant 0 : index
    %548 = vector.load %arg16[%c0_493, %c0_494, %c0_495] : memref<16x128x512xf32, #tpu.memory_space<vmem>>, vector<1x128x512xf32>
    %549 = vector.shape_cast %548 : vector<1x128x512xf32> to vector<128x512xf32>
    %cst_496 = arith.constant dense<0.000000e+00> : vector<1x512xf32>
    %550 = tpu.matmul %547, %549, %cst_496 {dimension_numbers = #tpu.dot_dimension_numbers<[1], [0], [0], [1], [0, 0, 1, 1], [], []>} : vector<1x128xf32>, vector<128x512xf32>, vector<1x512xf32> -> vector<1x512xf32>
    %551 = arith.addf %546, %550 : vector<1x512xf32>
    %c1_497 = arith.constant 1 : index
    %c0_498 = arith.constant 0 : index
    %552 = vector.load %arg15[%c1_497, %c0_498] : memref<16x128xf32, #tpu.memory_space<vmem>>, vector<1x128xf32>
    %c1_499 = arith.constant 1 : index
    %c0_500 = arith.constant 0 : index
    %c0_501 = arith.constant 0 : index
    %553 = vector.load %arg16[%c1_499, %c0_500, %c0_501] : memref<16x128x512xf32, #tpu.memory_space<vmem>>, vector<1x128x512xf32>
    %554 = vector.shape_cast %553 : vector<1x128x512xf32> to vector<128x512xf32>
    %cst_502 = arith.constant dense<0.000000e+00> : vector<1x512xf32>
    %555 = tpu.matmul %552, %554, %cst_502 {dimension_numbers = #tpu.dot_dimension_numbers<[1], [0], [0], [1], [0, 0, 1, 1], [], []>} : vector<1x128xf32>, vector<128x512xf32>, vector<1x512xf32> -> vector<1x512xf32>
    %556 = arith.addf %551, %555 : vector<1x512xf32>
    %c2_503 = arith.constant 2 : index
    %c0_504 = arith.constant 0 : index
    %557 = vector.load %arg15[%c2_503, %c0_504] : memref<16x128xf32, #tpu.memory_space<vmem>>, vector<1x128xf32>
    %c2_505 = arith.constant 2 : index
    %c0_506 = arith.constant 0 : index
    %c0_507 = arith.constant 0 : index
    %558 = vector.load %arg16[%c2_505, %c0_506, %c0_507] : memref<16x128x512xf32, #tpu.memory_space<vmem>>, vector<1x128x512xf32>
    %559 = vector.shape_cast %558 : vector<1x128x512xf32> to vector<128x512xf32>
    %cst_508 = arith.constant dense<0.000000e+00> : vector<1x512xf32>
    %560 = tpu.matmul %557, %559, %cst_508 {dimension_numbers = #tpu.dot_dimension_numbers<[1], [0], [0], [1], [0, 0, 1, 1], [], []>} : vector<1x128xf32>, vector<128x512xf32>, vector<1x512xf32> -> vector<1x512xf32>
    %561 = arith.addf %556, %560 : vector<1x512xf32>
    %c3_509 = arith.constant 3 : index
    %c0_510 = arith.constant 0 : index
    %562 = vector.load %arg15[%c3_509, %c0_510] : memref<16x128xf32, #tpu.memory_space<vmem>>, vector<1x128xf32>
    %c3_511 = arith.constant 3 : index
    %c0_512 = arith.constant 0 : index
    %c0_513 = arith.constant 0 : index
    %563 = vector.load %arg16[%c3_511, %c0_512, %c0_513] : memref<16x128x512xf32, #tpu.memory_space<vmem>>, vector<1x128x512xf32>
    %564 = vector.shape_cast %563 : vector<1x128x512xf32> to vector<128x512xf32>
    %cst_514 = arith.constant dense<0.000000e+00> : vector<1x512xf32>
    %565 = tpu.matmul %562, %564, %cst_514 {dimension_numbers = #tpu.dot_dimension_numbers<[1], [0], [0], [1], [0, 0, 1, 1], [], []>} : vector<1x128xf32>, vector<128x512xf32>, vector<1x512xf32> -> vector<1x512xf32>
    %566 = arith.addf %561, %565 : vector<1x512xf32>
    %c4_515 = arith.constant 4 : index
    %c0_516 = arith.constant 0 : index
    %567 = vector.load %arg15[%c4_515, %c0_516] : memref<16x128xf32, #tpu.memory_space<vmem>>, vector<1x128xf32>
    %c4_517 = arith.constant 4 : index
    %c0_518 = arith.constant 0 : index
    %c0_519 = arith.constant 0 : index
    %568 = vector.load %arg16[%c4_517, %c0_518, %c0_519] : memref<16x128x512xf32, #tpu.memory_space<vmem>>, vector<1x128x512xf32>
    %569 = vector.shape_cast %568 : vector<1x128x512xf32> to vector<128x512xf32>
    %cst_520 = arith.constant dense<0.000000e+00> : vector<1x512xf32>
    %570 = tpu.matmul %567, %569, %cst_520 {dimension_numbers = #tpu.dot_dimension_numbers<[1], [0], [0], [1], [0, 0, 1, 1], [], []>} : vector<1x128xf32>, vector<128x512xf32>, vector<1x512xf32> -> vector<1x512xf32>
    %571 = arith.addf %566, %570 : vector<1x512xf32>
    %c5_521 = arith.constant 5 : index
    %c0_522 = arith.constant 0 : index
    %572 = vector.load %arg15[%c5_521, %c0_522] : memref<16x128xf32, #tpu.memory_space<vmem>>, vector<1x128xf32>
    %c5_523 = arith.constant 5 : index
    %c0_524 = arith.constant 0 : index
    %c0_525 = arith.constant 0 : index
    %573 = vector.load %arg16[%c5_523, %c0_524, %c0_525] : memref<16x128x512xf32, #tpu.memory_space<vmem>>, vector<1x128x512xf32>
    %574 = vector.shape_cast %573 : vector<1x128x512xf32> to vector<128x512xf32>
    %cst_526 = arith.constant dense<0.000000e+00> : vector<1x512xf32>
    %575 = tpu.matmul %572, %574, %cst_526 {dimension_numbers = #tpu.dot_dimension_numbers<[1], [0], [0], [1], [0, 0, 1, 1], [], []>} : vector<1x128xf32>, vector<128x512xf32>, vector<1x512xf32> -> vector<1x512xf32>
    %576 = arith.addf %571, %575 : vector<1x512xf32>
    %c6_527 = arith.constant 6 : index
    %c0_528 = arith.constant 0 : index
    %577 = vector.load %arg15[%c6_527, %c0_528] : memref<16x128xf32, #tpu.memory_space<vmem>>, vector<1x128xf32>
    %c6_529 = arith.constant 6 : index
    %c0_530 = arith.constant 0 : index
    %c0_531 = arith.constant 0 : index
    %578 = vector.load %arg16[%c6_529, %c0_530, %c0_531] : memref<16x128x512xf32, #tpu.memory_space<vmem>>, vector<1x128x512xf32>
    %579 = vector.shape_cast %578 : vector<1x128x512xf32> to vector<128x512xf32>
    %cst_532 = arith.constant dense<0.000000e+00> : vector<1x512xf32>
    %580 = tpu.matmul %577, %579, %cst_532 {dimension_numbers = #tpu.dot_dimension_numbers<[1], [0], [0], [1], [0, 0, 1, 1], [], []>} : vector<1x128xf32>, vector<128x512xf32>, vector<1x512xf32> -> vector<1x512xf32>
    %581 = arith.addf %576, %580 : vector<1x512xf32>
    %c7_533 = arith.constant 7 : index
    %c0_534 = arith.constant 0 : index
    %582 = vector.load %arg15[%c7_533, %c0_534] : memref<16x128xf32, #tpu.memory_space<vmem>>, vector<1x128xf32>
    %c7_535 = arith.constant 7 : index
    %c0_536 = arith.constant 0 : index
    %c0_537 = arith.constant 0 : index
    %583 = vector.load %arg16[%c7_535, %c0_536, %c0_537] : memref<16x128x512xf32, #tpu.memory_space<vmem>>, vector<1x128x512xf32>
    %584 = vector.shape_cast %583 : vector<1x128x512xf32> to vector<128x512xf32>
    %cst_538 = arith.constant dense<0.000000e+00> : vector<1x512xf32>
    %585 = tpu.matmul %582, %584, %cst_538 {dimension_numbers = #tpu.dot_dimension_numbers<[1], [0], [0], [1], [0, 0, 1, 1], [], []>} : vector<1x128xf32>, vector<128x512xf32>, vector<1x512xf32> -> vector<1x512xf32>
    %586 = arith.addf %581, %585 : vector<1x512xf32>
    %c8_539 = arith.constant 8 : index
    %c0_540 = arith.constant 0 : index
    %587 = vector.load %arg15[%c8_539, %c0_540] : memref<16x128xf32, #tpu.memory_space<vmem>>, vector<1x128xf32>
    %c8_541 = arith.constant 8 : index
    %c0_542 = arith.constant 0 : index
    %c0_543 = arith.constant 0 : index
    %588 = vector.load %arg16[%c8_541, %c0_542, %c0_543] : memref<16x128x512xf32, #tpu.memory_space<vmem>>, vector<1x128x512xf32>
    %589 = vector.shape_cast %588 : vector<1x128x512xf32> to vector<128x512xf32>
    %cst_544 = arith.constant dense<0.000000e+00> : vector<1x512xf32>
    %590 = tpu.matmul %587, %589, %cst_544 {dimension_numbers = #tpu.dot_dimension_numbers<[1], [0], [0], [1], [0, 0, 1, 1], [], []>} : vector<1x128xf32>, vector<128x512xf32>, vector<1x512xf32> -> vector<1x512xf32>
    %591 = arith.addf %586, %590 : vector<1x512xf32>
    %c9 = arith.constant 9 : index
    %c0_545 = arith.constant 0 : index
    %592 = vector.load %arg15[%c9, %c0_545] : memref<16x128xf32, #tpu.memory_space<vmem>>, vector<1x128xf32>
    %c9_546 = arith.constant 9 : index
    %c0_547 = arith.constant 0 : index
    %c0_548 = arith.constant 0 : index
    %593 = vector.load %arg16[%c9_546, %c0_547, %c0_548] : memref<16x128x512xf32, #tpu.memory_space<vmem>>, vector<1x128x512xf32>
    %594 = vector.shape_cast %593 : vector<1x128x512xf32> to vector<128x512xf32>
    %cst_549 = arith.constant dense<0.000000e+00> : vector<1x512xf32>
    %595 = tpu.matmul %592, %594, %cst_549 {dimension_numbers = #tpu.dot_dimension_numbers<[1], [0], [0], [1], [0, 0, 1, 1], [], []>} : vector<1x128xf32>, vector<128x512xf32>, vector<1x512xf32> -> vector<1x512xf32>
    %596 = arith.addf %591, %595 : vector<1x512xf32>
    %c10 = arith.constant 10 : index
    %c0_550 = arith.constant 0 : index
    %597 = vector.load %arg15[%c10, %c0_550] : memref<16x128xf32, #tpu.memory_space<vmem>>, vector<1x128xf32>
    %c10_551 = arith.constant 10 : index
    %c0_552 = arith.constant 0 : index
    %c0_553 = arith.constant 0 : index
    %598 = vector.load %arg16[%c10_551, %c0_552, %c0_553] : memref<16x128x512xf32, #tpu.memory_space<vmem>>, vector<1x128x512xf32>
    %599 = vector.shape_cast %598 : vector<1x128x512xf32> to vector<128x512xf32>
    %cst_554 = arith.constant dense<0.000000e+00> : vector<1x512xf32>
    %600 = tpu.matmul %597, %599, %cst_554 {dimension_numbers = #tpu.dot_dimension_numbers<[1], [0], [0], [1], [0, 0, 1, 1], [], []>} : vector<1x128xf32>, vector<128x512xf32>, vector<1x512xf32> -> vector<1x512xf32>
    %601 = arith.addf %596, %600 : vector<1x512xf32>
    %c11 = arith.constant 11 : index
    %c0_555 = arith.constant 0 : index
    %602 = vector.load %arg15[%c11, %c0_555] : memref<16x128xf32, #tpu.memory_space<vmem>>, vector<1x128xf32>
    %c11_556 = arith.constant 11 : index
    %c0_557 = arith.constant 0 : index
    %c0_558 = arith.constant 0 : index
    %603 = vector.load %arg16[%c11_556, %c0_557, %c0_558] : memref<16x128x512xf32, #tpu.memory_space<vmem>>, vector<1x128x512xf32>
    %604 = vector.shape_cast %603 : vector<1x128x512xf32> to vector<128x512xf32>
    %cst_559 = arith.constant dense<0.000000e+00> : vector<1x512xf32>
    %605 = tpu.matmul %602, %604, %cst_559 {dimension_numbers = #tpu.dot_dimension_numbers<[1], [0], [0], [1], [0, 0, 1, 1], [], []>} : vector<1x128xf32>, vector<128x512xf32>, vector<1x512xf32> -> vector<1x512xf32>
    %606 = arith.addf %601, %605 : vector<1x512xf32>
    %c12_560 = arith.constant 12 : index
    %c0_561 = arith.constant 0 : index
    %607 = vector.load %arg15[%c12_560, %c0_561] : memref<16x128xf32, #tpu.memory_space<vmem>>, vector<1x128xf32>
    %c12_562 = arith.constant 12 : index
    %c0_563 = arith.constant 0 : index
    %c0_564 = arith.constant 0 : index
    %608 = vector.load %arg16[%c12_562, %c0_563, %c0_564] : memref<16x128x512xf32, #tpu.memory_space<vmem>>, vector<1x128x512xf32>
    %609 = vector.shape_cast %608 : vector<1x128x512xf32> to vector<128x512xf32>
    %cst_565 = arith.constant dense<0.000000e+00> : vector<1x512xf32>
    %610 = tpu.matmul %607, %609, %cst_565 {dimension_numbers = #tpu.dot_dimension_numbers<[1], [0], [0], [1], [0, 0, 1, 1], [], []>} : vector<1x128xf32>, vector<128x512xf32>, vector<1x512xf32> -> vector<1x512xf32>
    %611 = arith.addf %606, %610 : vector<1x512xf32>
    %c13 = arith.constant 13 : index
    %c0_566 = arith.constant 0 : index
    %612 = vector.load %arg15[%c13, %c0_566] : memref<16x128xf32, #tpu.memory_space<vmem>>, vector<1x128xf32>
    %c13_567 = arith.constant 13 : index
    %c0_568 = arith.constant 0 : index
    %c0_569 = arith.constant 0 : index
    %613 = vector.load %arg16[%c13_567, %c0_568, %c0_569] : memref<16x128x512xf32, #tpu.memory_space<vmem>>, vector<1x128x512xf32>
    %614 = vector.shape_cast %613 : vector<1x128x512xf32> to vector<128x512xf32>
    %cst_570 = arith.constant dense<0.000000e+00> : vector<1x512xf32>
    %615 = tpu.matmul %612, %614, %cst_570 {dimension_numbers = #tpu.dot_dimension_numbers<[1], [0], [0], [1], [0, 0, 1, 1], [], []>} : vector<1x128xf32>, vector<128x512xf32>, vector<1x512xf32> -> vector<1x512xf32>
    %616 = arith.addf %611, %615 : vector<1x512xf32>
    %c14 = arith.constant 14 : index
    %c0_571 = arith.constant 0 : index
    %617 = vector.load %arg15[%c14, %c0_571] : memref<16x128xf32, #tpu.memory_space<vmem>>, vector<1x128xf32>
    %c14_572 = arith.constant 14 : index
    %c0_573 = arith.constant 0 : index
    %c0_574 = arith.constant 0 : index
    %618 = vector.load %arg16[%c14_572, %c0_573, %c0_574] : memref<16x128x512xf32, #tpu.memory_space<vmem>>, vector<1x128x512xf32>
    %619 = vector.shape_cast %618 : vector<1x128x512xf32> to vector<128x512xf32>
    %cst_575 = arith.constant dense<0.000000e+00> : vector<1x512xf32>
    %620 = tpu.matmul %617, %619, %cst_575 {dimension_numbers = #tpu.dot_dimension_numbers<[1], [0], [0], [1], [0, 0, 1, 1], [], []>} : vector<1x128xf32>, vector<128x512xf32>, vector<1x512xf32> -> vector<1x512xf32>
    %621 = arith.addf %616, %620 : vector<1x512xf32>
    %c15 = arith.constant 15 : index
    %c0_576 = arith.constant 0 : index
    %622 = vector.load %arg15[%c15, %c0_576] : memref<16x128xf32, #tpu.memory_space<vmem>>, vector<1x128xf32>
    %c15_577 = arith.constant 15 : index
    %c0_578 = arith.constant 0 : index
    %c0_579 = arith.constant 0 : index
    %623 = vector.load %arg16[%c15_577, %c0_578, %c0_579] : memref<16x128x512xf32, #tpu.memory_space<vmem>>, vector<1x128x512xf32>
    %624 = vector.shape_cast %623 : vector<1x128x512xf32> to vector<128x512xf32>
    %cst_580 = arith.constant dense<0.000000e+00> : vector<1x512xf32>
    %625 = tpu.matmul %622, %624, %cst_580 {dimension_numbers = #tpu.dot_dimension_numbers<[1], [0], [0], [1], [0, 0, 1, 1], [], []>} : vector<1x128xf32>, vector<128x512xf32>, vector<1x512xf32> -> vector<1x512xf32>
    %626 = arith.addf %621, %625 : vector<1x512xf32>
    %cst_581 = arith.constant 0.000000e+00 : f32
    %627 = vector.broadcast %cst_581 : f32 to vector<1x512xf32>
    %628 = arith.maximumf %626, %627 : vector<1x512xf32>
    %c0_582 = arith.constant 0 : index
    %c0_583 = arith.constant 0 : index
    %629 = vector.load %arg8[%c0_582, %c0_583] : memref<512x512xf32, #tpu.memory_space<vmem>>, vector<512x512xf32>
    %cst_584 = arith.constant dense<0.000000e+00> : vector<1x512xf32>
    %630 = tpu.matmul %628, %629, %cst_584 {dimension_numbers = #tpu.dot_dimension_numbers<[1], [0], [0], [1], [0, 0, 1, 1], [], []>} : vector<1x512xf32>, vector<512x512xf32>, vector<1x512xf32> -> vector<1x512xf32>
    %c0_585 = arith.constant 0 : index
    %c0_586 = arith.constant 0 : index
    %631 = vector.load %arg9[%c0_585, %c0_586] : memref<1x512xf32, #tpu.memory_space<vmem>>, vector<1x512xf32>
    %632 = arith.addf %630, %631 : vector<1x512xf32>
    %cst_587 = arith.constant 0.000000e+00 : f32
    %633 = vector.broadcast %cst_587 : f32 to vector<1x512xf32>
    %634 = arith.maximumf %632, %633 : vector<1x512xf32>
    %c0_588 = arith.constant 0 : index
    %c0_589 = arith.constant 0 : index
    %635 = vector.load %arg10[%c0_588, %c0_589] : memref<512x128xf32, #tpu.memory_space<vmem>>, vector<512x128xf32>
    %cst_590 = arith.constant dense<0.000000e+00> : vector<1x128xf32>
    %636 = tpu.matmul %634, %635, %cst_590 {dimension_numbers = #tpu.dot_dimension_numbers<[1], [0], [0], [1], [0, 0, 1, 1], [], []>} : vector<1x512xf32>, vector<512x128xf32>, vector<1x128xf32> -> vector<1x128xf32>
    %c0_591 = arith.constant 0 : index
    %c0_592 = arith.constant 0 : index
    %637 = vector.load %arg11[%c0_591, %c0_592] : memref<1x128xf32, #tpu.memory_space<vmem>>, vector<1x128xf32>
    %638 = arith.addf %636, %637 : vector<1x128xf32>
    %c0_593 = arith.constant 0 : index
    %c0_594 = arith.constant 0 : index
    %639 = vector.load %arg12[%c0_593, %c0_594] : memref<1x128xf32, #tpu.memory_space<vmem>>, vector<1x128xf32>
    tpu.vector_store %arg12[%c0_593, %c0_594], %638 {strides = array<i32>} : memref<1x128xf32, #tpu.memory_space<vmem>>, vector<1x128xf32>,
    return
  }
  func.func @transform_0(%arg0: i32) -> (i32, i32) {
    %c0_i32 = arith.constant 0 : i32
    %c0_i32_0 = arith.constant 0 : i32
    %c0_i32_1 = arith.constant 0 : i32
    return %c0_i32, %c0_i32_0 : i32, i32
  }
  func.func @transform_1(%arg0: i32) -> (i32, i32) {
    %c0_i32 = arith.constant 0 : i32
    %c0_i32_0 = arith.constant 0 : i32
    %c0_i32_1 = arith.constant 0 : i32
    return %c0_i32, %c0_i32_0 : i32, i32
  }
  func.func @transform_2(%arg0: i32) -> (i32, i32) {
    %c0_i32 = arith.constant 0 : i32
    %c0_i32_0 = arith.constant 0 : i32
    %c0_i32_1 = arith.constant 0 : i32
    return %c0_i32, %c0_i32_0 : i32, i32
  }
  func.func @transform_3(%arg0: i32) -> (i32, i32, i32) {
    %c0_i32 = arith.constant 0 : i32
    %c0_i32_0 = arith.constant 0 : i32
    %c0_i32_1 = arith.constant 0 : i32
    %c0_i32_2 = arith.constant 0 : i32
    return %c0_i32, %c0_i32_0, %c0_i32_1 : i32, i32, i32
  }
  func.func @transform_4(%arg0: i32) -> (i32, i32) {
    %c0_i32 = arith.constant 0 : i32
    %c0_i32_0 = arith.constant 0 : i32
    %c0_i32_1 = arith.constant 0 : i32
    return %c0_i32, %c0_i32_0 : i32, i32
  }
  func.func @transform_6(%arg0: i32) -> (i32, i32) {
    %c0_i32 = arith.constant 0 : i32
    %c0_i32_0 = arith.constant 0 : i32
    %c0_i32_1 = arith.constant 0 : i32
    return %c0_i32, %c0_i32_0 : i32, i32
  }
  func.func @transform_7(%arg0: i32) -> (i32, i32) {
    %c0_i32 = arith.constant 0 : i32
    %c0_i32_0 = arith.constant 0 : i32
    %c0_i32_1 = arith.constant 0 : i32
    return %c0_i32, %c0_i32_0 : i32, i32
  }
  func.func @transform_8(%arg0: i32) -> (i32, i32) {
    %c0_i32 = arith.constant 0 : i32
    %c0_i32_0 = arith.constant 0 : i32
    %c0_i32_1 = arith.constant 0 : i32
    return %c0_i32, %c0_i32_0 : i32, i32
  }
  func.func @transform_9(%arg0: i32) -> (i32, i32) {
    %c0_i32 = arith.constant 0 : i32
    %c0_i32_0 = arith.constant 0 : i32
    %c0_i32_1 = arith.constant 0 : i32
    return %c0_i32, %c0_i32_0 : i32, i32
  }
  func.func @transform_10(%arg0: i32) -> (i32, i32) {
    %c0_i32 = arith.constant 0 : i32
    %c0_i32_0 = arith.constant 0 : i32
    %c0_i32_1 = arith.constant 0 : i32
    return %c0_i32, %c0_i32_0 : i32, i32
  }
  func.func @transform_11(%arg0: i32) -> (i32, i32) {
    %c0_i32 = arith.constant 0 : i32
    %c0_i32_0 = arith.constant 0 : i32
    %c0_i32_1 = arith.constant 0 : i32
    return %c0_i32, %c0_i32_0 : i32, i32
  }
}

</mosaic_0001>

<llo_original>
// kernel: dqn2048_pallas.1
$region0: #{dqn2048_pallas.1}
  #allocation0 [shape = 'u32[]', space=smem, size = 0x4, offset = 0x4, fixed_abs, tag = 'smem constant byte address 0x4 - core index']
  #allocation1 [shape = 'u32[144,128]{1,0:T(1,128)}', space=vmem, size = 0x12000, scoped, tag = 'internal scratch']
  #allocation2 [shape = 'f32[6,6,1]{2,1,0:T(8,128)}', space=vmem, size = 0x6000, scoped, tag = 'scratch operand']
  #allocation3 [shape = 'f32[6,6,128]{2,1,0:T(8,128)}', space=vmem, size = 0x6000, scoped, tag = 'scratch operand']
  #allocation4 [shape = 'f32[16,128]{1,0:T(8,128)}', space=vmem, size = 0x2000, scoped, tag = 'scratch operand']
  #allocation5 [shape = 'f32[16,128,512]{2,1,0:T(8,128)}', space=vmem, size = 0x400000, scoped, tag = 'scratch operand']
  #allocation6 [shape = 's32[1]{0}', space=sflag, size = 0x4, scoped, tag = 'scratch operand']
  #allocation23 [shape = 's32[]', space=sflag, size = 0x4, offset = 0, fixed_abs, tag = 'sflag constant byte address 0x0 - dummy sync flag']
  #allocation24 [shape = 's32[]', space=sflag, size = 0x4, offset = 0, fixed_abs, tag = 'sflag constant byte address 0x0 - dummy sync flag']
  #allocation25 [shape = 'u32[]', space=smem, size = 0x4, offset = 0x44, fixed_abs, tag = 'smem constant byte address 0x44 - assertion arg 0']
  #allocation26 [shape = 'u32[]', space=smem, size = 0x4, offset = 0x48, fixed_abs, tag = 'smem constant byte address 0x48 - assertion arg 1']
  %s0 = inlined_call_operand.vmem [shape: f32[16,1], index: 0, kind: input, shape index: {}]
  %s1 = inlined_call_operand.hbm [shape: f32[9,128], index: 1, kind: input, shape index: {}]
  %s2 = inlined_call_operand.hbm [shape: f32[1,128], index: 2, kind: input, shape index: {}]
  %s3 = inlined_call_operand.hbm [shape: f32[9,128,128], index: 3, kind: input, shape index: {}]
  %s4 = inlined_call_operand.hbm [shape: f32[1,128], index: 4, kind: input, shape index: {}]
  %s5 = inlined_call_operand.hbm [shape: f32[16,128,512], index: 5, kind: input, shape index: {}]
  %s6 = inlined_call_operand.hbm [shape: f32[1,512], index: 6, kind: input, shape index: {}]
  %s7 = inlined_call_operand.hbm [shape: f32[512,512], index: 7, kind: input, shape index: {}]
  %s8 = inlined_call_operand.hbm [shape: f32[1,512], index: 8, kind: input, shape index: {}]
  %s9 = inlined_call_operand.hbm [shape: f32[512,128], index: 9, kind: input, shape index: {}]
  %s10 = inlined_call_operand.hbm [shape: f32[1,128], index: 10, kind: input, shape index: {}]
  %s11 = inlined_call_operand.hbm [shape: f32[1,128], index: 11, kind: output, shape index: {}]
  %s12 = sld [smem:[#allocation0]]
  $region90: #{dqn2048_pallas.1} parent=0
    _
  %s14 = ssub.s32 1, %s12
  %s15 = scalar_select 0, %s14, %s12
  $region1: #{dqn2048_pallas.1} parent=0
    #allocation7 [shape = 'u8[8192]{0}', space=vmem, size = 0x2000, scoped, tag = 'input window, operand 1, single buffered']
    #allocation8 [shape = 's32[1]{0}', space=sflag, size = 0x4, scoped, tag = 'scoped memory for dqn2048_pallas.1']
    #allocation9 [shape = 's32[1]{0}', space=sflag, size = 0x4, scoped, tag = 'scoped memory for dqn2048_pallas.1']
    #allocation10 [shape = 'u8[512]{0}', space=vmem, size = 0x400, scoped, tag = 'input window, operand 2, single buffered']
    #allocation11 [shape = 's32[1]{0}', space=sflag, size = 0x4, scoped, tag = 'scoped memory for dqn2048_pallas.1']
    #allocation12 [shape = 'u8[589824]{0}', space=vmem, size = 0x90000, scoped, tag = 'input window, operand 3, single buffered']
    #allocation13 [shape = 'u8[512]{0}', space=vmem, size = 0x400, scoped, tag = 'input window, operand 4, single buffered']
    #allocation14 [shape = 's32[1]{0}', space=sflag, size = 0x4, scoped, tag = 'scoped memory for dqn2048_pallas.1']
    #allocation15 [shape = 'u8[2048]{0}', space=vmem, size = 0x800, scoped, tag = 'input window, operand 6, single buffered']
    #allocation16 [shape = 'u8[1048576]{0}', space=vmem, size = 0x100000, scoped, tag = 'input window, operand 7, single buffered']
    #allocation17 [shape = 's32[1]{0}', space=sflag, size = 0x4, scoped, tag = 'scoped memory for dqn2048_pallas.1']
    #allocation18 [shape = 'u8[2048]{0}', space=vmem, size = 0x800, scoped, tag = 'input window, operand 8, single buffered']
    #allocation19 [shape = 'u8[262144]{0}', space=vmem, size = 0x40000, scoped, tag = 'input window, operand 9, single buffered']
    #allocation20 [shape = 's32[1]{0}', space=sflag, size = 0x4, scoped, tag = 'scoped memory for dqn2048_pallas.1']
    #allocation21 [shape = 'u8[512]{0}', space=vmem, size = 0x400, scoped, tag = 'input window, operand 10, single buffered']
    #allocation22 [shape = 'u8[512]{0}', space=vmem, size = 0x400, scoped, tag = 'output window, operand 0, single buffered']
    %16 = vsyncpa [#allocation8], 0
    %17 = vsyncpa [#allocation11], 0
    %18 = vsyncpa [#allocation14], 0
    %19 = vsyncpa [#allocation17], 0
    %20 = vsyncpa [#allocation20], 0
    %21 = vsyncpa [#allocation9], 0
    // Predicated region
    $region2: #{dqn2048_pallas.1} parent=1 // pred_check
      _
    $region3: #{dqn2048_pallas.1} parent=1 // pred_check_branch
      %23 = sbr.rel (0) target = $region5
    $region4: #{dqn2048_pallas.1} parent=1 // pred_region
      _
    $region5: #{dqn2048_pallas.1} parent=1 // pred_fallthru
      _
    // Predicated region
    $region6: #{dqn2048_pallas.1} parent=1 // pred_check
      _
    $region7: #{dqn2048_pallas.1} parent=1 // pred_check_branch
      %25 = sbr.rel (0) target = $region9
    $region8: #{dqn2048_pallas.1} parent=1 // pred_region
      %s27 = ssub.s32 256, 256
      %28 = vsyncadd [#allocation8], %s27
      %s29 = sshll.u32 [#allocation7], 4
      %s30 = int_to_ptr.vmem [resolvable:$true] %s29
      %35 = dma.hbm_to_vmem [thread:$0]  %s1, 256, %s30, [#allocation8], 128, 128, 8
    $region9: #{dqn2048_pallas.1} parent=1 // pred_fallthru
      _
    // Predicated region
    $region10: #{dqn2048_pallas.1} parent=1 // pred_check
      _
    $region11: #{dqn2048_pallas.1} parent=1 // pred_check_branch
      %37 = sbr.rel (0) target = $region13
    $region12: #{dqn2048_pallas.1} parent=1 // pred_region
      %s39 = ssub.s32 16, 16
      %40 = vsyncadd [#allocation11], %s39
      %s42 = sshll.u32 [#allocation10], 4
      %s43 = int_to_ptr.vmem [resolvable:$true] %s42
      %45 = dma.hbm_to_vmem [thread:$0]  %s2, 16, %s43, [#allocation11]
    $region13: #{dqn2048_pallas.1} parent=1 // pred_fallthru
      _
    // Predicated region
    $region14: #{dqn2048_pallas.1} parent=1 // pred_check
      _
    $region15: #{dqn2048_pallas.1} parent=1 // pred_check_branch
      %47 = sbr.rel (0) target = $region17
    $region16: #{dqn2048_pallas.1} parent=1 // pred_region
      %s49 = ssub.s32 18432, 18432
      %50 = vsyncadd [#allocation11], %s49
      %s51 = sshll.u32 [#allocation12], 4
      %s52 = int_to_ptr.vmem [resolvable:$true] %s51
      %57 = dma.hbm_to_vmem [thread:$0]  %s3, 18432, %s52, [#allocation11], 128, 128, 8
    $region17: #{dqn2048_pallas.1} parent=1 // pred_fallthru
      _
    // Predicated region
    $region18: #{dqn2048_pallas.1} parent=1 // pred_check
      _
    $region19: #{dqn2048_pallas.1} parent=1 // pred_check_branch
      %59 = sbr.rel (0) target = $region21
    $region20: #{dqn2048_pallas.1} parent=1 // pred_region
      %s61 = ssub.s32 16, 16
      %62 = vsyncadd [#allocation14], %s61
      %s64 = sshll.u32 [#allocation13], 4
      %s65 = int_to_ptr.vmem [resolvable:$true] %s64
      %67 = dma.hbm_to_vmem [thread:$0]  %s4, 16, %s65, [#allocation14]
    $region21: #{dqn2048_pallas.1} parent=1 // pred_fallthru
      _
    // Predicated region
    $region22: #{dqn2048_pallas.1} parent=1 // pred_check
      _
    $region23: #{dqn2048_pallas.1} parent=1 // pred_check_branch
      %69 = sbr.rel (0) target = $region25
    $region24: #{dqn2048_pallas.1} parent=1 // pred_region
      %s71 = ssub.s32 64, 64
      %72 = vsyncadd [#allocation14], %s71
      %s74 = sshll.u32 [#allocation15], 4
      %s75 = int_to_ptr.vmem [resolvable:$true] %s74
      %77 = dma.hbm_to_vmem [thread:$0]  %s6, 64, %s75, [#allocation14]
    $region25: #{dqn2048_pallas.1} parent=1 // pred_fallthru
      _
    // Predicated region
    $region26: #{dqn2048_pallas.1} parent=1 // pred_check
      _
    $region27: #{dqn2048_pallas.1} parent=1 // pred_check_branch
      %79 = sbr.rel (0) target = $region29
    $region28: #{dqn2048_pallas.1} parent=1 // pred_region
      %s81 = ssub.s32 32768, 32768
      %82 = vsyncadd [#allocation17], %s81
      %s83 = sshll.u32 [#allocation16], 4
      %s84 = int_to_ptr.vmem [resolvable:$true] %s83
      %89 = dma.hbm_to_vmem [thread:$0]  %s7, 32768, %s84, [#allocation17], 512, 512, 32
    $region29: #{dqn2048_pallas.1} parent=1 // pred_fallthru
      _
    // Predicated region
    $region30: #{dqn2048_pallas.1} parent=1 // pred_check
      _
    $region31: #{dqn2048_pallas.1} parent=1 // pred_check_branch
      %91 = sbr.rel (0) target = $region33
    $region32: #{dqn2048_pallas.1} parent=1 // pred_region
      %s93 = ssub.s32 64, 64
      %94 = vsyncadd [#allocation17], %s93
      %s96 = sshll.u32 [#allocation18], 4
      %s97 = int_to_ptr.vmem [resolvable:$true] %s96
      %99 = dma.hbm_to_vmem [thread:$0]  %s8, 64, %s97, [#allocation17]
    $region33: #{dqn2048_pallas.1} parent=1 // pred_fallthru
      _
    // Predicated region
    $region34: #{dqn2048_pallas.1} parent=1 // pred_check
      _
    $region35: #{dqn2048_pallas.1} parent=1 // pred_check_branch
      %101 = sbr.rel (0) target = $region37
    $region36: #{dqn2048_pallas.1} parent=1 // pred_region
      %s103 = ssub.s32 8192, 8192
      %104 = vsyncadd [#allocation20], %s103
      %s105 = sshll.u32 [#allocation19], 4
      %s106 = int_to_ptr.vmem [resolvable:$true] %s105
      %111 = dma.hbm_to_vmem [thread:$0]  %s9, 8192, %s106, [#allocation20], 128, 128, 8
    $region37: #{dqn2048_pallas.1} parent=1 // pred_fallthru
      _
    // Predicated region
    $region38: #{dqn2048_pallas.1} parent=1 // pred_check
      _
    $region39: #{dqn2048_pallas.1} parent=1 // pred_check_branch
      %113 = sbr.rel (0) target = $region41
    $region40: #{dqn2048_pallas.1} parent=1 // pred_region
      %s115 = ssub.s32 16, 16
      %116 = vsyncadd [#allocation20], %s115
      %s118 = sshll.u32 [#allocation21], 4
      %s119 = int_to_ptr.vmem [resolvable:$true] %s118
      %121 = dma.hbm_to_vmem [thread:$0]  %s10, 16, %s119, [#allocation20]
    $region41: #{dqn2048_pallas.1} parent=1 // pred_fallthru
      _
    // Predicated region
    $region42: #{dqn2048_pallas.1} parent=1 // pred_check
      _
    $region43: #{dqn2048_pallas.1} parent=1 // pred_check_branch
      %123 = sbr.rel (0) target = $region45
    $region44: #{dqn2048_pallas.1} parent=1 // pred_region
      %124 = dma.done [#allocation8], 256
    $region45: #{dqn2048_pallas.1} parent=1 // pred_fallthru
      _
    // Predicated region
    $region46: #{dqn2048_pallas.1} parent=1 // pred_check
      _
    $region47: #{dqn2048_pallas.1} parent=1 // pred_check_branch
      %126 = sbr.rel (0) target = $region49
    $region48: #{dqn2048_pallas.1} parent=1 // pred_region
      %127 = dma.done [#allocation11], 16
    $region49: #{dqn2048_pallas.1} parent=1 // pred_fallthru
      _
    // Predicated region
    $region50: #{dqn2048_pallas.1} parent=1 // pred_check
      _
    $region51: #{dqn2048_pallas.1} parent=1 // pred_check_branch
      %129 = sbr.rel (0) target = $region53
    $region52: #{dqn2048_pallas.1} parent=1 // pred_region
      %130 = dma.done [#allocation11], 18432
    $region53: #{dqn2048_pallas.1} parent=1 // pred_fallthru
      _
    // Predicated region
    $region54: #{dqn2048_pallas.1} parent=1 // pred_check
      _
    $region55: #{dqn2048_pallas.1} parent=1 // pred_check_branch
      %132 = sbr.rel (0) target = $region57
    $region56: #{dqn2048_pallas.1} parent=1 // pred_region
      %133 = dma.done [#allocation14], 16
    $region57: #{dqn2048_pallas.1} parent=1 // pred_fallthru
      _
    // Predicated region
    $region58: #{dqn2048_pallas.1} parent=1 // pred_check
      _
    $region59: #{dqn2048_pallas.1} parent=1 // pred_check_branch
      %135 = sbr.rel (0) target = $region61
    $region60: #{dqn2048_pallas.1} parent=1 // pred_region
      %136 = dma.done [#allocation14], 64
    $region61: #{dqn2048_pallas.1} parent=1 // pred_fallthru
      _
    // Predicated region
    $region62: #{dqn2048_pallas.1} parent=1 // pred_check
      _
    $region63: #{dqn2048_pallas.1} parent=1 // pred_check_branch
      %138 = sbr.rel (0) target = $region65
    $region64: #{dqn2048_pallas.1} parent=1 // pred_region
      %139 = dma.done [#allocation17], 32768
    $region65: #{dqn2048_pallas.1} parent=1 // pred_fallthru
      _
    // Predicated region
    $region66: #{dqn2048_pallas.1} parent=1 // pred_check
      _
    $region67: #{dqn2048_pallas.1} parent=1 // pred_check_branch
      %141 = sbr.rel (0) target = $region69
    $region68: #{dqn2048_pallas.1} parent=1 // pred_region
      %142 = dma.done [#allocation17], 64
    $region69: #{dqn2048_pallas.1} parent=1 // pred_fallthru
      _
    // Predicated region
    $region70: #{dqn2048_pallas.1} parent=1 // pred_check
      _
    $region71: #{dqn2048_pallas.1} parent=1 // pred_check_branch
      %144 = sbr.rel (0) target = $region73
    $region72: #{dqn2048_pallas.1} parent=1 // pred_region
      %145 = dma.done [#allocation20], 8192
    $region73: #{dqn2048_pallas.1} parent=1 // pred_fallthru
      _
    // Predicated region
    $region74: #{dqn2048_pallas.1} parent=1 // pred_check
      _
    $region75: #{dqn2048_pallas.1} parent=1 // pred_check_branch
      %147 = sbr.rel (0) target = $region77
    $region76: #{dqn2048_pallas.1} parent=1 // pred_region
      %148 = dma.done [#allocation20], 16
    $region77: #{dqn2048_pallas.1} parent=1 // pred_fallthru
      _
    // Predicated region
    $region78: #{dqn2048_pallas.1} parent=1 // pred_check
      _
    $region79: #{dqn2048_pallas.1} parent=1 // pred_check_branch
      %150 = sbr.rel target = $region81
    $region80: #{dqn2048_pallas.1} parent=1 // pred_region
      %151 = sst [smem:[#allocation25]] [#allocation24]
      %152 = sst [smem:[#allocation26]] [#allocation23]
    $region81: #{dqn2048_pallas.1} parent=1 // pred_fallthru
      _
    %154 = shalt.err (0)
    %s156 = sshll.u32 [#allocation5], 4
    %s157 = int_to_ptr.vmem [resolvable:$true] %s156
    %159 = dma.hbm_to_vmem [thread:$0]  %s5, 131072, %s157, [#allocation6]
    %vm160 = vcmask 5120
    %161 = vst.msk [vmem:[#allocation2] sm:$0x3f] %vm160, 0.0
    %162 = vst.msk [vmem:[#allocation2 + $0x8] sm:$0x3f] %vm160, 0.0
    %163 = vst.msk [vmem:[#allocation2 + $0x10] sm:$0x3f] %vm160, 0.0
    %164 = vst.msk [vmem:[#allocation2 + $0x18] sm:$0x3f] %vm160, 0.0
    %165 = vst.msk [vmem:[#allocation2 + $0x20] sm:$0x3f] %vm160, 0.0
    %166 = vst.msk [vmem:[#allocation2 + $0x28] sm:$0x3f] %vm160, 0.0
    %v167 = vld [vmem:[%s0] sm:$0xf]
    %s168 = scalar_lea.vmem [#allocation2], 8
    %vm169 = vcmask 3072
    %170 = vst.msk [vmem:[%s168 + $0x1] sm:$0xf] %vm169, %v167
    %v171 = vld [vmem:[%s0 + $0x4] sm:$0xf]
    %s172 = scalar_lea.vmem [#allocation2], 16
    %173 = vst.msk [vmem:[%s172 + $0x1] sm:$0xf] %vm169, %v171
    %v174 = vld [vmem:[%s0 + $0x8] sm:$0xf]
    %s175 = scalar_lea.vmem [#allocation2], 24
    %176 = vst.msk [vmem:[%s175 + $0x1] sm:$0xf] %vm169, %v174
    %v177 = vld [vmem:[%s0 + $0xc] sm:$0xf]
    %s178 = scalar_lea.vmem [#allocation2], 32
    %179 = vst.msk [vmem:[%s178 + $0x1] sm:$0xf] %vm169, %v177
    %180 = vst [vmem:[#allocation3] sm:$0x3f] 0.0
    %181 = vst [vmem:[#allocation3 + $0x8] sm:$0x3f] 0.0
    %182 = vst [vmem:[#allocation3 + $0x10] sm:$0x3f] 0.0
    %183 = vst [vmem:[#allocation3 + $0x18] sm:$0x3f] 0.0
    %184 = vst [vmem:[#allocation3 + $0x20] sm:$0x3f] 0.0
    %185 = vst [vmem:[#allocation3 + $0x28] sm:$0x3f] 0.0
    %v186 = vld [vmem:[#allocation10] sm:$0x1]
    %v187 = vld [vmem:[#allocation2] sm:$0xf]
    %v188 = vld [vmem:[#allocation7] sm:$0x1]
    %190 = vset.pattern.permute.xlu0 0
    %191 = vperm.xlu0 %190, %v187
    %v192 = vpop.permute.xlu0 %191
    %v194 = vlaneseq
    %v195 = vshrl.u32 %v194, 7
    %v196 = vsub.s32 0, %v195
    %v197 = vrot.slane %v188, %v196
    %v198 = vmul.f32 %v192, %v197
    %v199 = vadd.f32 %v198, 0.0
    %v200 = vld [vmem:[#allocation2 + $0x1] sm:$0xf]
    %v201 = vld [vmem:[#allocation7 + $0x1] sm:$0x1]
    %203 = vset.pattern.permute.xlu0 0
    %204 = vperm.xlu0 %203, %v200
    %v205 = vpop.permute.xlu0 %204
    %v207 = vlaneseq
    %v208 = vshrl.u32 %v207, 7
    %v209 = vsub.s32 0, %v208
    %v210 = vrot.slane %v201, %v209
    %v211 = vmul.f32 %v205, %v210
    %v212 = vadd.f32 %v199, %v211
    %v213 = vld [vmem:[#allocation2 + $0x2] sm:$0xf]
    %v214 = vld [vmem:[#allocation7 + $0x2] sm:$0x1]
    %216 = vset.pattern.permute.xlu0 0
    %217 = vperm.xlu0 %216, %v213
    %v218 = vpop.permute.xlu0 %217
    %v220 = vlaneseq
    %v221 = vshrl.u32 %v220, 7
    %v222 = vsub.s32 0, %v221
    %v223 = vrot.slane %v214, %v222
    %v224 = vmul.f32 %v218, %v223
    %v225 = vadd.f32 %v212, %v224
    %v226 = vld [vmem:[%s168] sm:$0xf]
    %v227 = vld [vmem:[#allocation7 + $0x3] sm:$0x1]
    %229 = vset.pattern.permute.xlu0 0
    %230 = vperm.xlu0 %229, %v226
    %v231 = vpop.permute.xlu0 %230
    %v233 = vlaneseq
    %v234 = vshrl.u32 %v233, 7
    %v235 = vsub.s32 0, %v234
    %v236 = vrot.slane %v227, %v235
    %v237 = vmul.f32 %v231, %v236
    %v238 = vadd.f32 %v225, %v237
    %v239 = vld [vmem:[%s168 + $0x1] sm:$0xf]
    %v240 = vld [vmem:[#allocation7 + $0x4] sm:$0x1]
    %242 = vset.pattern.permute.xlu0 0
    %243 = vperm.xlu0 %242, %v239
    %v244 = vpop.permute.xlu0 %243
    %v246 = vlaneseq
    %v247 = vshrl.u32 %v246, 7
    %v248 = vsub.s32 0, %v247
    %v249 = vrot.slane %v240, %v248
    %v250 = vmul.f32 %v244, %v249
    %v251 = vadd.f32 %v238, %v250
    %v252 = vld [vmem:[%s168 + $0x2] sm:$0xf]
    %v253 = vld [vmem:[#allocation7 + $0x5] sm:$0x1]
    %255 = vset.pattern.permute.xlu0 0
    %256 = vperm.xlu0 %255, %v252
    %v257 = vpop.permute.xlu0 %256
    %v259 = vlaneseq
    %v260 = vshrl.u32 %v259, 7
    %v261 = vsub.s32 0, %v260
    %v262 = vrot.slane %v253, %v261
    %v263 = vmul.f32 %v257, %v262
    %v264 = vadd.f32 %v251, %v263
    %v265 = vld [vmem:[%s172] sm:$0xf]
    %v266 = vld [vmem:[#allocation7 + $0x6] sm:$0x1]
    %268 = vset.pattern.permute.xlu0 0
    %269 = vperm.xlu0 %268, %v265
    %v270 = vpop.permute.xlu0 %269
    %v272 = vlaneseq
    %v273 = vshrl.u32 %v272, 7
    %v274 = vsub.s32 0, %v273
    %v275 = vrot.slane %v266, %v274
    %v276 = vmul.f32 %v270, %v275
    %v277 = vadd.f32 %v264, %v276
    %v278 = vld [vmem:[%s172 + $0x1] sm:$0xf]
    %v279 = vld [vmem:[#allocation7 + $0x7] sm:$0x1]
    %281 = vset.pattern.permute.xlu0 0
    %282 = vperm.xlu0 %281, %v278
    %v283 = vpop.permute.xlu0 %282
    %v285 = vlaneseq
    %v286 = vshrl.u32 %v285, 7
    %v287 = vsub.s32 0, %v286
    %v288 = vrot.slane %v279, %v287
    %v289 = vmul.f32 %v283, %v288
    %v290 = vadd.f32 %v277, %v289
    %v291 = vld [vmem:[%s172 + $0x2] sm:$0xf]
    %v292 = vld [vmem:[#allocation7 + $0x8] sm:$0x1]
    %294 = vset.pattern.permute.xlu0 0
    %295 = vperm.xlu0 %294, %v291
    %v296 = vpop.permute.xlu0 %295
    %v298 = vlaneseq
    %v299 = vshrl.u32 %v298, 7
    %v300 = vsub.s32 0, %v299
    %v301 = vrot.slane %v292, %v300
    %v302 = vmul.f32 %v296, %v301
    %v303 = vadd.f32 %v290, %v302
    %v305 = vlaneseq
    %v306 = vshrl.u32 %v305, 7
    %v307 = vsub.s32 0, %v306
    %v308 = vrot.slane %v186, %v307
    %v310 = vadd.f32 %v303, %v308
    %v311 = vmax.f32 %v310, 0.0
    %s312 = scalar_lea.vmem [#allocation3], 8
    %313 = vst [vmem:[%s312 + $0x1] sm:$0xf] %v311
    %v314 = vld [vmem:[%s168] sm:$0xf]
    %v315 = vld [vmem:[#allocation7] sm:$0x1]
    %317 = vset.pattern.permute.xlu0 0
    %318 = vperm.xlu0 %317, %v314
    %v319 = vpop.permute.xlu0 %318
    %v321 = vlaneseq
    %v322 = vshrl.u32 %v321, 7
    %v323 = vsub.s32 0, %v322
    %v324 = vrot.slane %v315, %v323
    %v325 = vmul.f32 %v319, %v324
    %v326 = vadd.f32 %v325, 0.0
    %v327 = vld [vmem:[%s168 + $0x1] sm:$0xf]
    %v328 = vld [vmem:[#allocation7 + $0x1] sm:$0x1]
    %330 = vset.pattern.permute.xlu0 0
    %331 = vperm.xlu0 %330, %v327
    %v332 = vpop.permute.xlu0 %331
    %v334 = vlaneseq
    %v335 = vshrl.u32 %v334, 7
    %v336 = vsub.s32 0, %v335
    %v337 = vrot.slane %v328, %v336
    %v338 = vmul.f32 %v332, %v337
    %v339 = vadd.f32 %v326, %v338
    %v340 = vld [vmem:[%s168 + $0x2] sm:$0xf]
    %v341 = vld [vmem:[#allocation7 + $0x2] sm:$0x1]
    %343 = vset.pattern.permute.xlu0 0
    %344 = vperm.xlu0 %343, %v340
    %v345 = vpop.permute.xlu0 %344
    %v347 = vlaneseq
    %v348 = vshrl.u32 %v347, 7
    %v349 = vsub.s32 0, %v348
    %v350 = vrot.slane %v341, %v349
    %v351 = vmul.f32 %v345, %v350
    %v352 = vadd.f32 %v339, %v351
    %v353 = vld [vmem:[%s172] sm:$0xf]
    %v354 = vld [vmem:[#allocation7 + $0x3] sm:$0x1]
    %356 = vset.pattern.permute.xlu0 0
    %357 = vperm.xlu0 %356, %v353
    %v358 = vpop.permute.xlu0 %357
    %v360 = vlaneseq
    %v361 = vshrl.u32 %v360, 7
    %v362 = vsub.s32 0, %v361
    %v363 = vrot.slane %v354, %v362
    %v364 = vmul.f32 %v358, %v363
    %v365 = vadd.f32 %v352, %v364
    %v366 = vld [vmem:[%s172 + $0x1] sm:$0xf]
    %v367 = vld [vmem:[#allocation7 + $0x4] sm:$0x1]
    %369 = vset.pattern.permute.xlu0 0
    %370 = vperm.xlu0 %369, %v366
    %v371 = vpop.permute.xlu0 %370
    %v373 = vlaneseq
    %v374 = vshrl.u32 %v373, 7
    %v375 = vsub.s32 0, %v374
    %v376 = vrot.slane %v367, %v375
    %v377 = vmul.f32 %v371, %v376
    %v378 = vadd.f32 %v365, %v377
    %v379 = vld [vmem:[%s172 + $0x2] sm:$0xf]
    %v380 = vld [vmem:[#allocation7 + $0x5] sm:$0x1]
    %382 = vset.pattern.permute.xlu0 0
    %383 = vperm.xlu0 %382, %v379
    %v384 = vpop.permute.xlu0 %383
    %v386 = vlaneseq
    %v387 = vshrl.u32 %v386, 7
    %v388 = vsub.s32 0, %v387
    %v389 = vrot.slane %v380, %v388
    %v390 = vmul.f32 %v384, %v389
    %v391 = vadd.f32 %v378, %v390
    %v392 = vld [vmem:[%s175] sm:$0xf]
    %v393 = vld [vmem:[#allocation7 + $0x6] sm:$0x1]
    %395 = vset.pattern.permute.xlu0 0
    %396 = vperm.xlu0 %395, %v392
    %v397 = vpop.permute.xlu0 %396
    %v399 = vlaneseq
    %v400 = vshrl.u32 %v399, 7
    %v401 = vsub.s32 0, %v400
    %v402 = vrot.slane %v393, %v401
    %v403 = vmul.f32 %v397, %v402
    %v404 = vadd.f32 %v391, %v403
    %v405 = vld [vmem:[%s175 + $0x1] sm:$0xf]
    %v406 = vld [vmem:[#allocation7 + $0x7] sm:$0x1]
    %408 = vset.pattern.permute.xlu0 0
    %409 = vperm.xlu0 %408, %v405
    %v410 = vpop.permute.xlu0 %409
    %v412 = vlaneseq
    %v413 = vshrl.u32 %v412, 7
    %v414 = vsub.s32 0, %v413
    %v415 = vrot.slane %v406, %v414
    %v416 = vmul.f32 %v410, %v415
    %v417 = vadd.f32 %v404, %v416
    %v418 = vld [vmem:[%s175 + $0x2] sm:$0xf]
    %v419 = vld [vmem:[#allocation7 + $0x8] sm:$0x1]
    %421 = vset.pattern.permute.xlu0 0
    %422 = vperm.xlu0 %421, %v418
    %v423 = vpop.permute.xlu0 %422
    %v425 = vlaneseq
    %v426 = vshrl.u32 %v425, 7
    %v427 = vsub.s32 0, %v426
    %v428 = vrot.slane %v419, %v427
    %v429 = vmul.f32 %v423, %v428
    %v430 = vadd.f32 %v417, %v429
    %v431 = vadd.f32 %v430, %v308
    %v432 = vmax.f32 %v431, 0.0
    %s433 = scalar_lea.vmem [#allocation3], 16
    %434 = vst [vmem:[%s433 + $0x1] sm:$0xf] %v432
    %v435 = vld [vmem:[%s172] sm:$0xf]
    %v436 = vld [vmem:[#allocation7] sm:$0x1]
    %438 = vset.pattern.permute.xlu0 0
    %439 = vperm.xlu0 %438, %v435
    %v440 = vpop.permute.xlu0 %439
    %v442 = vlaneseq
    %v443 = vshrl.u32 %v442, 7
    %v444 = vsub.s32 0, %v443
    %v445 = vrot.slane %v436, %v444
    %v446 = vmul.f32 %v440, %v445
    %v447 = vadd.f32 %v446, 0.0
    %v448 = vld [vmem:[%s172 + $0x1] sm:$0xf]
    %v449 = vld [vmem:[#allocation7 + $0x1] sm:$0x1]
    %451 = vset.pattern.permute.xlu0 0
    %452 = vperm.xlu0 %451, %v448
    %v453 = vpop.permute.xlu0 %452
    %v455 = vlaneseq
    %v456 = vshrl.u32 %v455, 7
    %v457 = vsub.s32 0, %v456
    %v458 = vrot.slane %v449, %v457
    %v459 = vmul.f32 %v453, %v458
    %v460 = vadd.f32 %v447, %v459
    %v461 = vld [vmem:[%s172 + $0x2] sm:$0xf]
    %v462 = vld [vmem:[#allocation7 + $0x2] sm:$0x1]
    %464 = vset.pattern.permute.xlu0 0
    %465 = vperm.xlu0 %464, %v461
    %v466 = vpop.permute.xlu0 %465
    %v468 = vlaneseq
    %v469 = vshrl.u32 %v468, 7
    %v470 = vsub.s32 0, %v469
    %v471 = vrot.slane %v462, %v470
    %v472 = vmul.f32 %v466, %v471
    %v473 = vadd.f32 %v460, %v472
    %v474 = vld [vmem:[%s175] sm:$0xf]
    %v475 = vld [vmem:[#allocation7 + $0x3] sm:$0x1]
    %477 = vset.pattern.permute.xlu0 0
    %478 = vperm.xlu0 %477, %v474
    %v479 = vpop.permute.xlu0 %478
    %v481 = vlaneseq
    %v482 = vshrl.u32 %v481, 7
    %v483 = vsub.s32 0, %v482
    %v484 = vrot.slane %v475, %v483
    %v485 = vmul.f32 %v479, %v484
    %v486 = vadd.f32 %v473, %v485
    %v487 = vld [vmem:[%s175 + $0x1] sm:$0xf]
    %v488 = vld [vmem:[#allocation7 + $0x4] sm:$0x1]
    %490 = vset.pattern.permute.xlu0 0
    %491 = vperm.xlu0 %490, %v487
    %v492 = vpop.permute.xlu0 %491
    %v494 = vlaneseq
    %v495 = vshrl.u32 %v494, 7
    %v496 = vsub.s32 0, %v495
    %v497 = vrot.slane %v488, %v496
    %v498 = vmul.f32 %v492, %v497
    %v499 = vadd.f32 %v486, %v498
    %v500 = vld [vmem:[%s175 + $0x2] sm:$0xf]
    %v501 = vld [vmem:[#allocation7 + $0x5] sm:$0x1]
    %503 = vset.pattern.permute.xlu0 0
    %504 = vperm.xlu0 %503, %v500
    %v505 = vpop.permute.xlu0 %504
    %v507 = vlaneseq
    %v508 = vshrl.u32 %v507, 7
    %v509 = vsub.s32 0, %v508
    %v510 = vrot.slane %v501, %v509
    %v511 = vmul.f32 %v505, %v510
    %v512 = vadd.f32 %v499, %v511
    %v513 = vld [vmem:[%s178] sm:$0xf]
    %v514 = vld [vmem:[#allocation7 + $0x6] sm:$0x1]
    %516 = vset.pattern.permute.xlu0 0
    %517 = vperm.xlu0 %516, %v513
    %v518 = vpop.permute.xlu0 %517
    %v520 = vlaneseq
    %v521 = vshrl.u32 %v520, 7
    %v522 = vsub.s32 0, %v521
    %v523 = vrot.slane %v514, %v522
    %v524 = vmul.f32 %v518, %v523
    %v525 = vadd.f32 %v512, %v524
    %v526 = vld [vmem:[%s178 + $0x1] sm:$0xf]
    %v527 = vld [vmem:[#allocation7 + $0x7] sm:$0x1]
    %529 = vset.pattern.permute.xlu0 0
    %530 = vperm.xlu0 %529, %v526
    %v531 = vpop.permute.xlu0 %530
    %v533 = vlaneseq
    %v534 = vshrl.u32 %v533, 7
    %v535 = vsub.s32 0, %v534
    %v536 = vrot.slane %v527, %v535
    %v537 = vmul.f32 %v531, %v536
    %v538 = vadd.f32 %v525, %v537
    %v539 = vld [vmem:[%s178 + $0x2] sm:$0xf]
    %v540 = vld [vmem:[#allocation7 + $0x8] sm:$0x1]
    %542 = vset.pattern.permute.xlu0 0
    %543 = vperm.xlu0 %542, %v539
    %v544 = vpop.permute.xlu0 %543
    %v546 = vlaneseq
    %v547 = vshrl.u32 %v546, 7
    %v548 = vsub.s32 0, %v547
    %v549 = vrot.slane %v540, %v548
    %v550 = vmul.f32 %v544, %v549
    %v551 = vadd.f32 %v538, %v550
    %v552 = vadd.f32 %v551, %v308
    %v553 = vmax.f32 %v552, 0.0
    %s554 = scalar_lea.vmem [#allocation3], 24
    %555 = vst [vmem:[%s554 + $0x1] sm:$0xf] %v553
    %v556 = vld [vmem:[%s175] sm:$0xf]
    %v557 = vld [vmem:[#allocation7] sm:$0x1]
    %559 = vset.pattern.permute.xlu0 0
    %560 = vperm.xlu0 %559, %v556
    %v561 = vpop.permute.xlu0 %560
    %v563 = vlaneseq
    %v564 = vshrl.u32 %v563, 7
    %v565 = vsub.s32 0, %v564
    %v566 = vrot.slane %v557, %v565
    %v567 = vmul.f32 %v561, %v566
    %v568 = vadd.f32 %v567, 0.0
    %v569 = vld [vmem:[%s175 + $0x1] sm:$0xf]
    %v570 = vld [vmem:[#allocation7 + $0x1] sm:$0x1]
    %572 = vset.pattern.permute.xlu0 0
    %573 = vperm.xlu0 %572, %v569
    %v574 = vpop.permute.xlu0 %573
    %v576 = vlaneseq
    %v577 = vshrl.u32 %v576, 7
    %v578 = vsub.s32 0, %v577
    %v579 = vrot.slane %v570, %v578
    %v580 = vmul.f32 %v574, %v579
    %v581 = vadd.f32 %v568, %v580
    %v582 = vld [vmem:[%s175 + $0x2] sm:$0xf]
    %v583 = vld [vmem:[#allocation7 + $0x2] sm:$0x1]
    %585 = vset.pattern.permute.xlu0 0
    %586 = vperm.xlu0 %585, %v582
    %v587 = vpop.permute.xlu0 %586
    %v589 = vlaneseq
    %v590 = vshrl.u32 %v589, 7
    %v591 = vsub.s32 0, %v590
    %v592 = vrot.slane %v583, %v591
    %v593 = vmul.f32 %v587, %v592
    %v594 = vadd.f32 %v581, %v593
    %v595 = vld [vmem:[%s178] sm:$0xf]
    %v596 = vld [vmem:[#allocation7 + $0x3] sm:$0x1]
    %598 = vset.pattern.permute.xlu0 0
    %599 = vperm.xlu0 %598, %v595
    %v600 = vpop.permute.xlu0 %599
    %v602 = vlaneseq
    %v603 = vshrl.u32 %v602, 7
    %v604 = vsub.s32 0, %v603
    %v605 = vrot.slane %v596, %v604
    %v606 = vmul.f32 %v600, %v605
    %v607 = vadd.f32 %v594, %v606
    %v608 = vld [vmem:[%s178 + $0x1] sm:$0xf]
    %v609 = vld [vmem:[#allocation7 + $0x4] sm:$0x1]
    %611 = vset.pattern.permute.xlu0 0
    %612 = vperm.xlu0 %611, %v608
    %v613 = vpop.permute.xlu0 %612
    %v615 = vlaneseq
    %v616 = vshrl.u32 %v615, 7
    %v617 = vsub.s32 0, %v616
    %v618 = vrot.slane %v609, %v617
    %v619 = vmul.f32 %v613, %v618
    %v620 = vadd.f32 %v607, %v619
    %v621 = vld [vmem:[%s178 + $0x2] sm:$0xf]
    %v622 = vld [vmem:[#allocation7 + $0x5] sm:$0x1]
    %624 = vset.pattern.permute.xlu0 0
    %625 = vperm.xlu0 %624, %v621
    %v626 = vpop.permute.xlu0 %625
    %v628 = vlaneseq
    %v629 = vshrl.u32 %v628, 7
    %v630 = vsub.s32 0, %v629
    %v631 = vrot.slane %v622, %v630
    %v632 = vmul.f32 %v626, %v631
    %v633 = vadd.f32 %v620, %v632
    %s634 = scalar_lea.vmem [#allocation2], 40
    %v635 = vld [vmem:[%s634] sm:$0xf]
    %v636 = vld [vmem:[#allocation7 + $0x6] sm:$0x1]
    %638 = vset.pattern.permute.xlu0 0
    %639 = vperm.xlu0 %638, %v635
    %v640 = vpop.permute.xlu0 %639
    %v642 = vlaneseq
    %v643 = vshrl.u32 %v642, 7
    %v644 = vsub.s32 0, %v643
    %v645 = vrot.slane %v636, %v644
    %v646 = vmul.f32 %v640, %v645
    %v647 = vadd.f32 %v633, %v646
    %v648 = vld [vmem:[%s634 + $0x1] sm:$0xf]
    %v649 = vld [vmem:[#allocation7 + $0x7] sm:$0x1]
    %651 = vset.pattern.permute.xlu0 0
    %652 = vperm.xlu0 %651, %v648
    %v653 = vpop.permute.xlu0 %652
    %v655 = vlaneseq
    %v656 = vshrl.u32 %v655, 7
    %v657 = vsub.s32 0, %v656
    %v658 = vrot.slane %v649, %v657
    %v659 = vmul.f32 %v653, %v658
    %v660 = vadd.f32 %v647, %v659
    %v661 = vld [vmem:[%s634 + $0x2] sm:$0xf]
    %v662 = vld [vmem:[#allocation7 + $0x8] sm:$0x1]
    %664 = vset.pattern.permute.xlu0 0
    %665 = vperm.xlu0 %664, %v661
    %v666 = vpop.permute.xlu0 %665
    %v668 = vlaneseq
    %v669 = vshrl.u32 %v668, 7
    %v670 = vsub.s32 0, %v669
    %v671 = vrot.slane %v662, %v670
    %v672 = vmul.f32 %v666, %v671
    %v673 = vadd.f32 %v660, %v672
    %v674 = vadd.f32 %v673, %v308
    %v675 = vmax.f32 %v674, 0.0
    %s676 = scalar_lea.vmem [#allocation3], 32
    %677 = vst [vmem:[%s676 + $0x1] sm:$0xf] %v675
    %v678 = vld [vmem:[#allocation13] sm:$0x1]
    %v679 = vld [vmem:[#allocation3] sm:$0xf]
    %v680 = vld [vmem:[#allocation12] sm:$0xff]
    %v681 = vld [vmem:[#allocation12 + $0x8] sm:$0xff]
    %v682 = vld [vmem:[#allocation12 + $0x10] sm:$0xff]
    %v683 = vld [vmem:[#allocation12 + $0x18] sm:$0xff]
    %v684 = vld [vmem:[#allocation12 + $0x20] sm:$0xff]
    %v685 = vld [vmem:[#allocation12 + $0x28] sm:$0xff]
    %v686 = vld [vmem:[#allocation12 + $0x30] sm:$0xff]
    %v687 = vld [vmem:[#allocation12 + $0x38] sm:$0xff]
    %v688 = vld [vmem:[#allocation12 + $0x40] sm:$0xff]
    %v689 = vld [vmem:[#allocation12 + $0x48] sm:$0xff]
    %v690 = vld [vmem:[#allocation12 + $0x50] sm:$0xff]
    %v691 = vld [vmem:[#allocation12 + $0x58] sm:$0xff]
    %v692 = vld [vmem:[#allocation12 + $0x60] sm:$0xff]
    %v693 = vld [vmem:[#allocation12 + $0x68] sm:$0xff]
    %v694 = vld [vmem:[#allocation12 + $0x70] sm:$0xff]
    %v695 = vld [vmem:[#allocation12 + $0x78] sm:$0xff]
    %v696 = vld [vmem:[#allocation3 + $0x1] sm:$0xf]
    %s697 = scalar_lea.vmem [#allocation12], 128
    %v698 = vld [vmem:[%s697] sm:$0xff]
    %v699 = vld [vmem:[%s697 + $0x8] sm:$0xff]
    %v700 = vld [vmem:[%s697 + $0x10] sm:$0xff]
    %v701 = vld [vmem:[%s697 + $0x18] sm:$0xff]
    %v702 = vld [vmem:[%s697 + $0x20] sm:$0xff]
    %v703 = vld [vmem:[%s697 + $0x28] sm:$0xff]
    %v704 = vld [vmem:[%s697 + $0x30] sm:$0xff]
    %v705 = vld [vmem:[%s697 + $0x38] sm:$0xff]
    %v706 = vld [vmem:[%s697 + $0x40] sm:$0xff]
    %v707 = vld [vmem:[%s697 + $0x48] sm:$0xff]
    %v708 = vld [vmem:[%s697 + $0x50] sm:$0xff]
    %v709 = vld [vmem:[%s697 + $0x58] sm:$0xff]
    %v710 = vld [vmem:[%s697 + $0x60] sm:$0xff]
    %v711 = vld [vmem:[%s697 + $0x68] sm:$0xff]
    %v712 = vld [vmem:[%s697 + $0x70] sm:$0xff]
    %v713 = vld [vmem:[%s697 + $0x78] sm:$0xff]
    %714 = vmatprep.subr.mxu0 0.0
    %715 = vmatpush1.msra.mxu0 %v713
    %716 = vmatprep.subr.mxu0 0.0
    %717 = vmatpush1.msra.mxu0 %v712
    %718 = vmatprep.subr.mxu0 0.0
    %719 = vmatpush1.msra.mxu0 %v711
    %720 = vmatprep.subr.mxu0 0.0
    %721 = vmatpush1.msra.mxu0 %v710
    %722 = vmatprep.subr.mxu0 0.0
    %723 = vmatpush1.msra.mxu0 %v709
    %724 = vmatprep.subr.mxu0 0.0
    %725 = vmatpush1.msra.mxu0 %v708
    %726 = vmatprep.subr.mxu0 0.0
    %727 = vmatpush1.msra.mxu0 %v707
    %728 = vmatprep.subr.mxu0 0.0
    %729 = vmatpush1.msra.mxu0 %v706
    %730 = vmatprep.subr.mxu0 0.0
    %731 = vmatpush1.msra.mxu0 %v705
    %732 = vmatprep.subr.mxu0 0.0
    %733 = vmatpush1.msra.mxu0 %v704
    %734 = vmatprep.subr.mxu0 0.0
    %735 = vmatpush1.msra.mxu0 %v703
    %736 = vmatprep.subr.mxu0 0.0
    %737 = vmatpush1.msra.mxu0 %v702
    %738 = vmatprep.subr.mxu0 0.0
    %739 = vmatpush1.msra.mxu0 %v701
    %740 = vmatprep.subr.mxu0 0.0
    %741 = vmatpush1.msra.mxu0 %v700
    %742 = vmatprep.subr.mxu0 0.0
    %743 = vmatpush1.msra.mxu0 %v699
    %744 = vmatprep.subr.mxu0 0.0
    %745 = vmatpush1.msra.mxu0 %v698
    %746 = vmatprep.subr.mxu0 0.0
    %747 = vmatpush2.msra.mxu0 0.0
    %748 = vmatprep.subr.mxu0 0.0
    %749 = vmatpush2.msra.mxu0 0.0
    %750 = vmatprep.subr.mxu0 0.0
    %751 = vmatpush2.msra.mxu0 0.0
    %752 = vmatprep.subr.mxu0 0.0
    %753 = vmatpush2.msra.mxu0 0.0
    %754 = vmatprep.subr.mxu0 0.0
    %755 = vmatpush2.msra.mxu0 0.0
    %756 = vmatprep.subr.mxu0 0.0
    %757 = vmatpush2.msra.mxu0 0.0
    %758 = vmatprep.subr.mxu0 0.0
    %759 = vmatpush2.msra.mxu0 0.0
    %760 = vmatprep.subr.mxu0 0.0
    %761 = vmatpush2.msra.mxu0 0.0
    %762 = vmatprep.subr.mxu0 0.0
    %763 = vmatpush2.msra.mxu0 0.0
    %764 = vmatprep.subr.mxu0 0.0
    %765 = vmatpush2.msra.mxu0 0.0
    %766 = vmatprep.subr.mxu0 0.0
    %767 = vmatpush2.msra.mxu0 0.0
    %768 = vmatprep.subr.mxu0 0.0
    %769 = vmatpush2.msra.mxu0 0.0
    %770 = vmatprep.subr.mxu0 0.0
    %771 = vmatpush2.msra.mxu0 0.0
    %772 = vmatprep.subr.mxu0 0.0
    %773 = vmatpush2.msra.mxu0 0.0
    %774 = vmatprep.subr.mxu0 0.0
    %775 = vmatpush2.msra.mxu0 0.0
    %776 = vmatprep.subr.mxu0 0.0
    %777 = vmatpush2.msra.mxu0 0.0
    %778 = vmatprep.mubr.f32.mxu0 0.0
    %779 = vmatmul.mubr.f32.gmra.mxu0 %v696
    %v780 = vpop.f32.mrf.mxu0
    %v781 = vadd.f32 0.0, %v780
    %v782 = vpop.f32.mrf.mxu0
    %783 = vdwg.mxu0
    %784 = vmatprep.subr.mxu0 0.0
    %785 = vmatpush1.msra.mxu0 %v695
    %786 = vmatprep.subr.mxu0 0.0
    %787 = vmatpush1.msra.mxu0 %v694
    %788 = vmatprep.subr.mxu0 0.0
    %789 = vmatpush1.msra.mxu0 %v693
    %790 = vmatprep.subr.mxu0 0.0
    %791 = vmatpush1.msra.mxu0 %v692
    %792 = vmatprep.subr.mxu0 0.0
    %793 = vmatpush1.msra.mxu0 %v691
    %794 = vmatprep.subr.mxu0 0.0
    %795 = vmatpush1.msra.mxu0 %v690
    %796 = vmatprep.subr.mxu0 0.0
    %797 = vmatpush1.msra.mxu0 %v689
    %798 = vmatprep.subr.mxu0 0.0
    %799 = vmatpush1.msra.mxu0 %v688
    %800 = vmatprep.subr.mxu0 0.0
    %801 = vmatpush1.msra.mxu0 %v687
    %802 = vmatprep.subr.mxu0 0.0
    %803 = vmatpush1.msra.mxu0 %v686
    %804 = vmatprep.subr.mxu0 0.0
    %805 = vmatpush1.msra.mxu0 %v685
    %806 = vmatprep.subr.mxu0 0.0
    %807 = vmatpush1.msra.mxu0 %v684
    %808 = vmatprep.subr.mxu0 0.0
    %809 = vmatpush1.msra.mxu0 %v683
    %810 = vmatprep.subr.mxu0 0.0
    %811 = vmatpush1.msra.mxu0 %v682
    %812 = vmatprep.subr.mxu0 0.0
    %813 = vmatpush1.msra.mxu0 %v681
    %814 = vmatprep.subr.mxu0 0.0
    %815 = vmatpush1.msra.mxu0 %v680
    %816 = vmatprep.subr.mxu0 0.0
    %817 = vmatpush2.msra.mxu0 0.0
    %818 = vmatprep.subr.mxu0 0.0
    %819 = vmatpush2.msra.mxu0 0.0
    %820 = vmatprep.subr.mxu0 0.0
    %821 = vmatpush2.msra.mxu0 0.0
    %822 = vmatprep.subr.mxu0 0.0
    %823 = vmatpush2.msra.mxu0 0.0
    %824 = vmatprep.subr.mxu0 0.0
    %825 = vmatpush2.msra.mxu0 0.0
    %826 = vmatprep.subr.mxu0 0.0
    %827 = vmatpush2.msra.mxu0 0.0
    %828 = vmatprep.subr.mxu0 0.0
    %829 = vmatpush2.msra.mxu0 0.0
    %830 = vmatprep.subr.mxu0 0.0
    %831 = vmatpush2.msra.mxu0 0.0
    %832 = vmatprep.subr.mxu0 0.0
    %833 = vmatpush2.msra.mxu0 0.0
    %834 = vmatprep.subr.mxu0 0.0
    %835 = vmatpush2.msra.mxu0 0.0
    %836 = vmatprep.subr.mxu0 0.0
    %837 = vmatpush2.msra.mxu0 0.0
    %838 = vmatprep.subr.mxu0 0.0
    %839 = vmatpush2.msra.mxu0 0.0
    %840 = vmatprep.subr.mxu0 0.0
    %841 = vmatpush2.msra.mxu0 0.0
    %842 = vmatprep.subr.mxu0 0.0
    %843 = vmatpush2.msra.mxu0 0.0
    %844 = vmatprep.subr.mxu0 0.0
    %845 = vmatpush2.msra.mxu0 0.0
    %846 = vmatprep.subr.mxu0 0.0
    %847 = vmatpush2.msra.mxu0 0.0
    %848 = vmatprep.mubr.f32.mxu0 0.0
    %849 = vmatmul.mubr.f32.gmra.mxu0 %v679
    %v850 = vpop.f32.mrf.mxu0
    %v851 = vadd.f32 %v781, %v850
    %v852 = vpop.f32.mrf.mxu0
    %853 = vdwg.mxu0
    %v854 = vld [vmem:[#allocation3 + $0x2] sm:$0xf]
    %s855 = scalar_lea.vmem [#allocation12], 256
    %v856 = vld [vmem:[%s855] sm:$0xff]
    %v857 = vld [vmem:[%s855 + $0x8] sm:$0xff]
    %v858 = vld [vmem:[%s855 + $0x10] sm:$0xff]
    %v859 = vld [vmem:[%s855 + $0x18] sm:$0xff]
    %v860 = vld [vmem:[%s855 + $0x20] sm:$0xff]
    %v861 = vld [vmem:[%s855 + $0x28] sm:$0xff]
    %v862 = vld [vmem:[%s855 + $0x30] sm:$0xff]
    %v863 = vld [vmem:[%s855 + $0x38] sm:$0xff]
    %v864 = vld [vmem:[%s855 + $0x40] sm:$0xff]
    %v865 = vld [vmem:[%s855 + $0x48] sm:$0xff]
    %v866 = vld [vmem:[%s855 + $0x50] sm:$0xff]
    %v867 = vld [vmem:[%s855 + $0x58] sm:$0xff]
    %v868 = vld [vmem:[%s855 + $0x60] sm:$0xff]
    %v869 = vld [vmem:[%s855 + $0x68] sm:$0xff]
    %v870 = vld [vmem:[%s855 + $0x70] sm:$0xff]
    %v871 = vld [vmem:[%s855 + $0x78] sm:$0xff]
    %872 = vmatprep.subr.mxu0 0.0
    %873 = vmatpush1.msra.mxu0 %v871
    %874 = vmatprep.subr.mxu0 0.0
    %875 = vmatpush1.msra.mxu0 %v870
    %876 = vmatprep.subr.mxu0 0.0
    %877 = vmatpush1.msra.mxu0 %v869
    %878 = vmatprep.subr.mxu0 0.0
    %879 = vmatpush1.msra.mxu0 %v868
    %880 = vmatprep.subr.mxu0 0.0
    %881 = vmatpush1.msra.mxu0 %v867
    %882 = vmatprep.subr.mxu0 0.0
    %883 = vmatpush1.msra.mxu0 %v866
    %884 = vmatprep.subr.mxu0 0.0
    %885 = vmatpush1.msra.mxu0 %v865
    %886 = vmatprep.subr.mxu0 0.0
    %887 = vmatpush1.msra.mxu0 %v864
    %888 = vmatprep.subr.mxu0 0.0
    %889 = vmatpush1.msra.mxu0 %v863
    %890 = vmatprep.subr.mxu0 0.0
    %891 = vmatpush1.msra.mxu0 %v862
    %892 = vmatprep.subr.mxu0 0.0
    %893 = vmatpush1.msra.mxu0 %v861
    %894 = vmatprep.subr.mxu0 0.0
    %895 = vmatpush1.msra.mxu0 %v860
    %896 = vmatprep.subr.mxu0 0.0
    %897 = vmatpush1.msra.mxu0 %v859
    %898 = vmatprep.subr.mxu0 0.0
    %899 = vmatpush1.msra.mxu0 %v858
    %900 = vmatprep.subr.mxu0 0.0
    %901 = vmatpush1.msra.mxu0 %v857
    %902 = vmatprep.subr.mxu0 0.0
    %903 = vmatpush1.msra.mxu0 %v856
    %904 = vmatprep.subr.mxu0 0.0
    %905 = vmatpush2.msra.mxu0 0.0
    %906 = vmatprep.subr.mxu0 0.0
    %907 = vmatpush2.msra.mxu0 0.0
    %908 = vmatprep.subr.mxu0 0.0
    %909 = vmatpush2.msra.mxu0 0.0
    %910 = vmatprep.subr.mxu0 0.0
    %911 = vmatpush2.msra.mxu0 0.0
    %912 = vmatprep.subr.mxu0 0.0
    %913 = vmatpush2.msra.mxu0 0.0
    %914 = vmatprep.subr.mxu0 0.0
    %915 = vmatpush2.msra.mxu0 0.0
    %916 = vmatprep.subr.mxu0 0.0
    %917 = vmatpush2.msra.mxu0 0.0
    %918 = vmatprep.subr.mxu0 0.0
    %919 = vmatpush2.msra.mxu0 0.0
    %920 = vmatprep.subr.mxu0 0.0
    %921 = vmatpush2.msra.mxu0 0.0
    %922 = vmatprep.subr.mxu0 0.0
    %923 = vmatpush2.msra.mxu0 0.0
    %924 = vmatprep.subr.mxu0 0.0
    %925 = vmatpush2.msra.mxu0 0.0
    %926 = vmatprep.subr.mxu0 0.0
    %927 = vmatpush2.msra.mxu0 0.0
    %928 = vmatprep.subr.mxu0 0.0
    %929 = vmatpush2.msra.mxu0 0.0
    %930 = vmatprep.subr.mxu0 0.0
    %931 = vmatpush2.msra.mxu0 0.0
    %932 = vmatprep.subr.mxu0 0.0
    %933 = vmatpush2.msra.mxu0 0.0
    %934 = vmatprep.subr.mxu0 0.0
    %935 = vmatpush2.msra.mxu0 0.0
    %936 = vmatprep.mubr.f32.mxu0 0.0
    %937 = vmatmul.mubr.f32.gmra.mxu0 %v854
    %v938 = vpop.f32.mrf.mxu0
    %v939 = vadd.f32 0.0, %v938
    %v940 = vpop.f32.mrf.mxu0
    %941 = vdwg.mxu0
    %v942 = vadd.f32 %v851, %v939
    %v943 = vld [vmem:[%s312] sm:$0xf]
    %s944 = scalar_lea.vmem [#allocation12], 384
    %v945 = vld [vmem:[%s944] sm:$0xff]
    %v946 = vld [vmem:[%s944 + $0x8] sm:$0xff]
    %v947 = vld [vmem:[%s944 + $0x10] sm:$0xff]
    %v948 = vld [vmem:[%s944 + $0x18] sm:$0xff]
    %v949 = vld [vmem:[%s944 + $0x20] sm:$0xff]
    %v950 = vld [vmem:[%s944 + $0x28] sm:$0xff]
    %v951 = vld [vmem:[%s944 + $0x30] sm:$0xff]
    %v952 = vld [vmem:[%s944 + $0x38] sm:$0xff]
    %v953 = vld [vmem:[%s944 + $0x40] sm:$0xff]
    %v954 = vld [vmem:[%s944 + $0x48] sm:$0xff]
    %v955 = vld [vmem:[%s944 + $0x50] sm:$0xff]
    %v956 = vld [vmem:[%s944 + $0x58] sm:$0xff]
    %v957 = vld [vmem:[%s944 + $0x60] sm:$0xff]
    %v958 = vld [vmem:[%s944 + $0x68] sm:$0xff]
    %v959 = vld [vmem:[%s944 + $0x70] sm:$0xff]
    %v960 = vld [vmem:[%s944 + $0x78] sm:$0xff]
    %961 = vmatprep.subr.mxu0 0.0
    %962 = vmatpush1.msra.mxu0 %v960
    %963 = vmatprep.subr.mxu0 0.0
    %964 = vmatpush1.msra.mxu0 %v959
    %965 = vmatprep.subr.mxu0 0.0
    %966 = vmatpush1.msra.mxu0 %v958
    %967 = vmatprep.subr.mxu0 0.0
    %968 = vmatpush1.msra.mxu0 %v957
    %969 = vmatprep.subr.mxu0 0.0
    %970 = vmatpush1.msra.mxu0 %v956
    %971 = vmatprep.subr.mxu0 0.0
    %972 = vmatpush1.msra.mxu0 %v955
    %973 = vmatprep.subr.mxu0 0.0
    %974 = vmatpush1.msra.mxu0 %v954
    %975 = vmatprep.subr.mxu0 0.0
    %976 = vmatpush1.msra.mxu0 %v953
    %977 = vmatprep.subr.mxu0 0.0
    %978 = vmatpush1.msra.mxu0 %v952
    %979 = vmatprep.subr.mxu0 0.0
    %980 = vmatpush1.msra.mxu0 %v951
    %981 = vmatprep.subr.mxu0 0.0
    %982 = vmatpush1.msra.mxu0 %v950
    %983 = vmatprep.subr.mxu0 0.0
    %984 = vmatpush1.msra.mxu0 %v949
    %985 = vmatprep.subr.mxu0 0.0
    %986 = vmatpush1.msra.mxu0 %v948
    %987 = vmatprep.subr.mxu0 0.0
    %988 = vmatpush1.msra.mxu0 %v947
    %989 = vmatprep.subr.mxu0 0.0
    %990 = vmatpush1.msra.mxu0 %v946
    %991 = vmatprep.subr.mxu0 0.0
    %992 = vmatpush1.msra.mxu0 %v945
    %993 = vmatprep.subr.mxu0 0.0
    %994 = vmatpush2.msra.mxu0 0.0
    %995 = vmatprep.subr.mxu0 0.0
    %996 = vmatpush2.msra.mxu0 0.0
    %997 = vmatprep.subr.mxu0 0.0
    %998 = vmatpush2.msra.mxu0 0.0
    %999 = vmatprep.subr.mxu0 0.0
    %1000 = vmatpush2.msra.mxu0 0.0
    %1001 = vmatprep.subr.mxu0 0.0
    %1002 = vmatpush2.msra.mxu0 0.0
    %1003 = vmatprep.subr.mxu0 0.0
    %1004 = vmatpush2.msra.mxu0 0.0
    %1005 = vmatprep.subr.mxu0 0.0
    %1006 = vmatpush2.msra.mxu0 0.0
    %1007 = vmatprep.subr.mxu0 0.0
    %1008 = vmatpush2.msra.mxu0 0.0
    %1009 = vmatprep.subr.mxu0 0.0
    %1010 = vmatpush2.msra.mxu0 0.0
    %1011 = vmatprep.subr.mxu0 0.0
    %1012 = vmatpush2.msra.mxu0 0.0
    %1013 = vmatprep.subr.mxu0 0.0
    %1014 = vmatpush2.msra.mxu0 0.0
    %1015 = vmatprep.subr.mxu0 0.0
    %1016 = vmatpush2.msra.mxu0 0.0
    %1017 = vmatprep.subr.mxu0 0.0
    %1018 = vmatpush2.msra.mxu0 0.0
    %1019 = vmatprep.subr.mxu0 0.0
    %1020 = vmatpush2.msra.mxu0 0.0
    %1021 = vmatprep.subr.mxu0 0.0
    %1022 = vmatpush2.msra.mxu0 0.0
    %1023 = vmatprep.subr.mxu0 0.0
    %1024 = vmatpush2.msra.mxu0 0.0
    %1025 = vmatprep.mubr.f32.mxu0 0.0
    %1026 = vmatmul.mubr.f32.gmra.mxu0 %v943
    %v1027 = vpop.f32.mrf.mxu0
    %v1028 = vadd.f32 0.0, %v1027
    %v1029 = vpop.f32.mrf.mxu0
    %1030 = vdwg.mxu0
    %v1031 = vadd.f32 %v942, %v1028
    %v1032 = vld [vmem:[%s312 + $0x1] sm:$0xf]
    %s1033 = scalar_lea.vmem [#allocation12], 512
    %v1034 = vld [vmem:[%s1033] sm:$0xff]
    %v1035 = vld [vmem:[%s1033 + $0x8] sm:$0xff]
    %v1036 = vld [vmem:[%s1033 + $0x10] sm:$0xff]
    %v1037 = vld [vmem:[%s1033 + $0x18] sm:$0xff]
    %v1038 = vld [vmem:[%s1033 + $0x20] sm:$0xff]
    %v1039 = vld [vmem:[%s1033 + $0x28] sm:$0xff]
    %v1040 = vld [vmem:[%s1033 + $0x30] sm:$0xff]
    %v1041 = vld [vmem:[%s1033 + $0x38] sm:$0xff]
    %v1042 = vld [vmem:[%s1033 + $0x40] sm:$0xff]
    %v1043 = vld [vmem:[%s1033 + $0x48] sm:$0xff]
    %v1044 = vld [vmem:[%s1033 + $0x50] sm:$0xff]
    %v1045 = vld [vmem:[%s1033 + $0x58] sm:$0xff]
    %v1046 = vld [vmem:[%s1033 + $0x60] sm:$0xff]
    %v1047 = vld [vmem:[%s1033 + $0x68] sm:$0xff]
    %v1048 = vld [vmem:[%s1033 + $0x70] sm:$0xff]
    %v1049 = vld [vmem:[%s1033 + $0x78] sm:$0xff]
    %1050 = vmatprep.subr.mxu0 0.0
    %1051 = vmatpush1.msra.mxu0 %v1049
    %1052 = vmatprep.subr.mxu0 0.0
    %1053 = vmatpush1.msra.mxu0 %v1048
    %1054 = vmatprep.subr.mxu0 0.0
    %1055 = vmatpush1.msra.mxu0 %v1047
    %1056 = vmatprep.subr.mxu0 0.0
    %1057 = vmatpush1.msra.mxu0 %v1046
    %1058 = vmatprep.subr.mxu0 0.0
    %1059 = vmatpush1.msra.mxu0 %v1045
    %1060 = vmatprep.subr.mxu0 0.0
    %1061 = vmatpush1.msra.mxu0 %v1044
    %1062 = vmatprep.subr.mxu0 0.0
    %1063 = vmatpush1.msra.mxu0 %v1043
    %1064 = vmatprep.subr.mxu0 0.0
    %1065 = vmatpush1.msra.mxu0 %v1042
    %1066 = vmatprep.subr.mxu0 0.0
    %1067 = vmatpush1.msra.mxu0 %v1041
    %1068 = vmatprep.subr.mxu0 0.0
    %1069 = vmatpush1.msra.mxu0 %v1040
    %1070 = vmatprep.subr.mxu0 0.0
    %1071 = vmatpush1.msra.mxu0 %v1039
    %1072 = vmatprep.subr.mxu0 0.0
    %1073 = vmatpush1.msra.mxu0 %v1038
    %1074 = vmatprep.subr.mxu0 0.0
    %1075 = vmatpush1.msra.mxu0 %v1037
    %1076 = vmatprep.subr.mxu0 0.0
    %1077 = vmatpush1.msra.mxu0 %v1036
    %1078 = vmatprep.subr.mxu0 0.0
    %1079 = vmatpush1.msra.mxu0 %v1035
    %1080 = vmatprep.subr.mxu0 0.0
    %1081 = vmatpush1.msra.mxu0 %v1034
    %1082 = vmatprep.subr.mxu0 0.0
    %1083 = vmatpush2.msra.mxu0 0.0
    %1084 = vmatprep.subr.mxu0 0.0
    %1085 = vmatpush2.msra.mxu0 0.0
    %1086 = vmatprep.subr.mxu0 0.0
    %1087 = vmatpush2.msra.mxu0 0.0
    %1088 = vmatprep.subr.mxu0 0.0
    %1089 = vmatpush2.msra.mxu0 0.0
    %1090 = vmatprep.subr.mxu0 0.0
    %1091 = vmatpush2.msra.mxu0 0.0
    %1092 = vmatprep.subr.mxu0 0.0
    %1093 = vmatpush2.msra.mxu0 0.0
    %1094 = vmatprep.subr.mxu0 0.0
    %1095 = vmatpush2.msra.mxu0 0.0
    %1096 = vmatprep.subr.mxu0 0.0
    %1097 = vmatpush2.msra.mxu0 0.0
    %1098 = vmatprep.subr.mxu0 0.0
    %1099 = vmatpush2.msra.mxu0 0.0
    %1100 = vmatprep.subr.mxu0 0.0
    %1101 = vmatpush2.msra.mxu0 0.0
    %1102 = vmatprep.subr.mxu0 0.0
    %1103 = vmatpush2.msra.mxu0 0.0
    %1104 = vmatprep.subr.mxu0 0.0
    %1105 = vmatpush2.msra.mxu0 0.0
    %1106 = vmatprep.subr.mxu0 0.0
    %1107 = vmatpush2.msra.mxu0 0.0
    %1108 = vmatprep.subr.mxu0 0.0
    %1109 = vmatpush2.msra.mxu0 0.0
    %1110 = vmatprep.subr.mxu0 0.0
    %1111 = vmatpush2.msra.mxu0 0.0
    %1112 = vmatprep.subr.mxu0 0.0
    %1113 = vmatpush2.msra.mxu0 0.0
    %1114 = vmatprep.mubr.f32.mxu0 0.0
    %1115 = vmatmul.mubr.f32.gmra.mxu0 %v1032
    %v1116 = vpop.f32.mrf.mxu0
    %v1117 = vadd.f32 0.0, %v1116
    %v1118 = vpop.f32.mrf.mxu0
    %1119 = vdwg.mxu0
    %v1120 = vadd.f32 %v1031, %v1117
    %v1121 = vld [vmem:[%s312 + $0x2] sm:$0xf]
    %s1122 = scalar_lea.vmem [#allocation12], 640
    %v1123 = vld [vmem:[%s1122] sm:$0xff]
    %v1124 = vld [vmem:[%s1122 + $0x8] sm:$0xff]
    %v1125 = vld [vmem:[%s1122 + $0x10] sm:$0xff]
    %v1126 = vld [vmem:[%s1122 + $0x18] sm:$0xff]
    %v1127 = vld [vmem:[%s1122 + $0x20] sm:$0xff]
    %v1128 = vld [vmem:[%s1122 + $0x28] sm:$0xff]
    %v1129 = vld [vmem:[%s1122 + $0x30] sm:$0xff]
    %v1130 = vld [vmem:[%s1122 + $0x38] sm:$0xff]
    %v1131 = vld [vmem:[%s1122 + $0x40] sm:$0xff]
    %v1132 = vld [vmem:[%s1122 + $0x48] sm:$0xff]
    %v1133 = vld [vmem:[%s1122 + $0x50] sm:$0xff]
    %v1134 = vld [vmem:[%s1122 + $0x58] sm:$0xff]
    %v1135 = vld [vmem:[%s1122 + $0x60] sm:$0xff]
    %v1136 = vld [vmem:[%s1122 + $0x68] sm:$0xff]
    %v1137 = vld [vmem:[%s1122 + $0x70] sm:$0xff]
    %v1138 = vld [vmem:[%s1122 + $0x78] sm:$0xff]
    %1139 = vmatprep.subr.mxu0 0.0
    %1140 = vmatpush1.msra.mxu0 %v1138
    %1141 = vmatprep.subr.mxu0 0.0
    %1142 = vmatpush1.msra.mxu0 %v1137
    %1143 = vmatprep.subr.mxu0 0.0
    %1144 = vmatpush1.msra.mxu0 %v1136
    %1145 = vmatprep.subr.mxu0 0.0
    %1146 = vmatpush1.msra.mxu0 %v1135
    %1147 = vmatprep.subr.mxu0 0.0
    %1148 = vmatpush1.msra.mxu0 %v1134
    %1149 = vmatprep.subr.mxu0 0.0
    %1150 = vmatpush1.msra.mxu0 %v1133
    %1151 = vmatprep.subr.mxu0 0.0
    %1152 = vmatpush1.msra.mxu0 %v1132
    %1153 = vmatprep.subr.mxu0 0.0
    %1154 = vmatpush1.msra.mxu0 %v1131
    %1155 = vmatprep.subr.mxu0 0.0
    %1156 = vmatpush1.msra.mxu0 %v1130
    %1157 = vmatprep.subr.mxu0 0.0
    %1158 = vmatpush1.msra.mxu0 %v1129
    %1159 = vmatprep.subr.mxu0 0.0
    %1160 = vmatpush1.msra.mxu0 %v1128
    %1161 = vmatprep.subr.mxu0 0.0
    %1162 = vmatpush1.msra.mxu0 %v1127
    %1163 = vmatprep.subr.mxu0 0.0
    %1164 = vmatpush1.msra.mxu0 %v1126
    %1165 = vmatprep.subr.mxu0 0.0
    %1166 = vmatpush1.msra.mxu0 %v1125
    %1167 = vmatprep.subr.mxu0 0.0
    %1168 = vmatpush1.msra.mxu0 %v1124
    %1169 = vmatprep.subr.mxu0 0.0
    %1170 = vmatpush1.msra.mxu0 %v1123
    %1171 = vmatprep.subr.mxu0 0.0
    %1172 = vmatpush2.msra.mxu0 0.0
    %1173 = vmatprep.subr.mxu0 0.0
    %1174 = vmatpush2.msra.mxu0 0.0
    %1175 = vmatprep.subr.mxu0 0.0
    %1176 = vmatpush2.msra.mxu0 0.0
    %1177 = vmatprep.subr.mxu0 0.0
    %1178 = vmatpush2.msra.mxu0 0.0
    %1179 = vmatprep.subr.mxu0 0.0
    %1180 = vmatpush2.msra.mxu0 0.0
    %1181 = vmatprep.subr.mxu0 0.0
    %1182 = vmatpush2.msra.mxu0 0.0
    %1183 = vmatprep.subr.mxu0 0.0
    %1184 = vmatpush2.msra.mxu0 0.0
    %1185 = vmatprep.subr.mxu0 0.0
    %1186 = vmatpush2.msra.mxu0 0.0
    %1187 = vmatprep.subr.mxu0 0.0
    %1188 = vmatpush2.msra.mxu0 0.0
    %1189 = vmatprep.subr.mxu0 0.0
    %1190 = vmatpush2.msra.mxu0 0.0
    %1191 = vmatprep.subr.mxu0 0.0
    %1192 = vmatpush2.msra.mxu0 0.0
    %1193 = vmatprep.subr.mxu0 0.0
    %1194 = vmatpush2.msra.mxu0 0.0
    %1195 = vmatprep.subr.mxu0 0.0
    %1196 = vmatpush2.msra.mxu0 0.0
    %1197 = vmatprep.subr.mxu0 0.0
    %1198 = vmatpush2.msra.mxu0 0.0
    %1199 = vmatprep.subr.mxu0 0.0
    %1200 = vmatpush2.msra.mxu0 0.0
    %1201 = vmatprep.subr.mxu0 0.0
    %1202 = vmatpush2.msra.mxu0 0.0
    %1203 = vmatprep.mubr.f32.mxu0 0.0
    %1204 = vmatmul.mubr.f32.gmra.mxu0 %v1121
    %v1205 = vpop.f32.mrf.mxu0
    %v1206 = vadd.f32 0.0, %v1205
    %v1207 = vpop.f32.mrf.mxu0
    %1208 = vdwg.mxu0
    %v1209 = vadd.f32 %v1120, %v1206
    %v1210 = vld [vmem:[%s433] sm:$0xf]
    %s1211 = scalar_lea.vmem [#allocation12], 768
    %v1212 = vld [vmem:[%s1211] sm:$0xff]
    %v1213 = vld [vmem:[%s1211 + $0x8] sm:$0xff]
    %v1214 = vld [vmem:[%s1211 + $0x10] sm:$0xff]
    %v1215 = vld [vmem:[%s1211 + $0x18] sm:$0xff]
    %v1216 = vld [vmem:[%s1211 + $0x20] sm:$0xff]
    %v1217 = vld [vmem:[%s1211 + $0x28] sm:$0xff]
    %v1218 = vld [vmem:[%s1211 + $0x30] sm:$0xff]
    %v1219 = vld [vmem:[%s1211 + $0x38] sm:$0xff]
    %v1220 = vld [vmem:[%s1211 + $0x40] sm:$0xff]
    %v1221 = vld [vmem:[%s1211 + $0x48] sm:$0xff]
    %v1222 = vld [vmem:[%s1211 + $0x50] sm:$0xff]
    %v1223 = vld [vmem:[%s1211 + $0x58] sm:$0xff]
    %v1224 = vld [vmem:[%s1211 + $0x60] sm:$0xff]
    %v1225 = vld [vmem:[%s1211 + $0x68] sm:$0xff]
    %v1226 = vld [vmem:[%s1211 + $0x70] sm:$0xff]
    %v1227 = vld [vmem:[%s1211 + $0x78] sm:$0xff]
    %1228 = vmatprep.subr.mxu0 0.0
    %1229 = vmatpush1.msra.mxu0 %v1227
    %1230 = vmatprep.subr.mxu0 0.0
    %1231 = vmatpush1.msra.mxu0 %v1226
    %1232 = vmatprep.subr.mxu0 0.0
    %1233 = vmatpush1.msra.mxu0 %v1225
    %1234 = vmatprep.subr.mxu0 0.0
    %1235 = vmatpush1.msra.mxu0 %v1224
    %1236 = vmatprep.subr.mxu0 0.0
    %1237 = vmatpush1.msra.mxu0 %v1223
    %1238 = vmatprep.subr.mxu0 0.0
    %1239 = vmatpush1.msra.mxu0 %v1222
    %1240 = vmatprep.subr.mxu0 0.0
    %1241 = vmatpush1.msra.mxu0 %v1221
    %1242 = vmatprep.subr.mxu0 0.0
    %1243 = vmatpush1.msra.mxu0 %v1220
    %1244 = vmatprep.subr.mxu0 0.0
    %1245 = vmatpush1.msra.mxu0 %v1219
    %1246 = vmatprep.subr.mxu0 0.0
    %1247 = vmatpush1.msra.mxu0 %v1218
    %1248 = vmatprep.subr.mxu0 0.0
    %1249 = vmatpush1.msra.mxu0 %v1217
    %1250 = vmatprep.subr.mxu0 0.0
    %1251 = vmatpush1.msra.mxu0 %v1216
    %1252 = vmatprep.subr.mxu0 0.0
    %1253 = vmatpush1.msra.mxu0 %v1215
    %1254 = vmatprep.subr.mxu0 0.0
    %1255 = vmatpush1.msra.mxu0 %v1214
    %1256 = vmatprep.subr.mxu0 0.0
    %1257 = vmatpush1.msra.mxu0 %v1213
    %1258 = vmatprep.subr.mxu0 0.0
    %1259 = vmatpush1.msra.mxu0 %v1212
    %1260 = vmatprep.subr.mxu0 0.0
    %1261 = vmatpush2.msra.mxu0 0.0
    %1262 = vmatprep.subr.mxu0 0.0
    %1263 = vmatpush2.msra.mxu0 0.0
    %1264 = vmatprep.subr.mxu0 0.0
    %1265 = vmatpush2.msra.mxu0 0.0
    %1266 = vmatprep.subr.mxu0 0.0
    %1267 = vmatpush2.msra.mxu0 0.0
    %1268 = vmatprep.subr.mxu0 0.0
    %1269 = vmatpush2.msra.mxu0 0.0
    %1270 = vmatprep.subr.mxu0 0.0
    %1271 = vmatpush2.msra.mxu0 0.0
    %1272 = vmatprep.subr.mxu0 0.0
    %1273 = vmatpush2.msra.mxu0 0.0
    %1274 = vmatprep.subr.mxu0 0.0
    %1275 = vmatpush2.msra.mxu0 0.0
    %1276 = vmatprep.subr.mxu0 0.0
    %1277 = vmatpush2.msra.mxu0 0.0
    %1278 = vmatprep.subr.mxu0 0.0
    %1279 = vmatpush2.msra.mxu0 0.0
    %1280 = vmatprep.subr.mxu0 0.0
    %1281 = vmatpush2.msra.mxu0 0.0
    %1282 = vmatprep.subr.mxu0 0.0
    %1283 = vmatpush2.msra.mxu0 0.0
    %1284 = vmatprep.subr.mxu0 0.0
    %1285 = vmatpush2.msra.mxu0 0.0
    %1286 = vmatprep.subr.mxu0 0.0
    %1287 = vmatpush2.msra.mxu0 0.0
    %1288 = vmatprep.subr.mxu0 0.0
    %1289 = vmatpush2.msra.mxu0 0.0
    %1290 = vmatprep.subr.mxu0 0.0
    %1291 = vmatpush2.msra.mxu0 0.0
    %1292 = vmatprep.mubr.f32.mxu0 0.0
    %1293 = vmatmul.mubr.f32.gmra.mxu0 %v1210
    %v1294 = vpop.f32.mrf.mxu0
    %v1295 = vadd.f32 0.0, %v1294
    %v1296 = vpop.f32.mrf.mxu0
    %1297 = vdwg.mxu0
    %v1298 = vadd.f32 %v1209, %v1295
    %v1299 = vld [vmem:[%s433 + $0x1] sm:$0xf]
    %s1300 = scalar_lea.vmem [#allocation12], 896
    %v1301 = vld [vmem:[%s1300] sm:$0xff]
    %v1302 = vld [vmem:[%s1300 + $0x8] sm:$0xff]
    %v1303 = vld [vmem:[%s1300 + $0x10] sm:$0xff]
    %v1304 = vld [vmem:[%s1300 + $0x18] sm:$0xff]
    %v1305 = vld [vmem:[%s1300 + $0x20] sm:$0xff]
    %v1306 = vld [vmem:[%s1300 + $0x28] sm:$0xff]
    %v1307 = vld [vmem:[%s1300 + $0x30] sm:$0xff]
    %v1308 = vld [vmem:[%s1300 + $0x38] sm:$0xff]
    %v1309 = vld [vmem:[%s1300 + $0x40] sm:$0xff]
    %v1310 = vld [vmem:[%s1300 + $0x48] sm:$0xff]
    %v1311 = vld [vmem:[%s1300 + $0x50] sm:$0xff]
    %v1312 = vld [vmem:[%s1300 + $0x58] sm:$0xff]
    %v1313 = vld [vmem:[%s1300 + $0x60] sm:$0xff]
    %v1314 = vld [vmem:[%s1300 + $0x68] sm:$0xff]
    %v1315 = vld [vmem:[%s1300 + $0x70] sm:$0xff]
    %v1316 = vld [vmem:[%s1300 + $0x78] sm:$0xff]
    %1317 = vmatprep.subr.mxu0 0.0
    %1318 = vmatpush1.msra.mxu0 %v1316
    %1319 = vmatprep.subr.mxu0 0.0
    %1320 = vmatpush1.msra.mxu0 %v1315
    %1321 = vmatprep.subr.mxu0 0.0
    %1322 = vmatpush1.msra.mxu0 %v1314
    %1323 = vmatprep.subr.mxu0 0.0
    %1324 = vmatpush1.msra.mxu0 %v1313
    %1325 = vmatprep.subr.mxu0 0.0
    %1326 = vmatpush1.msra.mxu0 %v1312
    %1327 = vmatprep.subr.mxu0 0.0
    %1328 = vmatpush1.msra.mxu0 %v1311
    %1329 = vmatprep.subr.mxu0 0.0
    %1330 = vmatpush1.msra.mxu0 %v1310
    %1331 = vmatprep.subr.mxu0 0.0
    %1332 = vmatpush1.msra.mxu0 %v1309
    %1333 = vmatprep.subr.mxu0 0.0
    %1334 = vmatpush1.msra.mxu0 %v1308
    %1335 = vmatprep.subr.mxu0 0.0
    %1336 = vmatpush1.msra.mxu0 %v1307
    %1337 = vmatprep.subr.mxu0 0.0
    %1338 = vmatpush1.msra.mxu0 %v1306
    %1339 = vmatprep.subr.mxu0 0.0
    %1340 = vmatpush1.msra.mxu0 %v1305
    %1341 = vmatprep.subr.mxu0 0.0
    %1342 = vmatpush1.msra.mxu0 %v1304
    %1343 = vmatprep.subr.mxu0 0.0
    %1344 = vmatpush1.msra.mxu0 %v1303
    %1345 = vmatprep.subr.mxu0 0.0
    %1346 = vmatpush1.msra.mxu0 %v1302
    %1347 = vmatprep.subr.mxu0 0.0
    %1348 = vmatpush1.msra.mxu0 %v1301
    %1349 = vmatprep.subr.mxu0 0.0
    %1350 = vmatpush2.msra.mxu0 0.0
    %1351 = vmatprep.subr.mxu0 0.0
    %1352 = vmatpush2.msra.mxu0 0.0
    %1353 = vmatprep.subr.mxu0 0.0
    %1354 = vmatpush2.msra.mxu0 0.0
    %1355 = vmatprep.subr.mxu0 0.0
    %1356 = vmatpush2.msra.mxu0 0.0
    %1357 = vmatprep.subr.mxu0 0.0
    %1358 = vmatpush2.msra.mxu0 0.0
    %1359 = vmatprep.subr.mxu0 0.0
    %1360 = vmatpush2.msra.mxu0 0.0
    %1361 = vmatprep.subr.mxu0 0.0
    %1362 = vmatpush2.msra.mxu0 0.0
    %1363 = vmatprep.subr.mxu0 0.0
    %1364 = vmatpush2.msra.mxu0 0.0
    %1365 = vmatprep.subr.mxu0 0.0
    %1366 = vmatpush2.msra.mxu0 0.0
    %1367 = vmatprep.subr.mxu0 0.0
    %1368 = vmatpush2.msra.mxu0 0.0
    %1369 = vmatprep.subr.mxu0 0.0
    %1370 = vmatpush2.msra.mxu0 0.0
    %1371 = vmatprep.subr.mxu0 0.0
    %1372 = vmatpush2.msra.mxu0 0.0
    %1373 = vmatprep.subr.mxu0 0.0
    %1374 = vmatpush2.msra.mxu0 0.0
    %1375 = vmatprep.subr.mxu0 0.0
    %1376 = vmatpush2.msra.mxu0 0.0
    %1377 = vmatprep.subr.mxu0 0.0
    %1378 = vmatpush2.msra.mxu0 0.0
    %1379 = vmatprep.subr.mxu0 0.0
    %1380 = vmatpush2.msra.mxu0 0.0
    %1381 = vmatprep.mubr.f32.mxu0 0.0
    %1382 = vmatmul.mubr.f32.gmra.mxu0 %v1299
    %v1383 = vpop.f32.mrf.mxu0
    %v1384 = vadd.f32 0.0, %v1383
    %v1385 = vpop.f32.mrf.mxu0
    %1386 = vdwg.mxu0
    %v1387 = vadd.f32 %v1298, %v1384
    %v1388 = vld [vmem:[%s433 + $0x2] sm:$0xf]
    %s1389 = scalar_lea.vmem [#allocation12], 1024
    %v1390 = vld [vmem:[%s1389] sm:$0xff]
    %v1391 = vld [vmem:[%s1389 + $0x8] sm:$0xff]
    %v1392 = vld [vmem:[%s1389 + $0x10] sm:$0xff]
    %v1393 = vld [vmem:[%s1389 + $0x18] sm:$0xff]
    %v1394 = vld [vmem:[%s1389 + $0x20] sm:$0xff]
    %v1395 = vld [vmem:[%s1389 + $0x28] sm:$0xff]
    %v1396 = vld [vmem:[%s1389 + $0x30] sm:$0xff]
    %v1397 = vld [vmem:[%s1389 + $0x38] sm:$0xff]
    %v1398 = vld [vmem:[%s1389 + $0x40] sm:$0xff]
    %v1399 = vld [vmem:[%s1389 + $0x48] sm:$0xff]
    %v1400 = vld [vmem:[%s1389 + $0x50] sm:$0xff]
    %v1401 = vld [vmem:[%s1389 + $0x58] sm:$0xff]
    %v1402 = vld [vmem:[%s1389 + $0x60] sm:$0xff]
    %v1403 = vld [vmem:[%s1389 + $0x68] sm:$0xff]
    %v1404 = vld [vmem:[%s1389 + $0x70] sm:$0xff]
    %v1405 = vld [vmem:[%s1389 + $0x78] sm:$0xff]
    %1406 = vmatprep.subr.mxu0 0.0
    %1407 = vmatpush1.msra.mxu0 %v1405
    %1408 = vmatprep.subr.mxu0 0.0
    %1409 = vmatpush1.msra.mxu0 %v1404
    %1410 = vmatprep.subr.mxu0 0.0
    %1411 = vmatpush1.msra.mxu0 %v1403
    %1412 = vmatprep.subr.mxu0 0.0
    %1413 = vmatpush1.msra.mxu0 %v1402
    %1414 = vmatprep.subr.mxu0 0.0
    %1415 = vmatpush1.msra.mxu0 %v1401
    %1416 = vmatprep.subr.mxu0 0.0
    %1417 = vmatpush1.msra.mxu0 %v1400
    %1418 = vmatprep.subr.mxu0 0.0
    %1419 = vmatpush1.msra.mxu0 %v1399
    %1420 = vmatprep.subr.mxu0 0.0
    %1421 = vmatpush1.msra.mxu0 %v1398
    %1422 = vmatprep.subr.mxu0 0.0
    %1423 = vmatpush1.msra.mxu0 %v1397
    %1424 = vmatprep.subr.mxu0 0.0
    %1425 = vmatpush1.msra.mxu0 %v1396
    %1426 = vmatprep.subr.mxu0 0.0
    %1427 = vmatpush1.msra.mxu0 %v1395
    %1428 = vmatprep.subr.mxu0 0.0
    %1429 = vmatpush1.msra.mxu0 %v1394
    %1430 = vmatprep.subr.mxu0 0.0
    %1431 = vmatpush1.msra.mxu0 %v1393
    %1432 = vmatprep.subr.mxu0 0.0
    %1433 = vmatpush1.msra.mxu0 %v1392
    %1434 = vmatprep.subr.mxu0 0.0
    %1435 = vmatpush1.msra.mxu0 %v1391
    %1436 = vmatprep.subr.mxu0 0.0
    %1437 = vmatpush1.msra.mxu0 %v1390
    %1438 = vmatprep.subr.mxu0 0.0
    %1439 = vmatpush2.msra.mxu0 0.0
    %1440 = vmatprep.subr.mxu0 0.0
    %1441 = vmatpush2.msra.mxu0 0.0
    %1442 = vmatprep.subr.mxu0 0.0
    %1443 = vmatpush2.msra.mxu0 0.0
    %1444 = vmatprep.subr.mxu0 0.0
    %1445 = vmatpush2.msra.mxu0 0.0
    %1446 = vmatprep.subr.mxu0 0.0
    %1447 = vmatpush2.msra.mxu0 0.0
    %1448 = vmatprep.subr.mxu0 0.0
    %1449 = vmatpush2.msra.mxu0 0.0
    %1450 = vmatprep.subr.mxu0 0.0
    %1451 = vmatpush2.msra.mxu0 0.0
    %1452 = vmatprep.subr.mxu0 0.0
    %1453 = vmatpush2.msra.mxu0 0.0
    %1454 = vmatprep.subr.mxu0 0.0
    %1455 = vmatpush2.msra.mxu0 0.0
    %1456 = vmatprep.subr.mxu0 0.0
    %1457 = vmatpush2.msra.mxu0 0.0
    %1458 = vmatprep.subr.mxu0 0.0
    %1459 = vmatpush2.msra.mxu0 0.0
    %1460 = vmatprep.subr.mxu0 0.0
    %1461 = vmatpush2.msra.mxu0 0.0
    %1462 = vmatprep.subr.mxu0 0.0
    %1463 = vmatpush2.msra.mxu0 0.0
    %1464 = vmatprep.subr.mxu0 0.0
    %1465 = vmatpush2.msra.mxu0 0.0
    %1466 = vmatprep.subr.mxu0 0.0
    %1467 = vmatpush2.msra.mxu0 0.0
    %1468 = vmatprep.subr.mxu0 0.0
    %1469 = vmatpush2.msra.mxu0 0.0
    %1470 = vmatprep.mubr.f32.mxu0 0.0
    %1471 = vmatmul.mubr.f32.gmra.mxu0 %v1388
    %v1472 = vpop.f32.mrf.mxu0
    %v1473 = vadd.f32 0.0, %v1472
    %v1474 = vpop.f32.mrf.mxu0
    %1475 = vdwg.mxu0
    %v1476 = vadd.f32 %v1387, %v1473
    %v1478 = vlaneseq
    %v1479 = vshrl.u32 %v1478, 7
    %v1480 = vsub.s32 0, %v1479
    %v1481 = vrot.slane %v678, %v1480
    %v1483 = vadd.f32 %v1476, %v1481
    %v1484 = vmax.f32 %v1483, 0.0
    %1485 = vst [vmem:[#allocation4] sm:$0xf] %v1484
    %v1486 = vld [vmem:[%s312] sm:$0xf]
    %v1487 = vld [vmem:[#allocation12] sm:$0xff]
    %v1488 = vld [vmem:[#allocation12 + $0x8] sm:$0xff]
    %v1489 = vld [vmem:[#allocation12 + $0x10] sm:$0xff]
    %v1490 = vld [vmem:[#allocation12 + $0x18] sm:$0xff]
    %v1491 = vld [vmem:[#allocation12 + $0x20] sm:$0xff]
    %v1492 = vld [vmem:[#allocation12 + $0x28] sm:$0xff]
    %v1493 = vld [vmem:[#allocation12 + $0x30] sm:$0xff]
    %v1494 = vld [vmem:[#allocation12 + $0x38] sm:$0xff]
    %v1495 = vld [vmem:[#allocation12 + $0x40] sm:$0xff]
    %v1496 = vld [vmem:[#allocation12 + $0x48] sm:$0xff]
    %v1497 = vld [vmem:[#allocation12 + $0x50] sm:$0xff]
    %v1498 = vld [vmem:[#allocation12 + $0x58] sm:$0xff]
    %v1499 = vld [vmem:[#allocation12 + $0x60] sm:$0xff]
    %v1500 = vld [vmem:[#allocation12 + $0x68] sm:$0xff]
    %v1501 = vld [vmem:[#allocation12 + $0x70] sm:$0xff]
    %v1502 = vld [vmem:[#allocation12 + $0x78] sm:$0xff]
    %v1503 = vld [vmem:[%s312 + $0x1] sm:$0xf]
    %v1504 = vld [vmem:[%s697] sm:$0xff]
    %v1505 = vld [vmem:[%s697 + $0x8] sm:$0xff]
    %v1506 = vld [vmem:[%s697 + $0x10] sm:$0xff]
    %v1507 = vld [vmem:[%s697 + $0x18] sm:$0xff]
    %v1508 = vld [vmem:[%s697 + $0x20] sm:$0xff]
    %v1509 = vld [vmem:[%s697 + $0x28] sm:$0xff]
    %v1510 = vld [vmem:[%s697 + $0x30] sm:$0xff]
    %v1511 = vld [vmem:[%s697 + $0x38] sm:$0xff]
    %v1512 = vld [vmem:[%s697 + $0x40] sm:$0xff]
    %v1513 = vld [vmem:[%s697 + $0x48] sm:$0xff]
    %v1514 = vld [vmem:[%s697 + $0x50] sm:$0xff]
    %v1515 = vld [vmem:[%s697 + $0x58] sm:$0xff]
    %v1516 = vld [vmem:[%s697 + $0x60] sm:$0xff]
    %v1517 = vld [vmem:[%s697 + $0x68] sm:$0xff]
    %v1518 = vld [vmem:[%s697 + $0x70] sm:$0xff]
    %v1519 = vld [vmem:[%s697 + $0x78] sm:$0xff]
    %1520 = vmatprep.subr.mxu0 0.0
    %1521 = vmatpush1.msra.mxu0 %v1519
    %1522 = vmatprep.subr.mxu0 0.0
    %1523 = vmatpush1.msra.mxu0 %v1518
    %1524 = vmatprep.subr.mxu0 0.0
    %1525 = vmatpush1.msra.mxu0 %v1517
    %1526 = vmatprep.subr.mxu0 0.0
    %1527 = vmatpush1.msra.mxu0 %v1516
    %1528 = vmatprep.subr.mxu0 0.0
    %1529 = vmatpush1.msra.mxu0 %v1515
    %1530 = vmatprep.subr.mxu0 0.0
    %1531 = vmatpush1.msra.mxu0 %v1514
    %1532 = vmatprep.subr.mxu0 0.0
    %1533 = vmatpush1.msra.mxu0 %v1513
    %1534 = vmatprep.subr.mxu0 0.0
    %1535 = vmatpush1.msra.mxu0 %v1512
    %1536 = vmatprep.subr.mxu0 0.0
    %1537 = vmatpush1.msra.mxu0 %v1511
    %1538 = vmatprep.subr.mxu0 0.0
    %1539 = vmatpush1.msra.mxu0 %v1510
    %1540 = vmatprep.subr.mxu0 0.0
    %1541 = vmatpush1.msra.mxu0 %v1509
    %1542 = vmatprep.subr.mxu0 0.0
    %1543 = vmatpush1.msra.mxu0 %v1508
    %1544 = vmatprep.subr.mxu0 0.0
    %1545 = vmatpush1.msra.mxu0 %v1507
    %1546 = vmatprep.subr.mxu0 0.0
    %1547 = vmatpush1.msra.mxu0 %v1506
    %1548 = vmatprep.subr.mxu0 0.0
    %1549 = vmatpush1.msra.mxu0 %v1505
    %1550 = vmatprep.subr.mxu0 0.0
    %1551 = vmatpush1.msra.mxu0 %v1504
    %1552 = vmatprep.subr.mxu0 0.0
    %1553 = vmatpush2.msra.mxu0 0.0
    %1554 = vmatprep.subr.mxu0 0.0
    %1555 = vmatpush2.msra.mxu0 0.0
    %1556 = vmatprep.subr.mxu0 0.0
    %1557 = vmatpush2.msra.mxu0 0.0
    %1558 = vmatprep.subr.mxu0 0.0
    %1559 = vmatpush2.msra.mxu0 0.0
    %1560 = vmatprep.subr.mxu0 0.0
    %1561 = vmatpush2.msra.mxu0 0.0
    %1562 = vmatprep.subr.mxu0 0.0
    %1563 = vmatpush2.msra.mxu0 0.0
    %1564 = vmatprep.subr.mxu0 0.0
    %1565 = vmatpush2.msra.mxu0 0.0
    %1566 = vmatprep.subr.mxu0 0.0
    %1567 = vmatpush2.msra.mxu0 0.0
    %1568 = vmatprep.subr.mxu0 0.0
    %1569 = vmatpush2.msra.mxu0 0.0
    %1570 = vmatprep.subr.mxu0 0.0
    %1571 = vmatpush2.msra.mxu0 0.0
    %1572 = vmatprep.subr.mxu0 0.0
    %1573 = vmatpush2.msra.mxu0 0.0
    %1574 = vmatprep.subr.mxu0 0.0
    %1575 = vmatpush2.msra.mxu0 0.0
    %1576 = vmatprep.subr.mxu0 0.0
    %1577 = vmatpush2.msra.mxu0 0.0
    %1578 = vmatprep.subr.mxu0 0.0
    %1579 = vmatpush2.msra.mxu0 0.0
    %1580 = vmatprep.subr.mxu0 0.0
    %1581 = vmatpush2.msra.mxu0 0.0
    %1582 = vmatprep.subr.mxu0 0.0
    %1583 = vmatpush2.msra.mxu0 0.0
    %1584 = vmatprep.mubr.f32.mxu0 0.0
    %1585 = vmatmul.mubr.f32.gmra.mxu0 %v1503
    %v1586 = vpop.f32.mrf.mxu0
    %v1587 = vadd.f32 0.0, %v1586
    %v1588 = vpop.f32.mrf.mxu0
    %1589 = vdwg.mxu0
    %1590 = vmatprep.subr.mxu0 0.0
    %1591 = vmatpush1.msra.mxu0 %v1502
    %1592 = vmatprep.subr.mxu0 0.0
    %1593 = vmatpush1.msra.mxu0 %v1501
    %1594 = vmatprep.subr.mxu0 0.0
    %1595 = vmatpush1.msra.mxu0 %v1500
    %1596 = vmatprep.subr.mxu0 0.0
    %1597 = vmatpush1.msra.mxu0 %v1499
    %1598 = vmatprep.subr.mxu0 0.0
    %1599 = vmatpush1.msra.mxu0 %v1498
    %1600 = vmatprep.subr.mxu0 0.0
    %1601 = vmatpush1.msra.mxu0 %v1497
    %1602 = vmatprep.subr.mxu0 0.0
    %1603 = vmatpush1.msra.mxu0 %v1496
    %1604 = vmatprep.subr.mxu0 0.0
    %1605 = vmatpush1.msra.mxu0 %v1495
    %1606 = vmatprep.subr.mxu0 0.0
    %1607 = vmatpush1.msra.mxu0 %v1494
    %1608 = vmatprep.subr.mxu0 0.0
    %1609 = vmatpush1.msra.mxu0 %v1493
    %1610 = vmatprep.subr.mxu0 0.0
    %1611 = vmatpush1.msra.mxu0 %v1492
    %1612 = vmatprep.subr.mxu0 0.0
    %1613 = vmatpush1.msra.mxu0 %v1491
    %1614 = vmatprep.subr.mxu0 0.0
    %1615 = vmatpush1.msra.mxu0 %v1490
    %1616 = vmatprep.subr.mxu0 0.0
    %1617 = vmatpush1.msra.mxu0 %v1489
    %1618 = vmatprep.subr.mxu0 0.0
    %1619 = vmatpush1.msra.mxu0 %v1488
    %1620 = vmatprep.subr.mxu0 0.0
    %1621 = vmatpush1.msra.mxu0 %v1487
    %1622 = vmatprep.subr.mxu0 0.0
    %1623 = vmatpush2.msra.mxu0 0.0
    %1624 = vmatprep.subr.mxu0 0.0
    %1625 = vmatpush2.msra.mxu0 0.0
    %1626 = vmatprep.subr.mxu0 0.0
    %1627 = vmatpush2.msra.mxu0 0.0
    %1628 = vmatprep.subr.mxu0 0.0
    %1629 = vmatpush2.msra.mxu0 0.0
    %1630 = vmatprep.subr.mxu0 0.0
    %1631 = vmatpush2.msra.mxu0 0.0
    %1632 = vmatprep.subr.mxu0 0.0
    %1633 = vmatpush2.msra.mxu0 0.0
    %1634 = vmatprep.subr.mxu0 0.0
    %1635 = vmatpush2.msra.mxu0 0.0
    %1636 = vmatprep.subr.mxu0 0.0
    %1637 = vmatpush2.msra.mxu0 0.0
    %1638 = vmatprep.subr.mxu0 0.0
    %1639 = vmatpush2.msra.mxu0 0.0
    %1640 = vmatprep.subr.mxu0 0.0
    %1641 = vmatpush2.msra.mxu0 0.0
    %1642 = vmatprep.subr.mxu0 0.0
    %1643 = vmatpush2.msra.mxu0 0.0
    %1644 = vmatprep.subr.mxu0 0.0
    %1645 = vmatpush2.msra.mxu0 0.0
    %1646 = vmatprep.subr.mxu0 0.0
    %1647 = vmatpush2.msra.mxu0 0.0
    %1648 = vmatprep.subr.mxu0 0.0
    %1649 = vmatpush2.msra.mxu0 0.0
    %1650 = vmatprep.subr.mxu0 0.0
    %1651 = vmatpush2.msra.mxu0 0.0
    %1652 = vmatprep.subr.mxu0 0.0
    %1653 = vmatpush2.msra.mxu0 0.0
    %1654 = vmatprep.mubr.f32.mxu0 0.0
    %1655 = vmatmul.mubr.f32.gmra.mxu0 %v1486
    %v1656 = vpop.f32.mrf.mxu0
    %v1657 = vadd.f32 %v1587, %v1656
    %v1658 = vpop.f32.mrf.mxu0
    %1659 = vdwg.mxu0
    %v1660 = vld [vmem:[%s312 + $0x2] sm:$0xf]
    %v1661 = vld [vmem:[%s855] sm:$0xff]
    %v1662 = vld [vmem:[%s855 + $0x8] sm:$0xff]
    %v1663 = vld [vmem:[%s855 + $0x10] sm:$0xff]
    %v1664 = vld [vmem:[%s855 + $0x18] sm:$0xff]
    %v1665 = vld [vmem:[%s855 + $0x20] sm:$0xff]
    %v1666 = vld [vmem:[%s855 + $0x28] sm:$0xff]
    %v1667 = vld [vmem:[%s855 + $0x30] sm:$0xff]
    %v1668 = vld [vmem:[%s855 + $0x38] sm:$0xff]
    %v1669 = vld [vmem:[%s855 + $0x40] sm:$0xff]
    %v1670 = vld [vmem:[%s855 + $0x48] sm:$0xff]
    %v1671 = vld [vmem:[%s855 + $0x50] sm:$0xff]
    %v1672 = vld [vmem:[%s855 + $0x58] sm:$0xff]
    %v1673 = vld [vmem:[%s855 + $0x60] sm:$0xff]
    %v1674 = vld [vmem:[%s855 + $0x68] sm:$0xff]
    %v1675 = vld [vmem:[%s855 + $0x70] sm:$0xff]
    %v1676 = vld [vmem:[%s855 + $0x78] sm:$0xff]
    %1677 = vmatprep.subr.mxu0 0.0
    %1678 = vmatpush1.msra.mxu0 %v1676
    %1679 = vmatprep.subr.mxu0 0.0
    %1680 = vmatpush1.msra.mxu0 %v1675
    %1681 = vmatprep.subr.mxu0 0.0
    %1682 = vmatpush1.msra.mxu0 %v1674
    %1683 = vmatprep.subr.mxu0 0.0
    %1684 = vmatpush1.msra.mxu0 %v1673
    %1685 = vmatprep.subr.mxu0 0.0
    %1686 = vmatpush1.msra.mxu0 %v1672
    %1687 = vmatprep.subr.mxu0 0.0
    %1688 = vmatpush1.msra.mxu0 %v1671
    %1689 = vmatprep.subr.mxu0 0.0
    %1690 = vmatpush1.msra.mxu0 %v1670
    %1691 = vmatprep.subr.mxu0 0.0
    %1692 = vmatpush1.msra.mxu0 %v1669
    %1693 = vmatprep.subr.mxu0 0.0
    %1694 = vmatpush1.msra.mxu0 %v1668
    %1695 = vmatprep.subr.mxu0 0.0
    %1696 = vmatpush1.msra.mxu0 %v1667
    %1697 = vmatprep.subr.mxu0 0.0
    %1698 = vmatpush1.msra.mxu0 %v1666
    %1699 = vmatprep.subr.mxu0 0.0
    %1700 = vmatpush1.msra.mxu0 %v1665
    %1701 = vmatprep.subr.mxu0 0.0
    %1702 = vmatpush1.msra.mxu0 %v1664
    %1703 = vmatprep.subr.mxu0 0.0
    %1704 = vmatpush1.msra.mxu0 %v1663
    %1705 = vmatprep.subr.mxu0 0.0
    %1706 = vmatpush1.msra.mxu0 %v1662
    %1707 = vmatprep.subr.mxu0 0.0
    %1708 = vmatpush1.msra.mxu0 %v1661
    %1709 = vmatprep.subr.mxu0 0.0
    %1710 = vmatpush2.msra.mxu0 0.0
    %1711 = vmatprep.subr.mxu0 0.0
    %1712 = vmatpush2.msra.mxu0 0.0
    %1713 = vmatprep.subr.mxu0 0.0
    %1714 = vmatpush2.msra.mxu0 0.0
    %1715 = vmatprep.subr.mxu0 0.0
    %1716 = vmatpush2.msra.mxu0 0.0
    %1717 = vmatprep.subr.mxu0 0.0
    %1718 = vmatpush2.msra.mxu0 0.0
    %1719 = vmatprep.subr.mxu0 0.0
    %1720 = vmatpush2.msra.mxu0 0.0
    %1721 = vmatprep.subr.mxu0 0.0
    %1722 = vmatpush2.msra.mxu0 0.0
    %1723 = vmatprep.subr.mxu0 0.0
    %1724 = vmatpush2.msra.mxu0 0.0
    %1725 = vmatprep.subr.mxu0 0.0
    %1726 = vmatpush2.msra.mxu0 0.0
    %1727 = vmatprep.subr.mxu0 0.0
    %1728 = vmatpush2.msra.mxu0 0.0
    %1729 = vmatprep.subr.mxu0 0.0
    %1730 = vmatpush2.msra.mxu0 0.0
    %1731 = vmatprep.subr.mxu0 0.0
    %1732 = vmatpush2.msra.mxu0 0.0
    %1733 = vmatprep.subr.mxu0 0.0
    %1734 = vmatpush2.msra.mxu0 0.0
    %1735 = vmatprep.subr.mxu0 0.0
    %1736 = vmatpush2.msra.mxu0 0.0
    %1737 = vmatprep.subr.mxu0 0.0
    %1738 = vmatpush2.msra.mxu0 0.0
    %1739 = vmatprep.subr.mxu0 0.0
    %1740 = vmatpush2.msra.mxu0 0.0
    %1741 = vmatprep.mubr.f32.mxu0 0.0
    %1742 = vmatmul.mubr.f32.gmra.mxu0 %v1660
    %v1743 = vpop.f32.mrf.mxu0
    %v1744 = vadd.f32 0.0, %v1743
    %v1745 = vpop.f32.mrf.mxu0
    %1746 = vdwg.mxu0
    %v1747 = vadd.f32 %v1657, %v1744
    %v1748 = vld [vmem:[%s433] sm:$0xf]
    %v1749 = vld [vmem:[%s944] sm:$0xff]
    %v1750 = vld [vmem:[%s944 + $0x8] sm:$0xff]
    %v1751 = vld [vmem:[%s944 + $0x10] sm:$0xff]
    %v1752 = vld [vmem:[%s944 + $0x18] sm:$0xff]
    %v1753 = vld [vmem:[%s944 + $0x20] sm:$0xff]
    %v1754 = vld [vmem:[%s944 + $0x28] sm:$0xff]
    %v1755 = vld [vmem:[%s944 + $0x30] sm:$0xff]
    %v1756 = vld [vmem:[%s944 + $0x38] sm:$0xff]
    %v1757 = vld [vmem:[%s944 + $0x40] sm:$0xff]
    %v1758 = vld [vmem:[%s944 + $0x48] sm:$0xff]
    %v1759 = vld [vmem:[%s944 + $0x50] sm:$0xff]
    %v1760 = vld [vmem:[%s944 + $0x58] sm:$0xff]
    %v1761 = vld [vmem:[%s944 + $0x60] sm:$0xff]
    %v1762 = vld [vmem:[%s944 + $0x68] sm:$0xff]
    %v1763 = vld [vmem:[%s944 + $0x70] sm:$0xff]
    %v1764 = vld [vmem:[%s944 + $0x78] sm:$0xff]
    %1765 = vmatprep.subr.mxu0 0.0
    %1766 = vmatpush1.msra.mxu0 %v1764
    %1767 = vmatprep.subr.mxu0 0.0
    %1768 = vmatpush1.msra.mxu0 %v1763
    %1769 = vmatprep.subr.mxu0 0.0
    %1770 = vmatpush1.msra.mxu0 %v1762
    %1771 = vmatprep.subr.mxu0 0.0
    %1772 = vmatpush1.msra.mxu0 %v1761
    %1773 = vmatprep.subr.mxu0 0.0
    %1774 = vmatpush1.msra.mxu0 %v1760
    %1775 = vmatprep.subr.mxu0 0.0
    %1776 = vmatpush1.msra.mxu0 %v1759
    %1777 = vmatprep.subr.mxu0 0.0
    %1778 = vmatpush1.msra.mxu0 %v1758
    %1779 = vmatprep.subr.mxu0 0.0
    %1780 = vmatpush1.msra.mxu0 %v1757
    %1781 = vmatprep.subr.mxu0 0.0
    %1782 = vmatpush1.msra.mxu0 %v1756
    %1783 = vmatprep.subr.mxu0 0.0
    %1784 = vmatpush1.msra.mxu0 %v1755
    %1785 = vmatprep.subr.mxu0 0.0
    %1786 = vmatpush1.msra.mxu0 %v1754
    %1787 = vmatprep.subr.mxu0 0.0
    %1788 = vmatpush1.msra.mxu0 %v1753
    %1789 = vmatprep.subr.mxu0 0.0
    %1790 = vmatpush1.msra.mxu0 %v1752
    %1791 = vmatprep.subr.mxu0 0.0
    %1792 = vmatpush1.msra.mxu0 %v1751
    %1793 = vmatprep.subr.mxu0 0.0
    %1794 = vmatpush1.msra.mxu0 %v1750
    %1795 = vmatprep.subr.mxu0 0.0
    %1796 = vmatpush1.msra.mxu0 %v1749
    %1797 = vmatprep.subr.mxu0 0.0
    %1798 = vmatpush2.msra.mxu0 0.0
    %1799 = vmatprep.subr.mxu0 0.0
    %1800 = vmatpush2.msra.mxu0 0.0
    %1801 = vmatprep.subr.mxu0 0.0
    %1802 = vmatpush2.msra.mxu0 0.0
    %1803 = vmatprep.subr.mxu0 0.0
    %1804 = vmatpush2.msra.mxu0 0.0
    %1805 = vmatprep.subr.mxu0 0.0
    %1806 = vmatpush2.msra.mxu0 0.0
    %1807 = vmatprep.subr.mxu0 0.0
    %1808 = vmatpush2.msra.mxu0 0.0
    %1809 = vmatprep.subr.mxu0 0.0
    %1810 = vmatpush2.msra.mxu0 0.0
    %1811 = vmatprep.subr.mxu0 0.0
    %1812 = vmatpush2.msra.mxu0 0.0
    %1813 = vmatprep.subr.mxu0 0.0
    %1814 = vmatpush2.msra.mxu0 0.0
    %1815 = vmatprep.subr.mxu0 0.0
    %1816 = vmatpush2.msra.mxu0 0.0
    %1817 = vmatprep.subr.mxu0 0.0
    %1818 = vmatpush2.msra.mxu0 0.0
    %1819 = vmatprep.subr.mxu0 0.0
    %1820 = vmatpush2.msra.mxu0 0.0
    %1821 = vmatprep.subr.mxu0 0.0
    %1822 = vmatpush2.msra.mxu0 0.0
    %1823 = vmatprep.subr.mxu0 0.0
    %1824 = vmatpush2.msra.mxu0 0.0
    %1825 = vmatprep.subr.mxu0 0.0
    %1826 = vmatpush2.msra.mxu0 0.0
    %1827 = vmatprep.subr.mxu0 0.0
    %1828 = vmatpush2.msra.mxu0 0.0
    %1829 = vmatprep.mubr.f32.mxu0 0.0
    %1830 = vmatmul.mubr.f32.gmra.mxu0 %v1748
    %v1831 = vpop.f32.mrf.mxu0
    %v1832 = vadd.f32 0.0, %v1831
    %v1833 = vpop.f32.mrf.mxu0
    %1834 = vdwg.mxu0
    %v1835 = vadd.f32 %v1747, %v1832
    %v1836 = vld [vmem:[%s433 + $0x1] sm:$0xf]
    %v1837 = vld [vmem:[%s1033] sm:$0xff]
    %v1838 = vld [vmem:[%s1033 + $0x8] sm:$0xff]
    %v1839 = vld [vmem:[%s1033 + $0x10] sm:$0xff]
    %v1840 = vld [vmem:[%s1033 + $0x18] sm:$0xff]
    %v1841 = vld [vmem:[%s1033 + $0x20] sm:$0xff]
    %v1842 = vld [vmem:[%s1033 + $0x28] sm:$0xff]
    %v1843 = vld [vmem:[%s1033 + $0x30] sm:$0xff]
    %v1844 = vld [vmem:[%s1033 + $0x38] sm:$0xff]
    %v1845 = vld [vmem:[%s1033 + $0x40] sm:$0xff]
    %v1846 = vld [vmem:[%s1033 + $0x48] sm:$0xff]
    %v1847 = vld [vmem:[%s1033 + $0x50] sm:$0xff]
    %v1848 = vld [vmem:[%s1033 + $0x58] sm:$0xff]
    %v1849 = vld [vmem:[%s1033 + $0x60] sm:$0xff]
    %v1850 = vld [vmem:[%s1033 + $0x68] sm:$0xff]
    %v1851 = vld [vmem:[%s1033 + $0x70] sm:$0xff]
    %v1852 = vld [vmem:[%s1033 + $0x78] sm:$0xff]
    %1853 = vmatprep.subr.mxu0 0.0
    %1854 = vmatpush1.msra.mxu0 %v1852
    %1855 = vmatprep.subr.mxu0 0.0
    %1856 = vmatpush1.msra.mxu0 %v1851
    %1857 = vmatprep.subr.mxu0 0.0
    %1858 = vmatpush1.msra.mxu0 %v1850
    %1859 = vmatprep.subr.mxu0 0.0
    %1860 = vmatpush1.msra.mxu0 %v1849
    %1861 = vmatprep.subr.mxu0 0.0
    %1862 = vmatpush1.msra.mxu0 %v1848
    %1863 = vmatprep.subr.mxu0 0.0
    %1864 = vmatpush1.msra.mxu0 %v1847
    %1865 = vmatprep.subr.mxu0 0.0
    %1866 = vmatpush1.msra.mxu0 %v1846
    %1867 = vmatprep.subr.mxu0 0.0
    %1868 = vmatpush1.msra.mxu0 %v1845
    %1869 = vmatprep.subr.mxu0 0.0
    %1870 = vmatpush1.msra.mxu0 %v1844
    %1871 = vmatprep.subr.mxu0 0.0
    %1872 = vmatpush1.msra.mxu0 %v1843
    %1873 = vmatprep.subr.mxu0 0.0
    %1874 = vmatpush1.msra.mxu0 %v1842
    %1875 = vmatprep.subr.mxu0 0.0
    %1876 = vmatpush1.msra.mxu0 %v1841
    %1877 = vmatprep.subr.mxu0 0.0
    %1878 = vmatpush1.msra.mxu0 %v1840
    %1879 = vmatprep.subr.mxu0 0.0
    %1880 = vmatpush1.msra.mxu0 %v1839
    %1881 = vmatprep.subr.mxu0 0.0
    %1882 = vmatpush1.msra.mxu0 %v1838
    %1883 = vmatprep.subr.mxu0 0.0
    %1884 = vmatpush1.msra.mxu0 %v1837
    %1885 = vmatprep.subr.mxu0 0.0
    %1886 = vmatpush2.msra.mxu0 0.0
    %1887 = vmatprep.subr.mxu0 0.0
    %1888 = vmatpush2.msra.mxu0 0.0
    %1889 = vmatprep.subr.mxu0 0.0
    %1890 = vmatpush2.msra.mxu0 0.0
    %1891 = vmatprep.subr.mxu0 0.0
    %1892 = vmatpush2.msra.mxu0 0.0
    %1893 = vmatprep.subr.mxu0 0.0
    %1894 = vmatpush2.msra.mxu0 0.0
    %1895 = vmatprep.subr.mxu0 0.0
    %1896 = vmatpush2.msra.mxu0 0.0
    %1897 = vmatprep.subr.mxu0 0.0
    %1898 = vmatpush2.msra.mxu0 0.0
    %1899 = vmatprep.subr.mxu0 0.0
    %1900 = vmatpush2.msra.mxu0 0.0
    %1901 = vmatprep.subr.mxu0 0.0
    %1902 = vmatpush2.msra.mxu0 0.0
    %1903 = vmatprep.subr.mxu0 0.0
    %1904 = vmatpush2.msra.mxu0 0.0
    %1905 = vmatprep.subr.mxu0 0.0
    %1906 = vmatpush2.msra.mxu0 0.0
    %1907 = vmatprep.subr.mxu0 0.0
    %1908 = vmatpush2.msra.mxu0 0.0
    %1909 = vmatprep.subr.mxu0 0.0
    %1910 = vmatpush2.msra.mxu0 0.0
    %1911 = vmatprep.subr.mxu0 0.0
    %1912 = vmatpush2.msra.mxu0 0.0
    %1913 = vmatprep.subr.mxu0 0.0
    %1914 = vmatpush2.msra.mxu0 0.0
    %1915 = vmatprep.subr.mxu0 0.0
    %1916 = vmatpush2.msra.mxu0 0.0
    %1917 = vmatprep.mubr.f32.mxu0 0.0
    %1918 = vmatmul.mubr.f32.gmra.mxu0 %v1836
    %v1919 = vpop.f32.mrf.mxu0
    %v1920 = vadd.f32 0.0, %v1919
    %v1921 = vpop.f32.mrf.mxu0
    %1922 = vdwg.mxu0
    %v1923 = vadd.f32 %v1835, %v1920
    %v1924 = vld [vmem:[%s433 + $0x2] sm:$0xf]
    %v1925 = vld [vmem:[%s1122] sm:$0xff]
    %v1926 = vld [vmem:[%s1122 + $0x8] sm:$0xff]
    %v1927 = vld [vmem:[%s1122 + $0x10] sm:$0xff]
    %v1928 = vld [vmem:[%s1122 + $0x18] sm:$0xff]
    %v1929 = vld [vmem:[%s1122 + $0x20] sm:$0xff]
    %v1930 = vld [vmem:[%s1122 + $0x28] sm:$0xff]
    %v1931 = vld [vmem:[%s1122 + $0x30] sm:$0xff]
    %v1932 = vld [vmem:[%s1122 + $0x38] sm:$0xff]
    %v1933 = vld [vmem:[%s1122 + $0x40] sm:$0xff]
    %v1934 = vld [vmem:[%s1122 + $0x48] sm:$0xff]
    %v1935 = vld [vmem:[%s1122 + $0x50] sm:$0xff]
    %v1936 = vld [vmem:[%s1122 + $0x58] sm:$0xff]
    %v1937 = vld [vmem:[%s1122 + $0x60] sm:$0xff]
    %v1938 = vld [vmem:[%s1122 + $0x68] sm:$0xff]
    %v1939 = vld [vmem:[%s1122 + $0x70] sm:$0xff]
    %v1940 = vld [vmem:[%s1122 + $0x78] sm:$0xff]
    %1941 = vmatprep.subr.mxu0 0.0
    %1942 = vmatpush1.msra.mxu0 %v1940
    %1943 = vmatprep.subr.mxu0 0.0
    %1944 = vmatpush1.msra.mxu0 %v1939
    %1945 = vmatprep.subr.mxu0 0.0
    %1946 = vmatpush1.msra.mxu0 %v1938
    %1947 = vmatprep.subr.mxu0 0.0
    %1948 = vmatpush1.msra.mxu0 %v1937
    %1949 = vmatprep.subr.mxu0 0.0
    %1950 = vmatpush1.msra.mxu0 %v1936
    %1951 = vmatprep.subr.mxu0 0.0
    %1952 = vmatpush1.msra.mxu0 %v1935
    %1953 = vmatprep.subr.mxu0 0.0
    %1954 = vmatpush1.msra.mxu0 %v1934
    %1955 = vmatprep.subr.mxu0 0.0
    %1956 = vmatpush1.msra.mxu0 %v1933
    %1957 = vmatprep.subr.mxu0 0.0
    %1958 = vmatpush1.msra.mxu0 %v1932
    %1959 = vmatprep.subr.mxu0 0.0
    %1960 = vmatpush1.msra.mxu0 %v1931
    %1961 = vmatprep.subr.mxu0 0.0
    %1962 = vmatpush1.msra.mxu0 %v1930
    %1963 = vmatprep.subr.mxu0 0.0
    %1964 = vmatpush1.msra.mxu0 %v1929
    %1965 = vmatprep.subr.mxu0 0.0
    %1966 = vmatpush1.msra.mxu0 %v1928
    %1967 = vmatprep.subr.mxu0 0.0
    %1968 = vmatpush1.msra.mxu0 %v1927
    %1969 = vmatprep.subr.mxu0 0.0
    %1970 = vmatpush1.msra.mxu0 %v1926
    %1971 = vmatprep.subr.mxu0 0.0
    %1972 = vmatpush1.msra.mxu0 %v1925
    %1973 = vmatprep.subr.mxu0 0.0
    %1974 = vmatpush2.msra.mxu0 0.0
    %1975 = vmatprep.subr.mxu0 0.0
    %1976 = vmatpush2.msra.mxu0 0.0
    %1977 = vmatprep.subr.mxu0 0.0
    %1978 = vmatpush2.msra.mxu0 0.0
    %1979 = vmatprep.subr.mxu0 0.0
    %1980 = vmatpush2.msra.mxu0 0.0
    %1981 = vmatprep.subr.mxu0 0.0
    %1982 = vmatpush2.msra.mxu0 0.0
    %1983 = vmatprep.subr.mxu0 0.0
    %1984 = vmatpush2.msra.mxu0 0.0
    %1985 = vmatprep.subr.mxu0 0.0
    %1986 = vmatpush2.msra.mxu0 0.0
    %1987 = vmatprep.subr.mxu0 0.0
    %1988 = vmatpush2.msra.mxu0 0.0
    %1989 = vmatprep.subr.mxu0 0.0
    %1990 = vmatpush2.msra.mxu0 0.0
    %1991 = vmatprep.subr.mxu0 0.0
    %1992 = vmatpush2.msra.mxu0 0.0
    %1993 = vmatprep.subr.mxu0 0.0
    %1994 = vmatpush2.msra.mxu0 0.0
    %1995 = vmatprep.subr.mxu0 0.0
    %1996 = vmatpush2.msra.mxu0 0.0
    %1997 = vmatprep.subr.mxu0 0.0
    %1998 = vmatpush2.msra.mxu0 0.0
    %1999 = vmatprep.subr.mxu0 0.0
    %2000 = vmatpush2.msra.mxu0 0.0
    %2001 = vmatprep.subr.mxu0 0.0
    %2002 = vmatpush2.msra.mxu0 0.0
    %2003 = vmatprep.subr.mxu0 0.0
    %2004 = vmatpush2.msra.mxu0 0.0
    %2005 = vmatprep.mubr.f32.mxu0 0.0
    %2006 = vmatmul.mubr.f32.gmra.mxu0 %v1924
    %v2007 = vpop.f32.mrf.mxu0
    %v2008 = vadd.f32 0.0, %v2007
    %v2009 = vpop.f32.mrf.mxu0
    %2010 = vdwg.mxu0
    %v2011 = vadd.f32 %v1923, %v2008
    %v2012 = vld [vmem:[%s554] sm:$0xf]
    %v2013 = vld [vmem:[%s1211] sm:$0xff]
    %v2014 = vld [vmem:[%s1211 + $0x8] sm:$0xff]
    %v2015 = vld [vmem:[%s1211 + $0x10] sm:$0xff]
    %v2016 = vld [vmem:[%s1211 + $0x18] sm:$0xff]
    %v2017 = vld [vmem:[%s1211 + $0x20] sm:$0xff]
    %v2018 = vld [vmem:[%s1211 + $0x28] sm:$0xff]
    %v2019 = vld [vmem:[%s1211 + $0x30] sm:$0xff]
    %v2020 = vld [vmem:[%s1211 + $0x38] sm:$0xff]
    %v2021 = vld [vmem:[%s1211 + $0x40] sm:$0xff]
    %v2022 = vld [vmem:[%s1211 + $0x48] sm:$0xff]
    %v2023 = vld [vmem:[%s1211 + $0x50] sm:$0xff]
    %v2024 = vld [vmem:[%s1211 + $0x58] sm:$0xff]
    %v2025 = vld [vmem:[%s1211 + $0x60] sm:$0xff]
    %v2026 = vld [vmem:[%s1211 + $0x68] sm:$0xff]
    %v2027 = vld [vmem:[%s1211 + $0x70] sm:$0xff]
    %v2028 = vld [vmem:[%s1211 + $0x78] sm:$0xff]
    %2029 = vmatprep.subr.mxu0 0.0
    %2030 = vmatpush1.msra.mxu0 %v2028
    %2031 = vmatprep.subr.mxu0 0.0
    %2032 = vmatpush1.msra.mxu0 %v2027
    %2033 = vmatprep.subr.mxu0 0.0
    %2034 = vmatpush1.msra.mxu0 %v2026
    %2035 = vmatprep.subr.mxu0 0.0
    %2036 = vmatpush1.msra.mxu0 %v2025
    %2037 = vmatprep.subr.mxu0 0.0
    %2038 = vmatpush1.msra.mxu0 %v2024
    %2039 = vmatprep.subr.mxu0 0.0
    %2040 = vmatpush1.msra.mxu0 %v2023
    %2041 = vmatprep.subr.mxu0 0.0
    %2042 = vmatpush1.msra.mxu0 %v2022
    %2043 = vmatprep.subr.mxu0 0.0
    %2044 = vmatpush1.msra.mxu0 %v2021
    %2045 = vmatprep.subr.mxu0 0.0
    %2046 = vmatpush1.msra.mxu0 %v2020
    %2047 = vmatprep.subr.mxu0 0.0
    %2048 = vmatpush1.msra.mxu0 %v2019
    %2049 = vmatprep.subr.mxu0 0.0
    %2050 = vmatpush1.msra.mxu0 %v2018
    %2051 = vmatprep.subr.mxu0 0.0
    %2052 = vmatpush1.msra.mxu0 %v2017
    %2053 = vmatprep.subr.mxu0 0.0
    %2054 = vmatpush1.msra.mxu0 %v2016
    %2055 = vmatprep.subr.mxu0 0.0
    %2056 = vmatpush1.msra.mxu0 %v2015
    %2057 = vmatprep.subr.mxu0 0.0
    %2058 = vmatpush1.msra.mxu0 %v2014
    %2059 = vmatprep.subr.mxu0 0.0
    %2060 = vmatpush1.msra.mxu0 %v2013
    %2061 = vmatprep.subr.mxu0 0.0
    %2062 = vmatpush2.msra.mxu0 0.0
    %2063 = vmatprep.subr.mxu0 0.0
    %2064 = vmatpush2.msra.mxu0 0.0
    %2065 = vmatprep.subr.mxu0 0.0
    %2066 = vmatpush2.msra.mxu0 0.0
    %2067 = vmatprep.subr.mxu0 0.0
    %2068 = vmatpush2.msra.mxu0 0.0
    %2069 = vmatprep.subr.mxu0 0.0
    %2070 = vmatpush2.msra.mxu0 0.0
    %2071 = vmatprep.subr.mxu0 0.0
    %2072 = vmatpush2.msra.mxu0 0.0
    %2073 = vmatprep.subr.mxu0 0.0
    %2074 = vmatpush2.msra.mxu0 0.0
    %2075 = vmatprep.subr.mxu0 0.0
    %2076 = vmatpush2.msra.mxu0 0.0
    %2077 = vmatprep.subr.mxu0 0.0
    %2078 = vmatpush2.msra.mxu0 0.0
    %2079 = vmatprep.subr.mxu0 0.0
    %2080 = vmatpush2.msra.mxu0 0.0
    %2081 = vmatprep.subr.mxu0 0.0
    %2082 = vmatpush2.msra.mxu0 0.0
    %2083 = vmatprep.subr.mxu0 0.0
    %2084 = vmatpush2.msra.mxu0 0.0
    %2085 = vmatprep.subr.mxu0 0.0
    %2086 = vmatpush2.msra.mxu0 0.0
    %2087 = vmatprep.subr.mxu0 0.0
    %2088 = vmatpush2.msra.mxu0 0.0
    %2089 = vmatprep.subr.mxu0 0.0
    %2090 = vmatpush2.msra.mxu0 0.0
    %2091 = vmatprep.subr.mxu0 0.0
    %2092 = vmatpush2.msra.mxu0 0.0
    %2093 = vmatprep.mubr.f32.mxu0 0.0
    %2094 = vmatmul.mubr.f32.gmra.mxu0 %v2012
    %v2095 = vpop.f32.mrf.mxu0
    %v2096 = vadd.f32 0.0, %v2095
    %v2097 = vpop.f32.mrf.mxu0
    %2098 = vdwg.mxu0
    %v2099 = vadd.f32 %v2011, %v2096
    %v2100 = vld [vmem:[%s554 + $0x1] sm:$0xf]
    %v2101 = vld [vmem:[%s1300] sm:$0xff]
    %v2102 = vld [vmem:[%s1300 + $0x8] sm:$0xff]
    %v2103 = vld [vmem:[%s1300 + $0x10] sm:$0xff]
    %v2104 = vld [vmem:[%s1300 + $0x18] sm:$0xff]
    %v2105 = vld [vmem:[%s1300 + $0x20] sm:$0xff]
    %v2106 = vld [vmem:[%s1300 + $0x28] sm:$0xff]
    %v2107 = vld [vmem:[%s1300 + $0x30] sm:$0xff]
    %v2108 = vld [vmem:[%s1300 + $0x38] sm:$0xff]
    %v2109 = vld [vmem:[%s1300 + $0x40] sm:$0xff]
    %v2110 = vld [vmem:[%s1300 + $0x48] sm:$0xff]
    %v2111 = vld [vmem:[%s1300 + $0x50] sm:$0xff]
    %v2112 = vld [vmem:[%s1300 + $0x58] sm:$0xff]
    %v2113 = vld [vmem:[%s1300 + $0x60] sm:$0xff]
    %v2114 = vld [vmem:[%s1300 + $0x68] sm:$0xff]
    %v2115 = vld [vmem:[%s1300 + $0x70] sm:$0xff]
    %v2116 = vld [vmem:[%s1300 + $0x78] sm:$0xff]
    %2117 = vmatprep.subr.mxu0 0.0
    %2118 = vmatpush1.msra.mxu0 %v2116
    %2119 = vmatprep.subr.mxu0 0.0
    %2120 = vmatpush1.msra.mxu0 %v2115
    %2121 = vmatprep.subr.mxu0 0.0
    %2122 = vmatpush1.msra.mxu0 %v2114
    %2123 = vmatprep.subr.mxu0 0.0
    %2124 = vmatpush1.msra.mxu0 %v2113
    %2125 = vmatprep.subr.mxu0 0.0
    %2126 = vmatpush1.msra.mxu0 %v2112
    %2127 = vmatprep.subr.mxu0 0.0
    %2128 = vmatpush1.msra.mxu0 %v2111
    %2129 = vmatprep.subr.mxu0 0.0
    %2130 = vmatpush1.msra.mxu0 %v2110
    %2131 = vmatprep.subr.mxu0 0.0
    %2132 = vmatpush1.msra.mxu0 %v2109
    %2133 = vmatprep.subr.mxu0 0.0
    %2134 = vmatpush1.msra.mxu0 %v2108
    %2135 = vmatprep.subr.mxu0 0.0
    %2136 = vmatpush1.msra.mxu0 %v2107
    %2137 = vmatprep.subr.mxu0 0.0
    %2138 = vmatpush1.msra.mxu0 %v2106
    %2139 = vmatprep.subr.mxu0 0.0
    %2140 = vmatpush1.msra.mxu0 %v2105
    %2141 = vmatprep.subr.mxu0 0.0
    %2142 = vmatpush1.msra.mxu0 %v2104
    %2143 = vmatprep.subr.mxu0 0.0
    %2144 = vmatpush1.msra.mxu0 %v2103
    %2145 = vmatprep.subr.mxu0 0.0
    %2146 = vmatpush1.msra.mxu0 %v2102
    %2147 = vmatprep.subr.mxu0 0.0
    %2148 = vmatpush1.msra.mxu0 %v2101
    %2149 = vmatprep.subr.mxu0 0.0
    %2150 = vmatpush2.msra.mxu0 0.0
    %2151 = vmatprep.subr.mxu0 0.0
    %2152 = vmatpush2.msra.mxu0 0.0
    %2153 = vmatprep.subr.mxu0 0.0
    %2154 = vmatpush2.msra.mxu0 0.0
    %2155 = vmatprep.subr.mxu0 0.0
    %2156 = vmatpush2.msra.mxu0 0.0
    %2157 = vmatprep.subr.mxu0 0.0
    %2158 = vmatpush2.msra.mxu0 0.0
    %2159 = vmatprep.subr.mxu0 0.0
    %2160 = vmatpush2.msra.mxu0 0.0
    %2161 = vmatprep.subr.mxu0 0.0
    %2162 = vmatpush2.msra.mxu0 0.0
    %2163 = vmatprep.subr.mxu0 0.0
    %2164 = vmatpush2.msra.mxu0 0.0
    %2165 = vmatprep.subr.mxu0 0.0
    %2166 = vmatpush2.msra.mxu0 0.0
    %2167 = vmatprep.subr.mxu0 0.0
    %2168 = vmatpush2.msra.mxu0 0.0
    %2169 = vmatprep.subr.mxu0 0.0
    %2170 = vmatpush2.msra.mxu0 0.0
    %2171 = vmatprep.subr.mxu0 0.0
    %2172 = vmatpush2.msra.mxu0 0.0
    %2173 = vmatprep.subr.mxu0 0.0
    %2174 = vmatpush2.msra.mxu0 0.0
    %2175 = vmatprep.subr.mxu0 0.0
    %2176 = vmatpush2.msra.mxu0 0.0
    %2177 = vmatprep.subr.mxu0 0.0
    %2178 = vmatpush2.msra.mxu0 0.0
    %2179 = vmatprep.subr.mxu0 0.0
    %2180 = vmatpush2.msra.mxu0 0.0
    %2181 = vmatprep.mubr.f32.mxu0 0.0
    %2182 = vmatmul.mubr.f32.gmra.mxu0 %v2100
    %v2183 = vpop.f32.mrf.mxu0
    %v2184 = vadd.f32 0.0, %v2183
    %v2185 = vpop.f32.mrf.mxu0
    %2186 = vdwg.mxu0
    %v2187 = vadd.f32 %v2099, %v2184
    %v2188 = vld [vmem:[%s554 + $0x2] sm:$0xf]
    %v2189 = vld [vmem:[%s1389] sm:$0xff]
    %v2190 = vld [vmem:[%s1389 + $0x8] sm:$0xff]
    %v2191 = vld [vmem:[%s1389 + $0x10] sm:$0xff]
    %v2192 = vld [vmem:[%s1389 + $0x18] sm:$0xff]
    %v2193 = vld [vmem:[%s1389 + $0x20] sm:$0xff]
    %v2194 = vld [vmem:[%s1389 + $0x28] sm:$0xff]
    %v2195 = vld [vmem:[%s1389 + $0x30] sm:$0xff]
    %v2196 = vld [vmem:[%s1389 + $0x38] sm:$0xff]
    %v2197 = vld [vmem:[%s1389 + $0x40] sm:$0xff]
    %v2198 = vld [vmem:[%s1389 + $0x48] sm:$0xff]
    %v2199 = vld [vmem:[%s1389 + $0x50] sm:$0xff]
    %v2200 = vld [vmem:[%s1389 + $0x58] sm:$0xff]
    %v2201 = vld [vmem:[%s1389 + $0x60] sm:$0xff]
    %v2202 = vld [vmem:[%s1389 + $0x68] sm:$0xff]
    %v2203 = vld [vmem:[%s1389 + $0x70] sm:$0xff]
    %v2204 = vld [vmem:[%s1389 + $0x78] sm:$0xff]
    %2205 = vmatprep.subr.mxu0 0.0
    %2206 = vmatpush1.msra.mxu0 %v2204
    %2207 = vmatprep.subr.mxu0 0.0
    %2208 = vmatpush1.msra.mxu0 %v2203
    %2209 = vmatprep.subr.mxu0 0.0
    %2210 = vmatpush1.msra.mxu0 %v2202
    %2211 = vmatprep.subr.mxu0 0.0
    %2212 = vmatpush1.msra.mxu0 %v2201
    %2213 = vmatprep.subr.mxu0 0.0
    %2214 = vmatpush1.msra.mxu0 %v2200
    %2215 = vmatprep.subr.mxu0 0.0
    %2216 = vmatpush1.msra.mxu0 %v2199
    %2217 = vmatprep.subr.mxu0 0.0
    %2218 = vmatpush1.msra.mxu0 %v2198
    %2219 = vmatprep.subr.mxu0 0.0
    %2220 = vmatpush1.msra.mxu0 %v2197
    %2221 = vmatprep.subr.mxu0 0.0
    %2222 = vmatpush1.msra.mxu0 %v2196
    %2223 = vmatprep.subr.mxu0 0.0
    %2224 = vmatpush1.msra.mxu0 %v2195
    %2225 = vmatprep.subr.mxu0 0.0
    %2226 = vmatpush1.msra.mxu0 %v2194
    %2227 = vmatprep.subr.mxu0 0.0
    %2228 = vmatpush1.msra.mxu0 %v2193
    %2229 = vmatprep.subr.mxu0 0.0
    %2230 = vmatpush1.msra.mxu0 %v2192
    %2231 = vmatprep.subr.mxu0 0.0
    %2232 = vmatpush1.msra.mxu0 %v2191
    %2233 = vmatprep.subr.mxu0 0.0
    %2234 = vmatpush1.msra.mxu0 %v2190
    %2235 = vmatprep.subr.mxu0 0.0
    %2236 = vmatpush1.msra.mxu0 %v2189
    %2237 = vmatprep.subr.mxu0 0.0
    %2238 = vmatpush2.msra.mxu0 0.0
    %2239 = vmatprep.subr.mxu0 0.0
    %2240 = vmatpush2.msra.mxu0 0.0
    %2241 = vmatprep.subr.mxu0 0.0
    %2242 = vmatpush2.msra.mxu0 0.0
    %2243 = vmatprep.subr.mxu0 0.0
    %2244 = vmatpush2.msra.mxu0 0.0
    %2245 = vmatprep.subr.mxu0 0.0
    %2246 = vmatpush2.msra.mxu0 0.0
    %2247 = vmatprep.subr.mxu0 0.0
    %2248 = vmatpush2.msra.mxu0 0.0
    %2249 = vmatprep.subr.mxu0 0.0
    %2250 = vmatpush2.msra.mxu0 0.0
    %2251 = vmatprep.subr.mxu0 0.0
    %2252 = vmatpush2.msra.mxu0 0.0
    %2253 = vmatprep.subr.mxu0 0.0
    %2254 = vmatpush2.msra.mxu0 0.0
    %2255 = vmatprep.subr.mxu0 0.0
    %2256 = vmatpush2.msra.mxu0 0.0
    %2257 = vmatprep.subr.mxu0 0.0
    %2258 = vmatpush2.msra.mxu0 0.0
    %2259 = vmatprep.subr.mxu0 0.0
    %2260 = vmatpush2.msra.mxu0 0.0
    %2261 = vmatprep.subr.mxu0 0.0
    %2262 = vmatpush2.msra.mxu0 0.0
    %2263 = vmatprep.subr.mxu0 0.0
    %2264 = vmatpush2.msra.mxu0 0.0
    %2265 = vmatprep.subr.mxu0 0.0
    %2266 = vmatpush2.msra.mxu0 0.0
    %2267 = vmatprep.subr.mxu0 0.0
    %2268 = vmatpush2.msra.mxu0 0.0
    %2269 = vmatprep.mubr.f32.mxu0 0.0
    %2270 = vmatmul.mubr.f32.gmra.mxu0 %v2188
    %v2271 = vpop.f32.mrf.mxu0
    %v2272 = vadd.f32 0.0, %v2271
    %v2273 = vpop.f32.mrf.mxu0
    %2274 = vdwg.mxu0
    %v2275 = vadd.f32 %v2187, %v2272
    %v2276 = vadd.f32 %v2275, %v1481
    %v2277 = vmax.f32 %v2276, 0.0
    %2278 = vst [vmem:[#allocation4 + $0x4] sm:$0xf] %v2277
    %v2279 = vld [vmem:[%s433] sm:$0xf]
    %v2280 = vld [vmem:[#allocation12] sm:$0xff]
    %v2281 = vld [vmem:[#allocation12 + $0x8] sm:$0xff]
    %v2282 = vld [vmem:[#allocation12 + $0x10] sm:$0xff]
    %v2283 = vld [vmem:[#allocation12 + $0x18] sm:$0xff]
    %v2284 = vld [vmem:[#allocation12 + $0x20] sm:$0xff]
    %v2285 = vld [vmem:[#allocation12 + $0x28] sm:$0xff]
    %v2286 = vld [vmem:[#allocation12 + $0x30] sm:$0xff]
    %v2287 = vld [vmem:[#allocation12 + $0x38] sm:$0xff]
    %v2288 = vld [vmem:[#allocation12 + $0x40] sm:$0xff]
    %v2289 = vld [vmem:[#allocation12 + $0x48] sm:$0xff]
    %v2290 = vld [vmem:[#allocation12 + $0x50] sm:$0xff]
    %v2291 = vld [vmem:[#allocation12 + $0x58] sm:$0xff]
    %v2292 = vld [vmem:[#allocation12 + $0x60] sm:$0xff]
    %v2293 = vld [vmem:[#allocation12 + $0x68] sm:$0xff]
    %v2294 = vld [vmem:[#allocation12 + $0x70] sm:$0xff]
    %v2295 = vld [vmem:[#allocation12 + $0x78] sm:$0xff]
    %v2296 = vld [vmem:[%s433 + $0x1] sm:$0xf]
    %v2297 = vld [vmem:[%s697] sm:$0xff]
    %v2298 = vld [vmem:[%s697 + $0x8] sm:$0xff]
    %v2299 = vld [vmem:[%s697 + $0x10] sm:$0xff]
    %v2300 = vld [vmem:[%s697 + $0x18] sm:$0xff]
    %v2301 = vld [vmem:[%s697 + $0x20] sm:$0xff]
    %v2302 = vld [vmem:[%s697 + $0x28] sm:$0xff]
    %v2303 = vld [vmem:[%s697 + $0x30] sm:$0xff]
    %v2304 = vld [vmem:[%s697 + $0x38] sm:$0xff]
    %v2305 = vld [vmem:[%s697 + $0x40] sm:$0xff]
    %v2306 = vld [vmem:[%s697 + $0x48] sm:$0xff]
    %v2307 = vld [vmem:[%s697 + $0x50] sm:$0xff]
    %v2308 = vld [vmem:[%s697 + $0x58] sm:$0xff]
    %v2309 = vld [vmem:[%s697 + $0x60] sm:$0xff]
    %v2310 = vld [vmem:[%s697 + $0x68] sm:$0xff]
    %v2311 = vld [vmem:[%s697 + $0x70] sm:$0xff]
    %v2312 = vld [vmem:[%s697 + $0x78] sm:$0xff]
    %2313 = vmatprep.subr.mxu0 0.0
    %2314 = vmatpush1.msra.mxu0 %v2312
    %2315 = vmatprep.subr.mxu0 0.0
    %2316 = vmatpush1.msra.mxu0 %v2311
    %2317 = vmatprep.subr.mxu0 0.0
    %2318 = vmatpush1.msra.mxu0 %v2310
    %2319 = vmatprep.subr.mxu0 0.0
    %2320 = vmatpush1.msra.mxu0 %v2309
    %2321 = vmatprep.subr.mxu0 0.0
    %2322 = vmatpush1.msra.mxu0 %v2308
    %2323 = vmatprep.subr.mxu0 0.0
    %2324 = vmatpush1.msra.mxu0 %v2307
    %2325 = vmatprep.subr.mxu0 0.0
    %2326 = vmatpush1.msra.mxu0 %v2306
    %2327 = vmatprep.subr.mxu0 0.0
    %2328 = vmatpush1.msra.mxu0 %v2305
    %2329 = vmatprep.subr.mxu0 0.0
    %2330 = vmatpush1.msra.mxu0 %v2304
    %2331 = vmatprep.subr.mxu0 0.0
    %2332 = vmatpush1.msra.mxu0 %v2303
    %2333 = vmatprep.subr.mxu0 0.0
    %2334 = vmatpush1.msra.mxu0 %v2302
    %2335 = vmatprep.subr.mxu0 0.0
    %2336 = vmatpush1.msra.mxu0 %v2301
    %2337 = vmatprep.subr.mxu0 0.0
    %2338 = vmatpush1.msra.mxu0 %v2300
    %2339 = vmatprep.subr.mxu0 0.0
    %2340 = vmatpush1.msra.mxu0 %v2299
    %2341 = vmatprep.subr.mxu0 0.0
    %2342 = vmatpush1.msra.mxu0 %v2298
    %2343 = vmatprep.subr.mxu0 0.0
    %2344 = vmatpush1.msra.mxu0 %v2297
    %2345 = vmatprep.subr.mxu0 0.0
    %2346 = vmatpush2.msra.mxu0 0.0
    %2347 = vmatprep.subr.mxu0 0.0
    %2348 = vmatpush2.msra.mxu0 0.0
    %2349 = vmatprep.subr.mxu0 0.0
    %2350 = vmatpush2.msra.mxu0 0.0
    %2351 = vmatprep.subr.mxu0 0.0
    %2352 = vmatpush2.msra.mxu0 0.0
    %2353 = vmatprep.subr.mxu0 0.0
    %2354 = vmatpush2.msra.mxu0 0.0
    %2355 = vmatprep.subr.mxu0 0.0
    %2356 = vmatpush2.msra.mxu0 0.0
    %2357 = vmatprep.subr.mxu0 0.0
    %2358 = vmatpush2.msra.mxu0 0.0
    %2359 = vmatprep.subr.mxu0 0.0
    %2360 = vmatpush2.msra.mxu0 0.0
    %2361 = vmatprep.subr.mxu0 0.0
    %2362 = vmatpush2.msra.mxu0 0.0
    %2363 = vmatprep.subr.mxu0 0.0
    %2364 = vmatpush2.msra.mxu0 0.0
    %2365 = vmatprep.subr.mxu0 0.0
    %2366 = vmatpush2.msra.mxu0 0.0
    %2367 = vmatprep.subr.mxu0 0.0
    %2368 = vmatpush2.msra.mxu0 0.0
    %2369 = vmatprep.subr.mxu0 0.0
    %2370 = vmatpush2.msra.mxu0 0.0
    %2371 = vmatprep.subr.mxu0 0.0
    %2372 = vmatpush2.msra.mxu0 0.0
    %2373 = vmatprep.subr.mxu0 0.0
    %2374 = vmatpush2.msra.mxu0 0.0
    %2375 = vmatprep.subr.mxu0 0.0
    %2376 = vmatpush2.msra.mxu0 0.0
    %2377 = vmatprep.mubr.f32.mxu0 0.0
    %2378 = vmatmul.mubr.f32.gmra.mxu0 %v2296
    %v2379 = vpop.f32.mrf.mxu0
    %v2380 = vadd.f32 0.0, %v2379
    %v2381 = vpop.f32.mrf.mxu0
    %2382 = vdwg.mxu0
    %2383 = vmatprep.subr.mxu0 0.0
    %2384 = vmatpush1.msra.mxu0 %v2295
    %2385 = vmatprep.subr.mxu0 0.0
    %2386 = vmatpush1.msra.mxu0 %v2294
    %2387 = vmatprep.subr.mxu0 0.0
    %2388 = vmatpush1.msra.mxu0 %v2293
    %2389 = vmatprep.subr.mxu0 0.0
    %2390 = vmatpush1.msra.mxu0 %v2292
    %2391 = vmatprep.subr.mxu0 0.0
    %2392 = vmatpush1.msra.mxu0 %v2291
    %2393 = vmatprep.subr.mxu0 0.0
    %2394 = vmatpush1.msra.mxu0 %v2290
    %2395 = vmatprep.subr.mxu0 0.0
    %2396 = vmatpush1.msra.mxu0 %v2289
    %2397 = vmatprep.subr.mxu0 0.0
    %2398 = vmatpush1.msra.mxu0 %v2288
    %2399 = vmatprep.subr.mxu0 0.0
    %2400 = vmatpush1.msra.mxu0 %v2287
    %2401 = vmatprep.subr.mxu0 0.0
    %2402 = vmatpush1.msra.mxu0 %v2286
    %2403 = vmatprep.subr.mxu0 0.0
    %2404 = vmatpush1.msra.mxu0 %v2285
    %2405 = vmatprep.subr.mxu0 0.0
    %2406 = vmatpush1.msra.mxu0 %v2284
    %2407 = vmatprep.subr.mxu0 0.0
    %2408 = vmatpush1.msra.mxu0 %v2283
    %2409 = vmatprep.subr.mxu0 0.0
    %2410 = vmatpush1.msra.mxu0 %v2282
    %2411 = vmatprep.subr.mxu0 0.0
    %2412 = vmatpush1.msra.mxu0 %v2281
    %2413 = vmatprep.subr.mxu0 0.0
    %2414 = vmatpush1.msra.mxu0 %v2280
    %2415 = vmatprep.subr.mxu0 0.0
    %2416 = vmatpush2.msra.mxu0 0.0
    %2417 = vmatprep.subr.mxu0 0.0
    %2418 = vmatpush2.msra.mxu0 0.0
    %2419 = vmatprep.subr.mxu0 0.0
    %2420 = vmatpush2.msra.mxu0 0.0
    %2421 = vmatprep.subr.mxu0 0.0
    %2422 = vmatpush2.msra.mxu0 0.0
    %2423 = vmatprep.subr.mxu0 0.0
    %2424 = vmatpush2.msra.mxu0 0.0
    %2425 = vmatprep.subr.mxu0 0.0
    %2426 = vmatpush2.msra.mxu0 0.0
    %2427 = vmatprep.subr.mxu0 0.0
    %2428 = vmatpush2.msra.mxu0 0.0
    %2429 = vmatprep.subr.mxu0 0.0
    %2430 = vmatpush2.msra.mxu0 0.0
    %2431 = vmatprep.subr.mxu0 0.0
    %2432 = vmatpush2.msra.mxu0 0.0
    %2433 = vmatprep.subr.mxu0 0.0
    %2434 = vmatpush2.msra.mxu0 0.0
    %2435 = vmatprep.subr.mxu0 0.0
    %2436 = vmatpush2.msra.mxu0 0.0
    %2437 = vmatprep.subr.mxu0 0.0
    %2438 = vmatpush2.msra.mxu0 0.0
    %2439 = vmatprep.subr.mxu0 0.0
    %2440 = vmatpush2.msra.mxu0 0.0
    %2441 = vmatprep.subr.mxu0 0.0
    %2442 = vmatpush2.msra.mxu0 0.0
    %2443 = vmatprep.subr.mxu0 0.0
    %2444 = vmatpush2.msra.mxu0 0.0
    %2445 = vmatprep.subr.mxu0 0.0
    %2446 = vmatpush2.msra.mxu0 0.0
    %2447 = vmatprep.mubr.f32.mxu0 0.0
    %2448 = vmatmul.mubr.f32.gmra.mxu0 %v2279
    %v2449 = vpop.f32.mrf.mxu0
    %v2450 = vadd.f32 %v2380, %v2449
    %v2451 = vpop.f32.mrf.mxu0
    %2452 = vdwg.mxu0
    %v2453 = vld [vmem:[%s433 + $0x2] sm:$0xf]
    %v2454 = vld [vmem:[%s855] sm:$0xff]
    %v2455 = vld [vmem:[%s855 + $0x8] sm:$0xff]
    %v2456 = vld [vmem:[%s855 + $0x10] sm:$0xff]
    %v2457 = vld [vmem:[%s855 + $0x18] sm:$0xff]
    %v2458 = vld [vmem:[%s855 + $0x20] sm:$0xff]
    %v2459 = vld [vmem:[%s855 + $0x28] sm:$0xff]
    %v2460 = vld [vmem:[%s855 + $0x30] sm:$0xff]
    %v2461 = vld [vmem:[%s855 + $0x38] sm:$0xff]
    %v2462 = vld [vmem:[%s855 + $0x40] sm:$0xff]
    %v2463 = vld [vmem:[%s855 + $0x48] sm:$0xff]
    %v2464 = vld [vmem:[%s855 + $0x50] sm:$0xff]
    %v2465 = vld [vmem:[%s855 + $0x58] sm:$0xff]
    %v2466 = vld [vmem:[%s855 + $0x60] sm:$0xff]
    %v2467 = vld [vmem:[%s855 + $0x68] sm:$0xff]
    %v2468 = vld [vmem:[%s855 + $0x70] sm:$0xff]
    %v2469 = vld [vmem:[%s855 + $0x78] sm:$0xff]
    %2470 = vmatprep.subr.mxu0 0.0
    %2471 = vmatpush1.msra.mxu0 %v2469
    %2472 = vmatprep.subr.mxu0 0.0
    %2473 = vmatpush1.msra.mxu0 %v2468
    %2474 = vmatprep.subr.mxu0 0.0
    %2475 = vmatpush1.msra.mxu0 %v2467
    %2476 = vmatprep.subr.mxu0 0.0
    %2477 = vmatpush1.msra.mxu0 %v2466
    %2478 = vmatprep.subr.mxu0 0.0
    %2479 = vmatpush1.msra.mxu0 %v2465
    %2480 = vmatprep.subr.mxu0 0.0
    %2481 = vmatpush1.msra.mxu0 %v2464
    %2482 = vmatprep.subr.mxu0 0.0
    %2483 = vmatpush1.msra.mxu0 %v2463
    %2484 = vmatprep.subr.mxu0 0.0
    %2485 = vmatpush1.msra.mxu0 %v2462
    %2486 = vmatprep.subr.mxu0 0.0
    %2487 = vmatpush1.msra.mxu0 %v2461
    %2488 = vmatprep.subr.mxu0 0.0
    %2489 = vmatpush1.msra.mxu0 %v2460
    %2490 = vmatprep.subr.mxu0 0.0
    %2491 = vmatpush1.msra.mxu0 %v2459
    %2492 = vmatprep.subr.mxu0 0.0
    %2493 = vmatpush1.msra.mxu0 %v2458
    %2494 = vmatprep.subr.mxu0 0.0
    %2495 = vmatpush1.msra.mxu0 %v2457
    %2496 = vmatprep.subr.mxu0 0.0
    %2497 = vmatpush1.msra.mxu0 %v2456
    %2498 = vmatprep.subr.mxu0 0.0
    %2499 = vmatpush1.msra.mxu0 %v2455
    %2500 = vmatprep.subr.mxu0 0.0
    %2501 = vmatpush1.msra.mxu0 %v2454
    %2502 = vmatprep.subr.mxu0 0.0
    %2503 = vmatpush2.msra.mxu0 0.0
    %2504 = vmatprep.subr.mxu0 0.0
    %2505 = vmatpush2.msra.mxu0 0.0
    %2506 = vmatprep.subr.mxu0 0.0
    %2507 = vmatpush2.msra.mxu0 0.0
    %2508 = vmatprep.subr.mxu0 0.0
    %2509 = vmatpush2.msra.mxu0 0.0
    %2510 = vmatprep.subr.mxu0 0.0
    %2511 = vmatpush2.msra.mxu0 0.0
    %2512 = vmatprep.subr.mxu0 0.0
    %2513 = vmatpush2.msra.mxu0 0.0
    %2514 = vmatprep.subr.mxu0 0.0
    %2515 = vmatpush2.msra.mxu0 0.0
    %2516 = vmatprep.subr.mxu0 0.0
    %2517 = vmatpush2.msra.mxu0 0.0
    %2518 = vmatprep.subr.mxu0 0.0
    %2519 = vmatpush2.msra.mxu0 0.0
    %2520 = vmatprep.subr.mxu0 0.0
    %2521 = vmatpush2.msra.mxu0 0.0
    %2522 = vmatprep.subr.mxu0 0.0
    %2523 = vmatpush2.msra.mxu0 0.0
    %2524 = vmatprep.subr.mxu0 0.0
    %2525 = vmatpush2.msra.mxu0 0.0
    %2526 = vmatprep.subr.mxu0 0.0
    %2527 = vmatpush2.msra.mxu0 0.0
    %2528 = vmatprep.subr.mxu0 0.0
    %2529 = vmatpush2.msra.mxu0 0.0
    %2530 = vmatprep.subr.mxu0 0.0
    %2531 = vmatpush2.msra.mxu0 0.0
    %2532 = vmatprep.subr.mxu0 0.0
    %2533 = vmatpush2.msra.mxu0 0.0
    %2534 = vmatprep.mubr.f32.mxu0 0.0
    %2535 = vmatmul.mubr.f32.gmra.mxu0 %v2453
    %v2536 = vpop.f32.mrf.mxu0
    %v2537 = vadd.f32 0.0, %v2536
    %v2538 = vpop.f32.mrf.mxu0
    %2539 = vdwg.mxu0
    %v2540 = vadd.f32 %v2450, %v2537
    %v2541 = vld [vmem:[%s554] sm:$0xf]
    %v2542 = vld [vmem:[%s944] sm:$0xff]
    %v2543 = vld [vmem:[%s944 + $0x8] sm:$0xff]
    %v2544 = vld [vmem:[%s944 + $0x10] sm:$0xff]
    %v2545 = vld [vmem:[%s944 + $0x18] sm:$0xff]
    %v2546 = vld [vmem:[%s944 + $0x20] sm:$0xff]
    %v2547 = vld [vmem:[%s944 + $0x28] sm:$0xff]
    %v2548 = vld [vmem:[%s944 + $0x30] sm:$0xff]
    %v2549 = vld [vmem:[%s944 + $0x38] sm:$0xff]
    %v2550 = vld [vmem:[%s944 + $0x40] sm:$0xff]
    %v2551 = vld [vmem:[%s944 + $0x48] sm:$0xff]
    %v2552 = vld [vmem:[%s944 + $0x50] sm:$0xff]
    %v2553 = vld [vmem:[%s944 + $0x58] sm:$0xff]
    %v2554 = vld [vmem:[%s944 + $0x60] sm:$0xff]
    %v2555 = vld [vmem:[%s944 + $0x68] sm:$0xff]
    %v2556 = vld [vmem:[%s944 + $0x70] sm:$0xff]
    %v2557 = vld [vmem:[%s944 + $0x78] sm:$0xff]
    %2558 = vmatprep.subr.mxu0 0.0
    %2559 = vmatpush1.msra.mxu0 %v2557
    %2560 = vmatprep.subr.mxu0 0.0
    %2561 = vmatpush1.msra.mxu0 %v2556
    %2562 = vmatprep.subr.mxu0 0.0
    %2563 = vmatpush1.msra.mxu0 %v2555
    %2564 = vmatprep.subr.mxu0 0.0
    %2565 = vmatpush1.msra.mxu0 %v2554
    %2566 = vmatprep.subr.mxu0 0.0
    %2567 = vmatpush1.msra.mxu0 %v2553
    %2568 = vmatprep.subr.mxu0 0.0
    %2569 = vmatpush1.msra.mxu0 %v2552
    %2570 = vmatprep.subr.mxu0 0.0
    %2571 = vmatpush1.msra.mxu0 %v2551
    %2572 = vmatprep.subr.mxu0 0.0
    %2573 = vmatpush1.msra.mxu0 %v2550
    %2574 = vmatprep.subr.mxu0 0.0
    %2575 = vmatpush1.msra.mxu0 %v2549
    %2576 = vmatprep.subr.mxu0 0.0
    %2577 = vmatpush1.msra.mxu0 %v2548
    %2578 = vmatprep.subr.mxu0 0.0
    %2579 = vmatpush1.msra.mxu0 %v2547
    %2580 = vmatprep.subr.mxu0 0.0
    %2581 = vmatpush1.msra.mxu0 %v2546
    %2582 = vmatprep.subr.mxu0 0.0
    %2583 = vmatpush1.msra.mxu0 %v2545
    %2584 = vmatprep.subr.mxu0 0.0
    %2585 = vmatpush1.msra.mxu0 %v2544
    %2586 = vmatprep.subr.mxu0 0.0
    %2587 = vmatpush1.msra.mxu0 %v2543
    %2588 = vmatprep.subr.mxu0 0.0
    %2589 = vmatpush1.msra.mxu0 %v2542
    %2590 = vmatprep.subr.mxu0 0.0
    %2591 = vmatpush2.msra.mxu0 0.0
    %2592 = vmatprep.subr.mxu0 0.0
    %2593 = vmatpush2.msra.mxu0 0.0
    %2594 = vmatprep.subr.mxu0 0.0
    %2595 = vmatpush2.msra.mxu0 0.0
    %2596 = vmatprep.subr.mxu0 0.0
    %2597 = vmatpush2.msra.mxu0 0.0
    %2598 = vmatprep.subr.mxu0 0.0
    %2599 = vmatpush2.msra.mxu0 0.0
    %2600 = vmatprep.subr.mxu0 0.0
    %2601 = vmatpush2.msra.mxu0 0.0
    %2602 = vmatprep.subr.mxu0 0.0
    %2603 = vmatpush2.msra.mxu0 0.0
    %2604 = vmatprep.subr.mxu0 0.0
    %2605 = vmatpush2.msra.mxu0 0.0
    %2606 = vmatprep.subr.mxu0 0.0
    %2607 = vmatpush2.msra.mxu0 0.0
    %2608 = vmatprep.subr.mxu0 0.0
    %2609 = vmatpush2.msra.mxu0 0.0
    %2610 = vmatprep.subr.mxu0 0.0
    %2611 = vmatpush2.msra.mxu0 0.0
    %2612 = vmatprep.subr.mxu0 0.0
    %2613 = vmatpush2.msra.mxu0 0.0
    %2614 = vmatprep.subr.mxu0 0.0
    %2615 = vmatpush2.msra.mxu0 0.0
    %2616 = vmatprep.subr.mxu0 0.0
    %2617 = vmatpush2.msra.mxu0 0.0
    %2618 = vmatprep.subr.mxu0 0.0
    %2619 = vmatpush2.msra.mxu0 0.0
    %2620 = vmatprep.subr.mxu0 0.0
    %2621 = vmatpush2.msra.mxu0 0.0
    %2622 = vmatprep.mubr.f32.mxu0 0.0
    %2623 = vmatmul.mubr.f32.gmra.mxu0 %v2541
    %v2624 = vpop.f32.mrf.mxu0
    %v2625 = vadd.f32 0.0, %v2624
    %v2626 = vpop.f32.mrf.mxu0
    %2627 = vdwg.mxu0
    %v2628 = vadd.f32 %v2540, %v2625
    %v2629 = vld [vmem:[%s554 + $0x1] sm:$0xf]
    %v2630 = vld [vmem:[%s1033] sm:$0xff]
    %v2631 = vld [vmem:[%s1033 + $0x8] sm:$0xff]
    %v2632 = vld [vmem:[%s1033 + $0x10] sm:$0xff]
    %v2633 = vld [vmem:[%s1033 + $0x18] sm:$0xff]
    %v2634 = vld [vmem:[%s1033 + $0x20] sm:$0xff]
    %v2635 = vld [vmem:[%s1033 + $0x28] sm:$0xff]
    %v2636 = vld [vmem:[%s1033 + $0x30] sm:$0xff]
    %v2637 = vld [vmem:[%s1033 + $0x38] sm:$0xff]
    %v2638 = vld [vmem:[%s1033 + $0x40] sm:$0xff]
    %v2639 = vld [vmem:[%s1033 + $0x48] sm:$0xff]
    %v2640 = vld [vmem:[%s1033 + $0x50] sm:$0xff]
    %v2641 = vld [vmem:[%s1033 + $0x58] sm:$0xff]
    %v2642 = vld [vmem:[%s1033 + $0x60] sm:$0xff]
    %v2643 = vld [vmem:[%s1033 + $0x68] sm:$0xff]
    %v2644 = vld [vmem:[%s1033 + $0x70] sm:$0xff]
    %v2645 = vld [vmem:[%s1033 + $0x78] sm:$0xff]
    %2646 = vmatprep.subr.mxu0 0.0
    %2647 = vmatpush1.msra.mxu0 %v2645
    %2648 = vmatprep.subr.mxu0 0.0
    %2649 = vmatpush1.msra.mxu0 %v2644
    %2650 = vmatprep.subr.mxu0 0.0
    %2651 = vmatpush1.msra.mxu0 %v2643
    %2652 = vmatprep.subr.mxu0 0.0
    %2653 = vmatpush1.msra.mxu0 %v2642
    %2654 = vmatprep.subr.mxu0 0.0
    %2655 = vmatpush1.msra.mxu0 %v2641
    %2656 = vmatprep.subr.mxu0 0.0
    %2657 = vmatpush1.msra.mxu0 %v2640
    %2658 = vmatprep.subr.mxu0 0.0
    %2659 = vmatpush1.msra.mxu0 %v2639
    %2660 = vmatprep.subr.mxu0 0.0
    %2661 = vmatpush1.msra.mxu0 %v2638
    %2662 = vmatprep.subr.mxu0 0.0
    %2663 = vmatpush1.msra.mxu0 %v2637
    %2664 = vmatprep.subr.mxu0 0.0
    %2665 = vmatpush1.msra.mxu0 %v2636
    %2666 = vmatprep.subr.mxu0 0.0
    %2667 = vmatpush1.msra.mxu0 %v2635
    %2668 = vmatprep.subr.mxu0 0.0
    %2669 = vmatpush1.msra.mxu0 %v2634
    %2670 = vmatprep.subr.mxu0 0.0
    %2671 = vmatpush1.msra.mxu0 %v2633
    %2672 = vmatprep.subr.mxu0 0.0
    %2673 = vmatpush1.msra.mxu0 %v2632
    %2674 = vmatprep.subr.mxu0 0.0
    %2675 = vmatpush1.msra.mxu0 %v2631
    %2676 = vmatprep.subr.mxu0 0.0
    %2677 = vmatpush1.msra.mxu0 %v2630
    %2678 = vmatprep.subr.mxu0 0.0
    %2679 = vmatpush2.msra.mxu0 0.0
    %2680 = vmatprep.subr.mxu0 0.0
    %2681 = vmatpush2.msra.mxu0 0.0
    %2682 = vmatprep.subr.mxu0 0.0
    %2683 = vmatpush2.msra.mxu0 0.0
    %2684 = vmatprep.subr.mxu0 0.0
    %2685 = vmatpush2.msra.mxu0 0.0
    %2686 = vmatprep.subr.mxu0 0.0
    %2687 = vmatpush2.msra.mxu0 0.0
    %2688 = vmatprep.subr.mxu0 0.0
    %2689 = vmatpush2.msra.mxu0 0.0
    %2690 = vmatprep.subr.mxu0 0.0
    %2691 = vmatpush2.msra.mxu0 0.0
    %2692 = vmatprep.subr.mxu0 0.0
    %2693 = vmatpush2.msra.mxu0 0.0
    %2694 = vmatprep.subr.mxu0 0.0
    %2695 = vmatpush2.msra.mxu0 0.0
    %2696 = vmatprep.subr.mxu0 0.0
    %2697 = vmatpush2.msra.mxu0 0.0
    %2698 = vmatprep.subr.mxu0 0.0
    %2699 = vmatpush2.msra.mxu0 0.0
    %2700 = vmatprep.subr.mxu0 0.0
    %2701 = vmatpush2.msra.mxu0 0.0
    %2702 = vmatprep.subr.mxu0 0.0
    %2703 = vmatpush2.msra.mxu0 0.0
    %2704 = vmatprep.subr.mxu0 0.0
    %2705 = vmatpush2.msra.mxu0 0.0
    %2706 = vmatprep.subr.mxu0 0.0
    %2707 = vmatpush2.msra.mxu0 0.0
    %2708 = vmatprep.subr.mxu0 0.0
    %2709 = vmatpush2.msra.mxu0 0.0
    %2710 = vmatprep.mubr.f32.mxu0 0.0
    %2711 = vmatmul.mubr.f32.gmra.mxu0 %v2629
    %v2712 = vpop.f32.mrf.mxu0
    %v2713 = vadd.f32 0.0, %v2712
    %v2714 = vpop.f32.mrf.mxu0
    %2715 = vdwg.mxu0
    %v2716 = vadd.f32 %v2628, %v2713
    %v2717 = vld [vmem:[%s554 + $0x2] sm:$0xf]
    %v2718 = vld [vmem:[%s1122] sm:$0xff]
    %v2719 = vld [vmem:[%s1122 + $0x8] sm:$0xff]
    %v2720 = vld [vmem:[%s1122 + $0x10] sm:$0xff]
    %v2721 = vld [vmem:[%s1122 + $0x18] sm:$0xff]
    %v2722 = vld [vmem:[%s1122 + $0x20] sm:$0xff]
    %v2723 = vld [vmem:[%s1122 + $0x28] sm:$0xff]
    %v2724 = vld [vmem:[%s1122 + $0x30] sm:$0xff]
    %v2725 = vld [vmem:[%s1122 + $0x38] sm:$0xff]
    %v2726 = vld [vmem:[%s1122 + $0x40] sm:$0xff]
    %v2727 = vld [vmem:[%s1122 + $0x48] sm:$0xff]
    %v2728 = vld [vmem:[%s1122 + $0x50] sm:$0xff]
    %v2729 = vld [vmem:[%s1122 + $0x58] sm:$0xff]
    %v2730 = vld [vmem:[%s1122 + $0x60] sm:$0xff]
    %v2731 = vld [vmem:[%s1122 + $0x68] sm:$0xff]
    %v2732 = vld [vmem:[%s1122 + $0x70] sm:$0xff]
    %v2733 = vld [vmem:[%s1122 + $0x78] sm:$0xff]
    %2734 = vmatprep.subr.mxu0 0.0
    %2735 = vmatpush1.msra.mxu0 %v2733
    %2736 = vmatprep.subr.mxu0 0.0
    %2737 = vmatpush1.msra.mxu0 %v2732
    %2738 = vmatprep.subr.mxu0 0.0
    %2739 = vmatpush1.msra.mxu0 %v2731
    %2740 = vmatprep.subr.mxu0 0.0
    %2741 = vmatpush1.msra.mxu0 %v2730
    %2742 = vmatprep.subr.mxu0 0.0
    %2743 = vmatpush1.msra.mxu0 %v2729
    %2744 = vmatprep.subr.mxu0 0.0
    %2745 = vmatpush1.msra.mxu0 %v2728
    %2746 = vmatprep.subr.mxu0 0.0
    %2747 = vmatpush1.msra.mxu0 %v2727
    %2748 = vmatprep.subr.mxu0 0.0
    %2749 = vmatpush1.msra.mxu0 %v2726
    %2750 = vmatprep.subr.mxu0 0.0
    %2751 = vmatpush1.msra.mxu0 %v2725
    %2752 = vmatprep.subr.mxu0 0.0
    %2753 = vmatpush1.msra.mxu0 %v2724
    %2754 = vmatprep.subr.mxu0 0.0
    %2755 = vmatpush1.msra.mxu0 %v2723
    %2756 = vmatprep.subr.mxu0 0.0
    %2757 = vmatpush1.msra.mxu0 %v2722
    %2758 = vmatprep.subr.mxu0 0.0
    %2759 = vmatpush1.msra.mxu0 %v2721
    %2760 = vmatprep.subr.mxu0 0.0
    %2761 = vmatpush1.msra.mxu0 %v2720
    %2762 = vmatprep.subr.mxu0 0.0
    %2763 = vmatpush1.msra.mxu0 %v2719
    %2764 = vmatprep.subr.mxu0 0.0
    %2765 = vmatpush1.msra.mxu0 %v2718
    %2766 = vmatprep.subr.mxu0 0.0
    %2767 = vmatpush2.msra.mxu0 0.0
    %2768 = vmatprep.subr.mxu0 0.0
    %2769 = vmatpush2.msra.mxu0 0.0
    %2770 = vmatprep.subr.mxu0 0.0
    %2771 = vmatpush2.msra.mxu0 0.0
    %2772 = vmatprep.subr.mxu0 0.0
    %2773 = vmatpush2.msra.mxu0 0.0
    %2774 = vmatprep.subr.mxu0 0.0
    %2775 = vmatpush2.msra.mxu0 0.0
    %2776 = vmatprep.subr.mxu0 0.0
    %2777 = vmatpush2.msra.mxu0 0.0
    %2778 = vmatprep.subr.mxu0 0.0
    %2779 = vmatpush2.msra.mxu0 0.0
    %2780 = vmatprep.subr.mxu0 0.0
    %2781 = vmatpush2.msra.mxu0 0.0
    %2782 = vmatprep.subr.mxu0 0.0
    %2783 = vmatpush2.msra.mxu0 0.0
    %2784 = vmatprep.subr.mxu0 0.0
    %2785 = vmatpush2.msra.mxu0 0.0
    %2786 = vmatprep.subr.mxu0 0.0
    %2787 = vmatpush2.msra.mxu0 0.0
    %2788 = vmatprep.subr.mxu0 0.0
    %2789 = vmatpush2.msra.mxu0 0.0
    %2790 = vmatprep.subr.mxu0 0.0
    %2791 = vmatpush2.msra.mxu0 0.0
    %2792 = vmatprep.subr.mxu0 0.0
    %2793 = vmatpush2.msra.mxu0 0.0
    %2794 = vmatprep.subr.mxu0 0.0
    %2795 = vmatpush2.msra.mxu0 0.0
    %2796 = vmatprep.subr.mxu0 0.0
    %2797 = vmatpush2.msra.mxu0 0.0
    %2798 = vmatprep.mubr.f32.mxu0 0.0
    %2799 = vmatmul.mubr.f32.gmra.mxu0 %v2717
    %v2800 = vpop.f32.mrf.mxu0
    %v2801 = vadd.f32 0.0, %v2800
    %v2802 = vpop.f32.mrf.mxu0
    %2803 = vdwg.mxu0
    %v2804 = vadd.f32 %v2716, %v2801
    %v2805 = vld [vmem:[%s676] sm:$0xf]
    %v2806 = vld [vmem:[%s1211] sm:$0xff]
    %v2807 = vld [vmem:[%s1211 + $0x8] sm:$0xff]
    %v2808 = vld [vmem:[%s1211 + $0x10] sm:$0xff]
    %v2809 = vld [vmem:[%s1211 + $0x18] sm:$0xff]
    %v2810 = vld [vmem:[%s1211 + $0x20] sm:$0xff]
    %v2811 = vld [vmem:[%s1211 + $0x28] sm:$0xff]
    %v2812 = vld [vmem:[%s1211 + $0x30] sm:$0xff]
    %v2813 = vld [vmem:[%s1211 + $0x38] sm:$0xff]
    %v2814 = vld [vmem:[%s1211 + $0x40] sm:$0xff]
    %v2815 = vld [vmem:[%s1211 + $0x48] sm:$0xff]
    %v2816 = vld [vmem:[%s1211 + $0x50] sm:$0xff]
    %v2817 = vld [vmem:[%s1211 + $0x58] sm:$0xff]
    %v2818 = vld [vmem:[%s1211 + $0x60] sm:$0xff]
    %v2819 = vld [vmem:[%s1211 + $0x68] sm:$0xff]
    %v2820 = vld [vmem:[%s1211 + $0x70] sm:$0xff]
    %v2821 = vld [vmem:[%s1211 + $0x78] sm:$0xff]
    %2822 = vmatprep.subr.mxu0 0.0
    %2823 = vmatpush1.msra.mxu0 %v2821
    %2824 = vmatprep.subr.mxu0 0.0
    %2825 = vmatpush1.msra.mxu0 %v2820
    %2826 = vmatprep.subr.mxu0 0.0
    %2827 = vmatpush1.msra.mxu0 %v2819
    %2828 = vmatprep.subr.mxu0 0.0
    %2829 = vmatpush1.msra.mxu0 %v2818
    %2830 = vmatprep.subr.mxu0 0.0
    %2831 = vmatpush1.msra.mxu0 %v2817
    %2832 = vmatprep.subr.mxu0 0.0
    %2833 = vmatpush1.msra.mxu0 %v2816
    %2834 = vmatprep.subr.mxu0 0.0
    %2835 = vmatpush1.msra.mxu0 %v2815
    %2836 = vmatprep.subr.mxu0 0.0
    %2837 = vmatpush1.msra.mxu0 %v2814
    %2838 = vmatprep.subr.mxu0 0.0
    %2839 = vmatpush1.msra.mxu0 %v2813
    %2840 = vmatprep.subr.mxu0 0.0
    %2841 = vmatpush1.msra.mxu0 %v2812
    %2842 = vmatprep.subr.mxu0 0.0
    %2843 = vmatpush1.msra.mxu0 %v2811
    %2844 = vmatprep.subr.mxu0 0.0
    %2845 = vmatpush1.msra.mxu0 %v2810
    %2846 = vmatprep.subr.mxu0 0.0
    %2847 = vmatpush1.msra.mxu0 %v2809
    %2848 = vmatprep.subr.mxu0 0.0
    %2849 = vmatpush1.msra.mxu0 %v2808
    %2850 = vmatprep.subr.mxu0 0.0
    %2851 = vmatpush1.msra.mxu0 %v2807
    %2852 = vmatprep.subr.mxu0 0.0
    %2853 = vmatpush1.msra.mxu0 %v2806
    %2854 = vmatprep.subr.mxu0 0.0
    %2855 = vmatpush2.msra.mxu0 0.0
    %2856 = vmatprep.subr.mxu0 0.0
    %2857 = vmatpush2.msra.mxu0 0.0
    %2858 = vmatprep.subr.mxu0 0.0
    %2859 = vmatpush2.msra.mxu0 0.0
    %2860 = vmatprep.subr.mxu0 0.0
    %2861 = vmatpush2.msra.mxu0 0.0
    %2862 = vmatprep.subr.mxu0 0.0
    %2863 = vmatpush2.msra.mxu0 0.0
    %2864 = vmatprep.subr.mxu0 0.0
    %2865 = vmatpush2.msra.mxu0 0.0
    %2866 = vmatprep.subr.mxu0 0.0
    %2867 = vmatpush2.msra.mxu0 0.0
    %2868 = vmatprep.subr.mxu0 0.0
    %2869 = vmatpush2.msra.mxu0 0.0
    %2870 = vmatprep.subr.mxu0 0.0
    %2871 = vmatpush2.msra.mxu0 0.0
    %2872 = vmatprep.subr.mxu0 0.0
    %2873 = vmatpush2.msra.mxu0 0.0
    %2874 = vmatprep.subr.mxu0 0.0
    %2875 = vmatpush2.msra.mxu0 0.0
    %2876 = vmatprep.subr.mxu0 0.0
    %2877 = vmatpush2.msra.mxu0 0.0
    %2878 = vmatprep.subr.mxu0 0.0
    %2879 = vmatpush2.msra.mxu0 0.0
    %2880 = vmatprep.subr.mxu0 0.0
    %2881 = vmatpush2.msra.mxu0 0.0
    %2882 = vmatprep.subr.mxu0 0.0
    %2883 = vmatpush2.msra.mxu0 0.0
    %2884 = vmatprep.subr.mxu0 0.0
    %2885 = vmatpush2.msra.mxu0 0.0
    %2886 = vmatprep.mubr.f32.mxu0 0.0
    %2887 = vmatmul.mubr.f32.gmra.mxu0 %v2805
    %v2888 = vpop.f32.mrf.mxu0
    %v2889 = vadd.f32 0.0, %v2888
    %v2890 = vpop.f32.mrf.mxu0
    %2891 = vdwg.mxu0
    %v2892 = vadd.f32 %v2804, %v2889
    %v2893 = vld [vmem:[%s676 + $0x1] sm:$0xf]
    %v2894 = vld [vmem:[%s1300] sm:$0xff]
    %v2895 = vld [vmem:[%s1300 + $0x8] sm:$0xff]
    %v2896 = vld [vmem:[%s1300 + $0x10] sm:$0xff]
    %v2897 = vld [vmem:[%s1300 + $0x18] sm:$0xff]
    %v2898 = vld [vmem:[%s1300 + $0x20] sm:$0xff]
    %v2899 = vld [vmem:[%s1300 + $0x28] sm:$0xff]
    %v2900 = vld [vmem:[%s1300 + $0x30] sm:$0xff]
    %v2901 = vld [vmem:[%s1300 + $0x38] sm:$0xff]
    %v2902 = vld [vmem:[%s1300 + $0x40] sm:$0xff]
    %v2903 = vld [vmem:[%s1300 + $0x48] sm:$0xff]
    %v2904 = vld [vmem:[%s1300 + $0x50] sm:$0xff]
    %v2905 = vld [vmem:[%s1300 + $0x58] sm:$0xff]
    %v2906 = vld [vmem:[%s1300 + $0x60] sm:$0xff]
    %v2907 = vld [vmem:[%s1300 + $0x68] sm:$0xff]
    %v2908 = vld [vmem:[%s1300 + $0x70] sm:$0xff]
    %v2909 = vld [vmem:[%s1300 + $0x78] sm:$0xff]
    %2910 = vmatprep.subr.mxu0 0.0
    %2911 = vmatpush1.msra.mxu0 %v2909
    %2912 = vmatprep.subr.mxu0 0.0
    %2913 = vmatpush1.msra.mxu0 %v2908
    %2914 = vmatprep.subr.mxu0 0.0
    %2915 = vmatpush1.msra.mxu0 %v2907
    %2916 = vmatprep.subr.mxu0 0.0
    %2917 = vmatpush1.msra.mxu0 %v2906
    %2918 = vmatprep.subr.mxu0 0.0
    %2919 = vmatpush1.msra.mxu0 %v2905
    %2920 = vmatprep.subr.mxu0 0.0
    %2921 = vmatpush1.msra.mxu0 %v2904
    %2922 = vmatprep.subr.mxu0 0.0
    %2923 = vmatpush1.msra.mxu0 %v2903
    %2924 = vmatprep.subr.mxu0 0.0
    %2925 = vmatpush1.msra.mxu0 %v2902
    %2926 = vmatprep.subr.mxu0 0.0
    %2927 = vmatpush1.msra.mxu0 %v2901
    %2928 = vmatprep.subr.mxu0 0.0
    %2929 = vmatpush1.msra.mxu0 %v2900
    %2930 = vmatprep.subr.mxu0 0.0
    %2931 = vmatpush1.msra.mxu0 %v2899
    %2932 = vmatprep.subr.mxu0 0.0
    %2933 = vmatpush1.msra.mxu0 %v2898
    %2934 = vmatprep.subr.mxu0 0.0
    %2935 = vmatpush1.msra.mxu0 %v2897
    %2936 = vmatprep.subr.mxu0 0.0
    %2937 = vmatpush1.msra.mxu0 %v2896
    %2938 = vmatprep.subr.mxu0 0.0
    %2939 = vmatpush1.msra.mxu0 %v2895
    %2940 = vmatprep.subr.mxu0 0.0
    %2941 = vmatpush1.msra.mxu0 %v2894
    %2942 = vmatprep.subr.mxu0 0.0
    %2943 = vmatpush2.msra.mxu0 0.0
    %2944 = vmatprep.subr.mxu0 0.0
    %2945 = vmatpush2.msra.mxu0 0.0
    %2946 = vmatprep.subr.mxu0 0.0
    %2947 = vmatpush2.msra.mxu0 0.0
    %2948 = vmatprep.subr.mxu0 0.0
    %2949 = vmatpush2.msra.mxu0 0.0
    %2950 = vmatprep.subr.mxu0 0.0
    %2951 = vmatpush2.msra.mxu0 0.0
    %2952 = vmatprep.subr.mxu0 0.0
    %2953 = vmatpush2.msra.mxu0 0.0
    %2954 = vmatprep.subr.mxu0 0.0
    %2955 = vmatpush2.msra.mxu0 0.0
    %2956 = vmatprep.subr.mxu0 0.0
    %2957 = vmatpush2.msra.mxu0 0.0
    %2958 = vmatprep.subr.mxu0 0.0
    %2959 = vmatpush2.msra.mxu0 0.0
    %2960 = vmatprep.subr.mxu0 0.0
    %2961 = vmatpush2.msra.mxu0 0.0
    %2962 = vmatprep.subr.mxu0 0.0
    %2963 = vmatpush2.msra.mxu0 0.0
    %2964 = vmatprep.subr.mxu0 0.0
    %2965 = vmatpush2.msra.mxu0 0.0
    %2966 = vmatprep.subr.mxu0 0.0
    %2967 = vmatpush2.msra.mxu0 0.0
    %2968 = vmatprep.subr.mxu0 0.0
    %2969 = vmatpush2.msra.mxu0 0.0
    %2970 = vmatprep.subr.mxu0 0.0
    %2971 = vmatpush2.msra.mxu0 0.0
    %2972 = vmatprep.subr.mxu0 0.0
    %2973 = vmatpush2.msra.mxu0 0.0
    %2974 = vmatprep.mubr.f32.mxu0 0.0
    %2975 = vmatmul.mubr.f32.gmra.mxu0 %v2893
    %v2976 = vpop.f32.mrf.mxu0
    %v2977 = vadd.f32 0.0, %v2976
    %v2978 = vpop.f32.mrf.mxu0
    %2979 = vdwg.mxu0
    %v2980 = vadd.f32 %v2892, %v2977
    %v2981 = vld [vmem:[%s676 + $0x2] sm:$0xf]
    %v2982 = vld [vmem:[%s1389] sm:$0xff]
    %v2983 = vld [vmem:[%s1389 + $0x8] sm:$0xff]
    %v2984 = vld [vmem:[%s1389 + $0x10] sm:$0xff]
    %v2985 = vld [vmem:[%s1389 + $0x18] sm:$0xff]
    %v2986 = vld [vmem:[%s1389 + $0x20] sm:$0xff]
    %v2987 = vld [vmem:[%s1389 + $0x28] sm:$0xff]
    %v2988 = vld [vmem:[%s1389 + $0x30] sm:$0xff]
    %v2989 = vld [vmem:[%s1389 + $0x38] sm:$0xff]
    %v2990 = vld [vmem:[%s1389 + $0x40] sm:$0xff]
    %v2991 = vld [vmem:[%s1389 + $0x48] sm:$0xff]
    %v2992 = vld [vmem:[%s1389 + $0x50] sm:$0xff]
    %v2993 = vld [vmem:[%s1389 + $0x58] sm:$0xff]
    %v2994 = vld [vmem:[%s1389 + $0x60] sm:$0xff]
    %v2995 = vld [vmem:[%s1389 + $0x68] sm:$0xff]
    %v2996 = vld [vmem:[%s1389 + $0x70] sm:$0xff]
    %v2997 = vld [vmem:[%s1389 + $0x78] sm:$0xff]
    %2998 = vmatprep.subr.mxu0 0.0
    %2999 = vmatpush1.msra.mxu0 %v2997
    %3000 = vmatprep.subr.mxu0 0.0
    %3001 = vmatpush1.msra.mxu0 %v2996
    %3002 = vmatprep.subr.mxu0 0.0
    %3003 = vmatpush1.msra.mxu0 %v2995
    %3004 = vmatprep.subr.mxu0 0.0
    %3005 = vmatpush1.msra.mxu0 %v2994
    %3006 = vmatprep.subr.mxu0 0.0
    %3007 = vmatpush1.msra.mxu0 %v2993
    %3008 = vmatprep.subr.mxu0 0.0
    %3009 = vmatpush1.msra.mxu0 %v2992
    %3010 = vmatprep.subr.mxu0 0.0
    %3011 = vmatpush1.msra.mxu0 %v2991
    %3012 = vmatprep.subr.mxu0 0.0
    %3013 = vmatpush1.msra.mxu0 %v2990
    %3014 = vmatprep.subr.mxu0 0.0
    %3015 = vmatpush1.msra.mxu0 %v2989
    %3016 = vmatprep.subr.mxu0 0.0
    %3017 = vmatpush1.msra.mxu0 %v2988
    %3018 = vmatprep.subr.mxu0 0.0
    %3019 = vmatpush1.msra.mxu0 %v2987
    %3020 = vmatprep.subr.mxu0 0.0
    %3021 = vmatpush1.msra.mxu0 %v2986
    %3022 = vmatprep.subr.mxu0 0.0
    %3023 = vmatpush1.msra.mxu0 %v2985
    %3024 = vmatprep.subr.mxu0 0.0
    %3025 = vmatpush1.msra.mxu0 %v2984
    %3026 = vmatprep.subr.mxu0 0.0
    %3027 = vmatpush1.msra.mxu0 %v2983
    %3028 = vmatprep.subr.mxu0 0.0
    %3029 = vmatpush1.msra.mxu0 %v2982
    %3030 = vmatprep.subr.mxu0 0.0
    %3031 = vmatpush2.msra.mxu0 0.0
    %3032 = vmatprep.subr.mxu0 0.0
    %3033 = vmatpush2.msra.mxu0 0.0
    %3034 = vmatprep.subr.mxu0 0.0
    %3035 = vmatpush2.msra.mxu0 0.0
    %3036 = vmatprep.subr.mxu0 0.0
    %3037 = vmatpush2.msra.mxu0 0.0
    %3038 = vmatprep.subr.mxu0 0.0
    %3039 = vmatpush2.msra.mxu0 0.0
    %3040 = vmatprep.subr.mxu0 0.0
    %3041 = vmatpush2.msra.mxu0 0.0
    %3042 = vmatprep.subr.mxu0 0.0
    %3043 = vmatpush2.msra.mxu0 0.0
    %3044 = vmatprep.subr.mxu0 0.0
    %3045 = vmatpush2.msra.mxu0 0.0
    %3046 = vmatprep.subr.mxu0 0.0
    %3047 = vmatpush2.msra.mxu0 0.0
    %3048 = vmatprep.subr.mxu0 0.0
    %3049 = vmatpush2.msra.mxu0 0.0
    %3050 = vmatprep.subr.mxu0 0.0
    %3051 = vmatpush2.msra.mxu0 0.0
    %3052 = vmatprep.subr.mxu0 0.0
    %3053 = vmatpush2.msra.mxu0 0.0
    %3054 = vmatprep.subr.mxu0 0.0
    %3055 = vmatpush2.msra.mxu0 0.0
    %3056 = vmatprep.subr.mxu0 0.0
    %3057 = vmatpush2.msra.mxu0 0.0
    %3058 = vmatprep.subr.mxu0 0.0
    %3059 = vmatpush2.msra.mxu0 0.0
    %3060 = vmatprep.subr.mxu0 0.0
    %3061 = vmatpush2.msra.mxu0 0.0
    %3062 = vmatprep.mubr.f32.mxu0 0.0
    %3063 = vmatmul.mubr.f32.gmra.mxu0 %v2981
    %v3064 = vpop.f32.mrf.mxu0
    %v3065 = vadd.f32 0.0, %v3064
    %v3066 = vpop.f32.mrf.mxu0
    %3067 = vdwg.mxu0
    %v3068 = vadd.f32 %v2980, %v3065
    %v3069 = vadd.f32 %v3068, %v1481
    %v3070 = vmax.f32 %v3069, 0.0
    %3071 = vst [vmem:[#allocation4 + $0x8] sm:$0xf] %v3070
    %v3072 = vld [vmem:[%s554] sm:$0xf]
    %v3073 = vld [vmem:[#allocation12] sm:$0xff]
    %v3074 = vld [vmem:[#allocation12 + $0x8] sm:$0xff]
    %v3075 = vld [vmem:[#allocation12 + $0x10] sm:$0xff]
    %v3076 = vld [vmem:[#allocation12 + $0x18] sm:$0xff]
    %v3077 = vld [vmem:[#allocation12 + $0x20] sm:$0xff]
    %v3078 = vld [vmem:[#allocation12 + $0x28] sm:$0xff]
    %v3079 = vld [vmem:[#allocation12 + $0x30] sm:$0xff]
    %v3080 = vld [vmem:[#allocation12 + $0x38] sm:$0xff]
    %v3081 = vld [vmem:[#allocation12 + $0x40] sm:$0xff]
    %v3082 = vld [vmem:[#allocation12 + $0x48] sm:$0xff]
    %v3083 = vld [vmem:[#allocation12 + $0x50] sm:$0xff]
    %v3084 = vld [vmem:[#allocation12 + $0x58] sm:$0xff]
    %v3085 = vld [vmem:[#allocation12 + $0x60] sm:$0xff]
    %v3086 = vld [vmem:[#allocation12 + $0x68] sm:$0xff]
    %v3087 = vld [vmem:[#allocation12 + $0x70] sm:$0xff]
    %v3088 = vld [vmem:[#allocation12 + $0x78] sm:$0xff]
    %v3089 = vld [vmem:[%s554 + $0x1] sm:$0xf]
    %v3090 = vld [vmem:[%s697] sm:$0xff]
    %v3091 = vld [vmem:[%s697 + $0x8] sm:$0xff]
    %v3092 = vld [vmem:[%s697 + $0x10] sm:$0xff]
    %v3093 = vld [vmem:[%s697 + $0x18] sm:$0xff]
    %v3094 = vld [vmem:[%s697 + $0x20] sm:$0xff]
    %v3095 = vld [vmem:[%s697 + $0x28] sm:$0xff]
    %v3096 = vld [vmem:[%s697 + $0x30] sm:$0xff]
    %v3097 = vld [vmem:[%s697 + $0x38] sm:$0xff]
    %v3098 = vld [vmem:[%s697 + $0x40] sm:$0xff]
    %v3099 = vld [vmem:[%s697 + $0x48] sm:$0xff]
    %v3100 = vld [vmem:[%s697 + $0x50] sm:$0xff]
    %v3101 = vld [vmem:[%s697 + $0x58] sm:$0xff]
    %v3102 = vld [vmem:[%s697 + $0x60] sm:$0xff]
    %v3103 = vld [vmem:[%s697 + $0x68] sm:$0xff]
    %v3104 = vld [vmem:[%s697 + $0x70] sm:$0xff]
    %v3105 = vld [vmem:[%s697 + $0x78] sm:$0xff]
    %3106 = vmatprep.subr.mxu0 0.0
    %3107 = vmatpush1.msra.mxu0 %v3105
    %3108 = vmatprep.subr.mxu0 0.0
    %3109 = vmatpush1.msra.mxu0 %v3104
    %3110 = vmatprep.subr.mxu0 0.0
    %3111 = vmatpush1.msra.mxu0 %v3103
    %3112 = vmatprep.subr.mxu0 0.0
    %3113 = vmatpush1.msra.mxu0 %v3102
    %3114 = vmatprep.subr.mxu0 0.0
    %3115 = vmatpush1.msra.mxu0 %v3101
    %3116 = vmatprep.subr.mxu0 0.0
    %3117 = vmatpush1.msra.mxu0 %v3100
    %3118 = vmatprep.subr.mxu0 0.0
    %3119 = vmatpush1.msra.mxu0 %v3099
    %3120 = vmatprep.subr.mxu0 0.0
    %3121 = vmatpush1.msra.mxu0 %v3098
    %3122 = vmatprep.subr.mxu0 0.0
    %3123 = vmatpush1.msra.mxu0 %v3097
    %3124 = vmatprep.subr.mxu0 0.0
    %3125 = vmatpush1.msra.mxu0 %v3096
    %3126 = vmatprep.subr.mxu0 0.0
    %3127 = vmatpush1.msra.mxu0 %v3095
    %3128 = vmatprep.subr.mxu0 0.0
    %3129 = vmatpush1.msra.mxu0 %v3094
    %3130 = vmatprep.subr.mxu0 0.0
    %3131 = vmatpush1.msra.mxu0 %v3093
    %3132 = vmatprep.subr.mxu0 0.0
    %3133 = vmatpush1.msra.mxu0 %v3092
    %3134 = vmatprep.subr.mxu0 0.0
    %3135 = vmatpush1.msra.mxu0 %v3091
    %3136 = vmatprep.subr.mxu0 0.0
    %3137 = vmatpush1.msra.mxu0 %v3090
    %3138 = vmatprep.subr.mxu0 0.0
    %3139 = vmatpush2.msra.mxu0 0.0
    %3140 = vmatprep.subr.mxu0 0.0
    %3141 = vmatpush2.msra.mxu0 0.0
    %3142 = vmatprep.subr.mxu0 0.0
    %3143 = vmatpush2.msra.mxu0 0.0
    %3144 = vmatprep.subr.mxu0 0.0
    %3145 = vmatpush2.msra.mxu0 0.0
    %3146 = vmatprep.subr.mxu0 0.0
    %3147 = vmatpush2.msra.mxu0 0.0
    %3148 = vmatprep.subr.mxu0 0.0
    %3149 = vmatpush2.msra.mxu0 0.0
    %3150 = vmatprep.subr.mxu0 0.0
    %3151 = vmatpush2.msra.mxu0 0.0
    %3152 = vmatprep.subr.mxu0 0.0
    %3153 = vmatpush2.msra.mxu0 0.0
    %3154 = vmatprep.subr.mxu0 0.0
    %3155 = vmatpush2.msra.mxu0 0.0
    %3156 = vmatprep.subr.mxu0 0.0
    %3157 = vmatpush2.msra.mxu0 0.0
    %3158 = vmatprep.subr.mxu0 0.0
    %3159 = vmatpush2.msra.mxu0 0.0
    %3160 = vmatprep.subr.mxu0 0.0
    %3161 = vmatpush2.msra.mxu0 0.0
    %3162 = vmatprep.subr.mxu0 0.0
    %3163 = vmatpush2.msra.mxu0 0.0
    %3164 = vmatprep.subr.mxu0 0.0
    %3165 = vmatpush2.msra.mxu0 0.0
    %3166 = vmatprep.subr.mxu0 0.0
    %3167 = vmatpush2.msra.mxu0 0.0
    %3168 = vmatprep.subr.mxu0 0.0
    %3169 = vmatpush2.msra.mxu0 0.0
    %3170 = vmatprep.mubr.f32.mxu0 0.0
    %3171 = vmatmul.mubr.f32.gmra.mxu0 %v3089
    %v3172 = vpop.f32.mrf.mxu0
    %v3173 = vadd.f32 0.0, %v3172
    %v3174 = vpop.f32.mrf.mxu0
    %3175 = vdwg.mxu0
    %3176 = vmatprep.subr.mxu0 0.0
    %3177 = vmatpush1.msra.mxu0 %v3088
    %3178 = vmatprep.subr.mxu0 0.0
    %3179 = vmatpush1.msra.mxu0 %v3087
    %3180 = vmatprep.subr.mxu0 0.0
    %3181 = vmatpush1.msra.mxu0 %v3086
    %3182 = vmatprep.subr.mxu0 0.0
    %3183 = vmatpush1.msra.mxu0 %v3085
    %3184 = vmatprep.subr.mxu0 0.0
    %3185 = vmatpush1.msra.mxu0 %v3084
    %3186 = vmatprep.subr.mxu0 0.0
    %3187 = vmatpush1.msra.mxu0 %v3083
    %3188 = vmatprep.subr.mxu0 0.0
    %3189 = vmatpush1.msra.mxu0 %v3082
    %3190 = vmatprep.subr.mxu0 0.0
    %3191 = vmatpush1.msra.mxu0 %v3081
    %3192 = vmatprep.subr.mxu0 0.0
    %3193 = vmatpush1.msra.mxu0 %v3080
    %3194 = vmatprep.subr.mxu0 0.0
    %3195 = vmatpush1.msra.mxu0 %v3079
    %3196 = vmatprep.subr.mxu0 0.0
    %3197 = vmatpush1.msra.mxu0 %v3078
    %3198 = vmatprep.subr.mxu0 0.0
    %3199 = vmatpush1.msra.mxu0 %v3077
    %3200 = vmatprep.subr.mxu0 0.0
    %3201 = vmatpush1.msra.mxu0 %v3076
    %3202 = vmatprep.subr.mxu0 0.0
    %3203 = vmatpush1.msra.mxu0 %v3075
    %3204 = vmatprep.subr.mxu0 0.0
    %3205 = vmatpush1.msra.mxu0 %v3074
    %3206 = vmatprep.subr.mxu0 0.0
    %3207 = vmatpush1.msra.mxu0 %v3073
    %3208 = vmatprep.subr.mxu0 0.0
    %3209 = vmatpush2.msra.mxu0 0.0
    %3210 = vmatprep.subr.mxu0 0.0
    %3211 = vmatpush2.msra.mxu0 0.0
    %3212 = vmatprep.subr.mxu0 0.0
    %3213 = vmatpush2.msra.mxu0 0.0
    %3214 = vmatprep.subr.mxu0 0.0
    %3215 = vmatpush2.msra.mxu0 0.0
    %3216 = vmatprep.subr.mxu0 0.0
    %3217 = vmatpush2.msra.mxu0 0.0
    %3218 = vmatprep.subr.mxu0 0.0
    %3219 = vmatpush2.msra.mxu0 0.0
    %3220 = vmatprep.subr.mxu0 0.0
    %3221 = vmatpush2.msra.mxu0 0.0
    %3222 = vmatprep.subr.mxu0 0.0
    %3223 = vmatpush2.msra.mxu0 0.0
    %3224 = vmatprep.subr.mxu0 0.0
    %3225 = vmatpush2.msra.mxu0 0.0
    %3226 = vmatprep.subr.mxu0 0.0
    %3227 = vmatpush2.msra.mxu0 0.0
    %3228 = vmatprep.subr.mxu0 0.0
    %3229 = vmatpush2.msra.mxu0 0.0
    %3230 = vmatprep.subr.mxu0 0.0
    %3231 = vmatpush2.msra.mxu0 0.0
    %3232 = vmatprep.subr.mxu0 0.0
    %3233 = vmatpush2.msra.mxu0 0.0
    %3234 = vmatprep.subr.mxu0 0.0
    %3235 = vmatpush2.msra.mxu0 0.0
    %3236 = vmatprep.subr.mxu0 0.0
    %3237 = vmatpush2.msra.mxu0 0.0
    %3238 = vmatprep.subr.mxu0 0.0
    %3239 = vmatpush2.msra.mxu0 0.0
    %3240 = vmatprep.mubr.f32.mxu0 0.0
    %3241 = vmatmul.mubr.f32.gmra.mxu0 %v3072
    %v3242 = vpop.f32.mrf.mxu0
    %v3243 = vadd.f32 %v3173, %v3242
    %v3244 = vpop.f32.mrf.mxu0
    %3245 = vdwg.mxu0
    %v3246 = vld [vmem:[%s554 + $0x2] sm:$0xf]
    %v3247 = vld [vmem:[%s855] sm:$0xff]
    %v3248 = vld [vmem:[%s855 + $0x8] sm:$0xff]
    %v3249 = vld [vmem:[%s855 + $0x10] sm:$0xff]
    %v3250 = vld [vmem:[%s855 + $0x18] sm:$0xff]
    %v3251 = vld [vmem:[%s855 + $0x20] sm:$0xff]
    %v3252 = vld [vmem:[%s855 + $0x28] sm:$0xff]
    %v3253 = vld [vmem:[%s855 + $0x30] sm:$0xff]
    %v3254 = vld [vmem:[%s855 + $0x38] sm:$0xff]
    %v3255 = vld [vmem:[%s855 + $0x40] sm:$0xff]
    %v3256 = vld [vmem:[%s855 + $0x48] sm:$0xff]
    %v3257 = vld [vmem:[%s855 + $0x50] sm:$0xff]
    %v3258 = vld [vmem:[%s855 + $0x58] sm:$0xff]
    %v3259 = vld [vmem:[%s855 + $0x60] sm:$0xff]
    %v3260 = vld [vmem:[%s855 + $0x68] sm:$0xff]
    %v3261 = vld [vmem:[%s855 + $0x70] sm:$0xff]
    %v3262 = vld [vmem:[%s855 + $0x78] sm:$0xff]
    %3263 = vmatprep.subr.mxu0 0.0
    %3264 = vmatpush1.msra.mxu0 %v3262
    %3265 = vmatprep.subr.mxu0 0.0
    %3266 = vmatpush1.msra.mxu0 %v3261
    %3267 = vmatprep.subr.mxu0 0.0
    %3268 = vmatpush1.msra.mxu0 %v3260
    %3269 = vmatprep.subr.mxu0 0.0
    %3270 = vmatpush1.msra.mxu0 %v3259
    %3271 = vmatprep.subr.mxu0 0.0
    %3272 = vmatpush1.msra.mxu0 %v3258
    %3273 = vmatprep.subr.mxu0 0.0
    %3274 = vmatpush1.msra.mxu0 %v3257
    %3275 = vmatprep.subr.mxu0 0.0
    %3276 = vmatpush1.msra.mxu0 %v3256
    %3277 = vmatprep.subr.mxu0 0.0
    %3278 = vmatpush1.msra.mxu0 %v3255
    %3279 = vmatprep.subr.mxu0 0.0
    %3280 = vmatpush1.msra.mxu0 %v3254
    %3281 = vmatprep.subr.mxu0 0.0
    %3282 = vmatpush1.msra.mxu0 %v3253
    %3283 = vmatprep.subr.mxu0 0.0
    %3284 = vmatpush1.msra.mxu0 %v3252
    %3285 = vmatprep.subr.mxu0 0.0
    %3286 = vmatpush1.msra.mxu0 %v3251
    %3287 = vmatprep.subr.mxu0 0.0
    %3288 = vmatpush1.msra.mxu0 %v3250
    %3289 = vmatprep.subr.mxu0 0.0
    %3290 = vmatpush1.msra.mxu0 %v3249
    %3291 = vmatprep.subr.mxu0 0.0
    %3292 = vmatpush1.msra.mxu0 %v3248
    %3293 = vmatprep.subr.mxu0 0.0
    %3294 = vmatpush1.msra.mxu0 %v3247
    %3295 = vmatprep.subr.mxu0 0.0
    %3296 = vmatpush2.msra.mxu0 0.0
    %3297 = vmatprep.subr.mxu0 0.0
    %3298 = vmatpush2.msra.mxu0 0.0
    %3299 = vmatprep.subr.mxu0 0.0
    %3300 = vmatpush2.msra.mxu0 0.0
    %3301 = vmatprep.subr.mxu0 0.0
    %3302 = vmatpush2.msra.mxu0 0.0
    %3303 = vmatprep.subr.mxu0 0.0
    %3304 = vmatpush2.msra.mxu0 0.0
    %3305 = vmatprep.subr.mxu0 0.0
    %3306 = vmatpush2.msra.mxu0 0.0
    %3307 = vmatprep.subr.mxu0 0.0
    %3308 = vmatpush2.msra.mxu0 0.0
    %3309 = vmatprep.subr.mxu0 0.0
    %3310 = vmatpush2.msra.mxu0 0.0
    %3311 = vmatprep.subr.mxu0 0.0
    %3312 = vmatpush2.msra.mxu0 0.0
    %3313 = vmatprep.subr.mxu0 0.0
    %3314 = vmatpush2.msra.mxu0 0.0
    %3315 = vmatprep.subr.mxu0 0.0
    %3316 = vmatpush2.msra.mxu0 0.0
    %3317 = vmatprep.subr.mxu0 0.0
    %3318 = vmatpush2.msra.mxu0 0.0
    %3319 = vmatprep.subr.mxu0 0.0
    %3320 = vmatpush2.msra.mxu0 0.0
    %3321 = vmatprep.subr.mxu0 0.0
    %3322 = vmatpush2.msra.mxu0 0.0
    %3323 = vmatprep.subr.mxu0 0.0
    %3324 = vmatpush2.msra.mxu0 0.0
    %3325 = vmatprep.subr.mxu0 0.0
    %3326 = vmatpush2.msra.mxu0 0.0
    %3327 = vmatprep.mubr.f32.mxu0 0.0
    %3328 = vmatmul.mubr.f32.gmra.mxu0 %v3246
    %v3329 = vpop.f32.mrf.mxu0
    %v3330 = vadd.f32 0.0, %v3329
    %v3331 = vpop.f32.mrf.mxu0
    %3332 = vdwg.mxu0
    %v3333 = vadd.f32 %v3243, %v3330
    %v3334 = vld [vmem:[%s676] sm:$0xf]
    %v3335 = vld [vmem:[%s944] sm:$0xff]
    %v3336 = vld [vmem:[%s944 + $0x8] sm:$0xff]
    %v3337 = vld [vmem:[%s944 + $0x10] sm:$0xff]
    %v3338 = vld [vmem:[%s944 + $0x18] sm:$0xff]
    %v3339 = vld [vmem:[%s944 + $0x20] sm:$0xff]
    %v3340 = vld [vmem:[%s944 + $0x28] sm:$0xff]
    %v3341 = vld [vmem:[%s944 + $0x30] sm:$0xff]
    %v3342 = vld [vmem:[%s944 + $0x38] sm:$0xff]
    %v3343 = vld [vmem:[%s944 + $0x40] sm:$0xff]
    %v3344 = vld [vmem:[%s944 + $0x48] sm:$0xff]
    %v3345 = vld [vmem:[%s944 + $0x50] sm:$0xff]
    %v3346 = vld [vmem:[%s944 + $0x58] sm:$0xff]
    %v3347 = vld [vmem:[%s944 + $0x60] sm:$0xff]
    %v3348 = vld [vmem:[%s944 + $0x68] sm:$0xff]
    %v3349 = vld [vmem:[%s944 + $0x70] sm:$0xff]
    %v3350 = vld [vmem:[%s944 + $0x78] sm:$0xff]
    %3351 = vmatprep.subr.mxu0 0.0
    %3352 = vmatpush1.msra.mxu0 %v3350
    %3353 = vmatprep.subr.mxu0 0.0
    %3354 = vmatpush1.msra.mxu0 %v3349
    %3355 = vmatprep.subr.mxu0 0.0
    %3356 = vmatpush1.msra.mxu0 %v3348
    %3357 = vmatprep.subr.mxu0 0.0
    %3358 = vmatpush1.msra.mxu0 %v3347
    %3359 = vmatprep.subr.mxu0 0.0
    %3360 = vmatpush1.msra.mxu0 %v3346
    %3361 = vmatprep.subr.mxu0 0.0
    %3362 = vmatpush1.msra.mxu0 %v3345
    %3363 = vmatprep.subr.mxu0 0.0
    %3364 = vmatpush1.msra.mxu0 %v3344
    %3365 = vmatprep.subr.mxu0 0.0
    %3366 = vmatpush1.msra.mxu0 %v3343
    %3367 = vmatprep.subr.mxu0 0.0
    %3368 = vmatpush1.msra.mxu0 %v3342
    %3369 = vmatprep.subr.mxu0 0.0
    %3370 = vmatpush1.msra.mxu0 %v3341
    %3371 = vmatprep.subr.mxu0 0.0
    %3372 = vmatpush1.msra.mxu0 %v3340
    %3373 = vmatprep.subr.mxu0 0.0
    %3374 = vmatpush1.msra.mxu0 %v3339
    %3375 = vmatprep.subr.mxu0 0.0
    %3376 = vmatpush1.msra.mxu0 %v3338
    %3377 = vmatprep.subr.mxu0 0.0
    %3378 = vmatpush1.msra.mxu0 %v3337
    %3379 = vmatprep.subr.mxu0 0.0
    %3380 = vmatpush1.msra.mxu0 %v3336
    %3381 = vmatprep.subr.mxu0 0.0
    %3382 = vmatpush1.msra.mxu0 %v3335
    %3383 = vmatprep.subr.mxu0 0.0
    %3384 = vmatpush2.msra.mxu0 0.0
    %3385 = vmatprep.subr.mxu0 0.0
    %3386 = vmatpush2.msra.mxu0 0.0
    %3387 = vmatprep.subr.mxu0 0.0
    %3388 = vmatpush2.msra.mxu0 0.0
    %3389 = vmatprep.subr.mxu0 0.0
    %3390 = vmatpush2.msra.mxu0 0.0
    %3391 = vmatprep.subr.mxu0 0.0
    %3392 = vmatpush2.msra.mxu0 0.0
    %3393 = vmatprep.subr.mxu0 0.0
    %3394 = vmatpush2.msra.mxu0 0.0
    %3395 = vmatprep.subr.mxu0 0.0
    %3396 = vmatpush2.msra.mxu0 0.0
    %3397 = vmatprep.subr.mxu0 0.0
    %3398 = vmatpush2.msra.mxu0 0.0
    %3399 = vmatprep.subr.mxu0 0.0
    %3400 = vmatpush2.msra.mxu0 0.0
    %3401 = vmatprep.subr.mxu0 0.0
    %3402 = vmatpush2.msra.mxu0 0.0
    %3403 = vmatprep.subr.mxu0 0.0
    %3404 = vmatpush2.msra.mxu0 0.0
    %3405 = vmatprep.subr.mxu0 0.0
    %3406 = vmatpush2.msra.mxu0 0.0
    %3407 = vmatprep.subr.mxu0 0.0
    %3408 = vmatpush2.msra.mxu0 0.0
    %3409 = vmatprep.subr.mxu0 0.0
    %3410 = vmatpush2.msra.mxu0 0.0
    %3411 = vmatprep.subr.mxu0 0.0
    %3412 = vmatpush2.msra.mxu0 0.0
    %3413 = vmatprep.subr.mxu0 0.0
    %3414 = vmatpush2.msra.mxu0 0.0
    %3415 = vmatprep.mubr.f32.mxu0 0.0
    %3416 = vmatmul.mubr.f32.gmra.mxu0 %v3334
    %v3417 = vpop.f32.mrf.mxu0
    %v3418 = vadd.f32 0.0, %v3417
    %v3419 = vpop.f32.mrf.mxu0
    %3420 = vdwg.mxu0
    %v3421 = vadd.f32 %v3333, %v3418
    %v3422 = vld [vmem:[%s676 + $0x1] sm:$0xf]
    %v3423 = vld [vmem:[%s1033] sm:$0xff]
    %v3424 = vld [vmem:[%s1033 + $0x8] sm:$0xff]
    %v3425 = vld [vmem:[%s1033 + $0x10] sm:$0xff]
    %v3426 = vld [vmem:[%s1033 + $0x18] sm:$0xff]
    %v3427 = vld [vmem:[%s1033 + $0x20] sm:$0xff]
    %v3428 = vld [vmem:[%s1033 + $0x28] sm:$0xff]
    %v3429 = vld [vmem:[%s1033 + $0x30] sm:$0xff]
    %v3430 = vld [vmem:[%s1033 + $0x38] sm:$0xff]
    %v3431 = vld [vmem:[%s1033 + $0x40] sm:$0xff]
    %v3432 = vld [vmem:[%s1033 + $0x48] sm:$0xff]
    %v3433 = vld [vmem:[%s1033 + $0x50] sm:$0xff]
    %v3434 = vld [vmem:[%s1033 + $0x58] sm:$0xff]
    %v3435 = vld [vmem:[%s1033 + $0x60] sm:$0xff]
    %v3436 = vld [vmem:[%s1033 + $0x68] sm:$0xff]
    %v3437 = vld [vmem:[%s1033 + $0x70] sm:$0xff]
    %v3438 = vld [vmem:[%s1033 + $0x78] sm:$0xff]
    %3439 = vmatprep.subr.mxu0 0.0
    %3440 = vmatpush1.msra.mxu0 %v3438
    %3441 = vmatprep.subr.mxu0 0.0
    %3442 = vmatpush1.msra.mxu0 %v3437
    %3443 = vmatprep.subr.mxu0 0.0
    %3444 = vmatpush1.msra.mxu0 %v3436
    %3445 = vmatprep.subr.mxu0 0.0
    %3446 = vmatpush1.msra.mxu0 %v3435
    %3447 = vmatprep.subr.mxu0 0.0
    %3448 = vmatpush1.msra.mxu0 %v3434
    %3449 = vmatprep.subr.mxu0 0.0
    %3450 = vmatpush1.msra.mxu0 %v3433
    %3451 = vmatprep.subr.mxu0 0.0
    %3452 = vmatpush1.msra.mxu0 %v3432
    %3453 = vmatprep.subr.mxu0 0.0
    %3454 = vmatpush1.msra.mxu0 %v3431
    %3455 = vmatprep.subr.mxu0 0.0
    %3456 = vmatpush1.msra.mxu0 %v3430
    %3457 = vmatprep.subr.mxu0 0.0
    %3458 = vmatpush1.msra.mxu0 %v3429
    %3459 = vmatprep.subr.mxu0 0.0
    %3460 = vmatpush1.msra.mxu0 %v3428
    %3461 = vmatprep.subr.mxu0 0.0
    %3462 = vmatpush1.msra.mxu0 %v3427
    %3463 = vmatprep.subr.mxu0 0.0
    %3464 = vmatpush1.msra.mxu0 %v3426
    %3465 = vmatprep.subr.mxu0 0.0
    %3466 = vmatpush1.msra.mxu0 %v3425
    %3467 = vmatprep.subr.mxu0 0.0
    %3468 = vmatpush1.msra.mxu0 %v3424
    %3469 = vmatprep.subr.mxu0 0.0
    %3470 = vmatpush1.msra.mxu0 %v3423
    %3471 = vmatprep.subr.mxu0 0.0
    %3472 = vmatpush2.msra.mxu0 0.0
    %3473 = vmatprep.subr.mxu0 0.0
    %3474 = vmatpush2.msra.mxu0 0.0
    %3475 = vmatprep.subr.mxu0 0.0
    %3476 = vmatpush2.msra.mxu0 0.0
    %3477 = vmatprep.subr.mxu0 0.0
    %3478 = vmatpush2.msra.mxu0 0.0
    %3479 = vmatprep.subr.mxu0 0.0
    %3480 = vmatpush2.msra.mxu0 0.0
    %3481 = vmatprep.subr.mxu0 0.0
    %3482 = vmatpush2.msra.mxu0 0.0
    %3483 = vmatprep.subr.mxu0 0.0
    %3484 = vmatpush2.msra.mxu0 0.0
    %3485 = vmatprep.subr.mxu0 0.0
    %3486 = vmatpush2.msra.mxu0 0.0
    %3487 = vmatprep.subr.mxu0 0.0
    %3488 = vmatpush2.msra.mxu0 0.0
    %3489 = vmatprep.subr.mxu0 0.0
    %3490 = vmatpush2.msra.mxu0 0.0
    %3491 = vmatprep.subr.mxu0 0.0
    %3492 = vmatpush2.msra.mxu0 0.0
    %3493 = vmatprep.subr.mxu0 0.0
    %3494 = vmatpush2.msra.mxu0 0.0
    %3495 = vmatprep.subr.mxu0 0.0
    %3496 = vmatpush2.msra.mxu0 0.0
    %3497 = vmatprep.subr.mxu0 0.0
    %3498 = vmatpush2.msra.mxu0 0.0
    %3499 = vmatprep.subr.mxu0 0.0
    %3500 = vmatpush2.msra.mxu0 0.0
    %3501 = vmatprep.subr.mxu0 0.0
    %3502 = vmatpush2.msra.mxu0 0.0
    %3503 = vmatprep.mubr.f32.mxu0 0.0
    %3504 = vmatmul.mubr.f32.gmra.mxu0 %v3422
    %v3505 = vpop.f32.mrf.mxu0
    %v3506 = vadd.f32 0.0, %v3505
    %v3507 = vpop.f32.mrf.mxu0
    %3508 = vdwg.mxu0
    %v3509 = vadd.f32 %v3421, %v3506
    %v3510 = vld [vmem:[%s676 + $0x2] sm:$0xf]
    %v3511 = vld [vmem:[%s1122] sm:$0xff]
    %v3512 = vld [vmem:[%s1122 + $0x8] sm:$0xff]
    %v3513 = vld [vmem:[%s1122 + $0x10] sm:$0xff]
    %v3514 = vld [vmem:[%s1122 + $0x18] sm:$0xff]
    %v3515 = vld [vmem:[%s1122 + $0x20] sm:$0xff]
    %v3516 = vld [vmem:[%s1122 + $0x28] sm:$0xff]
    %v3517 = vld [vmem:[%s1122 + $0x30] sm:$0xff]
    %v3518 = vld [vmem:[%s1122 + $0x38] sm:$0xff]
    %v3519 = vld [vmem:[%s1122 + $0x40] sm:$0xff]
    %v3520 = vld [vmem:[%s1122 + $0x48] sm:$0xff]
    %v3521 = vld [vmem:[%s1122 + $0x50] sm:$0xff]
    %v3522 = vld [vmem:[%s1122 + $0x58] sm:$0xff]
    %v3523 = vld [vmem:[%s1122 + $0x60] sm:$0xff]
    %v3524 = vld [vmem:[%s1122 + $0x68] sm:$0xff]
    %v3525 = vld [vmem:[%s1122 + $0x70] sm:$0xff]
    %v3526 = vld [vmem:[%s1122 + $0x78] sm:$0xff]
    %3527 = vmatprep.subr.mxu0 0.0
    %3528 = vmatpush1.msra.mxu0 %v3526
    %3529 = vmatprep.subr.mxu0 0.0
    %3530 = vmatpush1.msra.mxu0 %v3525
    %3531 = vmatprep.subr.mxu0 0.0
    %3532 = vmatpush1.msra.mxu0 %v3524
    %3533 = vmatprep.subr.mxu0 0.0
    %3534 = vmatpush1.msra.mxu0 %v3523
    %3535 = vmatprep.subr.mxu0 0.0
    %3536 = vmatpush1.msra.mxu0 %v3522
    %3537 = vmatprep.subr.mxu0 0.0
    %3538 = vmatpush1.msra.mxu0 %v3521
    %3539 = vmatprep.subr.mxu0 0.0
    %3540 = vmatpush1.msra.mxu0 %v3520
    %3541 = vmatprep.subr.mxu0 0.0
    %3542 = vmatpush1.msra.mxu0 %v3519
    %3543 = vmatprep.subr.mxu0 0.0
    %3544 = vmatpush1.msra.mxu0 %v3518
    %3545 = vmatprep.subr.mxu0 0.0
    %3546 = vmatpush1.msra.mxu0 %v3517
    %3547 = vmatprep.subr.mxu0 0.0
    %3548 = vmatpush1.msra.mxu0 %v3516
    %3549 = vmatprep.subr.mxu0 0.0
    %3550 = vmatpush1.msra.mxu0 %v3515
    %3551 = vmatprep.subr.mxu0 0.0
    %3552 = vmatpush1.msra.mxu0 %v3514
    %3553 = vmatprep.subr.mxu0 0.0
    %3554 = vmatpush1.msra.mxu0 %v3513
    %3555 = vmatprep.subr.mxu0 0.0
    %3556 = vmatpush1.msra.mxu0 %v3512
    %3557 = vmatprep.subr.mxu0 0.0
    %3558 = vmatpush1.msra.mxu0 %v3511
    %3559 = vmatprep.subr.mxu0 0.0
    %3560 = vmatpush2.msra.mxu0 0.0
    %3561 = vmatprep.subr.mxu0 0.0
    %3562 = vmatpush2.msra.mxu0 0.0
    %3563 = vmatprep.subr.mxu0 0.0
    %3564 = vmatpush2.msra.mxu0 0.0
    %3565 = vmatprep.subr.mxu0 0.0
    %3566 = vmatpush2.msra.mxu0 0.0
    %3567 = vmatprep.subr.mxu0 0.0
    %3568 = vmatpush2.msra.mxu0 0.0
    %3569 = vmatprep.subr.mxu0 0.0
    %3570 = vmatpush2.msra.mxu0 0.0
    %3571 = vmatprep.subr.mxu0 0.0
    %3572 = vmatpush2.msra.mxu0 0.0
    %3573 = vmatprep.subr.mxu0 0.0
    %3574 = vmatpush2.msra.mxu0 0.0
    %3575 = vmatprep.subr.mxu0 0.0
    %3576 = vmatpush2.msra.mxu0 0.0
    %3577 = vmatprep.subr.mxu0 0.0
    %3578 = vmatpush2.msra.mxu0 0.0
    %3579 = vmatprep.subr.mxu0 0.0
    %3580 = vmatpush2.msra.mxu0 0.0
    %3581 = vmatprep.subr.mxu0 0.0
    %3582 = vmatpush2.msra.mxu0 0.0
    %3583 = vmatprep.subr.mxu0 0.0
    %3584 = vmatpush2.msra.mxu0 0.0
    %3585 = vmatprep.subr.mxu0 0.0
    %3586 = vmatpush2.msra.mxu0 0.0
    %3587 = vmatprep.subr.mxu0 0.0
    %3588 = vmatpush2.msra.mxu0 0.0
    %3589 = vmatprep.subr.mxu0 0.0
    %3590 = vmatpush2.msra.mxu0 0.0
    %3591 = vmatprep.mubr.f32.mxu0 0.0
    %3592 = vmatmul.mubr.f32.gmra.mxu0 %v3510
    %v3593 = vpop.f32.mrf.mxu0
    %v3594 = vadd.f32 0.0, %v3593
    %v3595 = vpop.f32.mrf.mxu0
    %3596 = vdwg.mxu0
    %v3597 = vadd.f32 %v3509, %v3594
    %s3598 = scalar_lea.vmem [#allocation3], 40
    %v3599 = vld [vmem:[%s3598] sm:$0xf]
    %v3600 = vld [vmem:[%s1211] sm:$0xff]
    %v3601 = vld [vmem:[%s1211 + $0x8] sm:$0xff]
    %v3602 = vld [vmem:[%s1211 + $0x10] sm:$0xff]
    %v3603 = vld [vmem:[%s1211 + $0x18] sm:$0xff]
    %v3604 = vld [vmem:[%s1211 + $0x20] sm:$0xff]
    %v3605 = vld [vmem:[%s1211 + $0x28] sm:$0xff]
    %v3606 = vld [vmem:[%s1211 + $0x30] sm:$0xff]
    %v3607 = vld [vmem:[%s1211 + $0x38] sm:$0xff]
    %v3608 = vld [vmem:[%s1211 + $0x40] sm:$0xff]
    %v3609 = vld [vmem:[%s1211 + $0x48] sm:$0xff]
    %v3610 = vld [vmem:[%s1211 + $0x50] sm:$0xff]
    %v3611 = vld [vmem:[%s1211 + $0x58] sm:$0xff]
    %v3612 = vld [vmem:[%s1211 + $0x60] sm:$0xff]
    %v3613 = vld [vmem:[%s1211 + $0x68] sm:$0xff]
    %v3614 = vld [vmem:[%s1211 + $0x70] sm:$0xff]
    %v3615 = vld [vmem:[%s1211 + $0x78] sm:$0xff]
    %3616 = vmatprep.subr.mxu0 0.0
    %3617 = vmatpush1.msra.mxu0 %v3615
    %3618 = vmatprep.subr.mxu0 0.0
    %3619 = vmatpush1.msra.mxu0 %v3614
    %3620 = vmatprep.subr.mxu0 0.0
    %3621 = vmatpush1.msra.mxu0 %v3613
    %3622 = vmatprep.subr.mxu0 0.0
    %3623 = vmatpush1.msra.mxu0 %v3612
    %3624 = vmatprep.subr.mxu0 0.0
    %3625 = vmatpush1.msra.mxu0 %v3611
    %3626 = vmatprep.subr.mxu0 0.0
    %3627 = vmatpush1.msra.mxu0 %v3610
    %3628 = vmatprep.subr.mxu0 0.0
    %3629 = vmatpush1.msra.mxu0 %v3609
    %3630 = vmatprep.subr.mxu0 0.0
    %3631 = vmatpush1.msra.mxu0 %v3608
    %3632 = vmatprep.subr.mxu0 0.0
    %3633 = vmatpush1.msra.mxu0 %v3607
    %3634 = vmatprep.subr.mxu0 0.0
    %3635 = vmatpush1.msra.mxu0 %v3606
    %3636 = vmatprep.subr.mxu0 0.0
    %3637 = vmatpush1.msra.mxu0 %v3605
    %3638 = vmatprep.subr.mxu0 0.0
    %3639 = vmatpush1.msra.mxu0 %v3604
    %3640 = vmatprep.subr.mxu0 0.0
    %3641 = vmatpush1.msra.mxu0 %v3603
    %3642 = vmatprep.subr.mxu0 0.0
    %3643 = vmatpush1.msra.mxu0 %v3602
    %3644 = vmatprep.subr.mxu0 0.0
    %3645 = vmatpush1.msra.mxu0 %v3601
    %3646 = vmatprep.subr.mxu0 0.0
    %3647 = vmatpush1.msra.mxu0 %v3600
    %3648 = vmatprep.subr.mxu0 0.0
    %3649 = vmatpush2.msra.mxu0 0.0
    %3650 = vmatprep.subr.mxu0 0.0
    %3651 = vmatpush2.msra.mxu0 0.0
    %3652 = vmatprep.subr.mxu0 0.0
    %3653 = vmatpush2.msra.mxu0 0.0
    %3654 = vmatprep.subr.mxu0 0.0
    %3655 = vmatpush2.msra.mxu0 0.0
    %3656 = vmatprep.subr.mxu0 0.0
    %3657 = vmatpush2.msra.mxu0 0.0
    %3658 = vmatprep.subr.mxu0 0.0
    %3659 = vmatpush2.msra.mxu0 0.0
    %3660 = vmatprep.subr.mxu0 0.0
    %3661 = vmatpush2.msra.mxu0 0.0
    %3662 = vmatprep.subr.mxu0 0.0
    %3663 = vmatpush2.msra.mxu0 0.0
    %3664 = vmatprep.subr.mxu0 0.0
    %3665 = vmatpush2.msra.mxu0 0.0
    %3666 = vmatprep.subr.mxu0 0.0
    %3667 = vmatpush2.msra.mxu0 0.0
    %3668 = vmatprep.subr.mxu0 0.0
    %3669 = vmatpush2.msra.mxu0 0.0
    %3670 = vmatprep.subr.mxu0 0.0
    %3671 = vmatpush2.msra.mxu0 0.0
    %3672 = vmatprep.subr.mxu0 0.0
    %3673 = vmatpush2.msra.mxu0 0.0
    %3674 = vmatprep.subr.mxu0 0.0
    %3675 = vmatpush2.msra.mxu0 0.0
    %3676 = vmatprep.subr.mxu0 0.0
    %3677 = vmatpush2.msra.mxu0 0.0
    %3678 = vmatprep.subr.mxu0 0.0
    %3679 = vmatpush2.msra.mxu0 0.0
    %3680 = vmatprep.mubr.f32.mxu0 0.0
    %3681 = vmatmul.mubr.f32.gmra.mxu0 %v3599
    %v3682 = vpop.f32.mrf.mxu0
    %v3683 = vadd.f32 0.0, %v3682
    %v3684 = vpop.f32.mrf.mxu0
    %3685 = vdwg.mxu0
    %v3686 = vadd.f32 %v3597, %v3683
    %v3687 = vld [vmem:[%s3598 + $0x1] sm:$0xf]
    %v3688 = vld [vmem:[%s1300] sm:$0xff]
    %v3689 = vld [vmem:[%s1300 + $0x8] sm:$0xff]
    %v3690 = vld [vmem:[%s1300 + $0x10] sm:$0xff]
    %v3691 = vld [vmem:[%s1300 + $0x18] sm:$0xff]
    %v3692 = vld [vmem:[%s1300 + $0x20] sm:$0xff]
    %v3693 = vld [vmem:[%s1300 + $0x28] sm:$0xff]
    %v3694 = vld [vmem:[%s1300 + $0x30] sm:$0xff]
    %v3695 = vld [vmem:[%s1300 + $0x38] sm:$0xff]
    %v3696 = vld [vmem:[%s1300 + $0x40] sm:$0xff]
    %v3697 = vld [vmem:[%s1300 + $0x48] sm:$0xff]
    %v3698 = vld [vmem:[%s1300 + $0x50] sm:$0xff]
    %v3699 = vld [vmem:[%s1300 + $0x58] sm:$0xff]
    %v3700 = vld [vmem:[%s1300 + $0x60] sm:$0xff]
    %v3701 = vld [vmem:[%s1300 + $0x68] sm:$0xff]
    %v3702 = vld [vmem:[%s1300 + $0x70] sm:$0xff]
    %v3703 = vld [vmem:[%s1300 + $0x78] sm:$0xff]
    %3704 = vmatprep.subr.mxu0 0.0
    %3705 = vmatpush1.msra.mxu0 %v3703
    %3706 = vmatprep.subr.mxu0 0.0
    %3707 = vmatpush1.msra.mxu0 %v3702
    %3708 = vmatprep.subr.mxu0 0.0
    %3709 = vmatpush1.msra.mxu0 %v3701
    %3710 = vmatprep.subr.mxu0 0.0
    %3711 = vmatpush1.msra.mxu0 %v3700
    %3712 = vmatprep.subr.mxu0 0.0
    %3713 = vmatpush1.msra.mxu0 %v3699
    %3714 = vmatprep.subr.mxu0 0.0
    %3715 = vmatpush1.msra.mxu0 %v3698
    %3716 = vmatprep.subr.mxu0 0.0
    %3717 = vmatpush1.msra.mxu0 %v3697
    %3718 = vmatprep.subr.mxu0 0.0
    %3719 = vmatpush1.msra.mxu0 %v3696
    %3720 = vmatprep.subr.mxu0 0.0
    %3721 = vmatpush1.msra.mxu0 %v3695
    %3722 = vmatprep.subr.mxu0 0.0
    %3723 = vmatpush1.msra.mxu0 %v3694
    %3724 = vmatprep.subr.mxu0 0.0
    %3725 = vmatpush1.msra.mxu0 %v3693
    %3726 = vmatprep.subr.mxu0 0.0
    %3727 = vmatpush1.msra.mxu0 %v3692
    %3728 = vmatprep.subr.mxu0 0.0
    %3729 = vmatpush1.msra.mxu0 %v3691
    %3730 = vmatprep.subr.mxu0 0.0
    %3731 = vmatpush1.msra.mxu0 %v3690
    %3732 = vmatprep.subr.mxu0 0.0
    %3733 = vmatpush1.msra.mxu0 %v3689
    %3734 = vmatprep.subr.mxu0 0.0
    %3735 = vmatpush1.msra.mxu0 %v3688
    %3736 = vmatprep.subr.mxu0 0.0
    %3737 = vmatpush2.msra.mxu0 0.0
    %3738 = vmatprep.subr.mxu0 0.0
    %3739 = vmatpush2.msra.mxu0 0.0
    %3740 = vmatprep.subr.mxu0 0.0
    %3741 = vmatpush2.msra.mxu0 0.0
    %3742 = vmatprep.subr.mxu0 0.0
    %3743 = vmatpush2.msra.mxu0 0.0
    %3744 = vmatprep.subr.mxu0 0.0
    %3745 = vmatpush2.msra.mxu0 0.0
    %3746 = vmatprep.subr.mxu0 0.0
    %3747 = vmatpush2.msra.mxu0 0.0
    %3748 = vmatprep.subr.mxu0 0.0
    %3749 = vmatpush2.msra.mxu0 0.0
    %3750 = vmatprep.subr.mxu0 0.0
    %3751 = vmatpush2.msra.mxu0 0.0
    %3752 = vmatprep.subr.mxu0 0.0
    %3753 = vmatpush2.msra.mxu0 0.0
    %3754 = vmatprep.subr.mxu0 0.0
    %3755 = vmatpush2.msra.mxu0 0.0
    %3756 = vmatprep.subr.mxu0 0.0
    %3757 = vmatpush2.msra.mxu0 0.0
    %3758 = vmatprep.subr.mxu0 0.0
    %3759 = vmatpush2.msra.mxu0 0.0
    %3760 = vmatprep.subr.mxu0 0.0
    %3761 = vmatpush2.msra.mxu0 0.0
    %3762 = vmatprep.subr.mxu0 0.0
    %3763 = vmatpush2.msra.mxu0 0.0
    %3764 = vmatprep.subr.mxu0 0.0
    %3765 = vmatpush2.msra.mxu0 0.0
    %3766 = vmatprep.subr.mxu0 0.0
    %3767 = vmatpush2.msra.mxu0 0.0
    %3768 = vmatprep.mubr.f32.mxu0 0.0
    %3769 = vmatmul.mubr.f32.gmra.mxu0 %v3687
    %v3770 = vpop.f32.mrf.mxu0
    %v3771 = vadd.f32 0.0, %v3770
    %v3772 = vpop.f32.mrf.mxu0
    %3773 = vdwg.mxu0
    %v3774 = vadd.f32 %v3686, %v3771
    %v3775 = vld [vmem:[%s3598 + $0x2] sm:$0xf]
    %v3776 = vld [vmem:[%s1389] sm:$0xff]
    %v3777 = vld [vmem:[%s1389 + $0x8] sm:$0xff]
    %v3778 = vld [vmem:[%s1389 + $0x10] sm:$0xff]
    %v3779 = vld [vmem:[%s1389 + $0x18] sm:$0xff]
    %v3780 = vld [vmem:[%s1389 + $0x20] sm:$0xff]
    %v3781 = vld [vmem:[%s1389 + $0x28] sm:$0xff]
    %v3782 = vld [vmem:[%s1389 + $0x30] sm:$0xff]
    %v3783 = vld [vmem:[%s1389 + $0x38] sm:$0xff]
    %v3784 = vld [vmem:[%s1389 + $0x40] sm:$0xff]
    %v3785 = vld [vmem:[%s1389 + $0x48] sm:$0xff]
    %v3786 = vld [vmem:[%s1389 + $0x50] sm:$0xff]
    %v3787 = vld [vmem:[%s1389 + $0x58] sm:$0xff]
    %v3788 = vld [vmem:[%s1389 + $0x60] sm:$0xff]
    %v3789 = vld [vmem:[%s1389 + $0x68] sm:$0xff]
    %v3790 = vld [vmem:[%s1389 + $0x70] sm:$0xff]
    %v3791 = vld [vmem:[%s1389 + $0x78] sm:$0xff]
    %3792 = vmatprep.subr.mxu0 0.0
    %3793 = vmatpush1.msra.mxu0 %v3791
    %3794 = vmatprep.subr.mxu0 0.0
    %3795 = vmatpush1.msra.mxu0 %v3790
    %3796 = vmatprep.subr.mxu0 0.0
    %3797 = vmatpush1.msra.mxu0 %v3789
    %3798 = vmatprep.subr.mxu0 0.0
    %3799 = vmatpush1.msra.mxu0 %v3788
    %3800 = vmatprep.subr.mxu0 0.0
    %3801 = vmatpush1.msra.mxu0 %v3787
    %3802 = vmatprep.subr.mxu0 0.0
    %3803 = vmatpush1.msra.mxu0 %v3786
    %3804 = vmatprep.subr.mxu0 0.0
    %3805 = vmatpush1.msra.mxu0 %v3785
    %3806 = vmatprep.subr.mxu0 0.0
    %3807 = vmatpush1.msra.mxu0 %v3784
    %3808 = vmatprep.subr.mxu0 0.0
    %3809 = vmatpush1.msra.mxu0 %v3783
    %3810 = vmatprep.subr.mxu0 0.0
    %3811 = vmatpush1.msra.mxu0 %v3782
    %3812 = vmatprep.subr.mxu0 0.0
    %3813 = vmatpush1.msra.mxu0 %v3781
    %3814 = vmatprep.subr.mxu0 0.0
    %3815 = vmatpush1.msra.mxu0 %v3780
    %3816 = vmatprep.subr.mxu0 0.0
    %3817 = vmatpush1.msra.mxu0 %v3779
    %3818 = vmatprep.subr.mxu0 0.0
    %3819 = vmatpush1.msra.mxu0 %v3778
    %3820 = vmatprep.subr.mxu0 0.0
    %3821 = vmatpush1.msra.mxu0 %v3777
    %3822 = vmatprep.subr.mxu0 0.0
    %3823 = vmatpush1.msra.mxu0 %v3776
    %3824 = vmatprep.subr.mxu0 0.0
    %3825 = vmatpush2.msra.mxu0 0.0
    %3826 = vmatprep.subr.mxu0 0.0
    %3827 = vmatpush2.msra.mxu0 0.0
    %3828 = vmatprep.subr.mxu0 0.0
    %3829 = vmatpush2.msra.mxu0 0.0
    %3830 = vmatprep.subr.mxu0 0.0
    %3831 = vmatpush2.msra.mxu0 0.0
    %3832 = vmatprep.subr.mxu0 0.0
    %3833 = vmatpush2.msra.mxu0 0.0
    %3834 = vmatprep.subr.mxu0 0.0
    %3835 = vmatpush2.msra.mxu0 0.0
    %3836 = vmatprep.subr.mxu0 0.0
    %3837 = vmatpush2.msra.mxu0 0.0
    %3838 = vmatprep.subr.mxu0 0.0
    %3839 = vmatpush2.msra.mxu0 0.0
    %3840 = vmatprep.subr.mxu0 0.0
    %3841 = vmatpush2.msra.mxu0 0.0
    %3842 = vmatprep.subr.mxu0 0.0
    %3843 = vmatpush2.msra.mxu0 0.0
    %3844 = vmatprep.subr.mxu0 0.0
    %3845 = vmatpush2.msra.mxu0 0.0
    %3846 = vmatprep.subr.mxu0 0.0
    %3847 = vmatpush2.msra.mxu0 0.0
    %3848 = vmatprep.subr.mxu0 0.0
    %3849 = vmatpush2.msra.mxu0 0.0
    %3850 = vmatprep.subr.mxu0 0.0
    %3851 = vmatpush2.msra.mxu0 0.0
    %3852 = vmatprep.subr.mxu0 0.0
    %3853 = vmatpush2.msra.mxu0 0.0
    %3854 = vmatprep.subr.mxu0 0.0
    %3855 = vmatpush2.msra.mxu0 0.0
    %3856 = vmatprep.mubr.f32.mxu0 0.0
    %3857 = vmatmul.mubr.f32.gmra.mxu0 %v3775
    %v3858 = vpop.f32.mrf.mxu0
    %v3859 = vadd.f32 0.0, %v3858
    %v3860 = vpop.f32.mrf.mxu0
    %3861 = vdwg.mxu0
    %v3862 = vadd.f32 %v3774, %v3859
    %v3863 = vadd.f32 %v3862, %v1481
    %v3864 = vmax.f32 %v3863, 0.0
    %3865 = vst [vmem:[#allocation4 + $0xc] sm:$0xf] %v3864
    %s3866 = smul.u32 8, 16
    %s3867 = smul.u32 %s3866, 16
    %s3868 = smul.u32 %s3867, 4
    %s3869 = sshll.u32 %s3868, 4
    %3870 = dma.done [#allocation6], %s3869
    %v3871 = vld [vmem:[#allocation15] sm:$0xf]
    %v3872 = vld [vmem:[#allocation4] sm:$0x1]
    %v3873 = vld [vmem:[#allocation5] sm:$0xff]
    %v3874 = vld [vmem:[#allocation5 + $0x8] sm:$0xff]
    %v3875 = vld [vmem:[#allocation5 + $0x10] sm:$0xff]
    %v3876 = vld [vmem:[#allocation5 + $0x18] sm:$0xff]
    %v3877 = vld [vmem:[#allocation5 + $0x20] sm:$0xff]
    %v3878 = vld [vmem:[#allocation5 + $0x28] sm:$0xff]
    %v3879 = vld [vmem:[#allocation5 + $0x30] sm:$0xff]
    %v3880 = vld [vmem:[#allocation5 + $0x38] sm:$0xff]
    %v3881 = vld [vmem:[#allocation5 + $0x40] sm:$0xff]
    %v3882 = vld [vmem:[#allocation5 + $0x48] sm:$0xff]
    %v3883 = vld [vmem:[#allocation5 + $0x50] sm:$0xff]
    %v3884 = vld [vmem:[#allocation5 + $0x58] sm:$0xff]
    %v3885 = vld [vmem:[#allocation5 + $0x60] sm:$0xff]
    %v3886 = vld [vmem:[#allocation5 + $0x68] sm:$0xff]
    %v3887 = vld [vmem:[#allocation5 + $0x70] sm:$0xff]
    %v3888 = vld [vmem:[#allocation5 + $0x78] sm:$0xff]
    %v3889 = vld [vmem:[#allocation5 + $0x80] sm:$0xff]
    %v3890 = vld [vmem:[#allocation5 + $0x88] sm:$0xff]
    %v3891 = vld [vmem:[#allocation5 + $0x90] sm:$0xff]
    %v3892 = vld [vmem:[#allocation5 + $0x98] sm:$0xff]
    %v3893 = vld [vmem:[#allocation5 + $0xa0] sm:$0xff]
    %v3894 = vld [vmem:[#allocation5 + $0xa8] sm:$0xff]
    %v3895 = vld [vmem:[#allocation5 + $0xb0] sm:$0xff]
    %v3896 = vld [vmem:[#allocation5 + $0xb8] sm:$0xff]
    %v3897 = vld [vmem:[#allocation5 + $0xc0] sm:$0xff]
    %v3898 = vld [vmem:[#allocation5 + $0xc8] sm:$0xff]
    %v3899 = vld [vmem:[#allocation5 + $0xd0] sm:$0xff]
    %v3900 = vld [vmem:[#allocation5 + $0xd8] sm:$0xff]
    %v3901 = vld [vmem:[#allocation5 + $0xe0] sm:$0xff]
    %v3902 = vld [vmem:[#allocation5 + $0xe8] sm:$0xff]
    %v3903 = vld [vmem:[#allocation5 + $0xf0] sm:$0xff]
    %v3904 = vld [vmem:[#allocation5 + $0xf8] sm:$0xff]
    %v3905 = vld [vmem:[#allocation5 + $0x100] sm:$0xff]
    %v3906 = vld [vmem:[#allocation5 + $0x108] sm:$0xff]
    %v3907 = vld [vmem:[#allocation5 + $0x110] sm:$0xff]
    %v3908 = vld [vmem:[#allocation5 + $0x118] sm:$0xff]
    %v3909 = vld [vmem:[#allocation5 + $0x120] sm:$0xff]
    %v3910 = vld [vmem:[#allocation5 + $0x128] sm:$0xff]
    %v3911 = vld [vmem:[#allocation5 + $0x130] sm:$0xff]
    %v3912 = vld [vmem:[#allocation5 + $0x138] sm:$0xff]
    %v3913 = vld [vmem:[#allocation5 + $0x140] sm:$0xff]
    %v3914 = vld [vmem:[#allocation5 + $0x148] sm:$0xff]
    %v3915 = vld [vmem:[#allocation5 + $0x150] sm:$0xff]
    %v3916 = vld [vmem:[#allocation5 + $0x158] sm:$0xff]
    %v3917 = vld [vmem:[#allocation5 + $0x160] sm:$0xff]
    %v3918 = vld [vmem:[#allocation5 + $0x168] sm:$0xff]
    %v3919 = vld [vmem:[#allocation5 + $0x170] sm:$0xff]
    %v3920 = vld [vmem:[#allocation5 + $0x178] sm:$0xff]
    %v3921 = vld [vmem:[#allocation5 + $0x180] sm:$0xff]
    %v3922 = vld [vmem:[#allocation5 + $0x188] sm:$0xff]
    %v3923 = vld [vmem:[#allocation5 + $0x190] sm:$0xff]
    %v3924 = vld [vmem:[#allocation5 + $0x198] sm:$0xff]
    %v3925 = vld [vmem:[#allocation5 + $0x1a0] sm:$0xff]
    %v3926 = vld [vmem:[#allocation5 + $0x1a8] sm:$0xff]
    %v3927 = vld [vmem:[#allocation5 + $0x1b0] sm:$0xff]
    %v3928 = vld [vmem:[#allocation5 + $0x1b8] sm:$0xff]
    %v3929 = vld [vmem:[#allocation5 + $0x1c0] sm:$0xff]
    %v3930 = vld [vmem:[#allocation5 + $0x1c8] sm:$0xff]
    %v3931 = vld [vmem:[#allocation5 + $0x1d0] sm:$0xff]
    %v3932 = vld [vmem:[#allocation5 + $0x1d8] sm:$0xff]
    %v3933 = vld [vmem:[#allocation5 + $0x1e0] sm:$0xff]
    %v3934 = vld [vmem:[#allocation5 + $0x1e8] sm:$0xff]
    %v3935 = vld [vmem:[#allocation5 + $0x1f0] sm:$0xff]
    %v3936 = vld [vmem:[#allocation5 + $0x1f8] sm:$0xff]
    %3937 = vmatprep.subr.mxu0 %v3934
    %3938 = vmatpush1.msra.mxu0 %v3933
    %3939 = vmatprep.subr.mxu0 %v3930
    %3940 = vmatpush1.msra.mxu0 %v3929
    %3941 = vmatprep.subr.mxu0 %v3926
    %3942 = vmatpush1.msra.mxu0 %v3925
    %3943 = vmatprep.subr.mxu0 %v3922
    %3944 = vmatpush1.msra.mxu0 %v3921
    %3945 = vmatprep.subr.mxu0 %v3918
    %3946 = vmatpush1.msra.mxu0 %v3917
    %3947 = vmatprep.subr.mxu0 %v3914
    %3948 = vmatpush1.msra.mxu0 %v3913
    %3949 = vmatprep.subr.mxu0 %v3910
    %3950 = vmatpush1.msra.mxu0 %v3909
    %3951 = vmatprep.subr.mxu0 %v3906
    %3952 = vmatpush1.msra.mxu0 %v3905
    %3953 = vmatprep.subr.mxu0 %v3902
    %3954 = vmatpush1.msra.mxu0 %v3901
    %3955 = vmatprep.subr.mxu0 %v3898
    %3956 = vmatpush1.msra.mxu0 %v3897
    %3957 = vmatprep.subr.mxu0 %v3894
    %3958 = vmatpush1.msra.mxu0 %v3893
    %3959 = vmatprep.subr.mxu0 %v3890
    %3960 = vmatpush1.msra.mxu0 %v3889
    %3961 = vmatprep.subr.mxu0 %v3886
    %3962 = vmatpush1.msra.mxu0 %v3885
    %3963 = vmatprep.subr.mxu0 %v3882
    %3964 = vmatpush1.msra.mxu0 %v3881
    %3965 = vmatprep.subr.mxu0 %v3878
    %3966 = vmatpush1.msra.mxu0 %v3877
    %3967 = vmatprep.subr.mxu0 %v3874
    %3968 = vmatpush1.msra.mxu0 %v3873
    %3969 = vmatprep.subr.mxu0 0.0
    %3970 = vmatpush2.msra.mxu0 0.0
    %3971 = vmatprep.subr.mxu0 0.0
    %3972 = vmatpush2.msra.mxu0 0.0
    %3973 = vmatprep.subr.mxu0 0.0
    %3974 = vmatpush2.msra.mxu0 0.0
    %3975 = vmatprep.subr.mxu0 0.0
    %3976 = vmatpush2.msra.mxu0 0.0
    %3977 = vmatprep.subr.mxu0 0.0
    %3978 = vmatpush2.msra.mxu0 0.0
    %3979 = vmatprep.subr.mxu0 0.0
    %3980 = vmatpush2.msra.mxu0 0.0
    %3981 = vmatprep.subr.mxu0 0.0
    %3982 = vmatpush2.msra.mxu0 0.0
    %3983 = vmatprep.subr.mxu0 0.0
    %3984 = vmatpush2.msra.mxu0 0.0
    %3985 = vmatprep.subr.mxu0 0.0
    %3986 = vmatpush2.msra.mxu0 0.0
    %3987 = vmatprep.subr.mxu0 0.0
    %3988 = vmatpush2.msra.mxu0 0.0
    %3989 = vmatprep.subr.mxu0 0.0
    %3990 = vmatpush2.msra.mxu0 0.0
    %3991 = vmatprep.subr.mxu0 0.0
    %3992 = vmatpush2.msra.mxu0 0.0
    %3993 = vmatprep.subr.mxu0 0.0
    %3994 = vmatpush2.msra.mxu0 0.0
    %3995 = vmatprep.subr.mxu0 0.0
    %3996 = vmatpush2.msra.mxu0 0.0
    %3997 = vmatprep.subr.mxu0 0.0
    %3998 = vmatpush2.msra.mxu0 0.0
    %3999 = vmatprep.subr.mxu0 0.0
    %4000 = vmatpush2.msra.mxu0 0.0
    %4001 = vmatprep.mubr.f32.mxu0 0.0
    %4002 = vmatmul.mubr.f32.gmra.mxu0 %v3872
    %v4003 = vpop.f32.mrf.mxu0
    %v4004 = vadd.f32 0.0, %v4003
    %v4005 = vpop.f32.mrf.mxu0
    %v4006 = vadd.f32 0.0, %v4005
    %4007 = vdwg.mxu0
    %4008 = vmatprep.subr.mxu0 %v3936
    %4009 = vmatpush1.msra.mxu0 %v3935
    %4010 = vmatprep.subr.mxu0 %v3932
    %4011 = vmatpush1.msra.mxu0 %v3931
    %4012 = vmatprep.subr.mxu0 %v3928
    %4013 = vmatpush1.msra.mxu0 %v3927
    %4014 = vmatprep.subr.mxu0 %v3924
    %4015 = vmatpush1.msra.mxu0 %v3923
    %4016 = vmatprep.subr.mxu0 %v3920
    %4017 = vmatpush1.msra.mxu0 %v3919
    %4018 = vmatprep.subr.mxu0 %v3916
    %4019 = vmatpush1.msra.mxu0 %v3915
    %4020 = vmatprep.subr.mxu0 %v3912
    %4021 = vmatpush1.msra.mxu0 %v3911
    %4022 = vmatprep.subr.mxu0 %v3908
    %4023 = vmatpush1.msra.mxu0 %v3907
    %4024 = vmatprep.subr.mxu0 %v3904
    %4025 = vmatpush1.msra.mxu0 %v3903
    %4026 = vmatprep.subr.mxu0 %v3900
    %4027 = vmatpush1.msra.mxu0 %v3899
    %4028 = vmatprep.subr.mxu0 %v3896
    %4029 = vmatpush1.msra.mxu0 %v3895
    %4030 = vmatprep.subr.mxu0 %v3892
    %4031 = vmatpush1.msra.mxu0 %v3891
    %4032 = vmatprep.subr.mxu0 %v3888
    %4033 = vmatpush1.msra.mxu0 %v3887
    %4034 = vmatprep.subr.mxu0 %v3884
    %4035 = vmatpush1.msra.mxu0 %v3883
    %4036 = vmatprep.subr.mxu0 %v3880
    %4037 = vmatpush1.msra.mxu0 %v3879
    %4038 = vmatprep.subr.mxu0 %v3876
    %4039 = vmatpush1.msra.mxu0 %v3875
    %4040 = vmatprep.subr.mxu0 0.0
    %4041 = vmatpush2.msra.mxu0 0.0
    %4042 = vmatprep.subr.mxu0 0.0
    %4043 = vmatpush2.msra.mxu0 0.0
    %4044 = vmatprep.subr.mxu0 0.0
    %4045 = vmatpush2.msra.mxu0 0.0
    %4046 = vmatprep.subr.mxu0 0.0
    %4047 = vmatpush2.msra.mxu0 0.0
    %4048 = vmatprep.subr.mxu0 0.0
    %4049 = vmatpush2.msra.mxu0 0.0
    %4050 = vmatprep.subr.mxu0 0.0
    %4051 = vmatpush2.msra.mxu0 0.0
    %4052 = vmatprep.subr.mxu0 0.0
    %4053 = vmatpush2.msra.mxu0 0.0
    %4054 = vmatprep.subr.mxu0 0.0
    %4055 = vmatpush2.msra.mxu0 0.0
    %4056 = vmatprep.subr.mxu0 0.0
    %4057 = vmatpush2.msra.mxu0 0.0
    %4058 = vmatprep.subr.mxu0 0.0
    %4059 = vmatpush2.msra.mxu0 0.0
    %4060 = vmatprep.subr.mxu0 0.0
    %4061 = vmatpush2.msra.mxu0 0.0
    %4062 = vmatprep.subr.mxu0 0.0
    %4063 = vmatpush2.msra.mxu0 0.0
    %4064 = vmatprep.subr.mxu0 0.0
    %4065 = vmatpush2.msra.mxu0 0.0
    %4066 = vmatprep.subr.mxu0 0.0
    %4067 = vmatpush2.msra.mxu0 0.0
    %4068 = vmatprep.subr.mxu0 0.0
    %4069 = vmatpush2.msra.mxu0 0.0
    %4070 = vmatprep.subr.mxu0 0.0
    %4071 = vmatpush2.msra.mxu0 0.0
    %4072 = vmatprep.mubr.f32.mxu0 0.0
    %4073 = vmatmul.mubr.f32.gmra.mxu0 %v3872
    %v4074 = vpop.f32.mrf.mxu0
    %v4075 = vadd.f32 0.0, %v4074
    %v4076 = vpop.f32.mrf.mxu0
    %v4077 = vadd.f32 0.0, %v4076
    %4078 = vdwg.mxu0
    %v4083 = vcombine.low %v4004, %v4006
    %v4084 = vcombine.low %v4075, %v4077
    %v4086 = vunpack.c.l.s4 1966171168
    %v4087 = vunpack.c.0.s8 %v4086
    %v4088 = vlaneseq
    %v4089 = vshrl.u32 %v4088, 7
    %v4090 = vsub.s32 %v4087, %v4089
    %v4091 = vrot.slane %v4083, %v4090
    %v4093 = vunpack.c.l.s4 1966171168
    %v4094 = vunpack.c.0.s8 %v4093
    %v4095 = vlaneseq
    %v4096 = vshrl.u32 %v4095, 7
    %v4097 = vsub.s32 %v4094, %v4096
    %v4098 = vrot.slane %v4084, %v4097
    %v4099 = vcombine.low %v4091, %v4098
    %v4101 = vunpack.c.l.s4 1966171168
    %v4102 = vunpack.c.0.s8 %v4101
    %v4103 = vlaneseq
    %v4104 = vshrl.u32 %v4103, 7
    %v4105 = vsub.s32 %v4102, %v4104
    %v4106 = vrot.slane %v4099, %v4105
    %v4108 = vadd.f32 %v3871, %v4106
    %v4109 = vld [vmem:[#allocation4 + $0x1] sm:$0x1]
    %s4110 = scalar_lea.vmem [#allocation5], 512
    %v4111 = vld [vmem:[%s4110] sm:$0xff]
    %v4112 = vld [vmem:[%s4110 + $0x8] sm:$0xff]
    %v4113 = vld [vmem:[%s4110 + $0x10] sm:$0xff]
    %v4114 = vld [vmem:[%s4110 + $0x18] sm:$0xff]
    %v4115 = vld [vmem:[%s4110 + $0x20] sm:$0xff]
    %v4116 = vld [vmem:[%s4110 + $0x28] sm:$0xff]
    %v4117 = vld [vmem:[%s4110 + $0x30] sm:$0xff]
    %v4118 = vld [vmem:[%s4110 + $0x38] sm:$0xff]
    %v4119 = vld [vmem:[%s4110 + $0x40] sm:$0xff]
    %v4120 = vld [vmem:[%s4110 + $0x48] sm:$0xff]
    %v4121 = vld [vmem:[%s4110 + $0x50] sm:$0xff]
    %v4122 = vld [vmem:[%s4110 + $0x58] sm:$0xff]
    %v4123 = vld [vmem:[%s4110 + $0x60] sm:$0xff]
    %v4124 = vld [vmem:[%s4110 + $0x68] sm:$0xff]
    %v4125 = vld [vmem:[%s4110 + $0x70] sm:$0xff]
    %v4126 = vld [vmem:[%s4110 + $0x78] sm:$0xff]
    %v4127 = vld [vmem:[%s4110 + $0x80] sm:$0xff]
    %v4128 = vld [vmem:[%s4110 + $0x88] sm:$0xff]
    %v4129 = vld [vmem:[%s4110 + $0x90] sm:$0xff]
    %v4130 = vld [vmem:[%s4110 + $0x98] sm:$0xff]
    %v4131 = vld [vmem:[%s4110 + $0xa0] sm:$0xff]
    %v4132 = vld [vmem:[%s4110 + $0xa8] sm:$0xff]
    %v4133 = vld [vmem:[%s4110 + $0xb0] sm:$0xff]
    %v4134 = vld [vmem:[%s4110 + $0xb8] sm:$0xff]
    %v4135 = vld [vmem:[%s4110 + $0xc0] sm:$0xff]
    %v4136 = vld [vmem:[%s4110 + $0xc8] sm:$0xff]
    %v4137 = vld [vmem:[%s4110 + $0xd0] sm:$0xff]
    %v4138 = vld [vmem:[%s4110 + $0xd8] sm:$0xff]
    %v4139 = vld [vmem:[%s4110 + $0xe0] sm:$0xff]
    %v4140 = vld [vmem:[%s4110 + $0xe8] sm:$0xff]
    %v4141 = vld [vmem:[%s4110 + $0xf0] sm:$0xff]
    %v4142 = vld [vmem:[%s4110 + $0xf8] sm:$0xff]
    %v4143 = vld [vmem:[%s4110 + $0x100] sm:$0xff]
    %v4144 = vld [vmem:[%s4110 + $0x108] sm:$0xff]
    %v4145 = vld [vmem:[%s4110 + $0x110] sm:$0xff]
    %v4146 = vld [vmem:[%s4110 + $0x118] sm:$0xff]
    %v4147 = vld [vmem:[%s4110 + $0x120] sm:$0xff]
    %v4148 = vld [vmem:[%s4110 + $0x128] sm:$0xff]
    %v4149 = vld [vmem:[%s4110 + $0x130] sm:$0xff]
    %v4150 = vld [vmem:[%s4110 + $0x138] sm:$0xff]
    %v4151 = vld [vmem:[%s4110 + $0x140] sm:$0xff]
    %v4152 = vld [vmem:[%s4110 + $0x148] sm:$0xff]
    %v4153 = vld [vmem:[%s4110 + $0x150] sm:$0xff]
    %v4154 = vld [vmem:[%s4110 + $0x158] sm:$0xff]
    %v4155 = vld [vmem:[%s4110 + $0x160] sm:$0xff]
    %v4156 = vld [vmem:[%s4110 + $0x168] sm:$0xff]
    %v4157 = vld [vmem:[%s4110 + $0x170] sm:$0xff]
    %v4158 = vld [vmem:[%s4110 + $0x178] sm:$0xff]
    %v4159 = vld [vmem:[%s4110 + $0x180] sm:$0xff]
    %v4160 = vld [vmem:[%s4110 + $0x188] sm:$0xff]
    %v4161 = vld [vmem:[%s4110 + $0x190] sm:$0xff]
    %v4162 = vld [vmem:[%s4110 + $0x198] sm:$0xff]
    %v4163 = vld [vmem:[%s4110 + $0x1a0] sm:$0xff]
    %v4164 = vld [vmem:[%s4110 + $0x1a8] sm:$0xff]
    %v4165 = vld [vmem:[%s4110 + $0x1b0] sm:$0xff]
    %v4166 = vld [vmem:[%s4110 + $0x1b8] sm:$0xff]
    %v4167 = vld [vmem:[%s4110 + $0x1c0] sm:$0xff]
    %v4168 = vld [vmem:[%s4110 + $0x1c8] sm:$0xff]
    %v4169 = vld [vmem:[%s4110 + $0x1d0] sm:$0xff]
    %v4170 = vld [vmem:[%s4110 + $0x1d8] sm:$0xff]
    %v4171 = vld [vmem:[%s4110 + $0x1e0] sm:$0xff]
    %v4172 = vld [vmem:[%s4110 + $0x1e8] sm:$0xff]
    %v4173 = vld [vmem:[%s4110 + $0x1f0] sm:$0xff]
    %v4174 = vld [vmem:[%s4110 + $0x1f8] sm:$0xff]
    %4175 = vmatprep.subr.mxu0 %v4172
    %4176 = vmatpush1.msra.mxu0 %v4171
    %4177 = vmatprep.subr.mxu0 %v4168
    %4178 = vmatpush1.msra.mxu0 %v4167
    %4179 = vmatprep.subr.mxu0 %v4164
    %4180 = vmatpush1.msra.mxu0 %v4163
    %4181 = vmatprep.subr.mxu0 %v4160
    %4182 = vmatpush1.msra.mxu0 %v4159
    %4183 = vmatprep.subr.mxu0 %v4156
    %4184 = vmatpush1.msra.mxu0 %v4155
    %4185 = vmatprep.subr.mxu0 %v4152
    %4186 = vmatpush1.msra.mxu0 %v4151
    %4187 = vmatprep.subr.mxu0 %v4148
    %4188 = vmatpush1.msra.mxu0 %v4147
    %4189 = vmatprep.subr.mxu0 %v4144
    %4190 = vmatpush1.msra.mxu0 %v4143
    %4191 = vmatprep.subr.mxu0 %v4140
    %4192 = vmatpush1.msra.mxu0 %v4139
    %4193 = vmatprep.subr.mxu0 %v4136
    %4194 = vmatpush1.msra.mxu0 %v4135
    %4195 = vmatprep.subr.mxu0 %v4132
    %4196 = vmatpush1.msra.mxu0 %v4131
    %4197 = vmatprep.subr.mxu0 %v4128
    %4198 = vmatpush1.msra.mxu0 %v4127
    %4199 = vmatprep.subr.mxu0 %v4124
    %4200 = vmatpush1.msra.mxu0 %v4123
    %4201 = vmatprep.subr.mxu0 %v4120
    %4202 = vmatpush1.msra.mxu0 %v4119
    %4203 = vmatprep.subr.mxu0 %v4116
    %4204 = vmatpush1.msra.mxu0 %v4115
    %4205 = vmatprep.subr.mxu0 %v4112
    %4206 = vmatpush1.msra.mxu0 %v4111
    %4207 = vmatprep.subr.mxu0 0.0
    %4208 = vmatpush2.msra.mxu0 0.0
    %4209 = vmatprep.subr.mxu0 0.0
    %4210 = vmatpush2.msra.mxu0 0.0
    %4211 = vmatprep.subr.mxu0 0.0
    %4212 = vmatpush2.msra.mxu0 0.0
    %4213 = vmatprep.subr.mxu0 0.0
    %4214 = vmatpush2.msra.mxu0 0.0
    %4215 = vmatprep.subr.mxu0 0.0
    %4216 = vmatpush2.msra.mxu0 0.0
    %4217 = vmatprep.subr.mxu0 0.0
    %4218 = vmatpush2.msra.mxu0 0.0
    %4219 = vmatprep.subr.mxu0 0.0
    %4220 = vmatpush2.msra.mxu0 0.0
    %4221 = vmatprep.subr.mxu0 0.0
    %4222 = vmatpush2.msra.mxu0 0.0
    %4223 = vmatprep.subr.mxu0 0.0
    %4224 = vmatpush2.msra.mxu0 0.0
    %4225 = vmatprep.subr.mxu0 0.0
    %4226 = vmatpush2.msra.mxu0 0.0
    %4227 = vmatprep.subr.mxu0 0.0
    %4228 = vmatpush2.msra.mxu0 0.0
    %4229 = vmatprep.subr.mxu0 0.0
    %4230 = vmatpush2.msra.mxu0 0.0
    %4231 = vmatprep.subr.mxu0 0.0
    %4232 = vmatpush2.msra.mxu0 0.0
    %4233 = vmatprep.subr.mxu0 0.0
    %4234 = vmatpush2.msra.mxu0 0.0
    %4235 = vmatprep.subr.mxu0 0.0
    %4236 = vmatpush2.msra.mxu0 0.0
    %4237 = vmatprep.subr.mxu0 0.0
    %4238 = vmatpush2.msra.mxu0 0.0
    %4239 = vmatprep.mubr.f32.mxu0 0.0
    %4240 = vmatmul.mubr.f32.gmra.mxu0 %v4109
    %v4241 = vpop.f32.mrf.mxu0
    %v4242 = vadd.f32 0.0, %v4241
    %v4243 = vpop.f32.mrf.mxu0
    %v4244 = vadd.f32 0.0, %v4243
    %4245 = vdwg.mxu0
    %4246 = vmatprep.subr.mxu0 %v4174
    %4247 = vmatpush1.msra.mxu0 %v4173
    %4248 = vmatprep.subr.mxu0 %v4170
    %4249 = vmatpush1.msra.mxu0 %v4169
    %4250 = vmatprep.subr.mxu0 %v4166
    %4251 = vmatpush1.msra.mxu0 %v4165
    %4252 = vmatprep.subr.mxu0 %v4162
    %4253 = vmatpush1.msra.mxu0 %v4161
    %4254 = vmatprep.subr.mxu0 %v4158
    %4255 = vmatpush1.msra.mxu0 %v4157
    %4256 = vmatprep.subr.mxu0 %v4154
    %4257 = vmatpush1.msra.mxu0 %v4153
    %4258 = vmatprep.subr.mxu0 %v4150
    %4259 = vmatpush1.msra.mxu0 %v4149
    %4260 = vmatprep.subr.mxu0 %v4146
    %4261 = vmatpush1.msra.mxu0 %v4145
    %4262 = vmatprep.subr.mxu0 %v4142
    %4263 = vmatpush1.msra.mxu0 %v4141
    %4264 = vmatprep.subr.mxu0 %v4138
    %4265 = vmatpush1.msra.mxu0 %v4137
    %4266 = vmatprep.subr.mxu0 %v4134
    %4267 = vmatpush1.msra.mxu0 %v4133
    %4268 = vmatprep.subr.mxu0 %v4130
    %4269 = vmatpush1.msra.mxu0 %v4129
    %4270 = vmatprep.subr.mxu0 %v4126
    %4271 = vmatpush1.msra.mxu0 %v4125
    %4272 = vmatprep.subr.mxu0 %v4122
    %4273 = vmatpush1.msra.mxu0 %v4121
    %4274 = vmatprep.subr.mxu0 %v4118
    %4275 = vmatpush1.msra.mxu0 %v4117
    %4276 = vmatprep.subr.mxu0 %v4114
    %4277 = vmatpush1.msra.mxu0 %v4113
    %4278 = vmatprep.subr.mxu0 0.0
    %4279 = vmatpush2.msra.mxu0 0.0
    %4280 = vmatprep.subr.mxu0 0.0
    %4281 = vmatpush2.msra.mxu0 0.0
    %4282 = vmatprep.subr.mxu0 0.0
    %4283 = vmatpush2.msra.mxu0 0.0
    %4284 = vmatprep.subr.mxu0 0.0
    %4285 = vmatpush2.msra.mxu0 0.0
    %4286 = vmatprep.subr.mxu0 0.0
    %4287 = vmatpush2.msra.mxu0 0.0
    %4288 = vmatprep.subr.mxu0 0.0
    %4289 = vmatpush2.msra.mxu0 0.0
    %4290 = vmatprep.subr.mxu0 0.0
    %4291 = vmatpush2.msra.mxu0 0.0
    %4292 = vmatprep.subr.mxu0 0.0
    %4293 = vmatpush2.msra.mxu0 0.0
    %4294 = vmatprep.subr.mxu0 0.0
    %4295 = vmatpush2.msra.mxu0 0.0
    %4296 = vmatprep.subr.mxu0 0.0
    %4297 = vmatpush2.msra.mxu0 0.0
    %4298 = vmatprep.subr.mxu0 0.0
    %4299 = vmatpush2.msra.mxu0 0.0
    %4300 = vmatprep.subr.mxu0 0.0
    %4301 = vmatpush2.msra.mxu0 0.0
    %4302 = vmatprep.subr.mxu0 0.0
    %4303 = vmatpush2.msra.mxu0 0.0
    %4304 = vmatprep.subr.mxu0 0.0
    %4305 = vmatpush2.msra.mxu0 0.0
    %4306 = vmatprep.subr.mxu0 0.0
    %4307 = vmatpush2.msra.mxu0 0.0
    %4308 = vmatprep.subr.mxu0 0.0
    %4309 = vmatpush2.msra.mxu0 0.0
    %4310 = vmatprep.mubr.f32.mxu0 0.0
    %4311 = vmatmul.mubr.f32.gmra.mxu0 %v4109
    %v4312 = vpop.f32.mrf.mxu0
    %v4313 = vadd.f32 0.0, %v4312
    %v4314 = vpop.f32.mrf.mxu0
    %v4315 = vadd.f32 0.0, %v4314
    %4316 = vdwg.mxu0
    %v4321 = vcombine.low %v4242, %v4244
    %v4322 = vcombine.low %v4313, %v4315
    %v4324 = vunpack.c.l.s4 1966171168
    %v4325 = vunpack.c.0.s8 %v4324
    %v4326 = vlaneseq
    %v4327 = vshrl.u32 %v4326, 7
    %v4328 = vsub.s32 %v4325, %v4327
    %v4329 = vrot.slane %v4321, %v4328
    %v4331 = vunpack.c.l.s4 1966171168
    %v4332 = vunpack.c.0.s8 %v4331
    %v4333 = vlaneseq
    %v4334 = vshrl.u32 %v4333, 7
    %v4335 = vsub.s32 %v4332, %v4334
    %v4336 = vrot.slane %v4322, %v4335
    %v4337 = vcombine.low %v4329, %v4336
    %v4339 = vunpack.c.l.s4 1966171168
    %v4340 = vunpack.c.0.s8 %v4339
    %v4341 = vlaneseq
    %v4342 = vshrl.u32 %v4341, 7
    %v4343 = vsub.s32 %v4340, %v4342
    %v4344 = vrot.slane %v4337, %v4343
    %v4346 = vadd.f32 %v4108, %v4344
    %v4347 = vld [vmem:[#allocation4 + $0x2] sm:$0x1]
    %s4348 = scalar_lea.vmem [#allocation5], 1024
    %v4349 = vld [vmem:[%s4348] sm:$0xff]
    %v4350 = vld [vmem:[%s4348 + $0x8] sm:$0xff]
    %v4351 = vld [vmem:[%s4348 + $0x10] sm:$0xff]
    %v4352 = vld [vmem:[%s4348 + $0x18] sm:$0xff]
    %v4353 = vld [vmem:[%s4348 + $0x20] sm:$0xff]
    %v4354 = vld [vmem:[%s4348 + $0x28] sm:$0xff]
    %v4355 = vld [vmem:[%s4348 + $0x30] sm:$0xff]
    %v4356 = vld [vmem:[%s4348 + $0x38] sm:$0xff]
    %v4357 = vld [vmem:[%s4348 + $0x40] sm:$0xff]
    %v4358 = vld [vmem:[%s4348 + $0x48] sm:$0xff]
    %v4359 = vld [vmem:[%s4348 + $0x50] sm:$0xff]
    %v4360 = vld [vmem:[%s4348 + $0x58] sm:$0xff]
    %v4361 = vld [vmem:[%s4348 + $0x60] sm:$0xff]
    %v4362 = vld [vmem:[%s4348 + $0x68] sm:$0xff]
    %v4363 = vld [vmem:[%s4348 + $0x70] sm:$0xff]
    %v4364 = vld [vmem:[%s4348 + $0x78] sm:$0xff]
    %v4365 = vld [vmem:[%s4348 + $0x80] sm:$0xff]
    %v4366 = vld [vmem:[%s4348 + $0x88] sm:$0xff]
    %v4367 = vld [vmem:[%s4348 + $0x90] sm:$0xff]
    %v4368 = vld [vmem:[%s4348 + $0x98] sm:$0xff]
    %v4369 = vld [vmem:[%s4348 + $0xa0] sm:$0xff]
    %v4370 = vld [vmem:[%s4348 + $0xa8] sm:$0xff]
    %v4371 = vld [vmem:[%s4348 + $0xb0] sm:$0xff]
    %v4372 = vld [vmem:[%s4348 + $0xb8] sm:$0xff]
    %v4373 = vld [vmem:[%s4348 + $0xc0] sm:$0xff]
    %v4374 = vld [vmem:[%s4348 + $0xc8] sm:$0xff]
    %v4375 = vld [vmem:[%s4348 + $0xd0] sm:$0xff]
    %v4376 = vld [vmem:[%s4348 + $0xd8] sm:$0xff]
    %v4377 = vld [vmem:[%s4348 + $0xe0] sm:$0xff]
    %v4378 = vld [vmem:[%s4348 + $0xe8] sm:$0xff]
    %v4379 = vld [vmem:[%s4348 + $0xf0] sm:$0xff]
    %v4380 = vld [vmem:[%s4348 + $0xf8] sm:$0xff]
    %v4381 = vld [vmem:[%s4348 + $0x100] sm:$0xff]
    %v4382 = vld [vmem:[%s4348 + $0x108] sm:$0xff]
    %v4383 = vld [vmem:[%s4348 + $0x110] sm:$0xff]
    %v4384 = vld [vmem:[%s4348 + $0x118] sm:$0xff]
    %v4385 = vld [vmem:[%s4348 + $0x120] sm:$0xff]
    %v4386 = vld [vmem:[%s4348 + $0x128] sm:$0xff]
    %v4387 = vld [vmem:[%s4348 + $0x130] sm:$0xff]
    %v4388 = vld [vmem:[%s4348 + $0x138] sm:$0xff]
    %v4389 = vld [vmem:[%s4348 + $0x140] sm:$0xff]
    %v4390 = vld [vmem:[%s4348 + $0x148] sm:$0xff]
    %v4391 = vld [vmem:[%s4348 + $0x150] sm:$0xff]
    %v4392 = vld [vmem:[%s4348 + $0x158] sm:$0xff]
    %v4393 = vld [vmem:[%s4348 + $0x160] sm:$0xff]
    %v4394 = vld [vmem:[%s4348 + $0x168] sm:$0xff]
    %v4395 = vld [vmem:[%s4348 + $0x170] sm:$0xff]
    %v4396 = vld [vmem:[%s4348 + $0x178] sm:$0xff]
    %v4397 = vld [vmem:[%s4348 + $0x180] sm:$0xff]
    %v4398 = vld [vmem:[%s4348 + $0x188] sm:$0xff]
    %v4399 = vld [vmem:[%s4348 + $0x190] sm:$0xff]
    %v4400 = vld [vmem:[%s4348 + $0x198] sm:$0xff]
    %v4401 = vld [vmem:[%s4348 + $0x1a0] sm:$0xff]
    %v4402 = vld [vmem:[%s4348 + $0x1a8] sm:$0xff]
    %v4403 = vld [vmem:[%s4348 + $0x1b0] sm:$0xff]
    %v4404 = vld [vmem:[%s4348 + $0x1b8] sm:$0xff]
    %v4405 = vld [vmem:[%s4348 + $0x1c0] sm:$0xff]
    %v4406 = vld [vmem:[%s4348 + $0x1c8] sm:$0xff]
    %v4407 = vld [vmem:[%s4348 + $0x1d0] sm:$0xff]
    %v4408 = vld [vmem:[%s4348 + $0x1d8] sm:$0xff]
    %v4409 = vld [vmem:[%s4348 + $0x1e0] sm:$0xff]
    %v4410 = vld [vmem:[%s4348 + $0x1e8] sm:$0xff]
    %v4411 = vld [vmem:[%s4348 + $0x1f0] sm:$0xff]
    %v4412 = vld [vmem:[%s4348 + $0x1f8] sm:$0xff]
    %4413 = vmatprep.subr.mxu0 %v4410
    %4414 = vmatpush1.msra.mxu0 %v4409
    %4415 = vmatprep.subr.mxu0 %v4406
    %4416 = vmatpush1.msra.mxu0 %v4405
    %4417 = vmatprep.subr.mxu0 %v4402
    %4418 = vmatpush1.msra.mxu0 %v4401
    %4419 = vmatprep.subr.mxu0 %v4398
    %4420 = vmatpush1.msra.mxu0 %v4397
    %4421 = vmatprep.subr.mxu0 %v4394
    %4422 = vmatpush1.msra.mxu0 %v4393
    %4423 = vmatprep.subr.mxu0 %v4390
    %4424 = vmatpush1.msra.mxu0 %v4389
    %4425 = vmatprep.subr.mxu0 %v4386
    %4426 = vmatpush1.msra.mxu0 %v4385
    %4427 = vmatprep.subr.mxu0 %v4382
    %4428 = vmatpush1.msra.mxu0 %v4381
    %4429 = vmatprep.subr.mxu0 %v4378
    %4430 = vmatpush1.msra.mxu0 %v4377
    %4431 = vmatprep.subr.mxu0 %v4374
    %4432 = vmatpush1.msra.mxu0 %v4373
    %4433 = vmatprep.subr.mxu0 %v4370
    %4434 = vmatpush1.msra.mxu0 %v4369
    %4435 = vmatprep.subr.mxu0 %v4366
    %4436 = vmatpush1.msra.mxu0 %v4365
    %4437 = vmatprep.subr.mxu0 %v4362
    %4438 = vmatpush1.msra.mxu0 %v4361
    %4439 = vmatprep.subr.mxu0 %v4358
    %4440 = vmatpush1.msra.mxu0 %v4357
    %4441 = vmatprep.subr.mxu0 %v4354
    %4442 = vmatpush1.msra.mxu0 %v4353
    %4443 = vmatprep.subr.mxu0 %v4350
    %4444 = vmatpush1.msra.mxu0 %v4349
    %4445 = vmatprep.subr.mxu0 0.0
    %4446 = vmatpush2.msra.mxu0 0.0
    %4447 = vmatprep.subr.mxu0 0.0
    %4448 = vmatpush2.msra.mxu0 0.0
    %4449 = vmatprep.subr.mxu0 0.0
    %4450 = vmatpush2.msra.mxu0 0.0
    %4451 = vmatprep.subr.mxu0 0.0
    %4452 = vmatpush2.msra.mxu0 0.0
    %4453 = vmatprep.subr.mxu0 0.0
    %4454 = vmatpush2.msra.mxu0 0.0
    %4455 = vmatprep.subr.mxu0 0.0
    %4456 = vmatpush2.msra.mxu0 0.0
    %4457 = vmatprep.subr.mxu0 0.0
    %4458 = vmatpush2.msra.mxu0 0.0
    %4459 = vmatprep.subr.mxu0 0.0
    %4460 = vmatpush2.msra.mxu0 0.0
    %4461 = vmatprep.subr.mxu0 0.0
    %4462 = vmatpush2.msra.mxu0 0.0
    %4463 = vmatprep.subr.mxu0 0.0
    %4464 = vmatpush2.msra.mxu0 0.0
    %4465 = vmatprep.subr.mxu0 0.0
    %4466 = vmatpush2.msra.mxu0 0.0
    %4467 = vmatprep.subr.mxu0 0.0
    %4468 = vmatpush2.msra.mxu0 0.0
    %4469 = vmatprep.subr.mxu0 0.0
    %4470 = vmatpush2.msra.mxu0 0.0
    %4471 = vmatprep.subr.mxu0 0.0
    %4472 = vmatpush2.msra.mxu0 0.0
    %4473 = vmatprep.subr.mxu0 0.0
    %4474 = vmatpush2.msra.mxu0 0.0
    %4475 = vmatprep.subr.mxu0 0.0
    %4476 = vmatpush2.msra.mxu0 0.0
    %4477 = vmatprep.mubr.f32.mxu0 0.0
    %4478 = vmatmul.mubr.f32.gmra.mxu0 %v4347
    %v4479 = vpop.f32.mrf.mxu0
    %v4480 = vadd.f32 0.0, %v4479
    %v4481 = vpop.f32.mrf.mxu0
    %v4482 = vadd.f32 0.0, %v4481
    %4483 = vdwg.mxu0
    %4484 = vmatprep.subr.mxu0 %v4412
    %4485 = vmatpush1.msra.mxu0 %v4411
    %4486 = vmatprep.subr.mxu0 %v4408
    %4487 = vmatpush1.msra.mxu0 %v4407
    %4488 = vmatprep.subr.mxu0 %v4404
    %4489 = vmatpush1.msra.mxu0 %v4403
    %4490 = vmatprep.subr.mxu0 %v4400
    %4491 = vmatpush1.msra.mxu0 %v4399
    %4492 = vmatprep.subr.mxu0 %v4396
    %4493 = vmatpush1.msra.mxu0 %v4395
    %4494 = vmatprep.subr.mxu0 %v4392
    %4495 = vmatpush1.msra.mxu0 %v4391
    %4496 = vmatprep.subr.mxu0 %v4388
    %4497 = vmatpush1.msra.mxu0 %v4387
    %4498 = vmatprep.subr.mxu0 %v4384
    %4499 = vmatpush1.msra.mxu0 %v4383
    %4500 = vmatprep.subr.mxu0 %v4380
    %4501 = vmatpush1.msra.mxu0 %v4379
    %4502 = vmatprep.subr.mxu0 %v4376
    %4503 = vmatpush1.msra.mxu0 %v4375
    %4504 = vmatprep.subr.mxu0 %v4372
    %4505 = vmatpush1.msra.mxu0 %v4371
    %4506 = vmatprep.subr.mxu0 %v4368
    %4507 = vmatpush1.msra.mxu0 %v4367
    %4508 = vmatprep.subr.mxu0 %v4364
    %4509 = vmatpush1.msra.mxu0 %v4363
    %4510 = vmatprep.subr.mxu0 %v4360
    %4511 = vmatpush1.msra.mxu0 %v4359
    %4512 = vmatprep.subr.mxu0 %v4356
    %4513 = vmatpush1.msra.mxu0 %v4355
    %4514 = vmatprep.subr.mxu0 %v4352
    %4515 = vmatpush1.msra.mxu0 %v4351
    %4516 = vmatprep.subr.mxu0 0.0
    %4517 = vmatpush2.msra.mxu0 0.0
    %4518 = vmatprep.subr.mxu0 0.0
    %4519 = vmatpush2.msra.mxu0 0.0
    %4520 = vmatprep.subr.mxu0 0.0
    %4521 = vmatpush2.msra.mxu0 0.0
    %4522 = vmatprep.subr.mxu0 0.0
    %4523 = vmatpush2.msra.mxu0 0.0
    %4524 = vmatprep.subr.mxu0 0.0
    %4525 = vmatpush2.msra.mxu0 0.0
    %4526 = vmatprep.subr.mxu0 0.0
    %4527 = vmatpush2.msra.mxu0 0.0
    %4528 = vmatprep.subr.mxu0 0.0
    %4529 = vmatpush2.msra.mxu0 0.0
    %4530 = vmatprep.subr.mxu0 0.0
    %4531 = vmatpush2.msra.mxu0 0.0
    %4532 = vmatprep.subr.mxu0 0.0
    %4533 = vmatpush2.msra.mxu0 0.0
    %4534 = vmatprep.subr.mxu0 0.0
    %4535 = vmatpush2.msra.mxu0 0.0
    %4536 = vmatprep.subr.mxu0 0.0
    %4537 = vmatpush2.msra.mxu0 0.0
    %4538 = vmatprep.subr.mxu0 0.0
    %4539 = vmatpush2.msra.mxu0 0.0
    %4540 = vmatprep.subr.mxu0 0.0
    %4541 = vmatpush2.msra.mxu0 0.0
    %4542 = vmatprep.subr.mxu0 0.0
    %4543 = vmatpush2.msra.mxu0 0.0
    %4544 = vmatprep.subr.mxu0 0.0
    %4545 = vmatpush2.msra.mxu0 0.0
    %4546 = vmatprep.subr.mxu0 0.0
    %4547 = vmatpush2.msra.mxu0 0.0
    %4548 = vmatprep.mubr.f32.mxu0 0.0
    %4549 = vmatmul.mubr.f32.gmra.mxu0 %v4347
    %v4550 = vpop.f32.mrf.mxu0
    %v4551 = vadd.f32 0.0, %v4550
    %v4552 = vpop.f32.mrf.mxu0
    %v4553 = vadd.f32 0.0, %v4552
    %4554 = vdwg.mxu0
    %v4559 = vcombine.low %v4480, %v4482
    %v4560 = vcombine.low %v4551, %v4553
    %v4562 = vunpack.c.l.s4 1966171168
    %v4563 = vunpack.c.0.s8 %v4562
    %v4564 = vlaneseq
    %v4565 = vshrl.u32 %v4564, 7
    %v4566 = vsub.s32 %v4563, %v4565
    %v4567 = vrot.slane %v4559, %v4566
    %v4569 = vunpack.c.l.s4 1966171168
    %v4570 = vunpack.c.0.s8 %v4569
    %v4571 = vlaneseq
    %v4572 = vshrl.u32 %v4571, 7
    %v4573 = vsub.s32 %v4570, %v4572
    %v4574 = vrot.slane %v4560, %v4573
    %v4575 = vcombine.low %v4567, %v4574
    %v4577 = vunpack.c.l.s4 1966171168
    %v4578 = vunpack.c.0.s8 %v4577
    %v4579 = vlaneseq
    %v4580 = vshrl.u32 %v4579, 7
    %v4581 = vsub.s32 %v4578, %v4580
    %v4582 = vrot.slane %v4575, %v4581
    %v4584 = vadd.f32 %v4346, %v4582
    %v4585 = vld [vmem:[#allocation4 + $0x3] sm:$0x1]
    %s4586 = scalar_lea.vmem [#allocation5], 1536
    %v4587 = vld [vmem:[%s4586] sm:$0xff]
    %v4588 = vld [vmem:[%s4586 + $0x8] sm:$0xff]
    %v4589 = vld [vmem:[%s4586 + $0x10] sm:$0xff]
    %v4590 = vld [vmem:[%s4586 + $0x18] sm:$0xff]
    %v4591 = vld [vmem:[%s4586 + $0x20] sm:$0xff]
    %v4592 = vld [vmem:[%s4586 + $0x28] sm:$0xff]
    %v4593 = vld [vmem:[%s4586 + $0x30] sm:$0xff]
    %v4594 = vld [vmem:[%s4586 + $0x38] sm:$0xff]
    %v4595 = vld [vmem:[%s4586 + $0x40] sm:$0xff]
    %v4596 = vld [vmem:[%s4586 + $0x48] sm:$0xff]
    %v4597 = vld [vmem:[%s4586 + $0x50] sm:$0xff]
    %v4598 = vld [vmem:[%s4586 + $0x58] sm:$0xff]
    %v4599 = vld [vmem:[%s4586 + $0x60] sm:$0xff]
    %v4600 = vld [vmem:[%s4586 + $0x68] sm:$0xff]
    %v4601 = vld [vmem:[%s4586 + $0x70] sm:$0xff]
    %v4602 = vld [vmem:[%s4586 + $0x78] sm:$0xff]
    %v4603 = vld [vmem:[%s4586 + $0x80] sm:$0xff]
    %v4604 = vld [vmem:[%s4586 + $0x88] sm:$0xff]
    %v4605 = vld [vmem:[%s4586 + $0x90] sm:$0xff]
    %v4606 = vld [vmem:[%s4586 + $0x98] sm:$0xff]
    %v4607 = vld [vmem:[%s4586 + $0xa0] sm:$0xff]
    %v4608 = vld [vmem:[%s4586 + $0xa8] sm:$0xff]
    %v4609 = vld [vmem:[%s4586 + $0xb0] sm:$0xff]
    %v4610 = vld [vmem:[%s4586 + $0xb8] sm:$0xff]
    %v4611 = vld [vmem:[%s4586 + $0xc0] sm:$0xff]
    %v4612 = vld [vmem:[%s4586 + $0xc8] sm:$0xff]
    %v4613 = vld [vmem:[%s4586 + $0xd0] sm:$0xff]
    %v4614 = vld [vmem:[%s4586 + $0xd8] sm:$0xff]
    %v4615 = vld [vmem:[%s4586 + $0xe0] sm:$0xff]
    %v4616 = vld [vmem:[%s4586 + $0xe8] sm:$0xff]
    %v4617 = vld [vmem:[%s4586 + $0xf0] sm:$0xff]
    %v4618 = vld [vmem:[%s4586 + $0xf8] sm:$0xff]
    %v4619 = vld [vmem:[%s4586 + $0x100] sm:$0xff]
    %v4620 = vld [vmem:[%s4586 + $0x108] sm:$0xff]
    %v4621 = vld [vmem:[%s4586 + $0x110] sm:$0xff]
    %v4622 = vld [vmem:[%s4586 + $0x118] sm:$0xff]
    %v4623 = vld [vmem:[%s4586 + $0x120] sm:$0xff]
    %v4624 = vld [vmem:[%s4586 + $0x128] sm:$0xff]
    %v4625 = vld [vmem:[%s4586 + $0x130] sm:$0xff]
    %v4626 = vld [vmem:[%s4586 + $0x138] sm:$0xff]
    %v4627 = vld [vmem:[%s4586 + $0x140] sm:$0xff]
    %v4628 = vld [vmem:[%s4586 + $0x148] sm:$0xff]
    %v4629 = vld [vmem:[%s4586 + $0x150] sm:$0xff]
    %v4630 = vld [vmem:[%s4586 + $0x158] sm:$0xff]
    %v4631 = vld [vmem:[%s4586 + $0x160] sm:$0xff]
    %v4632 = vld [vmem:[%s4586 + $0x168] sm:$0xff]
    %v4633 = vld [vmem:[%s4586 + $0x170] sm:$0xff]
    %v4634 = vld [vmem:[%s4586 + $0x178] sm:$0xff]
    %v4635 = vld [vmem:[%s4586 + $0x180] sm:$0xff]
    %v4636 = vld [vmem:[%s4586 + $0x188] sm:$0xff]
    %v4637 = vld [vmem:[%s4586 + $0x190] sm:$0xff]
    %v4638 = vld [vmem:[%s4586 + $0x198] sm:$0xff]
    %v4639 = vld [vmem:[%s4586 + $0x1a0] sm:$0xff]
    %v4640 = vld [vmem:[%s4586 + $0x1a8] sm:$0xff]
    %v4641 = vld [vmem:[%s4586 + $0x1b0] sm:$0xff]
    %v4642 = vld [vmem:[%s4586 + $0x1b8] sm:$0xff]
    %v4643 = vld [vmem:[%s4586 + $0x1c0] sm:$0xff]
    %v4644 = vld [vmem:[%s4586 + $0x1c8] sm:$0xff]
    %v4645 = vld [vmem:[%s4586 + $0x1d0] sm:$0xff]
    %v4646 = vld [vmem:[%s4586 + $0x1d8] sm:$0xff]
    %v4647 = vld [vmem:[%s4586 + $0x1e0] sm:$0xff]
    %v4648 = vld [vmem:[%s4586 + $0x1e8] sm:$0xff]
    %v4649 = vld [vmem:[%s4586 + $0x1f0] sm:$0xff]
    %v4650 = vld [vmem:[%s4586 + $0x1f8] sm:$0xff]
    %4651 = vmatprep.subr.mxu0 %v4648
    %4652 = vmatpush1.msra.mxu0 %v4647
    %4653 = vmatprep.subr.mxu0 %v4644
    %4654 = vmatpush1.msra.mxu0 %v4643
    %4655 = vmatprep.subr.mxu0 %v4640
    %4656 = vmatpush1.msra.mxu0 %v4639
    %4657 = vmatprep.subr.mxu0 %v4636
    %4658 = vmatpush1.msra.mxu0 %v4635
    %4659 = vmatprep.subr.mxu0 %v4632
    %4660 = vmatpush1.msra.mxu0 %v4631
    %4661 = vmatprep.subr.mxu0 %v4628
    %4662 = vmatpush1.msra.mxu0 %v4627
    %4663 = vmatprep.subr.mxu0 %v4624
    %4664 = vmatpush1.msra.mxu0 %v4623
    %4665 = vmatprep.subr.mxu0 %v4620
    %4666 = vmatpush1.msra.mxu0 %v4619
    %4667 = vmatprep.subr.mxu0 %v4616
    %4668 = vmatpush1.msra.mxu0 %v4615
    %4669 = vmatprep.subr.mxu0 %v4612
    %4670 = vmatpush1.msra.mxu0 %v4611
    %4671 = vmatprep.subr.mxu0 %v4608
    %4672 = vmatpush1.msra.mxu0 %v4607
    %4673 = vmatprep.subr.mxu0 %v4604
    %4674 = vmatpush1.msra.mxu0 %v4603
    %4675 = vmatprep.subr.mxu0 %v4600
    %4676 = vmatpush1.msra.mxu0 %v4599
    %4677 = vmatprep.subr.mxu0 %v4596
    %4678 = vmatpush1.msra.mxu0 %v4595
    %4679 = vmatprep.subr.mxu0 %v4592
    %4680 = vmatpush1.msra.mxu0 %v4591
    %4681 = vmatprep.subr.mxu0 %v4588
    %4682 = vmatpush1.msra.mxu0 %v4587
    %4683 = vmatprep.subr.mxu0 0.0
    %4684 = vmatpush2.msra.mxu0 0.0
    %4685 = vmatprep.subr.mxu0 0.0
    %4686 = vmatpush2.msra.mxu0 0.0
    %4687 = vmatprep.subr.mxu0 0.0
    %4688 = vmatpush2.msra.mxu0 0.0
    %4689 = vmatprep.subr.mxu0 0.0
    %4690 = vmatpush2.msra.mxu0 0.0
    %4691 = vmatprep.subr.mxu0 0.0
    %4692 = vmatpush2.msra.mxu0 0.0
    %4693 = vmatprep.subr.mxu0 0.0
    %4694 = vmatpush2.msra.mxu0 0.0
    %4695 = vmatprep.subr.mxu0 0.0
    %4696 = vmatpush2.msra.mxu0 0.0
    %4697 = vmatprep.subr.mxu0 0.0
    %4698 = vmatpush2.msra.mxu0 0.0
    %4699 = vmatprep.subr.mxu0 0.0
    %4700 = vmatpush2.msra.mxu0 0.0
    %4701 = vmatprep.subr.mxu0 0.0
    %4702 = vmatpush2.msra.mxu0 0.0
    %4703 = vmatprep.subr.mxu0 0.0
    %4704 = vmatpush2.msra.mxu0 0.0
    %4705 = vmatprep.subr.mxu0 0.0
    %4706 = vmatpush2.msra.mxu0 0.0
    %4707 = vmatprep.subr.mxu0 0.0
    %4708 = vmatpush2.msra.mxu0 0.0
    %4709 = vmatprep.subr.mxu0 0.0
    %4710 = vmatpush2.msra.mxu0 0.0
    %4711 = vmatprep.subr.mxu0 0.0
    %4712 = vmatpush2.msra.mxu0 0.0
    %4713 = vmatprep.subr.mxu0 0.0
    %4714 = vmatpush2.msra.mxu0 0.0
    %4715 = vmatprep.mubr.f32.mxu0 0.0
    %4716 = vmatmul.mubr.f32.gmra.mxu0 %v4585
    %v4717 = vpop.f32.mrf.mxu0
    %v4718 = vadd.f32 0.0, %v4717
    %v4719 = vpop.f32.mrf.mxu0
    %v4720 = vadd.f32 0.0, %v4719
    %4721 = vdwg.mxu0
    %4722 = vmatprep.subr.mxu0 %v4650
    %4723 = vmatpush1.msra.mxu0 %v4649
    %4724 = vmatprep.subr.mxu0 %v4646
    %4725 = vmatpush1.msra.mxu0 %v4645
    %4726 = vmatprep.subr.mxu0 %v4642
    %4727 = vmatpush1.msra.mxu0 %v4641
    %4728 = vmatprep.subr.mxu0 %v4638
    %4729 = vmatpush1.msra.mxu0 %v4637
    %4730 = vmatprep.subr.mxu0 %v4634
    %4731 = vmatpush1.msra.mxu0 %v4633
    %4732 = vmatprep.subr.mxu0 %v4630
    %4733 = vmatpush1.msra.mxu0 %v4629
    %4734 = vmatprep.subr.mxu0 %v4626
    %4735 = vmatpush1.msra.mxu0 %v4625
    %4736 = vmatprep.subr.mxu0 %v4622
    %4737 = vmatpush1.msra.mxu0 %v4621
    %4738 = vmatprep.subr.mxu0 %v4618
    %4739 = vmatpush1.msra.mxu0 %v4617
    %4740 = vmatprep.subr.mxu0 %v4614
    %4741 = vmatpush1.msra.mxu0 %v4613
    %4742 = vmatprep.subr.mxu0 %v4610
    %4743 = vmatpush1.msra.mxu0 %v4609
    %4744 = vmatprep.subr.mxu0 %v4606
    %4745 = vmatpush1.msra.mxu0 %v4605
    %4746 = vmatprep.subr.mxu0 %v4602
    %4747 = vmatpush1.msra.mxu0 %v4601
    %4748 = vmatprep.subr.mxu0 %v4598
    %4749 = vmatpush1.msra.mxu0 %v4597
    %4750 = vmatprep.subr.mxu0 %v4594
    %4751 = vmatpush1.msra.mxu0 %v4593
    %4752 = vmatprep.subr.mxu0 %v4590
    %4753 = vmatpush1.msra.mxu0 %v4589
    %4754 = vmatprep.subr.mxu0 0.0
    %4755 = vmatpush2.msra.mxu0 0.0
    %4756 = vmatprep.subr.mxu0 0.0
    %4757 = vmatpush2.msra.mxu0 0.0
    %4758 = vmatprep.subr.mxu0 0.0
    %4759 = vmatpush2.msra.mxu0 0.0
    %4760 = vmatprep.subr.mxu0 0.0
    %4761 = vmatpush2.msra.mxu0 0.0
    %4762 = vmatprep.subr.mxu0 0.0
    %4763 = vmatpush2.msra.mxu0 0.0
    %4764 = vmatprep.subr.mxu0 0.0
    %4765 = vmatpush2.msra.mxu0 0.0
    %4766 = vmatprep.subr.mxu0 0.0
    %4767 = vmatpush2.msra.mxu0 0.0
    %4768 = vmatprep.subr.mxu0 0.0
    %4769 = vmatpush2.msra.mxu0 0.0
    %4770 = vmatprep.subr.mxu0 0.0
    %4771 = vmatpush2.msra.mxu0 0.0
    %4772 = vmatprep.subr.mxu0 0.0
    %4773 = vmatpush2.msra.mxu0 0.0
    %4774 = vmatprep.subr.mxu0 0.0
    %4775 = vmatpush2.msra.mxu0 0.0
    %4776 = vmatprep.subr.mxu0 0.0
    %4777 = vmatpush2.msra.mxu0 0.0
    %4778 = vmatprep.subr.mxu0 0.0
    %4779 = vmatpush2.msra.mxu0 0.0
    %4780 = vmatprep.subr.mxu0 0.0
    %4781 = vmatpush2.msra.mxu0 0.0
    %4782 = vmatprep.subr.mxu0 0.0
    %4783 = vmatpush2.msra.mxu0 0.0
    %4784 = vmatprep.subr.mxu0 0.0
    %4785 = vmatpush2.msra.mxu0 0.0
    %4786 = vmatprep.mubr.f32.mxu0 0.0
    %4787 = vmatmul.mubr.f32.gmra.mxu0 %v4585
    %v4788 = vpop.f32.mrf.mxu0
    %v4789 = vadd.f32 0.0, %v4788
    %v4790 = vpop.f32.mrf.mxu0
    %v4791 = vadd.f32 0.0, %v4790
    %4792 = vdwg.mxu0
    %v4797 = vcombine.low %v4718, %v4720
    %v4798 = vcombine.low %v4789, %v4791
    %v4800 = vunpack.c.l.s4 1966171168
    %v4801 = vunpack.c.0.s8 %v4800
    %v4802 = vlaneseq
    %v4803 = vshrl.u32 %v4802, 7
    %v4804 = vsub.s32 %v4801, %v4803
    %v4805 = vrot.slane %v4797, %v4804
    %v4807 = vunpack.c.l.s4 1966171168
    %v4808 = vunpack.c.0.s8 %v4807
    %v4809 = vlaneseq
    %v4810 = vshrl.u32 %v4809, 7
    %v4811 = vsub.s32 %v4808, %v4810
    %v4812 = vrot.slane %v4798, %v4811
    %v4813 = vcombine.low %v4805, %v4812
    %v4815 = vunpack.c.l.s4 1966171168
    %v4816 = vunpack.c.0.s8 %v4815
    %v4817 = vlaneseq
    %v4818 = vshrl.u32 %v4817, 7
    %v4819 = vsub.s32 %v4816, %v4818
    %v4820 = vrot.slane %v4813, %v4819
    %v4822 = vadd.f32 %v4584, %v4820
    %v4823 = vld [vmem:[#allocation4 + $0x4] sm:$0x1]
    %s4824 = scalar_lea.vmem [#allocation5], 2048
    %v4825 = vld [vmem:[%s4824] sm:$0xff]
    %v4826 = vld [vmem:[%s4824 + $0x8] sm:$0xff]
    %v4827 = vld [vmem:[%s4824 + $0x10] sm:$0xff]
    %v4828 = vld [vmem:[%s4824 + $0x18] sm:$0xff]
    %v4829 = vld [vmem:[%s4824 + $0x20] sm:$0xff]
    %v4830 = vld [vmem:[%s4824 + $0x28] sm:$0xff]
    %v4831 = vld [vmem:[%s4824 + $0x30] sm:$0xff]
    %v4832 = vld [vmem:[%s4824 + $0x38] sm:$0xff]
    %v4833 = vld [vmem:[%s4824 + $0x40] sm:$0xff]
    %v4834 = vld [vmem:[%s4824 + $0x48] sm:$0xff]
    %v4835 = vld [vmem:[%s4824 + $0x50] sm:$0xff]
    %v4836 = vld [vmem:[%s4824 + $0x58] sm:$0xff]
    %v4837 = vld [vmem:[%s4824 + $0x60] sm:$0xff]
    %v4838 = vld [vmem:[%s4824 + $0x68] sm:$0xff]
    %v4839 = vld [vmem:[%s4824 + $0x70] sm:$0xff]
    %v4840 = vld [vmem:[%s4824 + $0x78] sm:$0xff]
    %v4841 = vld [vmem:[%s4824 + $0x80] sm:$0xff]
    %v4842 = vld [vmem:[%s4824 + $0x88] sm:$0xff]
    %v4843 = vld [vmem:[%s4824 + $0x90] sm:$0xff]
    %v4844 = vld [vmem:[%s4824 + $0x98] sm:$0xff]
    %v4845 = vld [vmem:[%s4824 + $0xa0] sm:$0xff]
    %v4846 = vld [vmem:[%s4824 + $0xa8] sm:$0xff]
    %v4847 = vld [vmem:[%s4824 + $0xb0] sm:$0xff]
    %v4848 = vld [vmem:[%s4824 + $0xb8] sm:$0xff]
    %v4849 = vld [vmem:[%s4824 + $0xc0] sm:$0xff]
    %v4850 = vld [vmem:[%s4824 + $0xc8] sm:$0xff]
    %v4851 = vld [vmem:[%s4824 + $0xd0] sm:$0xff]
    %v4852 = vld [vmem:[%s4824 + $0xd8] sm:$0xff]
    %v4853 = vld [vmem:[%s4824 + $0xe0] sm:$0xff]
    %v4854 = vld [vmem:[%s4824 + $0xe8] sm:$0xff]
    %v4855 = vld [vmem:[%s4824 + $0xf0] sm:$0xff]
    %v4856 = vld [vmem:[%s4824 + $0xf8] sm:$0xff]
    %v4857 = vld [vmem:[%s4824 + $0x100] sm:$0xff]
    %v4858 = vld [vmem:[%s4824 + $0x108] sm:$0xff]
    %v4859 = vld [vmem:[%s4824 + $0x110] sm:$0xff]
    %v4860 = vld [vmem:[%s4824 + $0x118] sm:$0xff]
    %v4861 = vld [vmem:[%s4824 + $0x120] sm:$0xff]
    %v4862 = vld [vmem:[%s4824 + $0x128] sm:$0xff]
    %v4863 = vld [vmem:[%s4824 + $0x130] sm:$0xff]
    %v4864 = vld [vmem:[%s4824 + $0x138] sm:$0xff]
    %v4865 = vld [vmem:[%s4824 + $0x140] sm:$0xff]
    %v4866 = vld [vmem:[%s4824 + $0x148] sm:$0xff]
    %v4867 = vld [vmem:[%s4824 + $0x150] sm:$0xff]
    %v4868 = vld [vmem:[%s4824 + $0x158] sm:$0xff]
    %v4869 = vld [vmem:[%s4824 + $0x160] sm:$0xff]
    %v4870 = vld [vmem:[%s4824 + $0x168] sm:$0xff]
    %v4871 = vld [vmem:[%s4824 + $0x170] sm:$0xff]
    %v4872 = vld [vmem:[%s4824 + $0x178] sm:$0xff]
    %v4873 = vld [vmem:[%s4824 + $0x180] sm:$0xff]
    %v4874 = vld [vmem:[%s4824 + $0x188] sm:$0xff]
    %v4875 = vld [vmem:[%s4824 + $0x190] sm:$0xff]
    %v4876 = vld [vmem:[%s4824 + $0x198] sm:$0xff]
    %v4877 = vld [vmem:[%s4824 + $0x1a0] sm:$0xff]
    %v4878 = vld [vmem:[%s4824 + $0x1a8] sm:$0xff]
    %v4879 = vld [vmem:[%s4824 + $0x1b0] sm:$0xff]
    %v4880 = vld [vmem:[%s4824 + $0x1b8] sm:$0xff]
    %v4881 = vld [vmem:[%s4824 + $0x1c0] sm:$0xff]
    %v4882 = vld [vmem:[%s4824 + $0x1c8] sm:$0xff]
    %v4883 = vld [vmem:[%s4824 + $0x1d0] sm:$0xff]
    %v4884 = vld [vmem:[%s4824 + $0x1d8] sm:$0xff]
    %v4885 = vld [vmem:[%s4824 + $0x1e0] sm:$0xff]
    %v4886 = vld [vmem:[%s4824 + $0x1e8] sm:$0xff]
    %v4887 = vld [vmem:[%s4824 + $0x1f0] sm:$0xff]
    %v4888 = vld [vmem:[%s4824 + $0x1f8] sm:$0xff]
    %4889 = vmatprep.subr.mxu0 %v4886
    %4890 = vmatpush1.msra.mxu0 %v4885
    %4891 = vmatprep.subr.mxu0 %v4882
    %4892 = vmatpush1.msra.mxu0 %v4881
    %4893 = vmatprep.subr.mxu0 %v4878
    %4894 = vmatpush1.msra.mxu0 %v4877
    %4895 = vmatprep.subr.mxu0 %v4874
    %4896 = vmatpush1.msra.mxu0 %v4873
    %4897 = vmatprep.subr.mxu0 %v4870
    %4898 = vmatpush1.msra.mxu0 %v4869
    %4899 = vmatprep.subr.mxu0 %v4866
    %4900 = vmatpush1.msra.mxu0 %v4865
    %4901 = vmatprep.subr.mxu0 %v4862
    %4902 = vmatpush1.msra.mxu0 %v4861
    %4903 = vmatprep.subr.mxu0 %v4858
    %4904 = vmatpush1.msra.mxu0 %v4857
    %4905 = vmatprep.subr.mxu0 %v4854
    %4906 = vmatpush1.msra.mxu0 %v4853
    %4907 = vmatprep.subr.mxu0 %v4850
    %4908 = vmatpush1.msra.mxu0 %v4849
    %4909 = vmatprep.subr.mxu0 %v4846
    %4910 = vmatpush1.msra.mxu0 %v4845
    %4911 = vmatprep.subr.mxu0 %v4842
    %4912 = vmatpush1.msra.mxu0 %v4841
    %4913 = vmatprep.subr.mxu0 %v4838
    %4914 = vmatpush1.msra.mxu0 %v4837
    %4915 = vmatprep.subr.mxu0 %v4834
    %4916 = vmatpush1.msra.mxu0 %v4833
    %4917 = vmatprep.subr.mxu0 %v4830
    %4918 = vmatpush1.msra.mxu0 %v4829
    %4919 = vmatprep.subr.mxu0 %v4826
    %4920 = vmatpush1.msra.mxu0 %v4825
    %4921 = vmatprep.subr.mxu0 0.0
    %4922 = vmatpush2.msra.mxu0 0.0
    %4923 = vmatprep.subr.mxu0 0.0
    %4924 = vmatpush2.msra.mxu0 0.0
    %4925 = vmatprep.subr.mxu0 0.0
    %4926 = vmatpush2.msra.mxu0 0.0
    %4927 = vmatprep.subr.mxu0 0.0
    %4928 = vmatpush2.msra.mxu0 0.0
    %4929 = vmatprep.subr.mxu0 0.0
    %4930 = vmatpush2.msra.mxu0 0.0
    %4931 = vmatprep.subr.mxu0 0.0
    %4932 = vmatpush2.msra.mxu0 0.0
    %4933 = vmatprep.subr.mxu0 0.0
    %4934 = vmatpush2.msra.mxu0 0.0
    %4935 = vmatprep.subr.mxu0 0.0
    %4936 = vmatpush2.msra.mxu0 0.0
    %4937 = vmatprep.subr.mxu0 0.0
    %4938 = vmatpush2.msra.mxu0 0.0
    %4939 = vmatprep.subr.mxu0 0.0
    %4940 = vmatpush2.msra.mxu0 0.0
    %4941 = vmatprep.subr.mxu0 0.0
    %4942 = vmatpush2.msra.mxu0 0.0
    %4943 = vmatprep.subr.mxu0 0.0
    %4944 = vmatpush2.msra.mxu0 0.0
    %4945 = vmatprep.subr.mxu0 0.0
    %4946 = vmatpush2.msra.mxu0 0.0
    %4947 = vmatprep.subr.mxu0 0.0
    %4948 = vmatpush2.msra.mxu0 0.0
    %4949 = vmatprep.subr.mxu0 0.0
    %4950 = vmatpush2.msra.mxu0 0.0
    %4951 = vmatprep.subr.mxu0 0.0
    %4952 = vmatpush2.msra.mxu0 0.0
    %4953 = vmatprep.mubr.f32.mxu0 0.0
    %4954 = vmatmul.mubr.f32.gmra.mxu0 %v4823
    %v4955 = vpop.f32.mrf.mxu0
    %v4956 = vadd.f32 0.0, %v4955
    %v4957 = vpop.f32.mrf.mxu0
    %v4958 = vadd.f32 0.0, %v4957
    %4959 = vdwg.mxu0
    %4960 = vmatprep.subr.mxu0 %v4888
    %4961 = vmatpush1.msra.mxu0 %v4887
    %4962 = vmatprep.subr.mxu0 %v4884
    %4963 = vmatpush1.msra.mxu0 %v4883
    %4964 = vmatprep.subr.mxu0 %v4880
    %4965 = vmatpush1.msra.mxu0 %v4879
    %4966 = vmatprep.subr.mxu0 %v4876
    %4967 = vmatpush1.msra.mxu0 %v4875
    %4968 = vmatprep.subr.mxu0 %v4872
    %4969 = vmatpush1.msra.mxu0 %v4871
    %4970 = vmatprep.subr.mxu0 %v4868
    %4971 = vmatpush1.msra.mxu0 %v4867
    %4972 = vmatprep.subr.mxu0 %v4864
    %4973 = vmatpush1.msra.mxu0 %v4863
    %4974 = vmatprep.subr.mxu0 %v4860
    %4975 = vmatpush1.msra.mxu0 %v4859
    %4976 = vmatprep.subr.mxu0 %v4856
    %4977 = vmatpush1.msra.mxu0 %v4855
    %4978 = vmatprep.subr.mxu0 %v4852
    %4979 = vmatpush1.msra.mxu0 %v4851
    %4980 = vmatprep.subr.mxu0 %v4848
    %4981 = vmatpush1.msra.mxu0 %v4847
    %4982 = vmatprep.subr.mxu0 %v4844
    %4983 = vmatpush1.msra.mxu0 %v4843
    %4984 = vmatprep.subr.mxu0 %v4840
    %4985 = vmatpush1.msra.mxu0 %v4839
    %4986 = vmatprep.subr.mxu0 %v4836
    %4987 = vmatpush1.msra.mxu0 %v4835
    %4988 = vmatprep.subr.mxu0 %v4832
    %4989 = vmatpush1.msra.mxu0 %v4831
    %4990 = vmatprep.subr.mxu0 %v4828
    %4991 = vmatpush1.msra.mxu0 %v4827
    %4992 = vmatprep.subr.mxu0 0.0
    %4993 = vmatpush2.msra.mxu0 0.0
    %4994 = vmatprep.subr.mxu0 0.0
    %4995 = vmatpush2.msra.mxu0 0.0
    %4996 = vmatprep.subr.mxu0 0.0
    %4997 = vmatpush2.msra.mxu0 0.0
    %4998 = vmatprep.subr.mxu0 0.0
    %4999 = vmatpush2.msra.mxu0 0.0
    %5000 = vmatprep.subr.mxu0 0.0
    %5001 = vmatpush2.msra.mxu0 0.0
    %5002 = vmatprep.subr.mxu0 0.0
    %5003 = vmatpush2.msra.mxu0 0.0
    %5004 = vmatprep.subr.mxu0 0.0
    %5005 = vmatpush2.msra.mxu0 0.0
    %5006 = vmatprep.subr.mxu0 0.0
    %5007 = vmatpush2.msra.mxu0 0.0
    %5008 = vmatprep.subr.mxu0 0.0
    %5009 = vmatpush2.msra.mxu0 0.0
    %5010 = vmatprep.subr.mxu0 0.0
    %5011 = vmatpush2.msra.mxu0 0.0
    %5012 = vmatprep.subr.mxu0 0.0
    %5013 = vmatpush2.msra.mxu0 0.0
    %5014 = vmatprep.subr.mxu0 0.0
    %5015 = vmatpush2.msra.mxu0 0.0
    %5016 = vmatprep.subr.mxu0 0.0
    %5017 = vmatpush2.msra.mxu0 0.0
    %5018 = vmatprep.subr.mxu0 0.0
    %5019 = vmatpush2.msra.mxu0 0.0
    %5020 = vmatprep.subr.mxu0 0.0
    %5021 = vmatpush2.msra.mxu0 0.0
    %5022 = vmatprep.subr.mxu0 0.0
    %5023 = vmatpush2.msra.mxu0 0.0
    %5024 = vmatprep.mubr.f32.mxu0 0.0
    %5025 = vmatmul.mubr.f32.gmra.mxu0 %v4823
    %v5026 = vpop.f32.mrf.mxu0
    %v5027 = vadd.f32 0.0, %v5026
    %v5028 = vpop.f32.mrf.mxu0
    %v5029 = vadd.f32 0.0, %v5028
    %5030 = vdwg.mxu0
    %v5035 = vcombine.low %v4956, %v4958
    %v5036 = vcombine.low %v5027, %v5029
    %v5038 = vunpack.c.l.s4 1966171168
    %v5039 = vunpack.c.0.s8 %v5038
    %v5040 = vlaneseq
    %v5041 = vshrl.u32 %v5040, 7
    %v5042 = vsub.s32 %v5039, %v5041
    %v5043 = vrot.slane %v5035, %v5042
    %v5045 = vunpack.c.l.s4 1966171168
    %v5046 = vunpack.c.0.s8 %v5045
    %v5047 = vlaneseq
    %v5048 = vshrl.u32 %v5047, 7
    %v5049 = vsub.s32 %v5046, %v5048
    %v5050 = vrot.slane %v5036, %v5049
    %v5051 = vcombine.low %v5043, %v5050
    %v5053 = vunpack.c.l.s4 1966171168
    %v5054 = vunpack.c.0.s8 %v5053
    %v5055 = vlaneseq
    %v5056 = vshrl.u32 %v5055, 7
    %v5057 = vsub.s32 %v5054, %v5056
    %v5058 = vrot.slane %v5051, %v5057
    %v5060 = vadd.f32 %v4822, %v5058
    %v5061 = vld [vmem:[#allocation4 + $0x5] sm:$0x1]
    %s5062 = scalar_lea.vmem [#allocation5], 2560
    %v5063 = vld [vmem:[%s5062] sm:$0xff]
    %v5064 = vld [vmem:[%s5062 + $0x8] sm:$0xff]
    %v5065 = vld [vmem:[%s5062 + $0x10] sm:$0xff]
    %v5066 = vld [vmem:[%s5062 + $0x18] sm:$0xff]
    %v5067 = vld [vmem:[%s5062 + $0x20] sm:$0xff]
    %v5068 = vld [vmem:[%s5062 + $0x28] sm:$0xff]
    %v5069 = vld [vmem:[%s5062 + $0x30] sm:$0xff]
    %v5070 = vld [vmem:[%s5062 + $0x38] sm:$0xff]
    %v5071 = vld [vmem:[%s5062 + $0x40] sm:$0xff]
    %v5072 = vld [vmem:[%s5062 + $0x48] sm:$0xff]
    %v5073 = vld [vmem:[%s5062 + $0x50] sm:$0xff]
    %v5074 = vld [vmem:[%s5062 + $0x58] sm:$0xff]
    %v5075 = vld [vmem:[%s5062 + $0x60] sm:$0xff]
    %v5076 = vld [vmem:[%s5062 + $0x68] sm:$0xff]
    %v5077 = vld [vmem:[%s5062 + $0x70] sm:$0xff]
    %v5078 = vld [vmem:[%s5062 + $0x78] sm:$0xff]
    %v5079 = vld [vmem:[%s5062 + $0x80] sm:$0xff]
    %v5080 = vld [vmem:[%s5062 + $0x88] sm:$0xff]
    %v5081 = vld [vmem:[%s5062 + $0x90] sm:$0xff]
    %v5082 = vld [vmem:[%s5062 + $0x98] sm:$0xff]
    %v5083 = vld [vmem:[%s5062 + $0xa0] sm:$0xff]
    %v5084 = vld [vmem:[%s5062 + $0xa8] sm:$0xff]
    %v5085 = vld [vmem:[%s5062 + $0xb0] sm:$0xff]
    %v5086 = vld [vmem:[%s5062 + $0xb8] sm:$0xff]
    %v5087 = vld [vmem:[%s5062 + $0xc0] sm:$0xff]
    %v5088 = vld [vmem:[%s5062 + $0xc8] sm:$0xff]
    %v5089 = vld [vmem:[%s5062 + $0xd0] sm:$0xff]
    %v5090 = vld [vmem:[%s5062 + $0xd8] sm:$0xff]
    %v5091 = vld [vmem:[%s5062 + $0xe0] sm:$0xff]
    %v5092 = vld [vmem:[%s5062 + $0xe8] sm:$0xff]
    %v5093 = vld [vmem:[%s5062 + $0xf0] sm:$0xff]
    %v5094 = vld [vmem:[%s5062 + $0xf8] sm:$0xff]
    %v5095 = vld [vmem:[%s5062 + $0x100] sm:$0xff]
    %v5096 = vld [vmem:[%s5062 + $0x108] sm:$0xff]
    %v5097 = vld [vmem:[%s5062 + $0x110] sm:$0xff]
    %v5098 = vld [vmem:[%s5062 + $0x118] sm:$0xff]
    %v5099 = vld [vmem:[%s5062 + $0x120] sm:$0xff]
    %v5100 = vld [vmem:[%s5062 + $0x128] sm:$0xff]
    %v5101 = vld [vmem:[%s5062 + $0x130] sm:$0xff]
    %v5102 = vld [vmem:[%s5062 + $0x138] sm:$0xff]
    %v5103 = vld [vmem:[%s5062 + $0x140] sm:$0xff]
    %v5104 = vld [vmem:[%s5062 + $0x148] sm:$0xff]
    %v5105 = vld [vmem:[%s5062 + $0x150] sm:$0xff]
    %v5106 = vld [vmem:[%s5062 + $0x158] sm:$0xff]
    %v5107 = vld [vmem:[%s5062 + $0x160] sm:$0xff]
    %v5108 = vld [vmem:[%s5062 + $0x168] sm:$0xff]
    %v5109 = vld [vmem:[%s5062 + $0x170] sm:$0xff]
    %v5110 = vld [vmem:[%s5062 + $0x178] sm:$0xff]
    %v5111 = vld [vmem:[%s5062 + $0x180] sm:$0xff]
    %v5112 = vld [vmem:[%s5062 + $0x188] sm:$0xff]
    %v5113 = vld [vmem:[%s5062 + $0x190] sm:$0xff]
    %v5114 = vld [vmem:[%s5062 + $0x198] sm:$0xff]
    %v5115 = vld [vmem:[%s5062 + $0x1a0] sm:$0xff]
    %v5116 = vld [vmem:[%s5062 + $0x1a8] sm:$0xff]
    %v5117 = vld [vmem:[%s5062 + $0x1b0] sm:$0xff]
    %v5118 = vld [vmem:[%s5062 + $0x1b8] sm:$0xff]
    %v5119 = vld [vmem:[%s5062 + $0x1c0] sm:$0xff]
    %v5120 = vld [vmem:[%s5062 + $0x1c8] sm:$0xff]
    %v5121 = vld [vmem:[%s5062 + $0x1d0] sm:$0xff]
    %v5122 = vld [vmem:[%s5062 + $0x1d8] sm:$0xff]
    %v5123 = vld [vmem:[%s5062 + $0x1e0] sm:$0xff]
    %v5124 = vld [vmem:[%s5062 + $0x1e8] sm:$0xff]
    %v5125 = vld [vmem:[%s5062 + $0x1f0] sm:$0xff]
    %v5126 = vld [vmem:[%s5062 + $0x1f8] sm:$0xff]
    %5127 = vmatprep.subr.mxu0 %v5124
    %5128 = vmatpush1.msra.mxu0 %v5123
    %5129 = vmatprep.subr.mxu0 %v5120
    %5130 = vmatpush1.msra.mxu0 %v5119
    %5131 = vmatprep.subr.mxu0 %v5116
    %5132 = vmatpush1.msra.mxu0 %v5115
    %5133 = vmatprep.subr.mxu0 %v5112
    %5134 = vmatpush1.msra.mxu0 %v5111
    %5135 = vmatprep.subr.mxu0 %v5108
    %5136 = vmatpush1.msra.mxu0 %v5107
    %5137 = vmatprep.subr.mxu0 %v5104
    %5138 = vmatpush1.msra.mxu0 %v5103
    %5139 = vmatprep.subr.mxu0 %v5100
    %5140 = vmatpush1.msra.mxu0 %v5099
    %5141 = vmatprep.subr.mxu0 %v5096
    %5142 = vmatpush1.msra.mxu0 %v5095
    %5143 = vmatprep.subr.mxu0 %v5092
    %5144 = vmatpush1.msra.mxu0 %v5091
    %5145 = vmatprep.subr.mxu0 %v5088
    %5146 = vmatpush1.msra.mxu0 %v5087
    %5147 = vmatprep.subr.mxu0 %v5084
    %5148 = vmatpush1.msra.mxu0 %v5083
    %5149 = vmatprep.subr.mxu0 %v5080
    %5150 = vmatpush1.msra.mxu0 %v5079
    %5151 = vmatprep.subr.mxu0 %v5076
    %5152 = vmatpush1.msra.mxu0 %v5075
    %5153 = vmatprep.subr.mxu0 %v5072
    %5154 = vmatpush1.msra.mxu0 %v5071
    %5155 = vmatprep.subr.mxu0 %v5068
    %5156 = vmatpush1.msra.mxu0 %v5067
    %5157 = vmatprep.subr.mxu0 %v5064
    %5158 = vmatpush1.msra.mxu0 %v5063
    %5159 = vmatprep.subr.mxu0 0.0
    %5160 = vmatpush2.msra.mxu0 0.0
    %5161 = vmatprep.subr.mxu0 0.0
    %5162 = vmatpush2.msra.mxu0 0.0
    %5163 = vmatprep.subr.mxu0 0.0
    %5164 = vmatpush2.msra.mxu0 0.0
    %5165 = vmatprep.subr.mxu0 0.0
    %5166 = vmatpush2.msra.mxu0 0.0
    %5167 = vmatprep.subr.mxu0 0.0
    %5168 = vmatpush2.msra.mxu0 0.0
    %5169 = vmatprep.subr.mxu0 0.0
    %5170 = vmatpush2.msra.mxu0 0.0
    %5171 = vmatprep.subr.mxu0 0.0
    %5172 = vmatpush2.msra.mxu0 0.0
    %5173 = vmatprep.subr.mxu0 0.0
    %5174 = vmatpush2.msra.mxu0 0.0
    %5175 = vmatprep.subr.mxu0 0.0
    %5176 = vmatpush2.msra.mxu0 0.0
    %5177 = vmatprep.subr.mxu0 0.0
    %5178 = vmatpush2.msra.mxu0 0.0
    %5179 = vmatprep.subr.mxu0 0.0
    %5180 = vmatpush2.msra.mxu0 0.0
    %5181 = vmatprep.subr.mxu0 0.0
    %5182 = vmatpush2.msra.mxu0 0.0
    %5183 = vmatprep.subr.mxu0 0.0
    %5184 = vmatpush2.msra.mxu0 0.0
    %5185 = vmatprep.subr.mxu0 0.0
    %5186 = vmatpush2.msra.mxu0 0.0
    %5187 = vmatprep.subr.mxu0 0.0
    %5188 = vmatpush2.msra.mxu0 0.0
    %5189 = vmatprep.subr.mxu0 0.0
    %5190 = vmatpush2.msra.mxu0 0.0
    %5191 = vmatprep.mubr.f32.mxu0 0.0
    %5192 = vmatmul.mubr.f32.gmra.mxu0 %v5061
    %v5193 = vpop.f32.mrf.mxu0
    %v5194 = vadd.f32 0.0, %v5193
    %v5195 = vpop.f32.mrf.mxu0
    %v5196 = vadd.f32 0.0, %v5195
    %5197 = vdwg.mxu0
    %5198 = vmatprep.subr.mxu0 %v5126
    %5199 = vmatpush1.msra.mxu0 %v5125
    %5200 = vmatprep.subr.mxu0 %v5122
    %5201 = vmatpush1.msra.mxu0 %v5121
    %5202 = vmatprep.subr.mxu0 %v5118
    %5203 = vmatpush1.msra.mxu0 %v5117
    %5204 = vmatprep.subr.mxu0 %v5114
    %5205 = vmatpush1.msra.mxu0 %v5113
    %5206 = vmatprep.subr.mxu0 %v5110
    %5207 = vmatpush1.msra.mxu0 %v5109
    %5208 = vmatprep.subr.mxu0 %v5106
    %5209 = vmatpush1.msra.mxu0 %v5105
    %5210 = vmatprep.subr.mxu0 %v5102
    %5211 = vmatpush1.msra.mxu0 %v5101
    %5212 = vmatprep.subr.mxu0 %v5098
    %5213 = vmatpush1.msra.mxu0 %v5097
    %5214 = vmatprep.subr.mxu0 %v5094
    %5215 = vmatpush1.msra.mxu0 %v5093
    %5216 = vmatprep.subr.mxu0 %v5090
    %5217 = vmatpush1.msra.mxu0 %v5089
    %5218 = vmatprep.subr.mxu0 %v5086
    %5219 = vmatpush1.msra.mxu0 %v5085
    %5220 = vmatprep.subr.mxu0 %v5082
    %5221 = vmatpush1.msra.mxu0 %v5081
    %5222 = vmatprep.subr.mxu0 %v5078
    %5223 = vmatpush1.msra.mxu0 %v5077
    %5224 = vmatprep.subr.mxu0 %v5074
    %5225 = vmatpush1.msra.mxu0 %v5073
    %5226 = vmatprep.subr.mxu0 %v5070
    %5227 = vmatpush1.msra.mxu0 %v5069
    %5228 = vmatprep.subr.mxu0 %v5066
    %5229 = vmatpush1.msra.mxu0 %v5065
    %5230 = vmatprep.subr.mxu0 0.0
    %5231 = vmatpush2.msra.mxu0 0.0
    %5232 = vmatprep.subr.mxu0 0.0
    %5233 = vmatpush2.msra.mxu0 0.0
    %5234 = vmatprep.subr.mxu0 0.0
    %5235 = vmatpush2.msra.mxu0 0.0
    %5236 = vmatprep.subr.mxu0 0.0
    %5237 = vmatpush2.msra.mxu0 0.0
    %5238 = vmatprep.subr.mxu0 0.0
    %5239 = vmatpush2.msra.mxu0 0.0
    %5240 = vmatprep.subr.mxu0 0.0
    %5241 = vmatpush2.msra.mxu0 0.0
    %5242 = vmatprep.subr.mxu0 0.0
    %5243 = vmatpush2.msra.mxu0 0.0
    %5244 = vmatprep.subr.mxu0 0.0
    %5245 = vmatpush2.msra.mxu0 0.0
    %5246 = vmatprep.subr.mxu0 0.0
    %5247 = vmatpush2.msra.mxu0 0.0
    %5248 = vmatprep.subr.mxu0 0.0
    %5249 = vmatpush2.msra.mxu0 0.0
    %5250 = vmatprep.subr.mxu0 0.0
    %5251 = vmatpush2.msra.mxu0 0.0
    %5252 = vmatprep.subr.mxu0 0.0
    %5253 = vmatpush2.msra.mxu0 0.0
    %5254 = vmatprep.subr.mxu0 0.0
    %5255 = vmatpush2.msra.mxu0 0.0
    %5256 = vmatprep.subr.mxu0 0.0
    %5257 = vmatpush2.msra.mxu0 0.0
    %5258 = vmatprep.subr.mxu0 0.0
    %5259 = vmatpush2.msra.mxu0 0.0
    %5260 = vmatprep.subr.mxu0 0.0
    %5261 = vmatpush2.msra.mxu0 0.0
    %5262 = vmatprep.mubr.f32.mxu0 0.0
    %5263 = vmatmul.mubr.f32.gmra.mxu0 %v5061
    %v5264 = vpop.f32.mrf.mxu0
    %v5265 = vadd.f32 0.0, %v5264
    %v5266 = vpop.f32.mrf.mxu0
    %v5267 = vadd.f32 0.0, %v5266
    %5268 = vdwg.mxu0
    %v5273 = vcombine.low %v5194, %v5196
    %v5274 = vcombine.low %v5265, %v5267
    %v5276 = vunpack.c.l.s4 1966171168
    %v5277 = vunpack.c.0.s8 %v5276
    %v5278 = vlaneseq
    %v5279 = vshrl.u32 %v5278, 7
    %v5280 = vsub.s32 %v5277, %v5279
    %v5281 = vrot.slane %v5273, %v5280
    %v5283 = vunpack.c.l.s4 1966171168
    %v5284 = vunpack.c.0.s8 %v5283
    %v5285 = vlaneseq
    %v5286 = vshrl.u32 %v5285, 7
    %v5287 = vsub.s32 %v5284, %v5286
    %v5288 = vrot.slane %v5274, %v5287
    %v5289 = vcombine.low %v5281, %v5288
    %v5291 = vunpack.c.l.s4 1966171168
    %v5292 = vunpack.c.0.s8 %v5291
    %v5293 = vlaneseq
    %v5294 = vshrl.u32 %v5293, 7
    %v5295 = vsub.s32 %v5292, %v5294
    %v5296 = vrot.slane %v5289, %v5295
    %v5298 = vadd.f32 %v5060, %v5296
    %v5299 = vld [vmem:[#allocation4 + $0x6] sm:$0x1]
    %s5300 = scalar_lea.vmem [#allocation5], 3072
    %v5301 = vld [vmem:[%s5300] sm:$0xff]
    %v5302 = vld [vmem:[%s5300 + $0x8] sm:$0xff]
    %v5303 = vld [vmem:[%s5300 + $0x10] sm:$0xff]
    %v5304 = vld [vmem:[%s5300 + $0x18] sm:$0xff]
    %v5305 = vld [vmem:[%s5300 + $0x20] sm:$0xff]
    %v5306 = vld [vmem:[%s5300 + $0x28] sm:$0xff]
    %v5307 = vld [vmem:[%s5300 + $0x30] sm:$0xff]
    %v5308 = vld [vmem:[%s5300 + $0x38] sm:$0xff]
    %v5309 = vld [vmem:[%s5300 + $0x40] sm:$0xff]
    %v5310 = vld [vmem:[%s5300 + $0x48] sm:$0xff]
    %v5311 = vld [vmem:[%s5300 + $0x50] sm:$0xff]
    %v5312 = vld [vmem:[%s5300 + $0x58] sm:$0xff]
    %v5313 = vld [vmem:[%s5300 + $0x60] sm:$0xff]
    %v5314 = vld [vmem:[%s5300 + $0x68] sm:$0xff]
    %v5315 = vld [vmem:[%s5300 + $0x70] sm:$0xff]
    %v5316 = vld [vmem:[%s5300 + $0x78] sm:$0xff]
    %v5317 = vld [vmem:[%s5300 + $0x80] sm:$0xff]
    %v5318 = vld [vmem:[%s5300 + $0x88] sm:$0xff]
    %v5319 = vld [vmem:[%s5300 + $0x90] sm:$0xff]
    %v5320 = vld [vmem:[%s5300 + $0x98] sm:$0xff]
    %v5321 = vld [vmem:[%s5300 + $0xa0] sm:$0xff]
    %v5322 = vld [vmem:[%s5300 + $0xa8] sm:$0xff]
    %v5323 = vld [vmem:[%s5300 + $0xb0] sm:$0xff]
    %v5324 = vld [vmem:[%s5300 + $0xb8] sm:$0xff]
    %v5325 = vld [vmem:[%s5300 + $0xc0] sm:$0xff]
    %v5326 = vld [vmem:[%s5300 + $0xc8] sm:$0xff]
    %v5327 = vld [vmem:[%s5300 + $0xd0] sm:$0xff]
    %v5328 = vld [vmem:[%s5300 + $0xd8] sm:$0xff]
    %v5329 = vld [vmem:[%s5300 + $0xe0] sm:$0xff]
    %v5330 = vld [vmem:[%s5300 + $0xe8] sm:$0xff]
    %v5331 = vld [vmem:[%s5300 + $0xf0] sm:$0xff]
    %v5332 = vld [vmem:[%s5300 + $0xf8] sm:$0xff]
    %v5333 = vld [vmem:[%s5300 + $0x100] sm:$0xff]
    %v5334 = vld [vmem:[%s5300 + $0x108] sm:$0xff]
    %v5335 = vld [vmem:[%s5300 + $0x110] sm:$0xff]
    %v5336 = vld [vmem:[%s5300 + $0x118] sm:$0xff]
    %v5337 = vld [vmem:[%s5300 + $0x120] sm:$0xff]
    %v5338 = vld [vmem:[%s5300 + $0x128] sm:$0xff]
    %v5339 = vld [vmem:[%s5300 + $0x130] sm:$0xff]
    %v5340 = vld [vmem:[%s5300 + $0x138] sm:$0xff]
    %v5341 = vld [vmem:[%s5300 + $0x140] sm:$0xff]
    %v5342 = vld [vmem:[%s5300 + $0x148] sm:$0xff]
    %v5343 = vld [vmem:[%s5300 + $0x150] sm:$0xff]
    %v5344 = vld [vmem:[%s5300 + $0x158] sm:$0xff]
    %v5345 = vld [vmem:[%s5300 + $0x160] sm:$0xff]
    %v5346 = vld [vmem:[%s5300 + $0x168] sm:$0xff]
    %v5347 = vld [vmem:[%s5300 + $0x170] sm:$0xff]
    %v5348 = vld [vmem:[%s5300 + $0x178] sm:$0xff]
    %v5349 = vld [vmem:[%s5300 + $0x180] sm:$0xff]
    %v5350 = vld [vmem:[%s5300 + $0x188] sm:$0xff]
    %v5351 = vld [vmem:[%s5300 + $0x190] sm:$0xff]
    %v5352 = vld [vmem:[%s5300 + $0x198] sm:$0xff]
    %v5353 = vld [vmem:[%s5300 + $0x1a0] sm:$0xff]
    %v5354 = vld [vmem:[%s5300 + $0x1a8] sm:$0xff]
    %v5355 = vld [vmem:[%s5300 + $0x1b0] sm:$0xff]
    %v5356 = vld [vmem:[%s5300 + $0x1b8] sm:$0xff]
    %v5357 = vld [vmem:[%s5300 + $0x1c0] sm:$0xff]
    %v5358 = vld [vmem:[%s5300 + $0x1c8] sm:$0xff]
    %v5359 = vld [vmem:[%s5300 + $0x1d0] sm:$0xff]
    %v5360 = vld [vmem:[%s5300 + $0x1d8] sm:$0xff]
    %v5361 = vld [vmem:[%s5300 + $0x1e0] sm:$0xff]
    %v5362 = vld [vmem:[%s5300 + $0x1e8] sm:$0xff]
    %v5363 = vld [vmem:[%s5300 + $0x1f0] sm:$0xff]
    %v5364 = vld [vmem:[%s5300 + $0x1f8] sm:$0xff]
    %5365 = vmatprep.subr.mxu0 %v5362
    %5366 = vmatpush1.msra.mxu0 %v5361
    %5367 = vmatprep.subr.mxu0 %v5358
    %5368 = vmatpush1.msra.mxu0 %v5357
    %5369 = vmatprep.subr.mxu0 %v5354
    %5370 = vmatpush1.msra.mxu0 %v5353
    %5371 = vmatprep.subr.mxu0 %v5350
    %5372 = vmatpush1.msra.mxu0 %v5349
    %5373 = vmatprep.subr.mxu0 %v5346
    %5374 = vmatpush1.msra.mxu0 %v5345
    %5375 = vmatprep.subr.mxu0 %v5342
    %5376 = vmatpush1.msra.mxu0 %v5341
    %5377 = vmatprep.subr.mxu0 %v5338
    %5378 = vmatpush1.msra.mxu0 %v5337
    %5379 = vmatprep.subr.mxu0 %v5334
    %5380 = vmatpush1.msra.mxu0 %v5333
    %5381 = vmatprep.subr.mxu0 %v5330
    %5382 = vmatpush1.msra.mxu0 %v5329
    %5383 = vmatprep.subr.mxu0 %v5326
    %5384 = vmatpush1.msra.mxu0 %v5325
    %5385 = vmatprep.subr.mxu0 %v5322
    %5386 = vmatpush1.msra.mxu0 %v5321
    %5387 = vmatprep.subr.mxu0 %v5318
    %5388 = vmatpush1.msra.mxu0 %v5317
    %5389 = vmatprep.subr.mxu0 %v5314
    %5390 = vmatpush1.msra.mxu0 %v5313
    %5391 = vmatprep.subr.mxu0 %v5310
    %5392 = vmatpush1.msra.mxu0 %v5309
    %5393 = vmatprep.subr.mxu0 %v5306
    %5394 = vmatpush1.msra.mxu0 %v5305
    %5395 = vmatprep.subr.mxu0 %v5302
    %5396 = vmatpush1.msra.mxu0 %v5301
    %5397 = vmatprep.subr.mxu0 0.0
    %5398 = vmatpush2.msra.mxu0 0.0
    %5399 = vmatprep.subr.mxu0 0.0
    %5400 = vmatpush2.msra.mxu0 0.0
    %5401 = vmatprep.subr.mxu0 0.0
    %5402 = vmatpush2.msra.mxu0 0.0
    %5403 = vmatprep.subr.mxu0 0.0
    %5404 = vmatpush2.msra.mxu0 0.0
    %5405 = vmatprep.subr.mxu0 0.0
    %5406 = vmatpush2.msra.mxu0 0.0
    %5407 = vmatprep.subr.mxu0 0.0
    %5408 = vmatpush2.msra.mxu0 0.0
    %5409 = vmatprep.subr.mxu0 0.0
    %5410 = vmatpush2.msra.mxu0 0.0
    %5411 = vmatprep.subr.mxu0 0.0
    %5412 = vmatpush2.msra.mxu0 0.0
    %5413 = vmatprep.subr.mxu0 0.0
    %5414 = vmatpush2.msra.mxu0 0.0
    %5415 = vmatprep.subr.mxu0 0.0
    %5416 = vmatpush2.msra.mxu0 0.0
    %5417 = vmatprep.subr.mxu0 0.0
    %5418 = vmatpush2.msra.mxu0 0.0
    %5419 = vmatprep.subr.mxu0 0.0
    %5420 = vmatpush2.msra.mxu0 0.0
    %5421 = vmatprep.subr.mxu0 0.0
    %5422 = vmatpush2.msra.mxu0 0.0
    %5423 = vmatprep.subr.mxu0 0.0
    %5424 = vmatpush2.msra.mxu0 0.0
    %5425 = vmatprep.subr.mxu0 0.0
    %5426 = vmatpush2.msra.mxu0 0.0
    %5427 = vmatprep.subr.mxu0 0.0
    %5428 = vmatpush2.msra.mxu0 0.0
    %5429 = vmatprep.mubr.f32.mxu0 0.0
    %5430 = vmatmul.mubr.f32.gmra.mxu0 %v5299
    %v5431 = vpop.f32.mrf.mxu0
    %v5432 = vadd.f32 0.0, %v5431
    %v5433 = vpop.f32.mrf.mxu0
    %v5434 = vadd.f32 0.0, %v5433
    %5435 = vdwg.mxu0
    %5436 = vmatprep.subr.mxu0 %v5364
    %5437 = vmatpush1.msra.mxu0 %v5363
    %5438 = vmatprep.subr.mxu0 %v5360
    %5439 = vmatpush1.msra.mxu0 %v5359
    %5440 = vmatprep.subr.mxu0 %v5356
    %5441 = vmatpush1.msra.mxu0 %v5355
    %5442 = vmatprep.subr.mxu0 %v5352
    %5443 = vmatpush1.msra.mxu0 %v5351
    %5444 = vmatprep.subr.mxu0 %v5348
    %5445 = vmatpush1.msra.mxu0 %v5347
    %5446 = vmatprep.subr.mxu0 %v5344
    %5447 = vmatpush1.msra.mxu0 %v5343
    %5448 = vmatprep.subr.mxu0 %v5340
    %5449 = vmatpush1.msra.mxu0 %v5339
    %5450 = vmatprep.subr.mxu0 %v5336
    %5451 = vmatpush1.msra.mxu0 %v5335
    %5452 = vmatprep.subr.mxu0 %v5332
    %5453 = vmatpush1.msra.mxu0 %v5331
    %5454 = vmatprep.subr.mxu0 %v5328
    %5455 = vmatpush1.msra.mxu0 %v5327
    %5456 = vmatprep.subr.mxu0 %v5324
    %5457 = vmatpush1.msra.mxu0 %v5323
    %5458 = vmatprep.subr.mxu0 %v5320
    %5459 = vmatpush1.msra.mxu0 %v5319
    %5460 = vmatprep.subr.mxu0 %v5316
    %5461 = vmatpush1.msra.mxu0 %v5315
    %5462 = vmatprep.subr.mxu0 %v5312
    %5463 = vmatpush1.msra.mxu0 %v5311
    %5464 = vmatprep.subr.mxu0 %v5308
    %5465 = vmatpush1.msra.mxu0 %v5307
    %5466 = vmatprep.subr.mxu0 %v5304
    %5467 = vmatpush1.msra.mxu0 %v5303
    %5468 = vmatprep.subr.mxu0 0.0
    %5469 = vmatpush2.msra.mxu0 0.0
    %5470 = vmatprep.subr.mxu0 0.0
    %5471 = vmatpush2.msra.mxu0 0.0
    %5472 = vmatprep.subr.mxu0 0.0
    %5473 = vmatpush2.msra.mxu0 0.0
    %5474 = vmatprep.subr.mxu0 0.0
    %5475 = vmatpush2.msra.mxu0 0.0
    %5476 = vmatprep.subr.mxu0 0.0
    %5477 = vmatpush2.msra.mxu0 0.0
    %5478 = vmatprep.subr.mxu0 0.0
    %5479 = vmatpush2.msra.mxu0 0.0
    %5480 = vmatprep.subr.mxu0 0.0
    %5481 = vmatpush2.msra.mxu0 0.0
    %5482 = vmatprep.subr.mxu0 0.0
    %5483 = vmatpush2.msra.mxu0 0.0
    %5484 = vmatprep.subr.mxu0 0.0
    %5485 = vmatpush2.msra.mxu0 0.0
    %5486 = vmatprep.subr.mxu0 0.0
    %5487 = vmatpush2.msra.mxu0 0.0
    %5488 = vmatprep.subr.mxu0 0.0
    %5489 = vmatpush2.msra.mxu0 0.0
    %5490 = vmatprep.subr.mxu0 0.0
    %5491 = vmatpush2.msra.mxu0 0.0
    %5492 = vmatprep.subr.mxu0 0.0
    %5493 = vmatpush2.msra.mxu0 0.0
    %5494 = vmatprep.subr.mxu0 0.0
    %5495 = vmatpush2.msra.mxu0 0.0
    %5496 = vmatprep.subr.mxu0 0.0
    %5497 = vmatpush2.msra.mxu0 0.0
    %5498 = vmatprep.subr.mxu0 0.0
    %5499 = vmatpush2.msra.mxu0 0.0
    %5500 = vmatprep.mubr.f32.mxu0 0.0
    %5501 = vmatmul.mubr.f32.gmra.mxu0 %v5299
    %v5502 = vpop.f32.mrf.mxu0
    %v5503 = vadd.f32 0.0, %v5502
    %v5504 = vpop.f32.mrf.mxu0
    %v5505 = vadd.f32 0.0, %v5504
    %5506 = vdwg.mxu0
    %v5511 = vcombine.low %v5432, %v5434
    %v5512 = vcombine.low %v5503, %v5505
    %v5514 = vunpack.c.l.s4 1966171168
    %v5515 = vunpack.c.0.s8 %v5514
    %v5516 = vlaneseq
    %v5517 = vshrl.u32 %v5516, 7
    %v5518 = vsub.s32 %v5515, %v5517
    %v5519 = vrot.slane %v5511, %v5518
    %v5521 = vunpack.c.l.s4 1966171168
    %v5522 = vunpack.c.0.s8 %v5521
    %v5523 = vlaneseq
    %v5524 = vshrl.u32 %v5523, 7
    %v5525 = vsub.s32 %v5522, %v5524
    %v5526 = vrot.slane %v5512, %v5525
    %v5527 = vcombine.low %v5519, %v5526
    %v5529 = vunpack.c.l.s4 1966171168
    %v5530 = vunpack.c.0.s8 %v5529
    %v5531 = vlaneseq
    %v5532 = vshrl.u32 %v5531, 7
    %v5533 = vsub.s32 %v5530, %v5532
    %v5534 = vrot.slane %v5527, %v5533
    %v5536 = vadd.f32 %v5298, %v5534
    %v5537 = vld [vmem:[#allocation4 + $0x7] sm:$0x1]
    %s5538 = scalar_lea.vmem [#allocation5], 3584
    %v5539 = vld [vmem:[%s5538] sm:$0xff]
    %v5540 = vld [vmem:[%s5538 + $0x8] sm:$0xff]
    %v5541 = vld [vmem:[%s5538 + $0x10] sm:$0xff]
    %v5542 = vld [vmem:[%s5538 + $0x18] sm:$0xff]
    %v5543 = vld [vmem:[%s5538 + $0x20] sm:$0xff]
    %v5544 = vld [vmem:[%s5538 + $0x28] sm:$0xff]
    %v5545 = vld [vmem:[%s5538 + $0x30] sm:$0xff]
    %v5546 = vld [vmem:[%s5538 + $0x38] sm:$0xff]
    %v5547 = vld [vmem:[%s5538 + $0x40] sm:$0xff]
    %v5548 = vld [vmem:[%s5538 + $0x48] sm:$0xff]
    %v5549 = vld [vmem:[%s5538 + $0x50] sm:$0xff]
    %v5550 = vld [vmem:[%s5538 + $0x58] sm:$0xff]
    %v5551 = vld [vmem:[%s5538 + $0x60] sm:$0xff]
    %v5552 = vld [vmem:[%s5538 + $0x68] sm:$0xff]
    %v5553 = vld [vmem:[%s5538 + $0x70] sm:$0xff]
    %v5554 = vld [vmem:[%s5538 + $0x78] sm:$0xff]
    %v5555 = vld [vmem:[%s5538 + $0x80] sm:$0xff]
    %v5556 = vld [vmem:[%s5538 + $0x88] sm:$0xff]
    %v5557 = vld [vmem:[%s5538 + $0x90] sm:$0xff]
    %v5558 = vld [vmem:[%s5538 + $0x98] sm:$0xff]
    %v5559 = vld [vmem:[%s5538 + $0xa0] sm:$0xff]
    %v5560 = vld [vmem:[%s5538 + $0xa8] sm:$0xff]
    %v5561 = vld [vmem:[%s5538 + $0xb0] sm:$0xff]
    %v5562 = vld [vmem:[%s5538 + $0xb8] sm:$0xff]
    %v5563 = vld [vmem:[%s5538 + $0xc0] sm:$0xff]
    %v5564 = vld [vmem:[%s5538 + $0xc8] sm:$0xff]
    %v5565 = vld [vmem:[%s5538 + $0xd0] sm:$0xff]
    %v5566 = vld [vmem:[%s5538 + $0xd8] sm:$0xff]
    %v5567 = vld [vmem:[%s5538 + $0xe0] sm:$0xff]
    %v5568 = vld [vmem:[%s5538 + $0xe8] sm:$0xff]
    %v5569 = vld [vmem:[%s5538 + $0xf0] sm:$0xff]
    %v5570 = vld [vmem:[%s5538 + $0xf8] sm:$0xff]
    %v5571 = vld [vmem:[%s5538 + $0x100] sm:$0xff]
    %v5572 = vld [vmem:[%s5538 + $0x108] sm:$0xff]
    %v5573 = vld [vmem:[%s5538 + $0x110] sm:$0xff]
    %v5574 = vld [vmem:[%s5538 + $0x118] sm:$0xff]
    %v5575 = vld [vmem:[%s5538 + $0x120] sm:$0xff]
    %v5576 = vld [vmem:[%s5538 + $0x128] sm:$0xff]
    %v5577 = vld [vmem:[%s5538 + $0x130] sm:$0xff]
    %v5578 = vld [vmem:[%s5538 + $0x138] sm:$0xff]
    %v5579 = vld [vmem:[%s5538 + $0x140] sm:$0xff]
    %v5580 = vld [vmem:[%s5538 + $0x148] sm:$0xff]
    %v5581 = vld [vmem:[%s5538 + $0x150] sm:$0xff]
    %v5582 = vld [vmem:[%s5538 + $0x158] sm:$0xff]
    %v5583 = vld [vmem:[%s5538 + $0x160] sm:$0xff]
    %v5584 = vld [vmem:[%s5538 + $0x168] sm:$0xff]
    %v5585 = vld [vmem:[%s5538 + $0x170] sm:$0xff]
    %v5586 = vld [vmem:[%s5538 + $0x178] sm:$0xff]
    %v5587 = vld [vmem:[%s5538 + $0x180] sm:$0xff]
    %v5588 = vld [vmem:[%s5538 + $0x188] sm:$0xff]
    %v5589 = vld [vmem:[%s5538 + $0x190] sm:$0xff]
    %v5590 = vld [vmem:[%s5538 + $0x198] sm:$0xff]
    %v5591 = vld [vmem:[%s5538 + $0x1a0] sm:$0xff]
    %v5592 = vld [vmem:[%s5538 + $0x1a8] sm:$0xff]
    %v5593 = vld [vmem:[%s5538 + $0x1b0] sm:$0xff]
    %v5594 = vld [vmem:[%s5538 + $0x1b8] sm:$0xff]
    %v5595 = vld [vmem:[%s5538 + $0x1c0] sm:$0xff]
    %v5596 = vld [vmem:[%s5538 + $0x1c8] sm:$0xff]
    %v5597 = vld [vmem:[%s5538 + $0x1d0] sm:$0xff]
    %v5598 = vld [vmem:[%s5538 + $0x1d8] sm:$0xff]
    %v5599 = vld [vmem:[%s5538 + $0x1e0] sm:$0xff]
    %v5600 = vld [vmem:[%s5538 + $0x1e8] sm:$0xff]
    %v5601 = vld [vmem:[%s5538 + $0x1f0] sm:$0xff]
    %v5602 = vld [vmem:[%s5538 + $0x1f8] sm:$0xff]
    %5603 = vmatprep.subr.mxu0 %v5600
    %5604 = vmatpush1.msra.mxu0 %v5599
    %5605 = vmatprep.subr.mxu0 %v5596
    %5606 = vmatpush1.msra.mxu0 %v5595
    %5607 = vmatprep.subr.mxu0 %v5592
    %5608 = vmatpush1.msra.mxu0 %v5591
    %5609 = vmatprep.subr.mxu0 %v5588
    %5610 = vmatpush1.msra.mxu0 %v5587
    %5611 = vmatprep.subr.mxu0 %v5584
    %5612 = vmatpush1.msra.mxu0 %v5583
    %5613 = vmatprep.subr.mxu0 %v5580
    %5614 = vmatpush1.msra.mxu0 %v5579
    %5615 = vmatprep.subr.mxu0 %v5576
    %5616 = vmatpush1.msra.mxu0 %v5575
    %5617 = vmatprep.subr.mxu0 %v5572
    %5618 = vmatpush1.msra.mxu0 %v5571
    %5619 = vmatprep.subr.mxu0 %v5568
    %5620 = vmatpush1.msra.mxu0 %v5567
    %5621 = vmatprep.subr.mxu0 %v5564
    %5622 = vmatpush1.msra.mxu0 %v5563
    %5623 = vmatprep.subr.mxu0 %v5560
    %5624 = vmatpush1.msra.mxu0 %v5559
    %5625 = vmatprep.subr.mxu0 %v5556
    %5626 = vmatpush1.msra.mxu0 %v5555
    %5627 = vmatprep.subr.mxu0 %v5552
    %5628 = vmatpush1.msra.mxu0 %v5551
    %5629 = vmatprep.subr.mxu0 %v5548
    %5630 = vmatpush1.msra.mxu0 %v5547
    %5631 = vmatprep.subr.mxu0 %v5544
    %5632 = vmatpush1.msra.mxu0 %v5543
    %5633 = vmatprep.subr.mxu0 %v5540
    %5634 = vmatpush1.msra.mxu0 %v5539
    %5635 = vmatprep.subr.mxu0 0.0
    %5636 = vmatpush2.msra.mxu0 0.0
    %5637 = vmatprep.subr.mxu0 0.0
    %5638 = vmatpush2.msra.mxu0 0.0
    %5639 = vmatprep.subr.mxu0 0.0
    %5640 = vmatpush2.msra.mxu0 0.0
    %5641 = vmatprep.subr.mxu0 0.0
    %5642 = vmatpush2.msra.mxu0 0.0
    %5643 = vmatprep.subr.mxu0 0.0
    %5644 = vmatpush2.msra.mxu0 0.0
    %5645 = vmatprep.subr.mxu0 0.0
    %5646 = vmatpush2.msra.mxu0 0.0
    %5647 = vmatprep.subr.mxu0 0.0
    %5648 = vmatpush2.msra.mxu0 0.0
    %5649 = vmatprep.subr.mxu0 0.0
    %5650 = vmatpush2.msra.mxu0 0.0
    %5651 = vmatprep.subr.mxu0 0.0
    %5652 = vmatpush2.msra.mxu0 0.0
    %5653 = vmatprep.subr.mxu0 0.0
    %5654 = vmatpush2.msra.mxu0 0.0
    %5655 = vmatprep.subr.mxu0 0.0
    %5656 = vmatpush2.msra.mxu0 0.0
    %5657 = vmatprep.subr.mxu0 0.0
    %5658 = vmatpush2.msra.mxu0 0.0
    %5659 = vmatprep.subr.mxu0 0.0
    %5660 = vmatpush2.msra.mxu0 0.0
    %5661 = vmatprep.subr.mxu0 0.0
    %5662 = vmatpush2.msra.mxu0 0.0
    %5663 = vmatprep.subr.mxu0 0.0
    %5664 = vmatpush2.msra.mxu0 0.0
    %5665 = vmatprep.subr.mxu0 0.0
    %5666 = vmatpush2.msra.mxu0 0.0
    %5667 = vmatprep.mubr.f32.mxu0 0.0
    %5668 = vmatmul.mubr.f32.gmra.mxu0 %v5537
    %v5669 = vpop.f32.mrf.mxu0
    %v5670 = vadd.f32 0.0, %v5669
    %v5671 = vpop.f32.mrf.mxu0
    %v5672 = vadd.f32 0.0, %v5671
    %5673 = vdwg.mxu0
    %5674 = vmatprep.subr.mxu0 %v5602
    %5675 = vmatpush1.msra.mxu0 %v5601
    %5676 = vmatprep.subr.mxu0 %v5598
    %5677 = vmatpush1.msra.mxu0 %v5597
    %5678 = vmatprep.subr.mxu0 %v5594
    %5679 = vmatpush1.msra.mxu0 %v5593
    %5680 = vmatprep.subr.mxu0 %v5590
    %5681 = vmatpush1.msra.mxu0 %v5589
    %5682 = vmatprep.subr.mxu0 %v5586
    %5683 = vmatpush1.msra.mxu0 %v5585
    %5684 = vmatprep.subr.mxu0 %v5582
    %5685 = vmatpush1.msra.mxu0 %v5581
    %5686 = vmatprep.subr.mxu0 %v5578
    %5687 = vmatpush1.msra.mxu0 %v5577
    %5688 = vmatprep.subr.mxu0 %v5574
    %5689 = vmatpush1.msra.mxu0 %v5573
    %5690 = vmatprep.subr.mxu0 %v5570
    %5691 = vmatpush1.msra.mxu0 %v5569
    %5692 = vmatprep.subr.mxu0 %v5566
    %5693 = vmatpush1.msra.mxu0 %v5565
    %5694 = vmatprep.subr.mxu0 %v5562
    %5695 = vmatpush1.msra.mxu0 %v5561
    %5696 = vmatprep.subr.mxu0 %v5558
    %5697 = vmatpush1.msra.mxu0 %v5557
    %5698 = vmatprep.subr.mxu0 %v5554
    %5699 = vmatpush1.msra.mxu0 %v5553
    %5700 = vmatprep.subr.mxu0 %v5550
    %5701 = vmatpush1.msra.mxu0 %v5549
    %5702 = vmatprep.subr.mxu0 %v5546
    %5703 = vmatpush1.msra.mxu0 %v5545
    %5704 = vmatprep.subr.mxu0 %v5542
    %5705 = vmatpush1.msra.mxu0 %v5541
    %5706 = vmatprep.subr.mxu0 0.0
    %5707 = vmatpush2.msra.mxu0 0.0
    %5708 = vmatprep.subr.mxu0 0.0
    %5709 = vmatpush2.msra.mxu0 0.0
    %5710 = vmatprep.subr.mxu0 0.0
    %5711 = vmatpush2.msra.mxu0 0.0
    %5712 = vmatprep.subr.mxu0 0.0
    %5713 = vmatpush2.msra.mxu0 0.0
    %5714 = vmatprep.subr.mxu0 0.0
    %5715 = vmatpush2.msra.mxu0 0.0
    %5716 = vmatprep.subr.mxu0 0.0
    %5717 = vmatpush2.msra.mxu0 0.0
    %5718 = vmatprep.subr.mxu0 0.0
    %5719 = vmatpush2.msra.mxu0 0.0
    %5720 = vmatprep.subr.mxu0 0.0
    %5721 = vmatpush2.msra.mxu0 0.0
    %5722 = vmatprep.subr.mxu0 0.0
    %5723 = vmatpush2.msra.mxu0 0.0
    %5724 = vmatprep.subr.mxu0 0.0
    %5725 = vmatpush2.msra.mxu0 0.0
    %5726 = vmatprep.subr.mxu0 0.0
    %5727 = vmatpush2.msra.mxu0 0.0
    %5728 = vmatprep.subr.mxu0 0.0
    %5729 = vmatpush2.msra.mxu0 0.0
    %5730 = vmatprep.subr.mxu0 0.0
    %5731 = vmatpush2.msra.mxu0 0.0
    %5732 = vmatprep.subr.mxu0 0.0
    %5733 = vmatpush2.msra.mxu0 0.0
    %5734 = vmatprep.subr.mxu0 0.0
    %5735 = vmatpush2.msra.mxu0 0.0
    %5736 = vmatprep.subr.mxu0 0.0
    %5737 = vmatpush2.msra.mxu0 0.0
    %5738 = vmatprep.mubr.f32.mxu0 0.0
    %5739 = vmatmul.mubr.f32.gmra.mxu0 %v5537
    %v5740 = vpop.f32.mrf.mxu0
    %v5741 = vadd.f32 0.0, %v5740
    %v5742 = vpop.f32.mrf.mxu0
    %v5743 = vadd.f32 0.0, %v5742
    %5744 = vdwg.mxu0
    %v5749 = vcombine.low %v5670, %v5672
    %v5750 = vcombine.low %v5741, %v5743
    %v5752 = vunpack.c.l.s4 1966171168
    %v5753 = vunpack.c.0.s8 %v5752
    %v5754 = vlaneseq
    %v5755 = vshrl.u32 %v5754, 7
    %v5756 = vsub.s32 %v5753, %v5755
    %v5757 = vrot.slane %v5749, %v5756
    %v5759 = vunpack.c.l.s4 1966171168
    %v5760 = vunpack.c.0.s8 %v5759
    %v5761 = vlaneseq
    %v5762 = vshrl.u32 %v5761, 7
    %v5763 = vsub.s32 %v5760, %v5762
    %v5764 = vrot.slane %v5750, %v5763
    %v5765 = vcombine.low %v5757, %v5764
    %v5767 = vunpack.c.l.s4 1966171168
    %v5768 = vunpack.c.0.s8 %v5767
    %v5769 = vlaneseq
    %v5770 = vshrl.u32 %v5769, 7
    %v5771 = vsub.s32 %v5768, %v5770
    %v5772 = vrot.slane %v5765, %v5771
    %v5774 = vadd.f32 %v5536, %v5772
    %v5775 = vld [vmem:[#allocation4 + $0x8] sm:$0x1]
    %s5776 = scalar_lea.vmem [#allocation5], 4096
    %v5777 = vld [vmem:[%s5776] sm:$0xff]
    %v5778 = vld [vmem:[%s5776 + $0x8] sm:$0xff]
    %v5779 = vld [vmem:[%s5776 + $0x10] sm:$0xff]
    %v5780 = vld [vmem:[%s5776 + $0x18] sm:$0xff]
    %v5781 = vld [vmem:[%s5776 + $0x20] sm:$0xff]
    %v5782 = vld [vmem:[%s5776 + $0x28] sm:$0xff]
    %v5783 = vld [vmem:[%s5776 + $0x30] sm:$0xff]
    %v5784 = vld [vmem:[%s5776 + $0x38] sm:$0xff]
    %v5785 = vld [vmem:[%s5776 + $0x40] sm:$0xff]
    %v5786 = vld [vmem:[%s5776 + $0x48] sm:$0xff]
    %v5787 = vld [vmem:[%s5776 + $0x50] sm:$0xff]
    %v5788 = vld [vmem:[%s5776 + $0x58] sm:$0xff]
    %v5789 = vld [vmem:[%s5776 + $0x60] sm:$0xff]
    %v5790 = vld [vmem:[%s5776 + $0x68] sm:$0xff]
    %v5791 = vld [vmem:[%s5776 + $0x70] sm:$0xff]
    %v5792 = vld [vmem:[%s5776 + $0x78] sm:$0xff]
    %v5793 = vld [vmem:[%s5776 + $0x80] sm:$0xff]
    %v5794 = vld [vmem:[%s5776 + $0x88] sm:$0xff]
    %v5795 = vld [vmem:[%s5776 + $0x90] sm:$0xff]
    %v5796 = vld [vmem:[%s5776 + $0x98] sm:$0xff]
    %v5797 = vld [vmem:[%s5776 + $0xa0] sm:$0xff]
    %v5798 = vld [vmem:[%s5776 + $0xa8] sm:$0xff]
    %v5799 = vld [vmem:[%s5776 + $0xb0] sm:$0xff]
    %v5800 = vld [vmem:[%s5776 + $0xb8] sm:$0xff]
    %v5801 = vld [vmem:[%s5776 + $0xc0] sm:$0xff]
    %v5802 = vld [vmem:[%s5776 + $0xc8] sm:$0xff]
    %v5803 = vld [vmem:[%s5776 + $0xd0] sm:$0xff]
    %v5804 = vld [vmem:[%s5776 + $0xd8] sm:$0xff]
    %v5805 = vld [vmem:[%s5776 + $0xe0] sm:$0xff]
    %v5806 = vld [vmem:[%s5776 + $0xe8] sm:$0xff]
    %v5807 = vld [vmem:[%s5776 + $0xf0] sm:$0xff]
    %v5808 = vld [vmem:[%s5776 + $0xf8] sm:$0xff]
    %v5809 = vld [vmem:[%s5776 + $0x100] sm:$0xff]
    %v5810 = vld [vmem:[%s5776 + $0x108] sm:$0xff]
    %v5811 = vld [vmem:[%s5776 + $0x110] sm:$0xff]
    %v5812 = vld [vmem:[%s5776 + $0x118] sm:$0xff]
    %v5813 = vld [vmem:[%s5776 + $0x120] sm:$0xff]
    %v5814 = vld [vmem:[%s5776 + $0x128] sm:$0xff]
    %v5815 = vld [vmem:[%s5776 + $0x130] sm:$0xff]
    %v5816 = vld [vmem:[%s5776 + $0x138] sm:$0xff]
    %v5817 = vld [vmem:[%s5776 + $0x140] sm:$0xff]
    %v5818 = vld [vmem:[%s5776 + $0x148] sm:$0xff]
    %v5819 = vld [vmem:[%s5776 + $0x150] sm:$0xff]
    %v5820 = vld [vmem:[%s5776 + $0x158] sm:$0xff]
    %v5821 = vld [vmem:[%s5776 + $0x160] sm:$0xff]
    %v5822 = vld [vmem:[%s5776 + $0x168] sm:$0xff]
    %v5823 = vld [vmem:[%s5776 + $0x170] sm:$0xff]
    %v5824 = vld [vmem:[%s5776 + $0x178] sm:$0xff]
    %v5825 = vld [vmem:[%s5776 + $0x180] sm:$0xff]
    %v5826 = vld [vmem:[%s5776 + $0x188] sm:$0xff]
    %v5827 = vld [vmem:[%s5776 + $0x190] sm:$0xff]
    %v5828 = vld [vmem:[%s5776 + $0x198] sm:$0xff]
    %v5829 = vld [vmem:[%s5776 + $0x1a0] sm:$0xff]
    %v5830 = vld [vmem:[%s5776 + $0x1a8] sm:$0xff]
    %v5831 = vld [vmem:[%s5776 + $0x1b0] sm:$0xff]
    %v5832 = vld [vmem:[%s5776 + $0x1b8] sm:$0xff]
    %v5833 = vld [vmem:[%s5776 + $0x1c0] sm:$0xff]
    %v5834 = vld [vmem:[%s5776 + $0x1c8] sm:$0xff]
    %v5835 = vld [vmem:[%s5776 + $0x1d0] sm:$0xff]
    %v5836 = vld [vmem:[%s5776 + $0x1d8] sm:$0xff]
    %v5837 = vld [vmem:[%s5776 + $0x1e0] sm:$0xff]
    %v5838 = vld [vmem:[%s5776 + $0x1e8] sm:$0xff]
    %v5839 = vld [vmem:[%s5776 + $0x1f0] sm:$0xff]
    %v5840 = vld [vmem:[%s5776 + $0x1f8] sm:$0xff]
    %5841 = vmatprep.subr.mxu0 %v5838
    %5842 = vmatpush1.msra.mxu0 %v5837
    %5843 = vmatprep.subr.mxu0 %v5834
    %5844 = vmatpush1.msra.mxu0 %v5833
    %5845 = vmatprep.subr.mxu0 %v5830
    %5846 = vmatpush1.msra.mxu0 %v5829
    %5847 = vmatprep.subr.mxu0 %v5826
    %5848 = vmatpush1.msra.mxu0 %v5825
    %5849 = vmatprep.subr.mxu0 %v5822
    %5850 = vmatpush1.msra.mxu0 %v5821
    %5851 = vmatprep.subr.mxu0 %v5818
    %5852 = vmatpush1.msra.mxu0 %v5817
    %5853 = vmatprep.subr.mxu0 %v5814
    %5854 = vmatpush1.msra.mxu0 %v5813
    %5855 = vmatprep.subr.mxu0 %v5810
    %5856 = vmatpush1.msra.mxu0 %v5809
    %5857 = vmatprep.subr.mxu0 %v5806
    %5858 = vmatpush1.msra.mxu0 %v5805
    %5859 = vmatprep.subr.mxu0 %v5802
    %5860 = vmatpush1.msra.mxu0 %v5801
    %5861 = vmatprep.subr.mxu0 %v5798
    %5862 = vmatpush1.msra.mxu0 %v5797
    %5863 = vmatprep.subr.mxu0 %v5794
    %5864 = vmatpush1.msra.mxu0 %v5793
    %5865 = vmatprep.subr.mxu0 %v5790
    %5866 = vmatpush1.msra.mxu0 %v5789
    %5867 = vmatprep.subr.mxu0 %v5786
    %5868 = vmatpush1.msra.mxu0 %v5785
    %5869 = vmatprep.subr.mxu0 %v5782
    %5870 = vmatpush1.msra.mxu0 %v5781
    %5871 = vmatprep.subr.mxu0 %v5778
    %5872 = vmatpush1.msra.mxu0 %v5777
    %5873 = vmatprep.subr.mxu0 0.0
    %5874 = vmatpush2.msra.mxu0 0.0
    %5875 = vmatprep.subr.mxu0 0.0
    %5876 = vmatpush2.msra.mxu0 0.0
    %5877 = vmatprep.subr.mxu0 0.0
    %5878 = vmatpush2.msra.mxu0 0.0
    %5879 = vmatprep.subr.mxu0 0.0
    %5880 = vmatpush2.msra.mxu0 0.0
    %5881 = vmatprep.subr.mxu0 0.0
    %5882 = vmatpush2.msra.mxu0 0.0
    %5883 = vmatprep.subr.mxu0 0.0
    %5884 = vmatpush2.msra.mxu0 0.0
    %5885 = vmatprep.subr.mxu0 0.0
    %5886 = vmatpush2.msra.mxu0 0.0
    %5887 = vmatprep.subr.mxu0 0.0
    %5888 = vmatpush2.msra.mxu0 0.0
    %5889 = vmatprep.subr.mxu0 0.0
    %5890 = vmatpush2.msra.mxu0 0.0
    %5891 = vmatprep.subr.mxu0 0.0
    %5892 = vmatpush2.msra.mxu0 0.0
    %5893 = vmatprep.subr.mxu0 0.0
    %5894 = vmatpush2.msra.mxu0 0.0
    %5895 = vmatprep.subr.mxu0 0.0
    %5896 = vmatpush2.msra.mxu0 0.0
    %5897 = vmatprep.subr.mxu0 0.0
    %5898 = vmatpush2.msra.mxu0 0.0
    %5899 = vmatprep.subr.mxu0 0.0
    %5900 = vmatpush2.msra.mxu0 0.0
    %5901 = vmatprep.subr.mxu0 0.0
    %5902 = vmatpush2.msra.mxu0 0.0
    %5903 = vmatprep.subr.mxu0 0.0
    %5904 = vmatpush2.msra.mxu0 0.0
    %5905 = vmatprep.mubr.f32.mxu0 0.0
    %5906 = vmatmul.mubr.f32.gmra.mxu0 %v5775
    %v5907 = vpop.f32.mrf.mxu0
    %v5908 = vadd.f32 0.0, %v5907
    %v5909 = vpop.f32.mrf.mxu0
    %v5910 = vadd.f32 0.0, %v5909
    %5911 = vdwg.mxu0
    %5912 = vmatprep.subr.mxu0 %v5840
    %5913 = vmatpush1.msra.mxu0 %v5839
    %5914 = vmatprep.subr.mxu0 %v5836
    %5915 = vmatpush1.msra.mxu0 %v5835
    %5916 = vmatprep.subr.mxu0 %v5832
    %5917 = vmatpush1.msra.mxu0 %v5831
    %5918 = vmatprep.subr.mxu0 %v5828
    %5919 = vmatpush1.msra.mxu0 %v5827
    %5920 = vmatprep.subr.mxu0 %v5824
    %5921 = vmatpush1.msra.mxu0 %v5823
    %5922 = vmatprep.subr.mxu0 %v5820
    %5923 = vmatpush1.msra.mxu0 %v5819
    %5924 = vmatprep.subr.mxu0 %v5816
    %5925 = vmatpush1.msra.mxu0 %v5815
    %5926 = vmatprep.subr.mxu0 %v5812
    %5927 = vmatpush1.msra.mxu0 %v5811
    %5928 = vmatprep.subr.mxu0 %v5808
    %5929 = vmatpush1.msra.mxu0 %v5807
    %5930 = vmatprep.subr.mxu0 %v5804
    %5931 = vmatpush1.msra.mxu0 %v5803
    %5932 = vmatprep.subr.mxu0 %v5800
    %5933 = vmatpush1.msra.mxu0 %v5799
    %5934 = vmatprep.subr.mxu0 %v5796
    %5935 = vmatpush1.msra.mxu0 %v5795
    %5936 = vmatprep.subr.mxu0 %v5792
    %5937 = vmatpush1.msra.mxu0 %v5791
    %5938 = vmatprep.subr.mxu0 %v5788
    %5939 = vmatpush1.msra.mxu0 %v5787
    %5940 = vmatprep.subr.mxu0 %v5784
    %5941 = vmatpush1.msra.mxu0 %v5783
    %5942 = vmatprep.subr.mxu0 %v5780
    %5943 = vmatpush1.msra.mxu0 %v5779
    %5944 = vmatprep.subr.mxu0 0.0
    %5945 = vmatpush2.msra.mxu0 0.0
    %5946 = vmatprep.subr.mxu0 0.0
    %5947 = vmatpush2.msra.mxu0 0.0
    %5948 = vmatprep.subr.mxu0 0.0
    %5949 = vmatpush2.msra.mxu0 0.0
    %5950 = vmatprep.subr.mxu0 0.0
    %5951 = vmatpush2.msra.mxu0 0.0
    %5952 = vmatprep.subr.mxu0 0.0
    %5953 = vmatpush2.msra.mxu0 0.0
    %5954 = vmatprep.subr.mxu0 0.0
    %5955 = vmatpush2.msra.mxu0 0.0
    %5956 = vmatprep.subr.mxu0 0.0
    %5957 = vmatpush2.msra.mxu0 0.0
    %5958 = vmatprep.subr.mxu0 0.0
    %5959 = vmatpush2.msra.mxu0 0.0
    %5960 = vmatprep.subr.mxu0 0.0
    %5961 = vmatpush2.msra.mxu0 0.0
    %5962 = vmatprep.subr.mxu0 0.0
    %5963 = vmatpush2.msra.mxu0 0.0
    %5964 = vmatprep.subr.mxu0 0.0
    %5965 = vmatpush2.msra.mxu0 0.0
    %5966 = vmatprep.subr.mxu0 0.0
    %5967 = vmatpush2.msra.mxu0 0.0
    %5968 = vmatprep.subr.mxu0 0.0
    %5969 = vmatpush2.msra.mxu0 0.0
    %5970 = vmatprep.subr.mxu0 0.0
    %5971 = vmatpush2.msra.mxu0 0.0
    %5972 = vmatprep.subr.mxu0 0.0
    %5973 = vmatpush2.msra.mxu0 0.0
    %5974 = vmatprep.subr.mxu0 0.0
    %5975 = vmatpush2.msra.mxu0 0.0
    %5976 = vmatprep.mubr.f32.mxu0 0.0
    %5977 = vmatmul.mubr.f32.gmra.mxu0 %v5775
    %v5978 = vpop.f32.mrf.mxu0
    %v5979 = vadd.f32 0.0, %v5978
    %v5980 = vpop.f32.mrf.mxu0
    %v5981 = vadd.f32 0.0, %v5980
    %5982 = vdwg.mxu0
    %v5987 = vcombine.low %v5908, %v5910
    %v5988 = vcombine.low %v5979, %v5981
    %v5990 = vunpack.c.l.s4 1966171168
    %v5991 = vunpack.c.0.s8 %v5990
    %v5992 = vlaneseq
    %v5993 = vshrl.u32 %v5992, 7
    %v5994 = vsub.s32 %v5991, %v5993
    %v5995 = vrot.slane %v5987, %v5994
    %v5997 = vunpack.c.l.s4 1966171168
    %v5998 = vunpack.c.0.s8 %v5997
    %v5999 = vlaneseq
    %v6000 = vshrl.u32 %v5999, 7
    %v6001 = vsub.s32 %v5998, %v6000
    %v6002 = vrot.slane %v5988, %v6001
    %v6003 = vcombine.low %v5995, %v6002
    %v6005 = vunpack.c.l.s4 1966171168
    %v6006 = vunpack.c.0.s8 %v6005
    %v6007 = vlaneseq
    %v6008 = vshrl.u32 %v6007, 7
    %v6009 = vsub.s32 %v6006, %v6008
    %v6010 = vrot.slane %v6003, %v6009
    %v6012 = vadd.f32 %v5774, %v6010
    %v6013 = vld [vmem:[#allocation4 + $0x9] sm:$0x1]
    %s6014 = scalar_lea.vmem [#allocation5], 4608
    %v6015 = vld [vmem:[%s6014] sm:$0xff]
    %v6016 = vld [vmem:[%s6014 + $0x8] sm:$0xff]
    %v6017 = vld [vmem:[%s6014 + $0x10] sm:$0xff]
    %v6018 = vld [vmem:[%s6014 + $0x18] sm:$0xff]
    %v6019 = vld [vmem:[%s6014 + $0x20] sm:$0xff]
    %v6020 = vld [vmem:[%s6014 + $0x28] sm:$0xff]
    %v6021 = vld [vmem:[%s6014 + $0x30] sm:$0xff]
    %v6022 = vld [vmem:[%s6014 + $0x38] sm:$0xff]
    %v6023 = vld [vmem:[%s6014 + $0x40] sm:$0xff]
    %v6024 = vld [vmem:[%s6014 + $0x48] sm:$0xff]
    %v6025 = vld [vmem:[%s6014 + $0x50] sm:$0xff]
    %v6026 = vld [vmem:[%s6014 + $0x58] sm:$0xff]
    %v6027 = vld [vmem:[%s6014 + $0x60] sm:$0xff]
    %v6028 = vld [vmem:[%s6014 + $0x68] sm:$0xff]
    %v6029 = vld [vmem:[%s6014 + $0x70] sm:$0xff]
    %v6030 = vld [vmem:[%s6014 + $0x78] sm:$0xff]
    %v6031 = vld [vmem:[%s6014 + $0x80] sm:$0xff]
    %v6032 = vld [vmem:[%s6014 + $0x88] sm:$0xff]
    %v6033 = vld [vmem:[%s6014 + $0x90] sm:$0xff]
    %v6034 = vld [vmem:[%s6014 + $0x98] sm:$0xff]
    %v6035 = vld [vmem:[%s6014 + $0xa0] sm:$0xff]
    %v6036 = vld [vmem:[%s6014 + $0xa8] sm:$0xff]
    %v6037 = vld [vmem:[%s6014 + $0xb0] sm:$0xff]
    %v6038 = vld [vmem:[%s6014 + $0xb8] sm:$0xff]
    %v6039 = vld [vmem:[%s6014 + $0xc0] sm:$0xff]
    %v6040 = vld [vmem:[%s6014 + $0xc8] sm:$0xff]
    %v6041 = vld [vmem:[%s6014 + $0xd0] sm:$0xff]
    %v6042 = vld [vmem:[%s6014 + $0xd8] sm:$0xff]
    %v6043 = vld [vmem:[%s6014 + $0xe0] sm:$0xff]
    %v6044 = vld [vmem:[%s6014 + $0xe8] sm:$0xff]
    %v6045 = vld [vmem:[%s6014 + $0xf0] sm:$0xff]
    %v6046 = vld [vmem:[%s6014 + $0xf8] sm:$0xff]
    %v6047 = vld [vmem:[%s6014 + $0x100] sm:$0xff]
    %v6048 = vld [vmem:[%s6014 + $0x108] sm:$0xff]
    %v6049 = vld [vmem:[%s6014 + $0x110] sm:$0xff]
    %v6050 = vld [vmem:[%s6014 + $0x118] sm:$0xff]
    %v6051 = vld [vmem:[%s6014 + $0x120] sm:$0xff]
    %v6052 = vld [vmem:[%s6014 + $0x128] sm:$0xff]
    %v6053 = vld [vmem:[%s6014 + $0x130] sm:$0xff]
    %v6054 = vld [vmem:[%s6014 + $0x138] sm:$0xff]
    %v6055 = vld [vmem:[%s6014 + $0x140] sm:$0xff]
    %v6056 = vld [vmem:[%s6014 + $0x148] sm:$0xff]
    %v6057 = vld [vmem:[%s6014 + $0x150] sm:$0xff]
    %v6058 = vld [vmem:[%s6014 + $0x158] sm:$0xff]
    %v6059 = vld [vmem:[%s6014 + $0x160] sm:$0xff]
    %v6060 = vld [vmem:[%s6014 + $0x168] sm:$0xff]
    %v6061 = vld [vmem:[%s6014 + $0x170] sm:$0xff]
    %v6062 = vld [vmem:[%s6014 + $0x178] sm:$0xff]
    %v6063 = vld [vmem:[%s6014 + $0x180] sm:$0xff]
    %v6064 = vld [vmem:[%s6014 + $0x188] sm:$0xff]
    %v6065 = vld [vmem:[%s6014 + $0x190] sm:$0xff]
    %v6066 = vld [vmem:[%s6014 + $0x198] sm:$0xff]
    %v6067 = vld [vmem:[%s6014 + $0x1a0] sm:$0xff]
    %v6068 = vld [vmem:[%s6014 + $0x1a8] sm:$0xff]
    %v6069 = vld [vmem:[%s6014 + $0x1b0] sm:$0xff]
    %v6070 = vld [vmem:[%s6014 + $0x1b8] sm:$0xff]
    %v6071 = vld [vmem:[%s6014 + $0x1c0] sm:$0xff]
    %v6072 = vld [vmem:[%s6014 + $0x1c8] sm:$0xff]
    %v6073 = vld [vmem:[%s6014 + $0x1d0] sm:$0xff]
    %v6074 = vld [vmem:[%s6014 + $0x1d8] sm:$0xff]
    %v6075 = vld [vmem:[%s6014 + $0x1e0] sm:$0xff]
    %v6076 = vld [vmem:[%s6014 + $0x1e8] sm:$0xff]
    %v6077 = vld [vmem:[%s6014 + $0x1f0] sm:$0xff]
    %v6078 = vld [vmem:[%s6014 + $0x1f8] sm:$0xff]
    %6079 = vmatprep.subr.mxu0 %v6076
    %6080 = vmatpush1.msra.mxu0 %v6075
    %6081 = vmatprep.subr.mxu0 %v6072
    %6082 = vmatpush1.msra.mxu0 %v6071
    %6083 = vmatprep.subr.mxu0 %v6068
    %6084 = vmatpush1.msra.mxu0 %v6067
    %6085 = vmatprep.subr.mxu0 %v6064
    %6086 = vmatpush1.msra.mxu0 %v6063
    %6087 = vmatprep.subr.mxu0 %v6060
    %6088 = vmatpush1.msra.mxu0 %v6059
    %6089 = vmatprep.subr.mxu0 %v6056
    %6090 = vmatpush1.msra.mxu0 %v6055
    %6091 = vmatprep.subr.mxu0 %v6052
    %6092 = vmatpush1.msra.mxu0 %v6051
    %6093 = vmatprep.subr.mxu0 %v6048
    %6094 = vmatpush1.msra.mxu0 %v6047
    %6095 = vmatprep.subr.mxu0 %v6044
    %6096 = vmatpush1.msra.mxu0 %v6043
    %6097 = vmatprep.subr.mxu0 %v6040
    %6098 = vmatpush1.msra.mxu0 %v6039
    %6099 = vmatprep.subr.mxu0 %v6036
    %6100 = vmatpush1.msra.mxu0 %v6035
    %6101 = vmatprep.subr.mxu0 %v6032
    %6102 = vmatpush1.msra.mxu0 %v6031
    %6103 = vmatprep.subr.mxu0 %v6028
    %6104 = vmatpush1.msra.mxu0 %v6027
    %6105 = vmatprep.subr.mxu0 %v6024
    %6106 = vmatpush1.msra.mxu0 %v6023
    %6107 = vmatprep.subr.mxu0 %v6020
    %6108 = vmatpush1.msra.mxu0 %v6019
    %6109 = vmatprep.subr.mxu0 %v6016
    %6110 = vmatpush1.msra.mxu0 %v6015
    %6111 = vmatprep.subr.mxu0 0.0
    %6112 = vmatpush2.msra.mxu0 0.0
    %6113 = vmatprep.subr.mxu0 0.0
    %6114 = vmatpush2.msra.mxu0 0.0
    %6115 = vmatprep.subr.mxu0 0.0
    %6116 = vmatpush2.msra.mxu0 0.0
    %6117 = vmatprep.subr.mxu0 0.0
    %6118 = vmatpush2.msra.mxu0 0.0
    %6119 = vmatprep.subr.mxu0 0.0
    %6120 = vmatpush2.msra.mxu0 0.0
    %6121 = vmatprep.subr.mxu0 0.0
    %6122 = vmatpush2.msra.mxu0 0.0
    %6123 = vmatprep.subr.mxu0 0.0
    %6124 = vmatpush2.msra.mxu0 0.0
    %6125 = vmatprep.subr.mxu0 0.0
    %6126 = vmatpush2.msra.mxu0 0.0
    %6127 = vmatprep.subr.mxu0 0.0
    %6128 = vmatpush2.msra.mxu0 0.0
    %6129 = vmatprep.subr.mxu0 0.0
    %6130 = vmatpush2.msra.mxu0 0.0
    %6131 = vmatprep.subr.mxu0 0.0
    %6132 = vmatpush2.msra.mxu0 0.0
    %6133 = vmatprep.subr.mxu0 0.0
    %6134 = vmatpush2.msra.mxu0 0.0
    %6135 = vmatprep.subr.mxu0 0.0
    %6136 = vmatpush2.msra.mxu0 0.0
    %6137 = vmatprep.subr.mxu0 0.0
    %6138 = vmatpush2.msra.mxu0 0.0
    %6139 = vmatprep.subr.mxu0 0.0
    %6140 = vmatpush2.msra.mxu0 0.0
    %6141 = vmatprep.subr.mxu0 0.0
    %6142 = vmatpush2.msra.mxu0 0.0
    %6143 = vmatprep.mubr.f32.mxu0 0.0
    %6144 = vmatmul.mubr.f32.gmra.mxu0 %v6013
    %v6145 = vpop.f32.mrf.mxu0
    %v6146 = vadd.f32 0.0, %v6145
    %v6147 = vpop.f32.mrf.mxu0
    %v6148 = vadd.f32 0.0, %v6147
    %6149 = vdwg.mxu0
    %6150 = vmatprep.subr.mxu0 %v6078
    %6151 = vmatpush1.msra.mxu0 %v6077
    %6152 = vmatprep.subr.mxu0 %v6074
    %6153 = vmatpush1.msra.mxu0 %v6073
    %6154 = vmatprep.subr.mxu0 %v6070
    %6155 = vmatpush1.msra.mxu0 %v6069
    %6156 = vmatprep.subr.mxu0 %v6066
    %6157 = vmatpush1.msra.mxu0 %v6065
    %6158 = vmatprep.subr.mxu0 %v6062
    %6159 = vmatpush1.msra.mxu0 %v6061
    %6160 = vmatprep.subr.mxu0 %v6058
    %6161 = vmatpush1.msra.mxu0 %v6057
    %6162 = vmatprep.subr.mxu0 %v6054
    %6163 = vmatpush1.msra.mxu0 %v6053
    %6164 = vmatprep.subr.mxu0 %v6050
    %6165 = vmatpush1.msra.mxu0 %v6049
    %6166 = vmatprep.subr.mxu0 %v6046
    %6167 = vmatpush1.msra.mxu0 %v6045
    %6168 = vmatprep.subr.mxu0 %v6042
    %6169 = vmatpush1.msra.mxu0 %v6041
    %6170 = vmatprep.subr.mxu0 %v6038
    %6171 = vmatpush1.msra.mxu0 %v6037
    %6172 = vmatprep.subr.mxu0 %v6034
    %6173 = vmatpush1.msra.mxu0 %v6033
    %6174 = vmatprep.subr.mxu0 %v6030
    %6175 = vmatpush1.msra.mxu0 %v6029
    %6176 = vmatprep.subr.mxu0 %v6026
    %6177 = vmatpush1.msra.mxu0 %v6025
    %6178 = vmatprep.subr.mxu0 %v6022
    %6179 = vmatpush1.msra.mxu0 %v6021
    %6180 = vmatprep.subr.mxu0 %v6018
    %6181 = vmatpush1.msra.mxu0 %v6017
    %6182 = vmatprep.subr.mxu0 0.0
    %6183 = vmatpush2.msra.mxu0 0.0
    %6184 = vmatprep.subr.mxu0 0.0
    %6185 = vmatpush2.msra.mxu0 0.0
    %6186 = vmatprep.subr.mxu0 0.0
    %6187 = vmatpush2.msra.mxu0 0.0
    %6188 = vmatprep.subr.mxu0 0.0
    %6189 = vmatpush2.msra.mxu0 0.0
    %6190 = vmatprep.subr.mxu0 0.0
    %6191 = vmatpush2.msra.mxu0 0.0
    %6192 = vmatprep.subr.mxu0 0.0
    %6193 = vmatpush2.msra.mxu0 0.0
    %6194 = vmatprep.subr.mxu0 0.0
    %6195 = vmatpush2.msra.mxu0 0.0
    %6196 = vmatprep.subr.mxu0 0.0
    %6197 = vmatpush2.msra.mxu0 0.0
    %6198 = vmatprep.subr.mxu0 0.0
    %6199 = vmatpush2.msra.mxu0 0.0
    %6200 = vmatprep.subr.mxu0 0.0
    %6201 = vmatpush2.msra.mxu0 0.0
    %6202 = vmatprep.subr.mxu0 0.0
    %6203 = vmatpush2.msra.mxu0 0.0
    %6204 = vmatprep.subr.mxu0 0.0
    %6205 = vmatpush2.msra.mxu0 0.0
    %6206 = vmatprep.subr.mxu0 0.0
    %6207 = vmatpush2.msra.mxu0 0.0
    %6208 = vmatprep.subr.mxu0 0.0
    %6209 = vmatpush2.msra.mxu0 0.0
    %6210 = vmatprep.subr.mxu0 0.0
    %6211 = vmatpush2.msra.mxu0 0.0
    %6212 = vmatprep.subr.mxu0 0.0
    %6213 = vmatpush2.msra.mxu0 0.0
    %6214 = vmatprep.mubr.f32.mxu0 0.0
    %6215 = vmatmul.mubr.f32.gmra.mxu0 %v6013
    %v6216 = vpop.f32.mrf.mxu0
    %v6217 = vadd.f32 0.0, %v6216
    %v6218 = vpop.f32.mrf.mxu0
    %v6219 = vadd.f32 0.0, %v6218
    %6220 = vdwg.mxu0
    %v6225 = vcombine.low %v6146, %v6148
    %v6226 = vcombine.low %v6217, %v6219
    %v6228 = vunpack.c.l.s4 1966171168
    %v6229 = vunpack.c.0.s8 %v6228
    %v6230 = vlaneseq
    %v6231 = vshrl.u32 %v6230, 7
    %v6232 = vsub.s32 %v6229, %v6231
    %v6233 = vrot.slane %v6225, %v6232
    %v6235 = vunpack.c.l.s4 1966171168
    %v6236 = vunpack.c.0.s8 %v6235
    %v6237 = vlaneseq
    %v6238 = vshrl.u32 %v6237, 7
    %v6239 = vsub.s32 %v6236, %v6238
    %v6240 = vrot.slane %v6226, %v6239
    %v6241 = vcombine.low %v6233, %v6240
    %v6243 = vunpack.c.l.s4 1966171168
    %v6244 = vunpack.c.0.s8 %v6243
    %v6245 = vlaneseq
    %v6246 = vshrl.u32 %v6245, 7
    %v6247 = vsub.s32 %v6244, %v6246
    %v6248 = vrot.slane %v6241, %v6247
    %v6250 = vadd.f32 %v6012, %v6248
    %v6251 = vld [vmem:[#allocation4 + $0xa] sm:$0x1]
    %s6252 = scalar_lea.vmem [#allocation5], 5120
    %v6253 = vld [vmem:[%s6252] sm:$0xff]
    %v6254 = vld [vmem:[%s6252 + $0x8] sm:$0xff]
    %v6255 = vld [vmem:[%s6252 + $0x10] sm:$0xff]
    %v6256 = vld [vmem:[%s6252 + $0x18] sm:$0xff]
    %v6257 = vld [vmem:[%s6252 + $0x20] sm:$0xff]
    %v6258 = vld [vmem:[%s6252 + $0x28] sm:$0xff]
    %v6259 = vld [vmem:[%s6252 + $0x30] sm:$0xff]
    %v6260 = vld [vmem:[%s6252 + $0x38] sm:$0xff]
    %v6261 = vld [vmem:[%s6252 + $0x40] sm:$0xff]
    %v6262 = vld [vmem:[%s6252 + $0x48] sm:$0xff]
    %v6263 = vld [vmem:[%s6252 + $0x50] sm:$0xff]
    %v6264 = vld [vmem:[%s6252 + $0x58] sm:$0xff]
    %v6265 = vld [vmem:[%s6252 + $0x60] sm:$0xff]
    %v6266 = vld [vmem:[%s6252 + $0x68] sm:$0xff]
    %v6267 = vld [vmem:[%s6252 + $0x70] sm:$0xff]
    %v6268 = vld [vmem:[%s6252 + $0x78] sm:$0xff]
    %v6269 = vld [vmem:[%s6252 + $0x80] sm:$0xff]
    %v6270 = vld [vmem:[%s6252 + $0x88] sm:$0xff]
    %v6271 = vld [vmem:[%s6252 + $0x90] sm:$0xff]
    %v6272 = vld [vmem:[%s6252 + $0x98] sm:$0xff]
    %v6273 = vld [vmem:[%s6252 + $0xa0] sm:$0xff]
    %v6274 = vld [vmem:[%s6252 + $0xa8] sm:$0xff]
    %v6275 = vld [vmem:[%s6252 + $0xb0] sm:$0xff]
    %v6276 = vld [vmem:[%s6252 + $0xb8] sm:$0xff]
    %v6277 = vld [vmem:[%s6252 + $0xc0] sm:$0xff]
    %v6278 = vld [vmem:[%s6252 + $0xc8] sm:$0xff]
    %v6279 = vld [vmem:[%s6252 + $0xd0] sm:$0xff]
    %v6280 = vld [vmem:[%s6252 + $0xd8] sm:$0xff]
    %v6281 = vld [vmem:[%s6252 + $0xe0] sm:$0xff]
    %v6282 = vld [vmem:[%s6252 + $0xe8] sm:$0xff]
    %v6283 = vld [vmem:[%s6252 + $0xf0] sm:$0xff]
    %v6284 = vld [vmem:[%s6252 + $0xf8] sm:$0xff]
    %v6285 = vld [vmem:[%s6252 + $0x100] sm:$0xff]
    %v6286 = vld [vmem:[%s6252 + $0x108] sm:$0xff]
    %v6287 = vld [vmem:[%s6252 + $0x110] sm:$0xff]
    %v6288 = vld [vmem:[%s6252 + $0x118] sm:$0xff]
    %v6289 = vld [vmem:[%s6252 + $0x120] sm:$0xff]
    %v6290 = vld [vmem:[%s6252 + $0x128] sm:$0xff]
    %v6291 = vld [vmem:[%s6252 + $0x130] sm:$0xff]
    %v6292 = vld [vmem:[%s6252 + $0x138] sm:$0xff]
    %v6293 = vld [vmem:[%s6252 + $0x140] sm:$0xff]
    %v6294 = vld [vmem:[%s6252 + $0x148] sm:$0xff]
    %v6295 = vld [vmem:[%s6252 + $0x150] sm:$0xff]
    %v6296 = vld [vmem:[%s6252 + $0x158] sm:$0xff]
    %v6297 = vld [vmem:[%s6252 + $0x160] sm:$0xff]
    %v6298 = vld [vmem:[%s6252 + $0x168] sm:$0xff]
    %v6299 = vld [vmem:[%s6252 + $0x170] sm:$0xff]
    %v6300 = vld [vmem:[%s6252 + $0x178] sm:$0xff]
    %v6301 = vld [vmem:[%s6252 + $0x180] sm:$0xff]
    %v6302 = vld [vmem:[%s6252 + $0x188] sm:$0xff]
    %v6303 = vld [vmem:[%s6252 + $0x190] sm:$0xff]
    %v6304 = vld [vmem:[%s6252 + $0x198] sm:$0xff]
    %v6305 = vld [vmem:[%s6252 + $0x1a0] sm:$0xff]
    %v6306 = vld [vmem:[%s6252 + $0x1a8] sm:$0xff]
    %v6307 = vld [vmem:[%s6252 + $0x1b0] sm:$0xff]
    %v6308 = vld [vmem:[%s6252 + $0x1b8] sm:$0xff]
    %v6309 = vld [vmem:[%s6252 + $0x1c0] sm:$0xff]
    %v6310 = vld [vmem:[%s6252 + $0x1c8] sm:$0xff]
    %v6311 = vld [vmem:[%s6252 + $0x1d0] sm:$0xff]
    %v6312 = vld [vmem:[%s6252 + $0x1d8] sm:$0xff]
    %v6313 = vld [vmem:[%s6252 + $0x1e0] sm:$0xff]
    %v6314 = vld [vmem:[%s6252 + $0x1e8] sm:$0xff]
    %v6315 = vld [vmem:[%s6252 + $0x1f0] sm:$0xff]
    %v6316 = vld [vmem:[%s6252 + $0x1f8] sm:$0xff]
    %6317 = vmatprep.subr.mxu0 %v6314
    %6318 = vmatpush1.msra.mxu0 %v6313
    %6319 = vmatprep.subr.mxu0 %v6310
    %6320 = vmatpush1.msra.mxu0 %v6309
    %6321 = vmatprep.subr.mxu0 %v6306
    %6322 = vmatpush1.msra.mxu0 %v6305
    %6323 = vmatprep.subr.mxu0 %v6302
    %6324 = vmatpush1.msra.mxu0 %v6301
    %6325 = vmatprep.subr.mxu0 %v6298
    %6326 = vmatpush1.msra.mxu0 %v6297
    %6327 = vmatprep.subr.mxu0 %v6294
    %6328 = vmatpush1.msra.mxu0 %v6293
    %6329 = vmatprep.subr.mxu0 %v6290
    %6330 = vmatpush1.msra.mxu0 %v6289
    %6331 = vmatprep.subr.mxu0 %v6286
    %6332 = vmatpush1.msra.mxu0 %v6285
    %6333 = vmatprep.subr.mxu0 %v6282
    %6334 = vmatpush1.msra.mxu0 %v6281
    %6335 = vmatprep.subr.mxu0 %v6278
    %6336 = vmatpush1.msra.mxu0 %v6277
    %6337 = vmatprep.subr.mxu0 %v6274
    %6338 = vmatpush1.msra.mxu0 %v6273
    %6339 = vmatprep.subr.mxu0 %v6270
    %6340 = vmatpush1.msra.mxu0 %v6269
    %6341 = vmatprep.subr.mxu0 %v6266
    %6342 = vmatpush1.msra.mxu0 %v6265
    %6343 = vmatprep.subr.mxu0 %v6262
    %6344 = vmatpush1.msra.mxu0 %v6261
    %6345 = vmatprep.subr.mxu0 %v6258
    %6346 = vmatpush1.msra.mxu0 %v6257
    %6347 = vmatprep.subr.mxu0 %v6254
    %6348 = vmatpush1.msra.mxu0 %v6253
    %6349 = vmatprep.subr.mxu0 0.0
    %6350 = vmatpush2.msra.mxu0 0.0
    %6351 = vmatprep.subr.mxu0 0.0
    %6352 = vmatpush2.msra.mxu0 0.0
    %6353 = vmatprep.subr.mxu0 0.0
    %6354 = vmatpush2.msra.mxu0 0.0
    %6355 = vmatprep.subr.mxu0 0.0
    %6356 = vmatpush2.msra.mxu0 0.0
    %6357 = vmatprep.subr.mxu0 0.0
    %6358 = vmatpush2.msra.mxu0 0.0
    %6359 = vmatprep.subr.mxu0 0.0
    %6360 = vmatpush2.msra.mxu0 0.0
    %6361 = vmatprep.subr.mxu0 0.0
    %6362 = vmatpush2.msra.mxu0 0.0
    %6363 = vmatprep.subr.mxu0 0.0
    %6364 = vmatpush2.msra.mxu0 0.0
    %6365 = vmatprep.subr.mxu0 0.0
    %6366 = vmatpush2.msra.mxu0 0.0
    %6367 = vmatprep.subr.mxu0 0.0
    %6368 = vmatpush2.msra.mxu0 0.0
    %6369 = vmatprep.subr.mxu0 0.0
    %6370 = vmatpush2.msra.mxu0 0.0
    %6371 = vmatprep.subr.mxu0 0.0
    %6372 = vmatpush2.msra.mxu0 0.0
    %6373 = vmatprep.subr.mxu0 0.0
    %6374 = vmatpush2.msra.mxu0 0.0
    %6375 = vmatprep.subr.mxu0 0.0
    %6376 = vmatpush2.msra.mxu0 0.0
    %6377 = vmatprep.subr.mxu0 0.0
    %6378 = vmatpush2.msra.mxu0 0.0
    %6379 = vmatprep.subr.mxu0 0.0
    %6380 = vmatpush2.msra.mxu0 0.0
    %6381 = vmatprep.mubr.f32.mxu0 0.0
    %6382 = vmatmul.mubr.f32.gmra.mxu0 %v6251
    %v6383 = vpop.f32.mrf.mxu0
    %v6384 = vadd.f32 0.0, %v6383
    %v6385 = vpop.f32.mrf.mxu0
    %v6386 = vadd.f32 0.0, %v6385
    %6387 = vdwg.mxu0
    %6388 = vmatprep.subr.mxu0 %v6316
    %6389 = vmatpush1.msra.mxu0 %v6315
    %6390 = vmatprep.subr.mxu0 %v6312
    %6391 = vmatpush1.msra.mxu0 %v6311
    %6392 = vmatprep.subr.mxu0 %v6308
    %6393 = vmatpush1.msra.mxu0 %v6307
    %6394 = vmatprep.subr.mxu0 %v6304
    %6395 = vmatpush1.msra.mxu0 %v6303
    %6396 = vmatprep.subr.mxu0 %v6300
    %6397 = vmatpush1.msra.mxu0 %v6299
    %6398 = vmatprep.subr.mxu0 %v6296
    %6399 = vmatpush1.msra.mxu0 %v6295
    %6400 = vmatprep.subr.mxu0 %v6292
    %6401 = vmatpush1.msra.mxu0 %v6291
    %6402 = vmatprep.subr.mxu0 %v6288
    %6403 = vmatpush1.msra.mxu0 %v6287
    %6404 = vmatprep.subr.mxu0 %v6284
    %6405 = vmatpush1.msra.mxu0 %v6283
    %6406 = vmatprep.subr.mxu0 %v6280
    %6407 = vmatpush1.msra.mxu0 %v6279
    %6408 = vmatprep.subr.mxu0 %v6276
    %6409 = vmatpush1.msra.mxu0 %v6275
    %6410 = vmatprep.subr.mxu0 %v6272
    %6411 = vmatpush1.msra.mxu0 %v6271
    %6412 = vmatprep.subr.mxu0 %v6268
    %6413 = vmatpush1.msra.mxu0 %v6267
    %6414 = vmatprep.subr.mxu0 %v6264
    %6415 = vmatpush1.msra.mxu0 %v6263
    %6416 = vmatprep.subr.mxu0 %v6260
    %6417 = vmatpush1.msra.mxu0 %v6259
    %6418 = vmatprep.subr.mxu0 %v6256
    %6419 = vmatpush1.msra.mxu0 %v6255
    %6420 = vmatprep.subr.mxu0 0.0
    %6421 = vmatpush2.msra.mxu0 0.0
    %6422 = vmatprep.subr.mxu0 0.0
    %6423 = vmatpush2.msra.mxu0 0.0
    %6424 = vmatprep.subr.mxu0 0.0
    %6425 = vmatpush2.msra.mxu0 0.0
    %6426 = vmatprep.subr.mxu0 0.0
    %6427 = vmatpush2.msra.mxu0 0.0
    %6428 = vmatprep.subr.mxu0 0.0
    %6429 = vmatpush2.msra.mxu0 0.0
    %6430 = vmatprep.subr.mxu0 0.0
    %6431 = vmatpush2.msra.mxu0 0.0
    %6432 = vmatprep.subr.mxu0 0.0
    %6433 = vmatpush2.msra.mxu0 0.0
    %6434 = vmatprep.subr.mxu0 0.0
    %6435 = vmatpush2.msra.mxu0 0.0
    %6436 = vmatprep.subr.mxu0 0.0
    %6437 = vmatpush2.msra.mxu0 0.0
    %6438 = vmatprep.subr.mxu0 0.0
    %6439 = vmatpush2.msra.mxu0 0.0
    %6440 = vmatprep.subr.mxu0 0.0
    %6441 = vmatpush2.msra.mxu0 0.0
    %6442 = vmatprep.subr.mxu0 0.0
    %6443 = vmatpush2.msra.mxu0 0.0
    %6444 = vmatprep.subr.mxu0 0.0
    %6445 = vmatpush2.msra.mxu0 0.0
    %6446 = vmatprep.subr.mxu0 0.0
    %6447 = vmatpush2.msra.mxu0 0.0
    %6448 = vmatprep.subr.mxu0 0.0
    %6449 = vmatpush2.msra.mxu0 0.0
    %6450 = vmatprep.subr.mxu0 0.0
    %6451 = vmatpush2.msra.mxu0 0.0
    %6452 = vmatprep.mubr.f32.mxu0 0.0
    %6453 = vmatmul.mubr.f32.gmra.mxu0 %v6251
    %v6454 = vpop.f32.mrf.mxu0
    %v6455 = vadd.f32 0.0, %v6454
    %v6456 = vpop.f32.mrf.mxu0
    %v6457 = vadd.f32 0.0, %v6456
    %6458 = vdwg.mxu0
    %v6463 = vcombine.low %v6384, %v6386
    %v6464 = vcombine.low %v6455, %v6457
    %v6466 = vunpack.c.l.s4 1966171168
    %v6467 = vunpack.c.0.s8 %v6466
    %v6468 = vlaneseq
    %v6469 = vshrl.u32 %v6468, 7
    %v6470 = vsub.s32 %v6467, %v6469
    %v6471 = vrot.slane %v6463, %v6470
    %v6473 = vunpack.c.l.s4 1966171168
    %v6474 = vunpack.c.0.s8 %v6473
    %v6475 = vlaneseq
    %v6476 = vshrl.u32 %v6475, 7
    %v6477 = vsub.s32 %v6474, %v6476
    %v6478 = vrot.slane %v6464, %v6477
    %v6479 = vcombine.low %v6471, %v6478
    %v6481 = vunpack.c.l.s4 1966171168
    %v6482 = vunpack.c.0.s8 %v6481
    %v6483 = vlaneseq
    %v6484 = vshrl.u32 %v6483, 7
    %v6485 = vsub.s32 %v6482, %v6484
    %v6486 = vrot.slane %v6479, %v6485
    %v6488 = vadd.f32 %v6250, %v6486
    %v6489 = vld [vmem:[#allocation4 + $0xb] sm:$0x1]
    %s6490 = scalar_lea.vmem [#allocation5], 5632
    %v6491 = vld [vmem:[%s6490] sm:$0xff]
    %v6492 = vld [vmem:[%s6490 + $0x8] sm:$0xff]
    %v6493 = vld [vmem:[%s6490 + $0x10] sm:$0xff]
    %v6494 = vld [vmem:[%s6490 + $0x18] sm:$0xff]
    %v6495 = vld [vmem:[%s6490 + $0x20] sm:$0xff]
    %v6496 = vld [vmem:[%s6490 + $0x28] sm:$0xff]
    %v6497 = vld [vmem:[%s6490 + $0x30] sm:$0xff]
    %v6498 = vld [vmem:[%s6490 + $0x38] sm:$0xff]
    %v6499 = vld [vmem:[%s6490 + $0x40] sm:$0xff]
    %v6500 = vld [vmem:[%s6490 + $0x48] sm:$0xff]
    %v6501 = vld [vmem:[%s6490 + $0x50] sm:$0xff]
    %v6502 = vld [vmem:[%s6490 + $0x58] sm:$0xff]
    %v6503 = vld [vmem:[%s6490 + $0x60] sm:$0xff]
    %v6504 = vld [vmem:[%s6490 + $0x68] sm:$0xff]
    %v6505 = vld [vmem:[%s6490 + $0x70] sm:$0xff]
    %v6506 = vld [vmem:[%s6490 + $0x78] sm:$0xff]
    %v6507 = vld [vmem:[%s6490 + $0x80] sm:$0xff]
    %v6508 = vld [vmem:[%s6490 + $0x88] sm:$0xff]
    %v6509 = vld [vmem:[%s6490 + $0x90] sm:$0xff]
    %v6510 = vld [vmem:[%s6490 + $0x98] sm:$0xff]
    %v6511 = vld [vmem:[%s6490 + $0xa0] sm:$0xff]
    %v6512 = vld [vmem:[%s6490 + $0xa8] sm:$0xff]
    %v6513 = vld [vmem:[%s6490 + $0xb0] sm:$0xff]
    %v6514 = vld [vmem:[%s6490 + $0xb8] sm:$0xff]
    %v6515 = vld [vmem:[%s6490 + $0xc0] sm:$0xff]
    %v6516 = vld [vmem:[%s6490 + $0xc8] sm:$0xff]
    %v6517 = vld [vmem:[%s6490 + $0xd0] sm:$0xff]
    %v6518 = vld [vmem:[%s6490 + $0xd8] sm:$0xff]
    %v6519 = vld [vmem:[%s6490 + $0xe0] sm:$0xff]
    %v6520 = vld [vmem:[%s6490 + $0xe8] sm:$0xff]
    %v6521 = vld [vmem:[%s6490 + $0xf0] sm:$0xff]
    %v6522 = vld [vmem:[%s6490 + $0xf8] sm:$0xff]
    %v6523 = vld [vmem:[%s6490 + $0x100] sm:$0xff]
    %v6524 = vld [vmem:[%s6490 + $0x108] sm:$0xff]
    %v6525 = vld [vmem:[%s6490 + $0x110] sm:$0xff]
    %v6526 = vld [vmem:[%s6490 + $0x118] sm:$0xff]
    %v6527 = vld [vmem:[%s6490 + $0x120] sm:$0xff]
    %v6528 = vld [vmem:[%s6490 + $0x128] sm:$0xff]
    %v6529 = vld [vmem:[%s6490 + $0x130] sm:$0xff]
    %v6530 = vld [vmem:[%s6490 + $0x138] sm:$0xff]
    %v6531 = vld [vmem:[%s6490 + $0x140] sm:$0xff]
    %v6532 = vld [vmem:[%s6490 + $0x148] sm:$0xff]
    %v6533 = vld [vmem:[%s6490 + $0x150] sm:$0xff]
    %v6534 = vld [vmem:[%s6490 + $0x158] sm:$0xff]
    %v6535 = vld [vmem:[%s6490 + $0x160] sm:$0xff]
    %v6536 = vld [vmem:[%s6490 + $0x168] sm:$0xff]
    %v6537 = vld [vmem:[%s6490 + $0x170] sm:$0xff]
    %v6538 = vld [vmem:[%s6490 + $0x178] sm:$0xff]
    %v6539 = vld [vmem:[%s6490 + $0x180] sm:$0xff]
    %v6540 = vld [vmem:[%s6490 + $0x188] sm:$0xff]
    %v6541 = vld [vmem:[%s6490 + $0x190] sm:$0xff]
    %v6542 = vld [vmem:[%s6490 + $0x198] sm:$0xff]
    %v6543 = vld [vmem:[%s6490 + $0x1a0] sm:$0xff]
    %v6544 = vld [vmem:[%s6490 + $0x1a8] sm:$0xff]
    %v6545 = vld [vmem:[%s6490 + $0x1b0] sm:$0xff]
    %v6546 = vld [vmem:[%s6490 + $0x1b8] sm:$0xff]
    %v6547 = vld [vmem:[%s6490 + $0x1c0] sm:$0xff]
    %v6548 = vld [vmem:[%s6490 + $0x1c8] sm:$0xff]
    %v6549 = vld [vmem:[%s6490 + $0x1d0] sm:$0xff]
    %v6550 = vld [vmem:[%s6490 + $0x1d8] sm:$0xff]
    %v6551 = vld [vmem:[%s6490 + $0x1e0] sm:$0xff]
    %v6552 = vld [vmem:[%s6490 + $0x1e8] sm:$0xff]
    %v6553 = vld [vmem:[%s6490 + $0x1f0] sm:$0xff]
    %v6554 = vld [vmem:[%s6490 + $0x1f8] sm:$0xff]
    %6555 = vmatprep.subr.mxu0 %v6552
    %6556 = vmatpush1.msra.mxu0 %v6551
    %6557 = vmatprep.subr.mxu0 %v6548
    %6558 = vmatpush1.msra.mxu0 %v6547
    %6559 = vmatprep.subr.mxu0 %v6544
    %6560 = vmatpush1.msra.mxu0 %v6543
    %6561 = vmatprep.subr.mxu0 %v6540
    %6562 = vmatpush1.msra.mxu0 %v6539
    %6563 = vmatprep.subr.mxu0 %v6536
    %6564 = vmatpush1.msra.mxu0 %v6535
    %6565 = vmatprep.subr.mxu0 %v6532
    %6566 = vmatpush1.msra.mxu0 %v6531
    %6567 = vmatprep.subr.mxu0 %v6528
    %6568 = vmatpush1.msra.mxu0 %v6527
    %6569 = vmatprep.subr.mxu0 %v6524
    %6570 = vmatpush1.msra.mxu0 %v6523
    %6571 = vmatprep.subr.mxu0 %v6520
    %6572 = vmatpush1.msra.mxu0 %v6519
    %6573 = vmatprep.subr.mxu0 %v6516
    %6574 = vmatpush1.msra.mxu0 %v6515
    %6575 = vmatprep.subr.mxu0 %v6512
    %6576 = vmatpush1.msra.mxu0 %v6511
    %6577 = vmatprep.subr.mxu0 %v6508
    %6578 = vmatpush1.msra.mxu0 %v6507
    %6579 = vmatprep.subr.mxu0 %v6504
    %6580 = vmatpush1.msra.mxu0 %v6503
    %6581 = vmatprep.subr.mxu0 %v6500
    %6582 = vmatpush1.msra.mxu0 %v6499
    %6583 = vmatprep.subr.mxu0 %v6496
    %6584 = vmatpush1.msra.mxu0 %v6495
    %6585 = vmatprep.subr.mxu0 %v6492
    %6586 = vmatpush1.msra.mxu0 %v6491
    %6587 = vmatprep.subr.mxu0 0.0
    %6588 = vmatpush2.msra.mxu0 0.0
    %6589 = vmatprep.subr.mxu0 0.0
    %6590 = vmatpush2.msra.mxu0 0.0
    %6591 = vmatprep.subr.mxu0 0.0
    %6592 = vmatpush2.msra.mxu0 0.0
    %6593 = vmatprep.subr.mxu0 0.0
    %6594 = vmatpush2.msra.mxu0 0.0
    %6595 = vmatprep.subr.mxu0 0.0
    %6596 = vmatpush2.msra.mxu0 0.0
    %6597 = vmatprep.subr.mxu0 0.0
    %6598 = vmatpush2.msra.mxu0 0.0
    %6599 = vmatprep.subr.mxu0 0.0
    %6600 = vmatpush2.msra.mxu0 0.0
    %6601 = vmatprep.subr.mxu0 0.0
    %6602 = vmatpush2.msra.mxu0 0.0
    %6603 = vmatprep.subr.mxu0 0.0
    %6604 = vmatpush2.msra.mxu0 0.0
    %6605 = vmatprep.subr.mxu0 0.0
    %6606 = vmatpush2.msra.mxu0 0.0
    %6607 = vmatprep.subr.mxu0 0.0
    %6608 = vmatpush2.msra.mxu0 0.0
    %6609 = vmatprep.subr.mxu0 0.0
    %6610 = vmatpush2.msra.mxu0 0.0
    %6611 = vmatprep.subr.mxu0 0.0
    %6612 = vmatpush2.msra.mxu0 0.0
    %6613 = vmatprep.subr.mxu0 0.0
    %6614 = vmatpush2.msra.mxu0 0.0
    %6615 = vmatprep.subr.mxu0 0.0
    %6616 = vmatpush2.msra.mxu0 0.0
    %6617 = vmatprep.subr.mxu0 0.0
    %6618 = vmatpush2.msra.mxu0 0.0
    %6619 = vmatprep.mubr.f32.mxu0 0.0
    %6620 = vmatmul.mubr.f32.gmra.mxu0 %v6489
    %v6621 = vpop.f32.mrf.mxu0
    %v6622 = vadd.f32 0.0, %v6621
    %v6623 = vpop.f32.mrf.mxu0
    %v6624 = vadd.f32 0.0, %v6623
    %6625 = vdwg.mxu0
    %6626 = vmatprep.subr.mxu0 %v6554
    %6627 = vmatpush1.msra.mxu0 %v6553
    %6628 = vmatprep.subr.mxu0 %v6550
    %6629 = vmatpush1.msra.mxu0 %v6549
    %6630 = vmatprep.subr.mxu0 %v6546
    %6631 = vmatpush1.msra.mxu0 %v6545
    %6632 = vmatprep.subr.mxu0 %v6542
    %6633 = vmatpush1.msra.mxu0 %v6541
    %6634 = vmatprep.subr.mxu0 %v6538
    %6635 = vmatpush1.msra.mxu0 %v6537
    %6636 = vmatprep.subr.mxu0 %v6534
    %6637 = vmatpush1.msra.mxu0 %v6533
    %6638 = vmatprep.subr.mxu0 %v6530
    %6639 = vmatpush1.msra.mxu0 %v6529
    %6640 = vmatprep.subr.mxu0 %v6526
    %6641 = vmatpush1.msra.mxu0 %v6525
    %6642 = vmatprep.subr.mxu0 %v6522
    %6643 = vmatpush1.msra.mxu0 %v6521
    %6644 = vmatprep.subr.mxu0 %v6518
    %6645 = vmatpush1.msra.mxu0 %v6517
    %6646 = vmatprep.subr.mxu0 %v6514
    %6647 = vmatpush1.msra.mxu0 %v6513
    %6648 = vmatprep.subr.mxu0 %v6510
    %6649 = vmatpush1.msra.mxu0 %v6509
    %6650 = vmatprep.subr.mxu0 %v6506
    %6651 = vmatpush1.msra.mxu0 %v6505
    %6652 = vmatprep.subr.mxu0 %v6502
    %6653 = vmatpush1.msra.mxu0 %v6501
    %6654 = vmatprep.subr.mxu0 %v6498
    %6655 = vmatpush1.msra.mxu0 %v6497
    %6656 = vmatprep.subr.mxu0 %v6494
    %6657 = vmatpush1.msra.mxu0 %v6493
    %6658 = vmatprep.subr.mxu0 0.0
    %6659 = vmatpush2.msra.mxu0 0.0
    %6660 = vmatprep.subr.mxu0 0.0
    %6661 = vmatpush2.msra.mxu0 0.0
    %6662 = vmatprep.subr.mxu0 0.0
    %6663 = vmatpush2.msra.mxu0 0.0
    %6664 = vmatprep.subr.mxu0 0.0
    %6665 = vmatpush2.msra.mxu0 0.0
    %6666 = vmatprep.subr.mxu0 0.0
    %6667 = vmatpush2.msra.mxu0 0.0
    %6668 = vmatprep.subr.mxu0 0.0
    %6669 = vmatpush2.msra.mxu0 0.0
    %6670 = vmatprep.subr.mxu0 0.0
    %6671 = vmatpush2.msra.mxu0 0.0
    %6672 = vmatprep.subr.mxu0 0.0
    %6673 = vmatpush2.msra.mxu0 0.0
    %6674 = vmatprep.subr.mxu0 0.0
    %6675 = vmatpush2.msra.mxu0 0.0
    %6676 = vmatprep.subr.mxu0 0.0
    %6677 = vmatpush2.msra.mxu0 0.0
    %6678 = vmatprep.subr.mxu0 0.0
    %6679 = vmatpush2.msra.mxu0 0.0
    %6680 = vmatprep.subr.mxu0 0.0
    %6681 = vmatpush2.msra.mxu0 0.0
    %6682 = vmatprep.subr.mxu0 0.0
    %6683 = vmatpush2.msra.mxu0 0.0
    %6684 = vmatprep.subr.mxu0 0.0
    %6685 = vmatpush2.msra.mxu0 0.0
    %6686 = vmatprep.subr.mxu0 0.0
    %6687 = vmatpush2.msra.mxu0 0.0
    %6688 = vmatprep.subr.mxu0 0.0
    %6689 = vmatpush2.msra.mxu0 0.0
    %6690 = vmatprep.mubr.f32.mxu0 0.0
    %6691 = vmatmul.mubr.f32.gmra.mxu0 %v6489
    %v6692 = vpop.f32.mrf.mxu0
    %v6693 = vadd.f32 0.0, %v6692
    %v6694 = vpop.f32.mrf.mxu0
    %v6695 = vadd.f32 0.0, %v6694
    %6696 = vdwg.mxu0
    %v6701 = vcombine.low %v6622, %v6624
    %v6702 = vcombine.low %v6693, %v6695
    %v6704 = vunpack.c.l.s4 1966171168
    %v6705 = vunpack.c.0.s8 %v6704
    %v6706 = vlaneseq
    %v6707 = vshrl.u32 %v6706, 7
    %v6708 = vsub.s32 %v6705, %v6707
    %v6709 = vrot.slane %v6701, %v6708
    %v6711 = vunpack.c.l.s4 1966171168
    %v6712 = vunpack.c.0.s8 %v6711
    %v6713 = vlaneseq
    %v6714 = vshrl.u32 %v6713, 7
    %v6715 = vsub.s32 %v6712, %v6714
    %v6716 = vrot.slane %v6702, %v6715
    %v6717 = vcombine.low %v6709, %v6716
    %v6719 = vunpack.c.l.s4 1966171168
    %v6720 = vunpack.c.0.s8 %v6719
    %v6721 = vlaneseq
    %v6722 = vshrl.u32 %v6721, 7
    %v6723 = vsub.s32 %v6720, %v6722
    %v6724 = vrot.slane %v6717, %v6723
    %v6726 = vadd.f32 %v6488, %v6724
    %v6727 = vld [vmem:[#allocation4 + $0xc] sm:$0x1]
    %s6728 = scalar_lea.vmem [#allocation5], 6144
    %v6729 = vld [vmem:[%s6728] sm:$0xff]
    %v6730 = vld [vmem:[%s6728 + $0x8] sm:$0xff]
    %v6731 = vld [vmem:[%s6728 + $0x10] sm:$0xff]
    %v6732 = vld [vmem:[%s6728 + $0x18] sm:$0xff]
    %v6733 = vld [vmem:[%s6728 + $0x20] sm:$0xff]
    %v6734 = vld [vmem:[%s6728 + $0x28] sm:$0xff]
    %v6735 = vld [vmem:[%s6728 + $0x30] sm:$0xff]
    %v6736 = vld [vmem:[%s6728 + $0x38] sm:$0xff]
    %v6737 = vld [vmem:[%s6728 + $0x40] sm:$0xff]
    %v6738 = vld [vmem:[%s6728 + $0x48] sm:$0xff]
    %v6739 = vld [vmem:[%s6728 + $0x50] sm:$0xff]
    %v6740 = vld [vmem:[%s6728 + $0x58] sm:$0xff]
    %v6741 = vld [vmem:[%s6728 + $0x60] sm:$0xff]
    %v6742 = vld [vmem:[%s6728 + $0x68] sm:$0xff]
    %v6743 = vld [vmem:[%s6728 + $0x70] sm:$0xff]
    %v6744 = vld [vmem:[%s6728 + $0x78] sm:$0xff]
    %v6745 = vld [vmem:[%s6728 + $0x80] sm:$0xff]
    %v6746 = vld [vmem:[%s6728 + $0x88] sm:$0xff]
    %v6747 = vld [vmem:[%s6728 + $0x90] sm:$0xff]
    %v6748 = vld [vmem:[%s6728 + $0x98] sm:$0xff]
    %v6749 = vld [vmem:[%s6728 + $0xa0] sm:$0xff]
    %v6750 = vld [vmem:[%s6728 + $0xa8] sm:$0xff]
    %v6751 = vld [vmem:[%s6728 + $0xb0] sm:$0xff]
    %v6752 = vld [vmem:[%s6728 + $0xb8] sm:$0xff]
    %v6753 = vld [vmem:[%s6728 + $0xc0] sm:$0xff]
    %v6754 = vld [vmem:[%s6728 + $0xc8] sm:$0xff]
    %v6755 = vld [vmem:[%s6728 + $0xd0] sm:$0xff]
    %v6756 = vld [vmem:[%s6728 + $0xd8] sm:$0xff]
    %v6757 = vld [vmem:[%s6728 + $0xe0] sm:$0xff]
    %v6758 = vld [vmem:[%s6728 + $0xe8] sm:$0xff]
    %v6759 = vld [vmem:[%s6728 + $0xf0] sm:$0xff]
    %v6760 = vld [vmem:[%s6728 + $0xf8] sm:$0xff]
    %v6761 = vld [vmem:[%s6728 + $0x100] sm:$0xff]
    %v6762 = vld [vmem:[%s6728 + $0x108] sm:$0xff]
    %v6763 = vld [vmem:[%s6728 + $0x110] sm:$0xff]
    %v6764 = vld [vmem:[%s6728 + $0x118] sm:$0xff]
    %v6765 = vld [vmem:[%s6728 + $0x120] sm:$0xff]
    %v6766 = vld [vmem:[%s6728 + $0x128] sm:$0xff]
    %v6767 = vld [vmem:[%s6728 + $0x130] sm:$0xff]
    %v6768 = vld [vmem:[%s6728 + $0x138] sm:$0xff]
    %v6769 = vld [vmem:[%s6728 + $0x140] sm:$0xff]
    %v6770 = vld [vmem:[%s6728 + $0x148] sm:$0xff]
    %v6771 = vld [vmem:[%s6728 + $0x150] sm:$0xff]
    %v6772 = vld [vmem:[%s6728 + $0x158] sm:$0xff]
    %v6773 = vld [vmem:[%s6728 + $0x160] sm:$0xff]
    %v6774 = vld [vmem:[%s6728 + $0x168] sm:$0xff]
    %v6775 = vld [vmem:[%s6728 + $0x170] sm:$0xff]
    %v6776 = vld [vmem:[%s6728 + $0x178] sm:$0xff]
    %v6777 = vld [vmem:[%s6728 + $0x180] sm:$0xff]
    %v6778 = vld [vmem:[%s6728 + $0x188] sm:$0xff]
    %v6779 = vld [vmem:[%s6728 + $0x190] sm:$0xff]
    %v6780 = vld [vmem:[%s6728 + $0x198] sm:$0xff]
    %v6781 = vld [vmem:[%s6728 + $0x1a0] sm:$0xff]
    %v6782 = vld [vmem:[%s6728 + $0x1a8] sm:$0xff]
    %v6783 = vld [vmem:[%s6728 + $0x1b0] sm:$0xff]
    %v6784 = vld [vmem:[%s6728 + $0x1b8] sm:$0xff]
    %v6785 = vld [vmem:[%s6728 + $0x1c0] sm:$0xff]
    %v6786 = vld [vmem:[%s6728 + $0x1c8] sm:$0xff]
    %v6787 = vld [vmem:[%s6728 + $0x1d0] sm:$0xff]
    %v6788 = vld [vmem:[%s6728 + $0x1d8] sm:$0xff]
    %v6789 = vld [vmem:[%s6728 + $0x1e0] sm:$0xff]
    %v6790 = vld [vmem:[%s6728 + $0x1e8] sm:$0xff]
    %v6791 = vld [vmem:[%s6728 + $0x1f0] sm:$0xff]
    %v6792 = vld [vmem:[%s6728 + $0x1f8] sm:$0xff]
    %6793 = vmatprep.subr.mxu0 %v6790
    %6794 = vmatpush1.msra.mxu0 %v6789
    %6795 = vmatprep.subr.mxu0 %v6786
    %6796 = vmatpush1.msra.mxu0 %v6785
    %6797 = vmatprep.subr.mxu0 %v6782
    %6798 = vmatpush1.msra.mxu0 %v6781
    %6799 = vmatprep.subr.mxu0 %v6778
    %6800 = vmatpush1.msra.mxu0 %v6777
    %6801 = vmatprep.subr.mxu0 %v6774
    %6802 = vmatpush1.msra.mxu0 %v6773
    %6803 = vmatprep.subr.mxu0 %v6770
    %6804 = vmatpush1.msra.mxu0 %v6769
    %6805 = vmatprep.subr.mxu0 %v6766
    %6806 = vmatpush1.msra.mxu0 %v6765
    %6807 = vmatprep.subr.mxu0 %v6762
    %6808 = vmatpush1.msra.mxu0 %v6761
    %6809 = vmatprep.subr.mxu0 %v6758
    %6810 = vmatpush1.msra.mxu0 %v6757
    %6811 = vmatprep.subr.mxu0 %v6754
    %6812 = vmatpush1.msra.mxu0 %v6753
    %6813 = vmatprep.subr.mxu0 %v6750
    %6814 = vmatpush1.msra.mxu0 %v6749
    %6815 = vmatprep.subr.mxu0 %v6746
    %6816 = vmatpush1.msra.mxu0 %v6745
    %6817 = vmatprep.subr.mxu0 %v6742
    %6818 = vmatpush1.msra.mxu0 %v6741
    %6819 = vmatprep.subr.mxu0 %v6738
    %6820 = vmatpush1.msra.mxu0 %v6737
    %6821 = vmatprep.subr.mxu0 %v6734
    %6822 = vmatpush1.msra.mxu0 %v6733
    %6823 = vmatprep.subr.mxu0 %v6730
    %6824 = vmatpush1.msra.mxu0 %v6729
    %6825 = vmatprep.subr.mxu0 0.0
    %6826 = vmatpush2.msra.mxu0 0.0
    %6827 = vmatprep.subr.mxu0 0.0
    %6828 = vmatpush2.msra.mxu0 0.0
    %6829 = vmatprep.subr.mxu0 0.0
    %6830 = vmatpush2.msra.mxu0 0.0
    %6831 = vmatprep.subr.mxu0 0.0
    %6832 = vmatpush2.msra.mxu0 0.0
    %6833 = vmatprep.subr.mxu0 0.0
    %6834 = vmatpush2.msra.mxu0 0.0
    %6835 = vmatprep.subr.mxu0 0.0
    %6836 = vmatpush2.msra.mxu0 0.0
    %6837 = vmatprep.subr.mxu0 0.0
    %6838 = vmatpush2.msra.mxu0 0.0
    %6839 = vmatprep.subr.mxu0 0.0
    %6840 = vmatpush2.msra.mxu0 0.0
    %6841 = vmatprep.subr.mxu0 0.0
    %6842 = vmatpush2.msra.mxu0 0.0
    %6843 = vmatprep.subr.mxu0 0.0
    %6844 = vmatpush2.msra.mxu0 0.0
    %6845 = vmatprep.subr.mxu0 0.0
    %6846 = vmatpush2.msra.mxu0 0.0
    %6847 = vmatprep.subr.mxu0 0.0
    %6848 = vmatpush2.msra.mxu0 0.0
    %6849 = vmatprep.subr.mxu0 0.0
    %6850 = vmatpush2.msra.mxu0 0.0
    %6851 = vmatprep.subr.mxu0 0.0
    %6852 = vmatpush2.msra.mxu0 0.0
    %6853 = vmatprep.subr.mxu0 0.0
    %6854 = vmatpush2.msra.mxu0 0.0
    %6855 = vmatprep.subr.mxu0 0.0
    %6856 = vmatpush2.msra.mxu0 0.0
    %6857 = vmatprep.mubr.f32.mxu0 0.0
    %6858 = vmatmul.mubr.f32.gmra.mxu0 %v6727
    %v6859 = vpop.f32.mrf.mxu0
    %v6860 = vadd.f32 0.0, %v6859
    %v6861 = vpop.f32.mrf.mxu0
    %v6862 = vadd.f32 0.0, %v6861
    %6863 = vdwg.mxu0
    %6864 = vmatprep.subr.mxu0 %v6792
    %6865 = vmatpush1.msra.mxu0 %v6791
    %6866 = vmatprep.subr.mxu0 %v6788
    %6867 = vmatpush1.msra.mxu0 %v6787
    %6868 = vmatprep.subr.mxu0 %v6784
    %6869 = vmatpush1.msra.mxu0 %v6783
    %6870 = vmatprep.subr.mxu0 %v6780
    %6871 = vmatpush1.msra.mxu0 %v6779
    %6872 = vmatprep.subr.mxu0 %v6776
    %6873 = vmatpush1.msra.mxu0 %v6775
    %6874 = vmatprep.subr.mxu0 %v6772
    %6875 = vmatpush1.msra.mxu0 %v6771
    %6876 = vmatprep.subr.mxu0 %v6768
    %6877 = vmatpush1.msra.mxu0 %v6767
    %6878 = vmatprep.subr.mxu0 %v6764
    %6879 = vmatpush1.msra.mxu0 %v6763
    %6880 = vmatprep.subr.mxu0 %v6760
    %6881 = vmatpush1.msra.mxu0 %v6759
    %6882 = vmatprep.subr.mxu0 %v6756
    %6883 = vmatpush1.msra.mxu0 %v6755
    %6884 = vmatprep.subr.mxu0 %v6752
    %6885 = vmatpush1.msra.mxu0 %v6751
    %6886 = vmatprep.subr.mxu0 %v6748
    %6887 = vmatpush1.msra.mxu0 %v6747
    %6888 = vmatprep.subr.mxu0 %v6744
    %6889 = vmatpush1.msra.mxu0 %v6743
    %6890 = vmatprep.subr.mxu0 %v6740
    %6891 = vmatpush1.msra.mxu0 %v6739
    %6892 = vmatprep.subr.mxu0 %v6736
    %6893 = vmatpush1.msra.mxu0 %v6735
    %6894 = vmatprep.subr.mxu0 %v6732
    %6895 = vmatpush1.msra.mxu0 %v6731
    %6896 = vmatprep.subr.mxu0 0.0
    %6897 = vmatpush2.msra.mxu0 0.0
    %6898 = vmatprep.subr.mxu0 0.0
    %6899 = vmatpush2.msra.mxu0 0.0
    %6900 = vmatprep.subr.mxu0 0.0
    %6901 = vmatpush2.msra.mxu0 0.0
    %6902 = vmatprep.subr.mxu0 0.0
    %6903 = vmatpush2.msra.mxu0 0.0
    %6904 = vmatprep.subr.mxu0 0.0
    %6905 = vmatpush2.msra.mxu0 0.0
    %6906 = vmatprep.subr.mxu0 0.0
    %6907 = vmatpush2.msra.mxu0 0.0
    %6908 = vmatprep.subr.mxu0 0.0
    %6909 = vmatpush2.msra.mxu0 0.0
    %6910 = vmatprep.subr.mxu0 0.0
    %6911 = vmatpush2.msra.mxu0 0.0
    %6912 = vmatprep.subr.mxu0 0.0
    %6913 = vmatpush2.msra.mxu0 0.0
    %6914 = vmatprep.subr.mxu0 0.0
    %6915 = vmatpush2.msra.mxu0 0.0
    %6916 = vmatprep.subr.mxu0 0.0
    %6917 = vmatpush2.msra.mxu0 0.0
    %6918 = vmatprep.subr.mxu0 0.0
    %6919 = vmatpush2.msra.mxu0 0.0
    %6920 = vmatprep.subr.mxu0 0.0
    %6921 = vmatpush2.msra.mxu0 0.0
    %6922 = vmatprep.subr.mxu0 0.0
    %6923 = vmatpush2.msra.mxu0 0.0
    %6924 = vmatprep.subr.mxu0 0.0
    %6925 = vmatpush2.msra.mxu0 0.0
    %6926 = vmatprep.subr.mxu0 0.0
    %6927 = vmatpush2.msra.mxu0 0.0
    %6928 = vmatprep.mubr.f32.mxu0 0.0
    %6929 = vmatmul.mubr.f32.gmra.mxu0 %v6727
    %v6930 = vpop.f32.mrf.mxu0
    %v6931 = vadd.f32 0.0, %v6930
    %v6932 = vpop.f32.mrf.mxu0
    %v6933 = vadd.f32 0.0, %v6932
    %6934 = vdwg.mxu0
    %v6939 = vcombine.low %v6860, %v6862
    %v6940 = vcombine.low %v6931, %v6933
    %v6942 = vunpack.c.l.s4 1966171168
    %v6943 = vunpack.c.0.s8 %v6942
    %v6944 = vlaneseq
    %v6945 = vshrl.u32 %v6944, 7
    %v6946 = vsub.s32 %v6943, %v6945
    %v6947 = vrot.slane %v6939, %v6946
    %v6949 = vunpack.c.l.s4 1966171168
    %v6950 = vunpack.c.0.s8 %v6949
    %v6951 = vlaneseq
    %v6952 = vshrl.u32 %v6951, 7
    %v6953 = vsub.s32 %v6950, %v6952
    %v6954 = vrot.slane %v6940, %v6953
    %v6955 = vcombine.low %v6947, %v6954
    %v6957 = vunpack.c.l.s4 1966171168
    %v6958 = vunpack.c.0.s8 %v6957
    %v6959 = vlaneseq
    %v6960 = vshrl.u32 %v6959, 7
    %v6961 = vsub.s32 %v6958, %v6960
    %v6962 = vrot.slane %v6955, %v6961
    %v6964 = vadd.f32 %v6726, %v6962
    %v6965 = vld [vmem:[#allocation4 + $0xd] sm:$0x1]
    %s6966 = scalar_lea.vmem [#allocation5], 6656
    %v6967 = vld [vmem:[%s6966] sm:$0xff]
    %v6968 = vld [vmem:[%s6966 + $0x8] sm:$0xff]
    %v6969 = vld [vmem:[%s6966 + $0x10] sm:$0xff]
    %v6970 = vld [vmem:[%s6966 + $0x18] sm:$0xff]
    %v6971 = vld [vmem:[%s6966 + $0x20] sm:$0xff]
    %v6972 = vld [vmem:[%s6966 + $0x28] sm:$0xff]
    %v6973 = vld [vmem:[%s6966 + $0x30] sm:$0xff]
    %v6974 = vld [vmem:[%s6966 + $0x38] sm:$0xff]
    %v6975 = vld [vmem:[%s6966 + $0x40] sm:$0xff]
    %v6976 = vld [vmem:[%s6966 + $0x48] sm:$0xff]
    %v6977 = vld [vmem:[%s6966 + $0x50] sm:$0xff]
    %v6978 = vld [vmem:[%s6966 + $0x58] sm:$0xff]
    %v6979 = vld [vmem:[%s6966 + $0x60] sm:$0xff]
    %v6980 = vld [vmem:[%s6966 + $0x68] sm:$0xff]
    %v6981 = vld [vmem:[%s6966 + $0x70] sm:$0xff]
    %v6982 = vld [vmem:[%s6966 + $0x78] sm:$0xff]
    %v6983 = vld [vmem:[%s6966 + $0x80] sm:$0xff]
    %v6984 = vld [vmem:[%s6966 + $0x88] sm:$0xff]
    %v6985 = vld [vmem:[%s6966 + $0x90] sm:$0xff]
    %v6986 = vld [vmem:[%s6966 + $0x98] sm:$0xff]
    %v6987 = vld [vmem:[%s6966 + $0xa0] sm:$0xff]
    %v6988 = vld [vmem:[%s6966 + $0xa8] sm:$0xff]
    %v6989 = vld [vmem:[%s6966 + $0xb0] sm:$0xff]
    %v6990 = vld [vmem:[%s6966 + $0xb8] sm:$0xff]
    %v6991 = vld [vmem:[%s6966 + $0xc0] sm:$0xff]
    %v6992 = vld [vmem:[%s6966 + $0xc8] sm:$0xff]
    %v6993 = vld [vmem:[%s6966 + $0xd0] sm:$0xff]
    %v6994 = vld [vmem:[%s6966 + $0xd8] sm:$0xff]
    %v6995 = vld [vmem:[%s6966 + $0xe0] sm:$0xff]
    %v6996 = vld [vmem:[%s6966 + $0xe8] sm:$0xff]
    %v6997 = vld [vmem:[%s6966 + $0xf0] sm:$0xff]
    %v6998 = vld [vmem:[%s6966 + $0xf8] sm:$0xff]
    %v6999 = vld [vmem:[%s6966 + $0x100] sm:$0xff]
    %v7000 = vld [vmem:[%s6966 + $0x108] sm:$0xff]
    %v7001 = vld [vmem:[%s6966 + $0x110] sm:$0xff]
    %v7002 = vld [vmem:[%s6966 + $0x118] sm:$0xff]
    %v7003 = vld [vmem:[%s6966 + $0x120] sm:$0xff]
    %v7004 = vld [vmem:[%s6966 + $0x128] sm:$0xff]
    %v7005 = vld [vmem:[%s6966 + $0x130] sm:$0xff]
    %v7006 = vld [vmem:[%s6966 + $0x138] sm:$0xff]
    %v7007 = vld [vmem:[%s6966 + $0x140] sm:$0xff]
    %v7008 = vld [vmem:[%s6966 + $0x148] sm:$0xff]
    %v7009 = vld [vmem:[%s6966 + $0x150] sm:$0xff]
    %v7010 = vld [vmem:[%s6966 + $0x158] sm:$0xff]
    %v7011 = vld [vmem:[%s6966 + $0x160] sm:$0xff]
    %v7012 = vld [vmem:[%s6966 + $0x168] sm:$0xff]
    %v7013 = vld [vmem:[%s6966 + $0x170] sm:$0xff]
    %v7014 = vld [vmem:[%s6966 + $0x178] sm:$0xff]
    %v7015 = vld [vmem:[%s6966 + $0x180] sm:$0xff]
    %v7016 = vld [vmem:[%s6966 + $0x188] sm:$0xff]
    %v7017 = vld [vmem:[%s6966 + $0x190] sm:$0xff]
    %v7018 = vld [vmem:[%s6966 + $0x198] sm:$0xff]
    %v7019 = vld [vmem:[%s6966 + $0x1a0] sm:$0xff]
    %v7020 = vld [vmem:[%s6966 + $0x1a8] sm:$0xff]
    %v7021 = vld [vmem:[%s6966 + $0x1b0] sm:$0xff]
    %v7022 = vld [vmem:[%s6966 + $0x1b8] sm:$0xff]
    %v7023 = vld [vmem:[%s6966 + $0x1c0] sm:$0xff]
    %v7024 = vld [vmem:[%s6966 + $0x1c8] sm:$0xff]
    %v7025 = vld [vmem:[%s6966 + $0x1d0] sm:$0xff]
    %v7026 = vld [vmem:[%s6966 + $0x1d8] sm:$0xff]
    %v7027 = vld [vmem:[%s6966 + $0x1e0] sm:$0xff]
    %v7028 = vld [vmem:[%s6966 + $0x1e8] sm:$0xff]
    %v7029 = vld [vmem:[%s6966 + $0x1f0] sm:$0xff]
    %v7030 = vld [vmem:[%s6966 + $0x1f8] sm:$0xff]
    %7031 = vmatprep.subr.mxu0 %v7028
    %7032 = vmatpush1.msra.mxu0 %v7027
    %7033 = vmatprep.subr.mxu0 %v7024
    %7034 = vmatpush1.msra.mxu0 %v7023
    %7035 = vmatprep.subr.mxu0 %v7020
    %7036 = vmatpush1.msra.mxu0 %v7019
    %7037 = vmatprep.subr.mxu0 %v7016
    %7038 = vmatpush1.msra.mxu0 %v7015
    %7039 = vmatprep.subr.mxu0 %v7012
    %7040 = vmatpush1.msra.mxu0 %v7011
    %7041 = vmatprep.subr.mxu0 %v7008
    %7042 = vmatpush1.msra.mxu0 %v7007
    %7043 = vmatprep.subr.mxu0 %v7004
    %7044 = vmatpush1.msra.mxu0 %v7003
    %7045 = vmatprep.subr.mxu0 %v7000
    %7046 = vmatpush1.msra.mxu0 %v6999
    %7047 = vmatprep.subr.mxu0 %v6996
    %7048 = vmatpush1.msra.mxu0 %v6995
    %7049 = vmatprep.subr.mxu0 %v6992
    %7050 = vmatpush1.msra.mxu0 %v6991
    %7051 = vmatprep.subr.mxu0 %v6988
    %7052 = vmatpush1.msra.mxu0 %v6987
    %7053 = vmatprep.subr.mxu0 %v6984
    %7054 = vmatpush1.msra.mxu0 %v6983
    %7055 = vmatprep.subr.mxu0 %v6980
    %7056 = vmatpush1.msra.mxu0 %v6979
    %7057 = vmatprep.subr.mxu0 %v6976
    %7058 = vmatpush1.msra.mxu0 %v6975
    %7059 = vmatprep.subr.mxu0 %v6972
    %7060 = vmatpush1.msra.mxu0 %v6971
    %7061 = vmatprep.subr.mxu0 %v6968
    %7062 = vmatpush1.msra.mxu0 %v6967
    %7063 = vmatprep.subr.mxu0 0.0
    %7064 = vmatpush2.msra.mxu0 0.0
    %7065 = vmatprep.subr.mxu0 0.0
    %7066 = vmatpush2.msra.mxu0 0.0
    %7067 = vmatprep.subr.mxu0 0.0
    %7068 = vmatpush2.msra.mxu0 0.0
    %7069 = vmatprep.subr.mxu0 0.0
    %7070 = vmatpush2.msra.mxu0 0.0
    %7071 = vmatprep.subr.mxu0 0.0
    %7072 = vmatpush2.msra.mxu0 0.0
    %7073 = vmatprep.subr.mxu0 0.0
    %7074 = vmatpush2.msra.mxu0 0.0
    %7075 = vmatprep.subr.mxu0 0.0
    %7076 = vmatpush2.msra.mxu0 0.0
    %7077 = vmatprep.subr.mxu0 0.0
    %7078 = vmatpush2.msra.mxu0 0.0
    %7079 = vmatprep.subr.mxu0 0.0
    %7080 = vmatpush2.msra.mxu0 0.0
    %7081 = vmatprep.subr.mxu0 0.0
    %7082 = vmatpush2.msra.mxu0 0.0
    %7083 = vmatprep.subr.mxu0 0.0
    %7084 = vmatpush2.msra.mxu0 0.0
    %7085 = vmatprep.subr.mxu0 0.0
    %7086 = vmatpush2.msra.mxu0 0.0
    %7087 = vmatprep.subr.mxu0 0.0
    %7088 = vmatpush2.msra.mxu0 0.0
    %7089 = vmatprep.subr.mxu0 0.0
    %7090 = vmatpush2.msra.mxu0 0.0
    %7091 = vmatprep.subr.mxu0 0.0
    %7092 = vmatpush2.msra.mxu0 0.0
    %7093 = vmatprep.subr.mxu0 0.0
    %7094 = vmatpush2.msra.mxu0 0.0
    %7095 = vmatprep.mubr.f32.mxu0 0.0
    %7096 = vmatmul.mubr.f32.gmra.mxu0 %v6965
    %v7097 = vpop.f32.mrf.mxu0
    %v7098 = vadd.f32 0.0, %v7097
    %v7099 = vpop.f32.mrf.mxu0
    %v7100 = vadd.f32 0.0, %v7099
    %7101 = vdwg.mxu0
    %7102 = vmatprep.subr.mxu0 %v7030
    %7103 = vmatpush1.msra.mxu0 %v7029
    %7104 = vmatprep.subr.mxu0 %v7026
    %7105 = vmatpush1.msra.mxu0 %v7025
    %7106 = vmatprep.subr.mxu0 %v7022
    %7107 = vmatpush1.msra.mxu0 %v7021
    %7108 = vmatprep.subr.mxu0 %v7018
    %7109 = vmatpush1.msra.mxu0 %v7017
    %7110 = vmatprep.subr.mxu0 %v7014
    %7111 = vmatpush1.msra.mxu0 %v7013
    %7112 = vmatprep.subr.mxu0 %v7010
    %7113 = vmatpush1.msra.mxu0 %v7009
    %7114 = vmatprep.subr.mxu0 %v7006
    %7115 = vmatpush1.msra.mxu0 %v7005
    %7116 = vmatprep.subr.mxu0 %v7002
    %7117 = vmatpush1.msra.mxu0 %v7001
    %7118 = vmatprep.subr.mxu0 %v6998
    %7119 = vmatpush1.msra.mxu0 %v6997
    %7120 = vmatprep.subr.mxu0 %v6994
    %7121 = vmatpush1.msra.mxu0 %v6993
    %7122 = vmatprep.subr.mxu0 %v6990
    %7123 = vmatpush1.msra.mxu0 %v6989
    %7124 = vmatprep.subr.mxu0 %v6986
    %7125 = vmatpush1.msra.mxu0 %v6985
    %7126 = vmatprep.subr.mxu0 %v6982
    %7127 = vmatpush1.msra.mxu0 %v6981
    %7128 = vmatprep.subr.mxu0 %v6978
    %7129 = vmatpush1.msra.mxu0 %v6977
    %7130 = vmatprep.subr.mxu0 %v6974
    %7131 = vmatpush1.msra.mxu0 %v6973
    %7132 = vmatprep.subr.mxu0 %v6970
    %7133 = vmatpush1.msra.mxu0 %v6969
    %7134 = vmatprep.subr.mxu0 0.0
    %7135 = vmatpush2.msra.mxu0 0.0
    %7136 = vmatprep.subr.mxu0 0.0
    %7137 = vmatpush2.msra.mxu0 0.0
    %7138 = vmatprep.subr.mxu0 0.0
    %7139 = vmatpush2.msra.mxu0 0.0
    %7140 = vmatprep.subr.mxu0 0.0
    %7141 = vmatpush2.msra.mxu0 0.0
    %7142 = vmatprep.subr.mxu0 0.0
    %7143 = vmatpush2.msra.mxu0 0.0
    %7144 = vmatprep.subr.mxu0 0.0
    %7145 = vmatpush2.msra.mxu0 0.0
    %7146 = vmatprep.subr.mxu0 0.0
    %7147 = vmatpush2.msra.mxu0 0.0
    %7148 = vmatprep.subr.mxu0 0.0
    %7149 = vmatpush2.msra.mxu0 0.0
    %7150 = vmatprep.subr.mxu0 0.0
    %7151 = vmatpush2.msra.mxu0 0.0
    %7152 = vmatprep.subr.mxu0 0.0
    %7153 = vmatpush2.msra.mxu0 0.0
    %7154 = vmatprep.subr.mxu0 0.0
    %7155 = vmatpush2.msra.mxu0 0.0
    %7156 = vmatprep.subr.mxu0 0.0
    %7157 = vmatpush2.msra.mxu0 0.0
    %7158 = vmatprep.subr.mxu0 0.0
    %7159 = vmatpush2.msra.mxu0 0.0
    %7160 = vmatprep.subr.mxu0 0.0
    %7161 = vmatpush2.msra.mxu0 0.0
    %7162 = vmatprep.subr.mxu0 0.0
    %7163 = vmatpush2.msra.mxu0 0.0
    %7164 = vmatprep.subr.mxu0 0.0
    %7165 = vmatpush2.msra.mxu0 0.0
    %7166 = vmatprep.mubr.f32.mxu0 0.0
    %7167 = vmatmul.mubr.f32.gmra.mxu0 %v6965
    %v7168 = vpop.f32.mrf.mxu0
    %v7169 = vadd.f32 0.0, %v7168
    %v7170 = vpop.f32.mrf.mxu0
    %v7171 = vadd.f32 0.0, %v7170
    %7172 = vdwg.mxu0
    %v7177 = vcombine.low %v7098, %v7100
    %v7178 = vcombine.low %v7169, %v7171
    %v7180 = vunpack.c.l.s4 1966171168
    %v7181 = vunpack.c.0.s8 %v7180
    %v7182 = vlaneseq
    %v7183 = vshrl.u32 %v7182, 7
    %v7184 = vsub.s32 %v7181, %v7183
    %v7185 = vrot.slane %v7177, %v7184
    %v7187 = vunpack.c.l.s4 1966171168
    %v7188 = vunpack.c.0.s8 %v7187
    %v7189 = vlaneseq
    %v7190 = vshrl.u32 %v7189, 7
    %v7191 = vsub.s32 %v7188, %v7190
    %v7192 = vrot.slane %v7178, %v7191
    %v7193 = vcombine.low %v7185, %v7192
    %v7195 = vunpack.c.l.s4 1966171168
    %v7196 = vunpack.c.0.s8 %v7195
    %v7197 = vlaneseq
    %v7198 = vshrl.u32 %v7197, 7
    %v7199 = vsub.s32 %v7196, %v7198
    %v7200 = vrot.slane %v7193, %v7199
    %v7202 = vadd.f32 %v6964, %v7200
    %v7203 = vld [vmem:[#allocation4 + $0xe] sm:$0x1]
    %s7204 = scalar_lea.vmem [#allocation5], 7168
    %v7205 = vld [vmem:[%s7204] sm:$0xff]
    %v7206 = vld [vmem:[%s7204 + $0x8] sm:$0xff]
    %v7207 = vld [vmem:[%s7204 + $0x10] sm:$0xff]
    %v7208 = vld [vmem:[%s7204 + $0x18] sm:$0xff]
    %v7209 = vld [vmem:[%s7204 + $0x20] sm:$0xff]
    %v7210 = vld [vmem:[%s7204 + $0x28] sm:$0xff]
    %v7211 = vld [vmem:[%s7204 + $0x30] sm:$0xff]
    %v7212 = vld [vmem:[%s7204 + $0x38] sm:$0xff]
    %v7213 = vld [vmem:[%s7204 + $0x40] sm:$0xff]
    %v7214 = vld [vmem:[%s7204 + $0x48] sm:$0xff]
    %v7215 = vld [vmem:[%s7204 + $0x50] sm:$0xff]
    %v7216 = vld [vmem:[%s7204 + $0x58] sm:$0xff]
    %v7217 = vld [vmem:[%s7204 + $0x60] sm:$0xff]
    %v7218 = vld [vmem:[%s7204 + $0x68] sm:$0xff]
    %v7219 = vld [vmem:[%s7204 + $0x70] sm:$0xff]
    %v7220 = vld [vmem:[%s7204 + $0x78] sm:$0xff]
    %v7221 = vld [vmem:[%s7204 + $0x80] sm:$0xff]
    %v7222 = vld [vmem:[%s7204 + $0x88] sm:$0xff]
    %v7223 = vld [vmem:[%s7204 + $0x90] sm:$0xff]
    %v7224 = vld [vmem:[%s7204 + $0x98] sm:$0xff]
    %v7225 = vld [vmem:[%s7204 + $0xa0] sm:$0xff]
    %v7226 = vld [vmem:[%s7204 + $0xa8] sm:$0xff]
    %v7227 = vld [vmem:[%s7204 + $0xb0] sm:$0xff]
    %v7228 = vld [vmem:[%s7204 + $0xb8] sm:$0xff]
    %v7229 = vld [vmem:[%s7204 + $0xc0] sm:$0xff]
    %v7230 = vld [vmem:[%s7204 + $0xc8] sm:$0xff]
    %v7231 = vld [vmem:[%s7204 + $0xd0] sm:$0xff]
    %v7232 = vld [vmem:[%s7204 + $0xd8] sm:$0xff]
    %v7233 = vld [vmem:[%s7204 + $0xe0] sm:$0xff]
    %v7234 = vld [vmem:[%s7204 + $0xe8] sm:$0xff]
    %v7235 = vld [vmem:[%s7204 + $0xf0] sm:$0xff]
    %v7236 = vld [vmem:[%s7204 + $0xf8] sm:$0xff]
    %v7237 = vld [vmem:[%s7204 + $0x100] sm:$0xff]
    %v7238 = vld [vmem:[%s7204 + $0x108] sm:$0xff]
    %v7239 = vld [vmem:[%s7204 + $0x110] sm:$0xff]
    %v7240 = vld [vmem:[%s7204 + $0x118] sm:$0xff]
    %v7241 = vld [vmem:[%s7204 + $0x120] sm:$0xff]
    %v7242 = vld [vmem:[%s7204 + $0x128] sm:$0xff]
    %v7243 = vld [vmem:[%s7204 + $0x130] sm:$0xff]
    %v7244 = vld [vmem:[%s7204 + $0x138] sm:$0xff]
    %v7245 = vld [vmem:[%s7204 + $0x140] sm:$0xff]
    %v7246 = vld [vmem:[%s7204 + $0x148] sm:$0xff]
    %v7247 = vld [vmem:[%s7204 + $0x150] sm:$0xff]
    %v7248 = vld [vmem:[%s7204 + $0x158] sm:$0xff]
    %v7249 = vld [vmem:[%s7204 + $0x160] sm:$0xff]
    %v7250 = vld [vmem:[%s7204 + $0x168] sm:$0xff]
    %v7251 = vld [vmem:[%s7204 + $0x170] sm:$0xff]
    %v7252 = vld [vmem:[%s7204 + $0x178] sm:$0xff]
    %v7253 = vld [vmem:[%s7204 + $0x180] sm:$0xff]
    %v7254 = vld [vmem:[%s7204 + $0x188] sm:$0xff]
    %v7255 = vld [vmem:[%s7204 + $0x190] sm:$0xff]
    %v7256 = vld [vmem:[%s7204 + $0x198] sm:$0xff]
    %v7257 = vld [vmem:[%s7204 + $0x1a0] sm:$0xff]
    %v7258 = vld [vmem:[%s7204 + $0x1a8] sm:$0xff]
    %v7259 = vld [vmem:[%s7204 + $0x1b0] sm:$0xff]
    %v7260 = vld [vmem:[%s7204 + $0x1b8] sm:$0xff]
    %v7261 = vld [vmem:[%s7204 + $0x1c0] sm:$0xff]
    %v7262 = vld [vmem:[%s7204 + $0x1c8] sm:$0xff]
    %v7263 = vld [vmem:[%s7204 + $0x1d0] sm:$0xff]
    %v7264 = vld [vmem:[%s7204 + $0x1d8] sm:$0xff]
    %v7265 = vld [vmem:[%s7204 + $0x1e0] sm:$0xff]
    %v7266 = vld [vmem:[%s7204 + $0x1e8] sm:$0xff]
    %v7267 = vld [vmem:[%s7204 + $0x1f0] sm:$0xff]
    %v7268 = vld [vmem:[%s7204 + $0x1f8] sm:$0xff]
    %7269 = vmatprep.subr.mxu0 %v7266
    %7270 = vmatpush1.msra.mxu0 %v7265
    %7271 = vmatprep.subr.mxu0 %v7262
    %7272 = vmatpush1.msra.mxu0 %v7261
    %7273 = vmatprep.subr.mxu0 %v7258
    %7274 = vmatpush1.msra.mxu0 %v7257
    %7275 = vmatprep.subr.mxu0 %v7254
    %7276 = vmatpush1.msra.mxu0 %v7253
    %7277 = vmatprep.subr.mxu0 %v7250
    %7278 = vmatpush1.msra.mxu0 %v7249
    %7279 = vmatprep.subr.mxu0 %v7246
    %7280 = vmatpush1.msra.mxu0 %v7245
    %7281 = vmatprep.subr.mxu0 %v7242
    %7282 = vmatpush1.msra.mxu0 %v7241
    %7283 = vmatprep.subr.mxu0 %v7238
    %7284 = vmatpush1.msra.mxu0 %v7237
    %7285 = vmatprep.subr.mxu0 %v7234
    %7286 = vmatpush1.msra.mxu0 %v7233
    %7287 = vmatprep.subr.mxu0 %v7230
    %7288 = vmatpush1.msra.mxu0 %v7229
    %7289 = vmatprep.subr.mxu0 %v7226
    %7290 = vmatpush1.msra.mxu0 %v7225
    %7291 = vmatprep.subr.mxu0 %v7222
    %7292 = vmatpush1.msra.mxu0 %v7221
    %7293 = vmatprep.subr.mxu0 %v7218
    %7294 = vmatpush1.msra.mxu0 %v7217
    %7295 = vmatprep.subr.mxu0 %v7214
    %7296 = vmatpush1.msra.mxu0 %v7213
    %7297 = vmatprep.subr.mxu0 %v7210
    %7298 = vmatpush1.msra.mxu0 %v7209
    %7299 = vmatprep.subr.mxu0 %v7206
    %7300 = vmatpush1.msra.mxu0 %v7205
    %7301 = vmatprep.subr.mxu0 0.0
    %7302 = vmatpush2.msra.mxu0 0.0
    %7303 = vmatprep.subr.mxu0 0.0
    %7304 = vmatpush2.msra.mxu0 0.0
    %7305 = vmatprep.subr.mxu0 0.0
    %7306 = vmatpush2.msra.mxu0 0.0
    %7307 = vmatprep.subr.mxu0 0.0
    %7308 = vmatpush2.msra.mxu0 0.0
    %7309 = vmatprep.subr.mxu0 0.0
    %7310 = vmatpush2.msra.mxu0 0.0
    %7311 = vmatprep.subr.mxu0 0.0
    %7312 = vmatpush2.msra.mxu0 0.0
    %7313 = vmatprep.subr.mxu0 0.0
    %7314 = vmatpush2.msra.mxu0 0.0
    %7315 = vmatprep.subr.mxu0 0.0
    %7316 = vmatpush2.msra.mxu0 0.0
    %7317 = vmatprep.subr.mxu0 0.0
    %7318 = vmatpush2.msra.mxu0 0.0
    %7319 = vmatprep.subr.mxu0 0.0
    %7320 = vmatpush2.msra.mxu0 0.0
    %7321 = vmatprep.subr.mxu0 0.0
    %7322 = vmatpush2.msra.mxu0 0.0
    %7323 = vmatprep.subr.mxu0 0.0
    %7324 = vmatpush2.msra.mxu0 0.0
    %7325 = vmatprep.subr.mxu0 0.0
    %7326 = vmatpush2.msra.mxu0 0.0
    %7327 = vmatprep.subr.mxu0 0.0
    %7328 = vmatpush2.msra.mxu0 0.0
    %7329 = vmatprep.subr.mxu0 0.0
    %7330 = vmatpush2.msra.mxu0 0.0
    %7331 = vmatprep.subr.mxu0 0.0
    %7332 = vmatpush2.msra.mxu0 0.0
    %7333 = vmatprep.mubr.f32.mxu0 0.0
    %7334 = vmatmul.mubr.f32.gmra.mxu0 %v7203
    %v7335 = vpop.f32.mrf.mxu0
    %v7336 = vadd.f32 0.0, %v7335
    %v7337 = vpop.f32.mrf.mxu0
    %v7338 = vadd.f32 0.0, %v7337
    %7339 = vdwg.mxu0
    %7340 = vmatprep.subr.mxu0 %v7268
    %7341 = vmatpush1.msra.mxu0 %v7267
    %7342 = vmatprep.subr.mxu0 %v7264
    %7343 = vmatpush1.msra.mxu0 %v7263
    %7344 = vmatprep.subr.mxu0 %v7260
    %7345 = vmatpush1.msra.mxu0 %v7259
    %7346 = vmatprep.subr.mxu0 %v7256
    %7347 = vmatpush1.msra.mxu0 %v7255
    %7348 = vmatprep.subr.mxu0 %v7252
    %7349 = vmatpush1.msra.mxu0 %v7251
    %7350 = vmatprep.subr.mxu0 %v7248
    %7351 = vmatpush1.msra.mxu0 %v7247
    %7352 = vmatprep.subr.mxu0 %v7244
    %7353 = vmatpush1.msra.mxu0 %v7243
    %7354 = vmatprep.subr.mxu0 %v7240
    %7355 = vmatpush1.msra.mxu0 %v7239
    %7356 = vmatprep.subr.mxu0 %v7236
    %7357 = vmatpush1.msra.mxu0 %v7235
    %7358 = vmatprep.subr.mxu0 %v7232
    %7359 = vmatpush1.msra.mxu0 %v7231
    %7360 = vmatprep.subr.mxu0 %v7228
    %7361 = vmatpush1.msra.mxu0 %v7227
    %7362 = vmatprep.subr.mxu0 %v7224
    %7363 = vmatpush1.msra.mxu0 %v7223
    %7364 = vmatprep.subr.mxu0 %v7220
    %7365 = vmatpush1.msra.mxu0 %v7219
    %7366 = vmatprep.subr.mxu0 %v7216
    %7367 = vmatpush1.msra.mxu0 %v7215
    %7368 = vmatprep.subr.mxu0 %v7212
    %7369 = vmatpush1.msra.mxu0 %v7211
    %7370 = vmatprep.subr.mxu0 %v7208
    %7371 = vmatpush1.msra.mxu0 %v7207
    %7372 = vmatprep.subr.mxu0 0.0
    %7373 = vmatpush2.msra.mxu0 0.0
    %7374 = vmatprep.subr.mxu0 0.0
    %7375 = vmatpush2.msra.mxu0 0.0
    %7376 = vmatprep.subr.mxu0 0.0
    %7377 = vmatpush2.msra.mxu0 0.0
    %7378 = vmatprep.subr.mxu0 0.0
    %7379 = vmatpush2.msra.mxu0 0.0
    %7380 = vmatprep.subr.mxu0 0.0
    %7381 = vmatpush2.msra.mxu0 0.0
    %7382 = vmatprep.subr.mxu0 0.0
    %7383 = vmatpush2.msra.mxu0 0.0
    %7384 = vmatprep.subr.mxu0 0.0
    %7385 = vmatpush2.msra.mxu0 0.0
    %7386 = vmatprep.subr.mxu0 0.0
    %7387 = vmatpush2.msra.mxu0 0.0
    %7388 = vmatprep.subr.mxu0 0.0
    %7389 = vmatpush2.msra.mxu0 0.0
    %7390 = vmatprep.subr.mxu0 0.0
    %7391 = vmatpush2.msra.mxu0 0.0
    %7392 = vmatprep.subr.mxu0 0.0
    %7393 = vmatpush2.msra.mxu0 0.0
    %7394 = vmatprep.subr.mxu0 0.0
    %7395 = vmatpush2.msra.mxu0 0.0
    %7396 = vmatprep.subr.mxu0 0.0
    %7397 = vmatpush2.msra.mxu0 0.0
    %7398 = vmatprep.subr.mxu0 0.0
    %7399 = vmatpush2.msra.mxu0 0.0
    %7400 = vmatprep.subr.mxu0 0.0
    %7401 = vmatpush2.msra.mxu0 0.0
    %7402 = vmatprep.subr.mxu0 0.0
    %7403 = vmatpush2.msra.mxu0 0.0
    %7404 = vmatprep.mubr.f32.mxu0 0.0
    %7405 = vmatmul.mubr.f32.gmra.mxu0 %v7203
    %v7406 = vpop.f32.mrf.mxu0
    %v7407 = vadd.f32 0.0, %v7406
    %v7408 = vpop.f32.mrf.mxu0
    %v7409 = vadd.f32 0.0, %v7408
    %7410 = vdwg.mxu0
    %v7415 = vcombine.low %v7336, %v7338
    %v7416 = vcombine.low %v7407, %v7409
    %v7418 = vunpack.c.l.s4 1966171168
    %v7419 = vunpack.c.0.s8 %v7418
    %v7420 = vlaneseq
    %v7421 = vshrl.u32 %v7420, 7
    %v7422 = vsub.s32 %v7419, %v7421
    %v7423 = vrot.slane %v7415, %v7422
    %v7425 = vunpack.c.l.s4 1966171168
    %v7426 = vunpack.c.0.s8 %v7425
    %v7427 = vlaneseq
    %v7428 = vshrl.u32 %v7427, 7
    %v7429 = vsub.s32 %v7426, %v7428
    %v7430 = vrot.slane %v7416, %v7429
    %v7431 = vcombine.low %v7423, %v7430
    %v7433 = vunpack.c.l.s4 1966171168
    %v7434 = vunpack.c.0.s8 %v7433
    %v7435 = vlaneseq
    %v7436 = vshrl.u32 %v7435, 7
    %v7437 = vsub.s32 %v7434, %v7436
    %v7438 = vrot.slane %v7431, %v7437
    %v7440 = vadd.f32 %v7202, %v7438
    %v7441 = vld [vmem:[#allocation4 + $0xf] sm:$0x1]
    %s7442 = scalar_lea.vmem [#allocation5], 7680
    %v7443 = vld [vmem:[%s7442] sm:$0xff]
    %v7444 = vld [vmem:[%s7442 + $0x8] sm:$0xff]
    %v7445 = vld [vmem:[%s7442 + $0x10] sm:$0xff]
    %v7446 = vld [vmem:[%s7442 + $0x18] sm:$0xff]
    %v7447 = vld [vmem:[%s7442 + $0x20] sm:$0xff]
    %v7448 = vld [vmem:[%s7442 + $0x28] sm:$0xff]
    %v7449 = vld [vmem:[%s7442 + $0x30] sm:$0xff]
    %v7450 = vld [vmem:[%s7442 + $0x38] sm:$0xff]
    %v7451 = vld [vmem:[%s7442 + $0x40] sm:$0xff]
    %v7452 = vld [vmem:[%s7442 + $0x48] sm:$0xff]
    %v7453 = vld [vmem:[%s7442 + $0x50] sm:$0xff]
    %v7454 = vld [vmem:[%s7442 + $0x58] sm:$0xff]
    %v7455 = vld [vmem:[%s7442 + $0x60] sm:$0xff]
    %v7456 = vld [vmem:[%s7442 + $0x68] sm:$0xff]
    %v7457 = vld [vmem:[%s7442 + $0x70] sm:$0xff]
    %v7458 = vld [vmem:[%s7442 + $0x78] sm:$0xff]
    %v7459 = vld [vmem:[%s7442 + $0x80] sm:$0xff]
    %v7460 = vld [vmem:[%s7442 + $0x88] sm:$0xff]
    %v7461 = vld [vmem:[%s7442 + $0x90] sm:$0xff]
    %v7462 = vld [vmem:[%s7442 + $0x98] sm:$0xff]
    %v7463 = vld [vmem:[%s7442 + $0xa0] sm:$0xff]
    %v7464 = vld [vmem:[%s7442 + $0xa8] sm:$0xff]
    %v7465 = vld [vmem:[%s7442 + $0xb0] sm:$0xff]
    %v7466 = vld [vmem:[%s7442 + $0xb8] sm:$0xff]
    %v7467 = vld [vmem:[%s7442 + $0xc0] sm:$0xff]
    %v7468 = vld [vmem:[%s7442 + $0xc8] sm:$0xff]
    %v7469 = vld [vmem:[%s7442 + $0xd0] sm:$0xff]
    %v7470 = vld [vmem:[%s7442 + $0xd8] sm:$0xff]
    %v7471 = vld [vmem:[%s7442 + $0xe0] sm:$0xff]
    %v7472 = vld [vmem:[%s7442 + $0xe8] sm:$0xff]
    %v7473 = vld [vmem:[%s7442 + $0xf0] sm:$0xff]
    %v7474 = vld [vmem:[%s7442 + $0xf8] sm:$0xff]
    %v7475 = vld [vmem:[%s7442 + $0x100] sm:$0xff]
    %v7476 = vld [vmem:[%s7442 + $0x108] sm:$0xff]
    %v7477 = vld [vmem:[%s7442 + $0x110] sm:$0xff]
    %v7478 = vld [vmem:[%s7442 + $0x118] sm:$0xff]
    %v7479 = vld [vmem:[%s7442 + $0x120] sm:$0xff]
    %v7480 = vld [vmem:[%s7442 + $0x128] sm:$0xff]
    %v7481 = vld [vmem:[%s7442 + $0x130] sm:$0xff]
    %v7482 = vld [vmem:[%s7442 + $0x138] sm:$0xff]
    %v7483 = vld [vmem:[%s7442 + $0x140] sm:$0xff]
    %v7484 = vld [vmem:[%s7442 + $0x148] sm:$0xff]
    %v7485 = vld [vmem:[%s7442 + $0x150] sm:$0xff]
    %v7486 = vld [vmem:[%s7442 + $0x158] sm:$0xff]
    %v7487 = vld [vmem:[%s7442 + $0x160] sm:$0xff]
    %v7488 = vld [vmem:[%s7442 + $0x168] sm:$0xff]
    %v7489 = vld [vmem:[%s7442 + $0x170] sm:$0xff]
    %v7490 = vld [vmem:[%s7442 + $0x178] sm:$0xff]
    %v7491 = vld [vmem:[%s7442 + $0x180] sm:$0xff]
    %v7492 = vld [vmem:[%s7442 + $0x188] sm:$0xff]
    %v7493 = vld [vmem:[%s7442 + $0x190] sm:$0xff]
    %v7494 = vld [vmem:[%s7442 + $0x198] sm:$0xff]
    %v7495 = vld [vmem:[%s7442 + $0x1a0] sm:$0xff]
    %v7496 = vld [vmem:[%s7442 + $0x1a8] sm:$0xff]
    %v7497 = vld [vmem:[%s7442 + $0x1b0] sm:$0xff]
    %v7498 = vld [vmem:[%s7442 + $0x1b8] sm:$0xff]
    %v7499 = vld [vmem:[%s7442 + $0x1c0] sm:$0xff]
    %v7500 = vld [vmem:[%s7442 + $0x1c8] sm:$0xff]
    %v7501 = vld [vmem:[%s7442 + $0x1d0] sm:$0xff]
    %v7502 = vld [vmem:[%s7442 + $0x1d8] sm:$0xff]
    %v7503 = vld [vmem:[%s7442 + $0x1e0] sm:$0xff]
    %v7504 = vld [vmem:[%s7442 + $0x1e8] sm:$0xff]
    %v7505 = vld [vmem:[%s7442 + $0x1f0] sm:$0xff]
    %v7506 = vld [vmem:[%s7442 + $0x1f8] sm:$0xff]
    %7507 = vmatprep.subr.mxu0 %v7504
    %7508 = vmatpush1.msra.mxu0 %v7503
    %7509 = vmatprep.subr.mxu0 %v7500
    %7510 = vmatpush1.msra.mxu0 %v7499
    %7511 = vmatprep.subr.mxu0 %v7496
    %7512 = vmatpush1.msra.mxu0 %v7495
    %7513 = vmatprep.subr.mxu0 %v7492
    %7514 = vmatpush1.msra.mxu0 %v7491
    %7515 = vmatprep.subr.mxu0 %v7488
    %7516 = vmatpush1.msra.mxu0 %v7487
    %7517 = vmatprep.subr.mxu0 %v7484
    %7518 = vmatpush1.msra.mxu0 %v7483
    %7519 = vmatprep.subr.mxu0 %v7480
    %7520 = vmatpush1.msra.mxu0 %v7479
    %7521 = vmatprep.subr.mxu0 %v7476
    %7522 = vmatpush1.msra.mxu0 %v7475
    %7523 = vmatprep.subr.mxu0 %v7472
    %7524 = vmatpush1.msra.mxu0 %v7471
    %7525 = vmatprep.subr.mxu0 %v7468
    %7526 = vmatpush1.msra.mxu0 %v7467
    %7527 = vmatprep.subr.mxu0 %v7464
    %7528 = vmatpush1.msra.mxu0 %v7463
    %7529 = vmatprep.subr.mxu0 %v7460
    %7530 = vmatpush1.msra.mxu0 %v7459
    %7531 = vmatprep.subr.mxu0 %v7456
    %7532 = vmatpush1.msra.mxu0 %v7455
    %7533 = vmatprep.subr.mxu0 %v7452
    %7534 = vmatpush1.msra.mxu0 %v7451
    %7535 = vmatprep.subr.mxu0 %v7448
    %7536 = vmatpush1.msra.mxu0 %v7447
    %7537 = vmatprep.subr.mxu0 %v7444
    %7538 = vmatpush1.msra.mxu0 %v7443
    %7539 = vmatprep.subr.mxu0 0.0
    %7540 = vmatpush2.msra.mxu0 0.0
    %7541 = vmatprep.subr.mxu0 0.0
    %7542 = vmatpush2.msra.mxu0 0.0
    %7543 = vmatprep.subr.mxu0 0.0
    %7544 = vmatpush2.msra.mxu0 0.0
    %7545 = vmatprep.subr.mxu0 0.0
    %7546 = vmatpush2.msra.mxu0 0.0
    %7547 = vmatprep.subr.mxu0 0.0
    %7548 = vmatpush2.msra.mxu0 0.0
    %7549 = vmatprep.subr.mxu0 0.0
    %7550 = vmatpush2.msra.mxu0 0.0
    %7551 = vmatprep.subr.mxu0 0.0
    %7552 = vmatpush2.msra.mxu0 0.0
    %7553 = vmatprep.subr.mxu0 0.0
    %7554 = vmatpush2.msra.mxu0 0.0
    %7555 = vmatprep.subr.mxu0 0.0
    %7556 = vmatpush2.msra.mxu0 0.0
    %7557 = vmatprep.subr.mxu0 0.0
    %7558 = vmatpush2.msra.mxu0 0.0
    %7559 = vmatprep.subr.mxu0 0.0
    %7560 = vmatpush2.msra.mxu0 0.0
    %7561 = vmatprep.subr.mxu0 0.0
    %7562 = vmatpush2.msra.mxu0 0.0
    %7563 = vmatprep.subr.mxu0 0.0
    %7564 = vmatpush2.msra.mxu0 0.0
    %7565 = vmatprep.subr.mxu0 0.0
    %7566 = vmatpush2.msra.mxu0 0.0
    %7567 = vmatprep.subr.mxu0 0.0
    %7568 = vmatpush2.msra.mxu0 0.0
    %7569 = vmatprep.subr.mxu0 0.0
    %7570 = vmatpush2.msra.mxu0 0.0
    %7571 = vmatprep.mubr.f32.mxu0 0.0
    %7572 = vmatmul.mubr.f32.gmra.mxu0 %v7441
    %v7573 = vpop.f32.mrf.mxu0
    %v7574 = vadd.f32 0.0, %v7573
    %v7575 = vpop.f32.mrf.mxu0
    %v7576 = vadd.f32 0.0, %v7575
    %7577 = vdwg.mxu0
    %7578 = vmatprep.subr.mxu0 %v7506
    %7579 = vmatpush1.msra.mxu0 %v7505
    %7580 = vmatprep.subr.mxu0 %v7502
    %7581 = vmatpush1.msra.mxu0 %v7501
    %7582 = vmatprep.subr.mxu0 %v7498
    %7583 = vmatpush1.msra.mxu0 %v7497
    %7584 = vmatprep.subr.mxu0 %v7494
    %7585 = vmatpush1.msra.mxu0 %v7493
    %7586 = vmatprep.subr.mxu0 %v7490
    %7587 = vmatpush1.msra.mxu0 %v7489
    %7588 = vmatprep.subr.mxu0 %v7486
    %7589 = vmatpush1.msra.mxu0 %v7485
    %7590 = vmatprep.subr.mxu0 %v7482
    %7591 = vmatpush1.msra.mxu0 %v7481
    %7592 = vmatprep.subr.mxu0 %v7478
    %7593 = vmatpush1.msra.mxu0 %v7477
    %7594 = vmatprep.subr.mxu0 %v7474
    %7595 = vmatpush1.msra.mxu0 %v7473
    %7596 = vmatprep.subr.mxu0 %v7470
    %7597 = vmatpush1.msra.mxu0 %v7469
    %7598 = vmatprep.subr.mxu0 %v7466
    %7599 = vmatpush1.msra.mxu0 %v7465
    %7600 = vmatprep.subr.mxu0 %v7462
    %7601 = vmatpush1.msra.mxu0 %v7461
    %7602 = vmatprep.subr.mxu0 %v7458
    %7603 = vmatpush1.msra.mxu0 %v7457
    %7604 = vmatprep.subr.mxu0 %v7454
    %7605 = vmatpush1.msra.mxu0 %v7453
    %7606 = vmatprep.subr.mxu0 %v7450
    %7607 = vmatpush1.msra.mxu0 %v7449
    %7608 = vmatprep.subr.mxu0 %v7446
    %7609 = vmatpush1.msra.mxu0 %v7445
    %7610 = vmatprep.subr.mxu0 0.0
    %7611 = vmatpush2.msra.mxu0 0.0
    %7612 = vmatprep.subr.mxu0 0.0
    %7613 = vmatpush2.msra.mxu0 0.0
    %7614 = vmatprep.subr.mxu0 0.0
    %7615 = vmatpush2.msra.mxu0 0.0
    %7616 = vmatprep.subr.mxu0 0.0
    %7617 = vmatpush2.msra.mxu0 0.0
    %7618 = vmatprep.subr.mxu0 0.0
    %7619 = vmatpush2.msra.mxu0 0.0
    %7620 = vmatprep.subr.mxu0 0.0
    %7621 = vmatpush2.msra.mxu0 0.0
    %7622 = vmatprep.subr.mxu0 0.0
    %7623 = vmatpush2.msra.mxu0 0.0
    %7624 = vmatprep.subr.mxu0 0.0
    %7625 = vmatpush2.msra.mxu0 0.0
    %7626 = vmatprep.subr.mxu0 0.0
    %7627 = vmatpush2.msra.mxu0 0.0
    %7628 = vmatprep.subr.mxu0 0.0
    %7629 = vmatpush2.msra.mxu0 0.0
    %7630 = vmatprep.subr.mxu0 0.0
    %7631 = vmatpush2.msra.mxu0 0.0
    %7632 = vmatprep.subr.mxu0 0.0
    %7633 = vmatpush2.msra.mxu0 0.0
    %7634 = vmatprep.subr.mxu0 0.0
    %7635 = vmatpush2.msra.mxu0 0.0
    %7636 = vmatprep.subr.mxu0 0.0
    %7637 = vmatpush2.msra.mxu0 0.0
    %7638 = vmatprep.subr.mxu0 0.0
    %7639 = vmatpush2.msra.mxu0 0.0
    %7640 = vmatprep.subr.mxu0 0.0
    %7641 = vmatpush2.msra.mxu0 0.0
    %7642 = vmatprep.mubr.f32.mxu0 0.0
    %7643 = vmatmul.mubr.f32.gmra.mxu0 %v7441
    %v7644 = vpop.f32.mrf.mxu0
    %v7645 = vadd.f32 0.0, %v7644
    %v7646 = vpop.f32.mrf.mxu0
    %v7647 = vadd.f32 0.0, %v7646
    %7648 = vdwg.mxu0
    %v7653 = vcombine.low %v7574, %v7576
    %v7654 = vcombine.low %v7645, %v7647
    %v7656 = vunpack.c.l.s4 1966171168
    %v7657 = vunpack.c.0.s8 %v7656
    %v7658 = vlaneseq
    %v7659 = vshrl.u32 %v7658, 7
    %v7660 = vsub.s32 %v7657, %v7659
    %v7661 = vrot.slane %v7653, %v7660
    %v7663 = vunpack.c.l.s4 1966171168
    %v7664 = vunpack.c.0.s8 %v7663
    %v7665 = vlaneseq
    %v7666 = vshrl.u32 %v7665, 7
    %v7667 = vsub.s32 %v7664, %v7666
    %v7668 = vrot.slane %v7654, %v7667
    %v7669 = vcombine.low %v7661, %v7668
    %v7671 = vunpack.c.l.s4 1966171168
    %v7672 = vunpack.c.0.s8 %v7671
    %v7673 = vlaneseq
    %v7674 = vshrl.u32 %v7673, 7
    %v7675 = vsub.s32 %v7672, %v7674
    %v7676 = vrot.slane %v7669, %v7675
    %v7678 = vadd.f32 %v7440, %v7676
    %v7679 = vmax.f32 %v7678, 0.0
    %v7680 = vld [vmem:[#allocation16] sm:$0xff]
    %v7681 = vld [vmem:[#allocation16 + $0x8] sm:$0xff]
    %v7682 = vld [vmem:[#allocation16 + $0x10] sm:$0xff]
    %v7683 = vld [vmem:[#allocation16 + $0x18] sm:$0xff]
    %v7684 = vld [vmem:[#allocation16 + $0x20] sm:$0xff]
    %v7685 = vld [vmem:[#allocation16 + $0x28] sm:$0xff]
    %v7686 = vld [vmem:[#allocation16 + $0x30] sm:$0xff]
    %v7687 = vld [vmem:[#allocation16 + $0x38] sm:$0xff]
    %v7688 = vld [vmem:[#allocation16 + $0x40] sm:$0xff]
    %v7689 = vld [vmem:[#allocation16 + $0x48] sm:$0xff]
    %v7690 = vld [vmem:[#allocation16 + $0x50] sm:$0xff]
    %v7691 = vld [vmem:[#allocation16 + $0x58] sm:$0xff]
    %v7692 = vld [vmem:[#allocation16 + $0x60] sm:$0xff]
    %v7693 = vld [vmem:[#allocation16 + $0x68] sm:$0xff]
    %v7694 = vld [vmem:[#allocation16 + $0x70] sm:$0xff]
    %v7695 = vld [vmem:[#allocation16 + $0x78] sm:$0xff]
    %v7696 = vld [vmem:[#allocation16 + $0x80] sm:$0xff]
    %v7697 = vld [vmem:[#allocation16 + $0x88] sm:$0xff]
    %v7698 = vld [vmem:[#allocation16 + $0x90] sm:$0xff]
    %v7699 = vld [vmem:[#allocation16 + $0x98] sm:$0xff]
    %v7700 = vld [vmem:[#allocation16 + $0xa0] sm:$0xff]
    %v7701 = vld [vmem:[#allocation16 + $0xa8] sm:$0xff]
    %v7702 = vld [vmem:[#allocation16 + $0xb0] sm:$0xff]
    %v7703 = vld [vmem:[#allocation16 + $0xb8] sm:$0xff]
    %v7704 = vld [vmem:[#allocation16 + $0xc0] sm:$0xff]
    %v7705 = vld [vmem:[#allocation16 + $0xc8] sm:$0xff]
    %v7706 = vld [vmem:[#allocation16 + $0xd0] sm:$0xff]
    %v7707 = vld [vmem:[#allocation16 + $0xd8] sm:$0xff]
    %v7708 = vld [vmem:[#allocation16 + $0xe0] sm:$0xff]
    %v7709 = vld [vmem:[#allocation16 + $0xe8] sm:$0xff]
    %v7710 = vld [vmem:[#allocation16 + $0xf0] sm:$0xff]
    %v7711 = vld [vmem:[#allocation16 + $0xf8] sm:$0xff]
    %v7712 = vld [vmem:[#allocation16 + $0x100] sm:$0xff]
    %v7713 = vld [vmem:[#allocation16 + $0x108] sm:$0xff]
    %v7714 = vld [vmem:[#allocation16 + $0x110] sm:$0xff]
    %v7715 = vld [vmem:[#allocation16 + $0x118] sm:$0xff]
    %v7716 = vld [vmem:[#allocation16 + $0x120] sm:$0xff]
    %v7717 = vld [vmem:[#allocation16 + $0x128] sm:$0xff]
    %v7718 = vld [vmem:[#allocation16 + $0x130] sm:$0xff]
    %v7719 = vld [vmem:[#allocation16 + $0x138] sm:$0xff]
    %v7720 = vld [vmem:[#allocation16 + $0x140] sm:$0xff]
    %v7721 = vld [vmem:[#allocation16 + $0x148] sm:$0xff]
    %v7722 = vld [vmem:[#allocation16 + $0x150] sm:$0xff]
    %v7723 = vld [vmem:[#allocation16 + $0x158] sm:$0xff]
    %v7724 = vld [vmem:[#allocation16 + $0x160] sm:$0xff]
    %v7725 = vld [vmem:[#allocation16 + $0x168] sm:$0xff]
    %v7726 = vld [vmem:[#allocation16 + $0x170] sm:$0xff]
    %v7727 = vld [vmem:[#allocation16 + $0x178] sm:$0xff]
    %v7728 = vld [vmem:[#allocation16 + $0x180] sm:$0xff]
    %v7729 = vld [vmem:[#allocation16 + $0x188] sm:$0xff]
    %v7730 = vld [vmem:[#allocation16 + $0x190] sm:$0xff]
    %v7731 = vld [vmem:[#allocation16 + $0x198] sm:$0xff]
    %v7732 = vld [vmem:[#allocation16 + $0x1a0] sm:$0xff]
    %v7733 = vld [vmem:[#allocation16 + $0x1a8] sm:$0xff]
    %v7734 = vld [vmem:[#allocation16 + $0x1b0] sm:$0xff]
    %v7735 = vld [vmem:[#allocation16 + $0x1b8] sm:$0xff]
    %v7736 = vld [vmem:[#allocation16 + $0x1c0] sm:$0xff]
    %v7737 = vld [vmem:[#allocation16 + $0x1c8] sm:$0xff]
    %v7738 = vld [vmem:[#allocation16 + $0x1d0] sm:$0xff]
    %v7739 = vld [vmem:[#allocation16 + $0x1d8] sm:$0xff]
    %v7740 = vld [vmem:[#allocation16 + $0x1e0] sm:$0xff]
    %v7741 = vld [vmem:[#allocation16 + $0x1e8] sm:$0xff]
    %v7742 = vld [vmem:[#allocation16 + $0x1f0] sm:$0xff]
    %v7743 = vld [vmem:[#allocation16 + $0x1f8] sm:$0xff]
    %v7744 = vld [vmem:[#allocation16 + $0x200] sm:$0xff]
    %v7745 = vld [vmem:[#allocation16 + $0x208] sm:$0xff]
    %v7746 = vld [vmem:[#allocation16 + $0x210] sm:$0xff]
    %v7747 = vld [vmem:[#allocation16 + $0x218] sm:$0xff]
    %v7748 = vld [vmem:[#allocation16 + $0x220] sm:$0xff]
    %v7749 = vld [vmem:[#allocation16 + $0x228] sm:$0xff]
    %v7750 = vld [vmem:[#allocation16 + $0x230] sm:$0xff]
    %v7751 = vld [vmem:[#allocation16 + $0x238] sm:$0xff]
    %v7752 = vld [vmem:[#allocation16 + $0x240] sm:$0xff]
    %v7753 = vld [vmem:[#allocation16 + $0x248] sm:$0xff]
    %v7754 = vld [vmem:[#allocation16 + $0x250] sm:$0xff]
    %v7755 = vld [vmem:[#allocation16 + $0x258] sm:$0xff]
    %v7756 = vld [vmem:[#allocation16 + $0x260] sm:$0xff]
    %v7757 = vld [vmem:[#allocation16 + $0x268] sm:$0xff]
    %v7758 = vld [vmem:[#allocation16 + $0x270] sm:$0xff]
    %v7759 = vld [vmem:[#allocation16 + $0x278] sm:$0xff]
    %v7760 = vld [vmem:[#allocation16 + $0x280] sm:$0xff]
    %v7761 = vld [vmem:[#allocation16 + $0x288] sm:$0xff]
    %v7762 = vld [vmem:[#allocation16 + $0x290] sm:$0xff]
    %v7763 = vld [vmem:[#allocation16 + $0x298] sm:$0xff]
    %v7764 = vld [vmem:[#allocation16 + $0x2a0] sm:$0xff]
    %v7765 = vld [vmem:[#allocation16 + $0x2a8] sm:$0xff]
    %v7766 = vld [vmem:[#allocation16 + $0x2b0] sm:$0xff]
    %v7767 = vld [vmem:[#allocation16 + $0x2b8] sm:$0xff]
    %v7768 = vld [vmem:[#allocation16 + $0x2c0] sm:$0xff]
    %v7769 = vld [vmem:[#allocation16 + $0x2c8] sm:$0xff]
    %v7770 = vld [vmem:[#allocation16 + $0x2d0] sm:$0xff]
    %v7771 = vld [vmem:[#allocation16 + $0x2d8] sm:$0xff]
    %v7772 = vld [vmem:[#allocation16 + $0x2e0] sm:$0xff]
    %v7773 = vld [vmem:[#allocation16 + $0x2e8] sm:$0xff]
    %v7774 = vld [vmem:[#allocation16 + $0x2f0] sm:$0xff]
    %v7775 = vld [vmem:[#allocation16 + $0x2f8] sm:$0xff]
    %v7776 = vld [vmem:[#allocation16 + $0x300] sm:$0xff]
    %v7777 = vld [vmem:[#allocation16 + $0x308] sm:$0xff]
    %v7778 = vld [vmem:[#allocation16 + $0x310] sm:$0xff]
    %v7779 = vld [vmem:[#allocation16 + $0x318] sm:$0xff]
    %v7780 = vld [vmem:[#allocation16 + $0x320] sm:$0xff]
    %v7781 = vld [vmem:[#allocation16 + $0x328] sm:$0xff]
    %v7782 = vld [vmem:[#allocation16 + $0x330] sm:$0xff]
    %v7783 = vld [vmem:[#allocation16 + $0x338] sm:$0xff]
    %v7784 = vld [vmem:[#allocation16 + $0x340] sm:$0xff]
    %v7785 = vld [vmem:[#allocation16 + $0x348] sm:$0xff]
    %v7786 = vld [vmem:[#allocation16 + $0x350] sm:$0xff]
    %v7787 = vld [vmem:[#allocation16 + $0x358] sm:$0xff]
    %v7788 = vld [vmem:[#allocation16 + $0x360] sm:$0xff]
    %v7789 = vld [vmem:[#allocation16 + $0x368] sm:$0xff]
    %v7790 = vld [vmem:[#allocation16 + $0x370] sm:$0xff]
    %v7791 = vld [vmem:[#allocation16 + $0x378] sm:$0xff]
    %v7792 = vld [vmem:[#allocation16 + $0x380] sm:$0xff]
    %v7793 = vld [vmem:[#allocation16 + $0x388] sm:$0xff]
    %v7794 = vld [vmem:[#allocation16 + $0x390] sm:$0xff]
    %v7795 = vld [vmem:[#allocation16 + $0x398] sm:$0xff]
    %v7796 = vld [vmem:[#allocation16 + $0x3a0] sm:$0xff]
    %v7797 = vld [vmem:[#allocation16 + $0x3a8] sm:$0xff]
    %v7798 = vld [vmem:[#allocation16 + $0x3b0] sm:$0xff]
    %v7799 = vld [vmem:[#allocation16 + $0x3b8] sm:$0xff]
    %v7800 = vld [vmem:[#allocation16 + $0x3c0] sm:$0xff]
    %v7801 = vld [vmem:[#allocation16 + $0x3c8] sm:$0xff]
    %v7802 = vld [vmem:[#allocation16 + $0x3d0] sm:$0xff]
    %v7803 = vld [vmem:[#allocation16 + $0x3d8] sm:$0xff]
    %v7804 = vld [vmem:[#allocation16 + $0x3e0] sm:$0xff]
    %v7805 = vld [vmem:[#allocation16 + $0x3e8] sm:$0xff]
    %v7806 = vld [vmem:[#allocation16 + $0x3f0] sm:$0xff]
    %v7807 = vld [vmem:[#allocation16 + $0x3f8] sm:$0xff]
    %v7808 = vld [vmem:[#allocation16 + $0x400] sm:$0xff]
    %v7809 = vld [vmem:[#allocation16 + $0x408] sm:$0xff]
    %v7810 = vld [vmem:[#allocation16 + $0x410] sm:$0xff]
    %v7811 = vld [vmem:[#allocation16 + $0x418] sm:$0xff]
    %v7812 = vld [vmem:[#allocation16 + $0x420] sm:$0xff]
    %v7813 = vld [vmem:[#allocation16 + $0x428] sm:$0xff]
    %v7814 = vld [vmem:[#allocation16 + $0x430] sm:$0xff]
    %v7815 = vld [vmem:[#allocation16 + $0x438] sm:$0xff]
    %v7816 = vld [vmem:[#allocation16 + $0x440] sm:$0xff]
    %v7817 = vld [vmem:[#allocation16 + $0x448] sm:$0xff]
    %v7818 = vld [vmem:[#allocation16 + $0x450] sm:$0xff]
    %v7819 = vld [vmem:[#allocation16 + $0x458] sm:$0xff]
    %v7820 = vld [vmem:[#allocation16 + $0x460] sm:$0xff]
    %v7821 = vld [vmem:[#allocation16 + $0x468] sm:$0xff]
    %v7822 = vld [vmem:[#allocation16 + $0x470] sm:$0xff]
    %v7823 = vld [vmem:[#allocation16 + $0x478] sm:$0xff]
    %v7824 = vld [vmem:[#allocation16 + $0x480] sm:$0xff]
    %v7825 = vld [vmem:[#allocation16 + $0x488] sm:$0xff]
    %v7826 = vld [vmem:[#allocation16 + $0x490] sm:$0xff]
    %v7827 = vld [vmem:[#allocation16 + $0x498] sm:$0xff]
    %v7828 = vld [vmem:[#allocation16 + $0x4a0] sm:$0xff]
    %v7829 = vld [vmem:[#allocation16 + $0x4a8] sm:$0xff]
    %v7830 = vld [vmem:[#allocation16 + $0x4b0] sm:$0xff]
    %v7831 = vld [vmem:[#allocation16 + $0x4b8] sm:$0xff]
    %v7832 = vld [vmem:[#allocation16 + $0x4c0] sm:$0xff]
    %v7833 = vld [vmem:[#allocation16 + $0x4c8] sm:$0xff]
    %v7834 = vld [vmem:[#allocation16 + $0x4d0] sm:$0xff]
    %v7835 = vld [vmem:[#allocation16 + $0x4d8] sm:$0xff]
    %v7836 = vld [vmem:[#allocation16 + $0x4e0] sm:$0xff]
    %v7837 = vld [vmem:[#allocation16 + $0x4e8] sm:$0xff]
    %v7838 = vld [vmem:[#allocation16 + $0x4f0] sm:$0xff]
    %v7839 = vld [vmem:[#allocation16 + $0x4f8] sm:$0xff]
    %v7840 = vld [vmem:[#allocation16 + $0x500] sm:$0xff]
    %v7841 = vld [vmem:[#allocation16 + $0x508] sm:$0xff]
    %v7842 = vld [vmem:[#allocation16 + $0x510] sm:$0xff]
    %v7843 = vld [vmem:[#allocation16 + $0x518] sm:$0xff]
    %v7844 = vld [vmem:[#allocation16 + $0x520] sm:$0xff]
    %v7845 = vld [vmem:[#allocation16 + $0x528] sm:$0xff]
    %v7846 = vld [vmem:[#allocation16 + $0x530] sm:$0xff]
    %v7847 = vld [vmem:[#allocation16 + $0x538] sm:$0xff]
    %v7848 = vld [vmem:[#allocation16 + $0x540] sm:$0xff]
    %v7849 = vld [vmem:[#allocation16 + $0x548] sm:$0xff]
    %v7850 = vld [vmem:[#allocation16 + $0x550] sm:$0xff]
    %v7851 = vld [vmem:[#allocation16 + $0x558] sm:$0xff]
    %v7852 = vld [vmem:[#allocation16 + $0x560] sm:$0xff]
    %v7853 = vld [vmem:[#allocation16 + $0x568] sm:$0xff]
    %v7854 = vld [vmem:[#allocation16 + $0x570] sm:$0xff]
    %v7855 = vld [vmem:[#allocation16 + $0x578] sm:$0xff]
    %v7856 = vld [vmem:[#allocation16 + $0x580] sm:$0xff]
    %v7857 = vld [vmem:[#allocation16 + $0x588] sm:$0xff]
    %v7858 = vld [vmem:[#allocation16 + $0x590] sm:$0xff]
    %v7859 = vld [vmem:[#allocation16 + $0x598] sm:$0xff]
    %v7860 = vld [vmem:[#allocation16 + $0x5a0] sm:$0xff]
    %v7861 = vld [vmem:[#allocation16 + $0x5a8] sm:$0xff]
    %v7862 = vld [vmem:[#allocation16 + $0x5b0] sm:$0xff]
    %v7863 = vld [vmem:[#allocation16 + $0x5b8] sm:$0xff]
    %v7864 = vld [vmem:[#allocation16 + $0x5c0] sm:$0xff]
    %v7865 = vld [vmem:[#allocation16 + $0x5c8] sm:$0xff]
    %v7866 = vld [vmem:[#allocation16 + $0x5d0] sm:$0xff]
    %v7867 = vld [vmem:[#allocation16 + $0x5d8] sm:$0xff]
    %v7868 = vld [vmem:[#allocation16 + $0x5e0] sm:$0xff]
    %v7869 = vld [vmem:[#allocation16 + $0x5e8] sm:$0xff]
    %v7870 = vld [vmem:[#allocation16 + $0x5f0] sm:$0xff]
    %v7871 = vld [vmem:[#allocation16 + $0x5f8] sm:$0xff]
    %v7872 = vld [vmem:[#allocation16 + $0x600] sm:$0xff]
    %v7873 = vld [vmem:[#allocation16 + $0x608] sm:$0xff]
    %v7874 = vld [vmem:[#allocation16 + $0x610] sm:$0xff]
    %v7875 = vld [vmem:[#allocation16 + $0x618] sm:$0xff]
    %v7876 = vld [vmem:[#allocation16 + $0x620] sm:$0xff]
    %v7877 = vld [vmem:[#allocation16 + $0x628] sm:$0xff]
    %v7878 = vld [vmem:[#allocation16 + $0x630] sm:$0xff]
    %v7879 = vld [vmem:[#allocation16 + $0x638] sm:$0xff]
    %v7880 = vld [vmem:[#allocation16 + $0x640] sm:$0xff]
    %v7881 = vld [vmem:[#allocation16 + $0x648] sm:$0xff]
    %v7882 = vld [vmem:[#allocation16 + $0x650] sm:$0xff]
    %v7883 = vld [vmem:[#allocation16 + $0x658] sm:$0xff]
    %v7884 = vld [vmem:[#allocation16 + $0x660] sm:$0xff]
    %v7885 = vld [vmem:[#allocation16 + $0x668] sm:$0xff]
    %v7886 = vld [vmem:[#allocation16 + $0x670] sm:$0xff]
    %v7887 = vld [vmem:[#allocation16 + $0x678] sm:$0xff]
    %v7888 = vld [vmem:[#allocation16 + $0x680] sm:$0xff]
    %v7889 = vld [vmem:[#allocation16 + $0x688] sm:$0xff]
    %v7890 = vld [vmem:[#allocation16 + $0x690] sm:$0xff]
    %v7891 = vld [vmem:[#allocation16 + $0x698] sm:$0xff]
    %v7892 = vld [vmem:[#allocation16 + $0x6a0] sm:$0xff]
    %v7893 = vld [vmem:[#allocation16 + $0x6a8] sm:$0xff]
    %v7894 = vld [vmem:[#allocation16 + $0x6b0] sm:$0xff]
    %v7895 = vld [vmem:[#allocation16 + $0x6b8] sm:$0xff]
    %v7896 = vld [vmem:[#allocation16 + $0x6c0] sm:$0xff]
    %v7897 = vld [vmem:[#allocation16 + $0x6c8] sm:$0xff]
    %v7898 = vld [vmem:[#allocation16 + $0x6d0] sm:$0xff]
    %v7899 = vld [vmem:[#allocation16 + $0x6d8] sm:$0xff]
    %v7900 = vld [vmem:[#allocation16 + $0x6e0] sm:$0xff]
    %v7901 = vld [vmem:[#allocation16 + $0x6e8] sm:$0xff]
    %v7902 = vld [vmem:[#allocation16 + $0x6f0] sm:$0xff]
    %v7903 = vld [vmem:[#allocation16 + $0x6f8] sm:$0xff]
    %v7904 = vld [vmem:[#allocation16 + $0x700] sm:$0xff]
    %v7905 = vld [vmem:[#allocation16 + $0x708] sm:$0xff]
    %v7906 = vld [vmem:[#allocation16 + $0x710] sm:$0xff]
    %v7907 = vld [vmem:[#allocation16 + $0x718] sm:$0xff]
    %v7908 = vld [vmem:[#allocation16 + $0x720] sm:$0xff]
    %v7909 = vld [vmem:[#allocation16 + $0x728] sm:$0xff]
    %v7910 = vld [vmem:[#allocation16 + $0x730] sm:$0xff]
    %v7911 = vld [vmem:[#allocation16 + $0x738] sm:$0xff]
    %v7912 = vld [vmem:[#allocation16 + $0x740] sm:$0xff]
    %v7913 = vld [vmem:[#allocation16 + $0x748] sm:$0xff]
    %v7914 = vld [vmem:[#allocation16 + $0x750] sm:$0xff]
    %v7915 = vld [vmem:[#allocation16 + $0x758] sm:$0xff]
    %v7916 = vld [vmem:[#allocation16 + $0x760] sm:$0xff]
    %v7917 = vld [vmem:[#allocation16 + $0x768] sm:$0xff]
    %v7918 = vld [vmem:[#allocation16 + $0x770] sm:$0xff]
    %v7919 = vld [vmem:[#allocation16 + $0x778] sm:$0xff]
    %v7920 = vld [vmem:[#allocation16 + $0x780] sm:$0xff]
    %v7921 = vld [vmem:[#allocation16 + $0x788] sm:$0xff]
    %v7922 = vld [vmem:[#allocation16 + $0x790] sm:$0xff]
    %v7923 = vld [vmem:[#allocation16 + $0x798] sm:$0xff]
    %v7924 = vld [vmem:[#allocation16 + $0x7a0] sm:$0xff]
    %v7925 = vld [vmem:[#allocation16 + $0x7a8] sm:$0xff]
    %v7926 = vld [vmem:[#allocation16 + $0x7b0] sm:$0xff]
    %v7927 = vld [vmem:[#allocation16 + $0x7b8] sm:$0xff]
    %v7928 = vld [vmem:[#allocation16 + $0x7c0] sm:$0xff]
    %v7929 = vld [vmem:[#allocation16 + $0x7c8] sm:$0xff]
    %v7930 = vld [vmem:[#allocation16 + $0x7d0] sm:$0xff]
    %v7931 = vld [vmem:[#allocation16 + $0x7d8] sm:$0xff]
    %v7932 = vld [vmem:[#allocation16 + $0x7e0] sm:$0xff]
    %v7933 = vld [vmem:[#allocation16 + $0x7e8] sm:$0xff]
    %v7934 = vld [vmem:[#allocation16 + $0x7f0] sm:$0xff]
    %v7935 = vld [vmem:[#allocation16 + $0x7f8] sm:$0xff]
    %v7936 = vld [vmem:[#allocation18] sm:$0xf]
    %v7938 = vlaneseq
    %v7939 = vshrl.u32 %v7938, 7
    %v7940 = vsub.s32 0, %v7939
    %v7941 = vrot.slane %v7679, %v7940
    %v7942 = vlaneseq
    %v7943 = vshrl.u32 %v7942, 7
    %v7944 = vsub.s32 1, %v7943
    %v7945 = vrot.slane %v7679, %v7944
    %v7946 = vlaneseq
    %v7947 = vshrl.u32 %v7946, 7
    %v7948 = vsub.s32 2, %v7947
    %v7949 = vrot.slane %v7679, %v7948
    %v7950 = vlaneseq
    %v7951 = vshrl.u32 %v7950, 7
    %v7952 = vsub.s32 3, %v7951
    %v7953 = vrot.slane %v7679, %v7952
    %v7959 = vlaneseq
    %v7960 = vshrl.u32 %v7959, 7
    %v7961 = vsub.s32 0, %v7960
    %v7962 = vrot.slane %v7936, %v7961
    %v7963 = vlaneseq
    %v7964 = vshrl.u32 %v7963, 7
    %v7965 = vsub.s32 1, %v7964
    %v7966 = vrot.slane %v7936, %v7965
    %v7967 = vlaneseq
    %v7968 = vshrl.u32 %v7967, 7
    %v7969 = vsub.s32 2, %v7968
    %v7970 = vrot.slane %v7936, %v7969
    %v7971 = vlaneseq
    %v7972 = vshrl.u32 %v7971, 7
    %v7973 = vsub.s32 3, %v7972
    %v7974 = vrot.slane %v7936, %v7973
    %7979 = vmatprep.subr.mxu0 %v7741
    %7980 = vmatpush1.msra.mxu0 %v7740
    %7981 = vmatprep.subr.mxu0 %v7737
    %7982 = vmatpush1.msra.mxu0 %v7736
    %7983 = vmatprep.subr.mxu0 %v7733
    %7984 = vmatpush1.msra.mxu0 %v7732
    %7985 = vmatprep.subr.mxu0 %v7729
    %7986 = vmatpush1.msra.mxu0 %v7728
    %7987 = vmatprep.subr.mxu0 %v7725
    %7988 = vmatpush1.msra.mxu0 %v7724
    %7989 = vmatprep.subr.mxu0 %v7721
    %7990 = vmatpush1.msra.mxu0 %v7720
    %7991 = vmatprep.subr.mxu0 %v7717
    %7992 = vmatpush1.msra.mxu0 %v7716
    %7993 = vmatprep.subr.mxu0 %v7713
    %7994 = vmatpush1.msra.mxu0 %v7712
    %7995 = vmatprep.subr.mxu0 %v7709
    %7996 = vmatpush1.msra.mxu0 %v7708
    %7997 = vmatprep.subr.mxu0 %v7705
    %7998 = vmatpush1.msra.mxu0 %v7704
    %7999 = vmatprep.subr.mxu0 %v7701
    %8000 = vmatpush1.msra.mxu0 %v7700
    %8001 = vmatprep.subr.mxu0 %v7697
    %8002 = vmatpush1.msra.mxu0 %v7696
    %8003 = vmatprep.subr.mxu0 %v7693
    %8004 = vmatpush1.msra.mxu0 %v7692
    %8005 = vmatprep.subr.mxu0 %v7689
    %8006 = vmatpush1.msra.mxu0 %v7688
    %8007 = vmatprep.subr.mxu0 %v7685
    %8008 = vmatpush1.msra.mxu0 %v7684
    %8009 = vmatprep.subr.mxu0 %v7681
    %8010 = vmatpush1.msra.mxu0 %v7680
    %8011 = vmatprep.subr.mxu0 %v7805
    %8012 = vmatpush2.msra.mxu0 %v7804
    %8013 = vmatprep.subr.mxu0 %v7801
    %8014 = vmatpush2.msra.mxu0 %v7800
    %8015 = vmatprep.subr.mxu0 %v7797
    %8016 = vmatpush2.msra.mxu0 %v7796
    %8017 = vmatprep.subr.mxu0 %v7793
    %8018 = vmatpush2.msra.mxu0 %v7792
    %8019 = vmatprep.subr.mxu0 %v7789
    %8020 = vmatpush2.msra.mxu0 %v7788
    %8021 = vmatprep.subr.mxu0 %v7785
    %8022 = vmatpush2.msra.mxu0 %v7784
    %8023 = vmatprep.subr.mxu0 %v7781
    %8024 = vmatpush2.msra.mxu0 %v7780
    %8025 = vmatprep.subr.mxu0 %v7777
    %8026 = vmatpush2.msra.mxu0 %v7776
    %8027 = vmatprep.subr.mxu0 %v7773
    %8028 = vmatpush2.msra.mxu0 %v7772
    %8029 = vmatprep.subr.mxu0 %v7769
    %8030 = vmatpush2.msra.mxu0 %v7768
    %8031 = vmatprep.subr.mxu0 %v7765
    %8032 = vmatpush2.msra.mxu0 %v7764
    %8033 = vmatprep.subr.mxu0 %v7761
    %8034 = vmatpush2.msra.mxu0 %v7760
    %8035 = vmatprep.subr.mxu0 %v7757
    %8036 = vmatpush2.msra.mxu0 %v7756
    %8037 = vmatprep.subr.mxu0 %v7753
    %8038 = vmatpush2.msra.mxu0 %v7752
    %8039 = vmatprep.subr.mxu0 %v7749
    %8040 = vmatpush2.msra.mxu0 %v7748
    %8041 = vmatprep.subr.mxu0 %v7745
    %8042 = vmatpush2.msra.mxu0 %v7744
    %8043 = vmatprep.mubr.f32.mxu0 %v7945
    %8044 = vmatmul.mubr.f32.gmra.mxu0 %v7941
    %v8045 = vpop.f32.mrf.mxu0
    %v8046 = vadd.f32 %v7962, %v8045
    %v8047 = vpop.f32.mrf.mxu0
    %v8048 = vadd.f32 %v7966, %v8047
    %8049 = vdwg.mxu0
    %8050 = vmatprep.subr.mxu0 %v7869
    %8051 = vmatpush1.msra.mxu0 %v7868
    %8052 = vmatprep.subr.mxu0 %v7865
    %8053 = vmatpush1.msra.mxu0 %v7864
    %8054 = vmatprep.subr.mxu0 %v7861
    %8055 = vmatpush1.msra.mxu0 %v7860
    %8056 = vmatprep.subr.mxu0 %v7857
    %8057 = vmatpush1.msra.mxu0 %v7856
    %8058 = vmatprep.subr.mxu0 %v7853
    %8059 = vmatpush1.msra.mxu0 %v7852
    %8060 = vmatprep.subr.mxu0 %v7849
    %8061 = vmatpush1.msra.mxu0 %v7848
    %8062 = vmatprep.subr.mxu0 %v7845
    %8063 = vmatpush1.msra.mxu0 %v7844
    %8064 = vmatprep.subr.mxu0 %v7841
    %8065 = vmatpush1.msra.mxu0 %v7840
    %8066 = vmatprep.subr.mxu0 %v7837
    %8067 = vmatpush1.msra.mxu0 %v7836
    %8068 = vmatprep.subr.mxu0 %v7833
    %8069 = vmatpush1.msra.mxu0 %v7832
    %8070 = vmatprep.subr.mxu0 %v7829
    %8071 = vmatpush1.msra.mxu0 %v7828
    %8072 = vmatprep.subr.mxu0 %v7825
    %8073 = vmatpush1.msra.mxu0 %v7824
    %8074 = vmatprep.subr.mxu0 %v7821
    %8075 = vmatpush1.msra.mxu0 %v7820
    %8076 = vmatprep.subr.mxu0 %v7817
    %8077 = vmatpush1.msra.mxu0 %v7816
    %8078 = vmatprep.subr.mxu0 %v7813
    %8079 = vmatpush1.msra.mxu0 %v7812
    %8080 = vmatprep.subr.mxu0 %v7809
    %8081 = vmatpush1.msra.mxu0 %v7808
    %8082 = vmatprep.subr.mxu0 %v7933
    %8083 = vmatpush2.msra.mxu0 %v7932
    %8084 = vmatprep.subr.mxu0 %v7929
    %8085 = vmatpush2.msra.mxu0 %v7928
    %8086 = vmatprep.subr.mxu0 %v7925
    %8087 = vmatpush2.msra.mxu0 %v7924
    %8088 = vmatprep.subr.mxu0 %v7921
    %8089 = vmatpush2.msra.mxu0 %v7920
    %8090 = vmatprep.subr.mxu0 %v7917
    %8091 = vmatpush2.msra.mxu0 %v7916
    %8092 = vmatprep.subr.mxu0 %v7913
    %8093 = vmatpush2.msra.mxu0 %v7912
    %8094 = vmatprep.subr.mxu0 %v7909
    %8095 = vmatpush2.msra.mxu0 %v7908
    %8096 = vmatprep.subr.mxu0 %v7905
    %8097 = vmatpush2.msra.mxu0 %v7904
    %8098 = vmatprep.subr.mxu0 %v7901
    %8099 = vmatpush2.msra.mxu0 %v7900
    %8100 = vmatprep.subr.mxu0 %v7897
    %8101 = vmatpush2.msra.mxu0 %v7896
    %8102 = vmatprep.subr.mxu0 %v7893
    %8103 = vmatpush2.msra.mxu0 %v7892
    %8104 = vmatprep.subr.mxu0 %v7889
    %8105 = vmatpush2.msra.mxu0 %v7888
    %8106 = vmatprep.subr.mxu0 %v7885
    %8107 = vmatpush2.msra.mxu0 %v7884
    %8108 = vmatprep.subr.mxu0 %v7881
    %8109 = vmatpush2.msra.mxu0 %v7880
    %8110 = vmatprep.subr.mxu0 %v7877
    %8111 = vmatpush2.msra.mxu0 %v7876
    %8112 = vmatprep.subr.mxu0 %v7873
    %8113 = vmatpush2.msra.mxu0 %v7872
    %8114 = vmatprep.mubr.f32.mxu0 %v7953
    %8115 = vmatmul.mubr.f32.gmra.mxu0 %v7949
    %v8116 = vpop.f32.mrf.mxu0
    %v8117 = vadd.f32 %v8046, %v8116
    %v8118 = vpop.f32.mrf.mxu0
    %v8119 = vadd.f32 %v8048, %v8118
    %8120 = vdwg.mxu0
    %8121 = vmatprep.subr.mxu0 %v7743
    %8122 = vmatpush1.msra.mxu0 %v7742
    %8123 = vmatprep.subr.mxu0 %v7739
    %8124 = vmatpush1.msra.mxu0 %v7738
    %8125 = vmatprep.subr.mxu0 %v7735
    %8126 = vmatpush1.msra.mxu0 %v7734
    %8127 = vmatprep.subr.mxu0 %v7731
    %8128 = vmatpush1.msra.mxu0 %v7730
    %8129 = vmatprep.subr.mxu0 %v7727
    %8130 = vmatpush1.msra.mxu0 %v7726
    %8131 = vmatprep.subr.mxu0 %v7723
    %8132 = vmatpush1.msra.mxu0 %v7722
    %8133 = vmatprep.subr.mxu0 %v7719
    %8134 = vmatpush1.msra.mxu0 %v7718
    %8135 = vmatprep.subr.mxu0 %v7715
    %8136 = vmatpush1.msra.mxu0 %v7714
    %8137 = vmatprep.subr.mxu0 %v7711
    %8138 = vmatpush1.msra.mxu0 %v7710
    %8139 = vmatprep.subr.mxu0 %v7707
    %8140 = vmatpush1.msra.mxu0 %v7706
    %8141 = vmatprep.subr.mxu0 %v7703
    %8142 = vmatpush1.msra.mxu0 %v7702
    %8143 = vmatprep.subr.mxu0 %v7699
    %8144 = vmatpush1.msra.mxu0 %v7698
    %8145 = vmatprep.subr.mxu0 %v7695
    %8146 = vmatpush1.msra.mxu0 %v7694
    %8147 = vmatprep.subr.mxu0 %v7691
    %8148 = vmatpush1.msra.mxu0 %v7690
    %8149 = vmatprep.subr.mxu0 %v7687
    %8150 = vmatpush1.msra.mxu0 %v7686
    %8151 = vmatprep.subr.mxu0 %v7683
    %8152 = vmatpush1.msra.mxu0 %v7682
    %8153 = vmatprep.subr.mxu0 %v7807
    %8154 = vmatpush2.msra.mxu0 %v7806
    %8155 = vmatprep.subr.mxu0 %v7803
    %8156 = vmatpush2.msra.mxu0 %v7802
    %8157 = vmatprep.subr.mxu0 %v7799
    %8158 = vmatpush2.msra.mxu0 %v7798
    %8159 = vmatprep.subr.mxu0 %v7795
    %8160 = vmatpush2.msra.mxu0 %v7794
    %8161 = vmatprep.subr.mxu0 %v7791
    %8162 = vmatpush2.msra.mxu0 %v7790
    %8163 = vmatprep.subr.mxu0 %v7787
    %8164 = vmatpush2.msra.mxu0 %v7786
    %8165 = vmatprep.subr.mxu0 %v7783
    %8166 = vmatpush2.msra.mxu0 %v7782
    %8167 = vmatprep.subr.mxu0 %v7779
    %8168 = vmatpush2.msra.mxu0 %v7778
    %8169 = vmatprep.subr.mxu0 %v7775
    %8170 = vmatpush2.msra.mxu0 %v7774
    %8171 = vmatprep.subr.mxu0 %v7771
    %8172 = vmatpush2.msra.mxu0 %v7770
    %8173 = vmatprep.subr.mxu0 %v7767
    %8174 = vmatpush2.msra.mxu0 %v7766
    %8175 = vmatprep.subr.mxu0 %v7763
    %8176 = vmatpush2.msra.mxu0 %v7762
    %8177 = vmatprep.subr.mxu0 %v7759
    %8178 = vmatpush2.msra.mxu0 %v7758
    %8179 = vmatprep.subr.mxu0 %v7755
    %8180 = vmatpush2.msra.mxu0 %v7754
    %8181 = vmatprep.subr.mxu0 %v7751
    %8182 = vmatpush2.msra.mxu0 %v7750
    %8183 = vmatprep.subr.mxu0 %v7747
    %8184 = vmatpush2.msra.mxu0 %v7746
    %8185 = vmatprep.mubr.f32.mxu0 %v7945
    %8186 = vmatmul.mubr.f32.gmra.mxu0 %v7941
    %v8187 = vpop.f32.mrf.mxu0
    %v8188 = vadd.f32 %v7970, %v8187
    %v8189 = vpop.f32.mrf.mxu0
    %v8190 = vadd.f32 %v7974, %v8189
    %8191 = vdwg.mxu0
    %8192 = vmatprep.subr.mxu0 %v7871
    %8193 = vmatpush1.msra.mxu0 %v7870
    %8194 = vmatprep.subr.mxu0 %v7867
    %8195 = vmatpush1.msra.mxu0 %v7866
    %8196 = vmatprep.subr.mxu0 %v7863
    %8197 = vmatpush1.msra.mxu0 %v7862
    %8198 = vmatprep.subr.mxu0 %v7859
    %8199 = vmatpush1.msra.mxu0 %v7858
    %8200 = vmatprep.subr.mxu0 %v7855
    %8201 = vmatpush1.msra.mxu0 %v7854
    %8202 = vmatprep.subr.mxu0 %v7851
    %8203 = vmatpush1.msra.mxu0 %v7850
    %8204 = vmatprep.subr.mxu0 %v7847
    %8205 = vmatpush1.msra.mxu0 %v7846
    %8206 = vmatprep.subr.mxu0 %v7843
    %8207 = vmatpush1.msra.mxu0 %v7842
    %8208 = vmatprep.subr.mxu0 %v7839
    %8209 = vmatpush1.msra.mxu0 %v7838
    %8210 = vmatprep.subr.mxu0 %v7835
    %8211 = vmatpush1.msra.mxu0 %v7834
    %8212 = vmatprep.subr.mxu0 %v7831
    %8213 = vmatpush1.msra.mxu0 %v7830
    %8214 = vmatprep.subr.mxu0 %v7827
    %8215 = vmatpush1.msra.mxu0 %v7826
    %8216 = vmatprep.subr.mxu0 %v7823
    %8217 = vmatpush1.msra.mxu0 %v7822
    %8218 = vmatprep.subr.mxu0 %v7819
    %8219 = vmatpush1.msra.mxu0 %v7818
    %8220 = vmatprep.subr.mxu0 %v7815
    %8221 = vmatpush1.msra.mxu0 %v7814
    %8222 = vmatprep.subr.mxu0 %v7811
    %8223 = vmatpush1.msra.mxu0 %v7810
    %8224 = vmatprep.subr.mxu0 %v7935
    %8225 = vmatpush2.msra.mxu0 %v7934
    %8226 = vmatprep.subr.mxu0 %v7931
    %8227 = vmatpush2.msra.mxu0 %v7930
    %8228 = vmatprep.subr.mxu0 %v7927
    %8229 = vmatpush2.msra.mxu0 %v7926
    %8230 = vmatprep.subr.mxu0 %v7923
    %8231 = vmatpush2.msra.mxu0 %v7922
    %8232 = vmatprep.subr.mxu0 %v7919
    %8233 = vmatpush2.msra.mxu0 %v7918
    %8234 = vmatprep.subr.mxu0 %v7915
    %8235 = vmatpush2.msra.mxu0 %v7914
    %8236 = vmatprep.subr.mxu0 %v7911
    %8237 = vmatpush2.msra.mxu0 %v7910
    %8238 = vmatprep.subr.mxu0 %v7907
    %8239 = vmatpush2.msra.mxu0 %v7906
    %8240 = vmatprep.subr.mxu0 %v7903
    %8241 = vmatpush2.msra.mxu0 %v7902
    %8242 = vmatprep.subr.mxu0 %v7899
    %8243 = vmatpush2.msra.mxu0 %v7898
    %8244 = vmatprep.subr.mxu0 %v7895
    %8245 = vmatpush2.msra.mxu0 %v7894
    %8246 = vmatprep.subr.mxu0 %v7891
    %8247 = vmatpush2.msra.mxu0 %v7890
    %8248 = vmatprep.subr.mxu0 %v7887
    %8249 = vmatpush2.msra.mxu0 %v7886
    %8250 = vmatprep.subr.mxu0 %v7883
    %8251 = vmatpush2.msra.mxu0 %v7882
    %8252 = vmatprep.subr.mxu0 %v7879
    %8253 = vmatpush2.msra.mxu0 %v7878
    %8254 = vmatprep.subr.mxu0 %v7875
    %8255 = vmatpush2.msra.mxu0 %v7874
    %8256 = vmatprep.mubr.f32.mxu0 %v7953
    %8257 = vmatmul.mubr.f32.gmra.mxu0 %v7949
    %v8258 = vpop.f32.mrf.mxu0
    %v8259 = vadd.f32 %v8188, %v8258
    %v8260 = vpop.f32.mrf.mxu0
    %v8261 = vadd.f32 %v8190, %v8260
    %8262 = vdwg.mxu0
    %v8263 = vmax.f32 %v8117, 0.0
    %v8264 = vmax.f32 %v8119, 0.0
    %v8265 = vmax.f32 %v8259, 0.0
    %v8266 = vmax.f32 %v8261, 0.0
    %v8267 = vld [vmem:[#allocation19] sm:$0xff]
    %v8268 = vld [vmem:[#allocation19 + $0x8] sm:$0xff]
    %v8269 = vld [vmem:[#allocation19 + $0x10] sm:$0xff]
    %v8270 = vld [vmem:[#allocation19 + $0x18] sm:$0xff]
    %v8271 = vld [vmem:[#allocation19 + $0x20] sm:$0xff]
    %v8272 = vld [vmem:[#allocation19 + $0x28] sm:$0xff]
    %v8273 = vld [vmem:[#allocation19 + $0x30] sm:$0xff]
    %v8274 = vld [vmem:[#allocation19 + $0x38] sm:$0xff]
    %v8275 = vld [vmem:[#allocation19 + $0x40] sm:$0xff]
    %v8276 = vld [vmem:[#allocation19 + $0x48] sm:$0xff]
    %v8277 = vld [vmem:[#allocation19 + $0x50] sm:$0xff]
    %v8278 = vld [vmem:[#allocation19 + $0x58] sm:$0xff]
    %v8279 = vld [vmem:[#allocation19 + $0x60] sm:$0xff]
    %v8280 = vld [vmem:[#allocation19 + $0x68] sm:$0xff]
    %v8281 = vld [vmem:[#allocation19 + $0x70] sm:$0xff]
    %v8282 = vld [vmem:[#allocation19 + $0x78] sm:$0xff]
    %v8283 = vld [vmem:[#allocation19 + $0x80] sm:$0xff]
    %v8284 = vld [vmem:[#allocation19 + $0x88] sm:$0xff]
    %v8285 = vld [vmem:[#allocation19 + $0x90] sm:$0xff]
    %v8286 = vld [vmem:[#allocation19 + $0x98] sm:$0xff]
    %v8287 = vld [vmem:[#allocation19 + $0xa0] sm:$0xff]
    %v8288 = vld [vmem:[#allocation19 + $0xa8] sm:$0xff]
    %v8289 = vld [vmem:[#allocation19 + $0xb0] sm:$0xff]
    %v8290 = vld [vmem:[#allocation19 + $0xb8] sm:$0xff]
    %v8291 = vld [vmem:[#allocation19 + $0xc0] sm:$0xff]
    %v8292 = vld [vmem:[#allocation19 + $0xc8] sm:$0xff]
    %v8293 = vld [vmem:[#allocation19 + $0xd0] sm:$0xff]
    %v8294 = vld [vmem:[#allocation19 + $0xd8] sm:$0xff]
    %v8295 = vld [vmem:[#allocation19 + $0xe0] sm:$0xff]
    %v8296 = vld [vmem:[#allocation19 + $0xe8] sm:$0xff]
    %v8297 = vld [vmem:[#allocation19 + $0xf0] sm:$0xff]
    %v8298 = vld [vmem:[#allocation19 + $0xf8] sm:$0xff]
    %v8299 = vld [vmem:[#allocation19 + $0x100] sm:$0xff]
    %v8300 = vld [vmem:[#allocation19 + $0x108] sm:$0xff]
    %v8301 = vld [vmem:[#allocation19 + $0x110] sm:$0xff]
    %v8302 = vld [vmem:[#allocation19 + $0x118] sm:$0xff]
    %v8303 = vld [vmem:[#allocation19 + $0x120] sm:$0xff]
    %v8304 = vld [vmem:[#allocation19 + $0x128] sm:$0xff]
    %v8305 = vld [vmem:[#allocation19 + $0x130] sm:$0xff]
    %v8306 = vld [vmem:[#allocation19 + $0x138] sm:$0xff]
    %v8307 = vld [vmem:[#allocation19 + $0x140] sm:$0xff]
    %v8308 = vld [vmem:[#allocation19 + $0x148] sm:$0xff]
    %v8309 = vld [vmem:[#allocation19 + $0x150] sm:$0xff]
    %v8310 = vld [vmem:[#allocation19 + $0x158] sm:$0xff]
    %v8311 = vld [vmem:[#allocation19 + $0x160] sm:$0xff]
    %v8312 = vld [vmem:[#allocation19 + $0x168] sm:$0xff]
    %v8313 = vld [vmem:[#allocation19 + $0x170] sm:$0xff]
    %v8314 = vld [vmem:[#allocation19 + $0x178] sm:$0xff]
    %v8315 = vld [vmem:[#allocation19 + $0x180] sm:$0xff]
    %v8316 = vld [vmem:[#allocation19 + $0x188] sm:$0xff]
    %v8317 = vld [vmem:[#allocation19 + $0x190] sm:$0xff]
    %v8318 = vld [vmem:[#allocation19 + $0x198] sm:$0xff]
    %v8319 = vld [vmem:[#allocation19 + $0x1a0] sm:$0xff]
    %v8320 = vld [vmem:[#allocation19 + $0x1a8] sm:$0xff]
    %v8321 = vld [vmem:[#allocation19 + $0x1b0] sm:$0xff]
    %v8322 = vld [vmem:[#allocation19 + $0x1b8] sm:$0xff]
    %v8323 = vld [vmem:[#allocation19 + $0x1c0] sm:$0xff]
    %v8324 = vld [vmem:[#allocation19 + $0x1c8] sm:$0xff]
    %v8325 = vld [vmem:[#allocation19 + $0x1d0] sm:$0xff]
    %v8326 = vld [vmem:[#allocation19 + $0x1d8] sm:$0xff]
    %v8327 = vld [vmem:[#allocation19 + $0x1e0] sm:$0xff]
    %v8328 = vld [vmem:[#allocation19 + $0x1e8] sm:$0xff]
    %v8329 = vld [vmem:[#allocation19 + $0x1f0] sm:$0xff]
    %v8330 = vld [vmem:[#allocation19 + $0x1f8] sm:$0xff]
    %v8331 = vld [vmem:[#allocation21] sm:$0x1]
    %8332 = vmatprep.subr.mxu0 0.0
    %8333 = vmatpush1.msra.mxu0 %v8282
    %8334 = vmatprep.subr.mxu0 0.0
    %8335 = vmatpush1.msra.mxu0 %v8281
    %8336 = vmatprep.subr.mxu0 0.0
    %8337 = vmatpush1.msra.mxu0 %v8280
    %8338 = vmatprep.subr.mxu0 0.0
    %8339 = vmatpush1.msra.mxu0 %v8279
    %8340 = vmatprep.subr.mxu0 0.0
    %8341 = vmatpush1.msra.mxu0 %v8278
    %8342 = vmatprep.subr.mxu0 0.0
    %8343 = vmatpush1.msra.mxu0 %v8277
    %8344 = vmatprep.subr.mxu0 0.0
    %8345 = vmatpush1.msra.mxu0 %v8276
    %8346 = vmatprep.subr.mxu0 0.0
    %8347 = vmatpush1.msra.mxu0 %v8275
    %8348 = vmatprep.subr.mxu0 0.0
    %8349 = vmatpush1.msra.mxu0 %v8274
    %8350 = vmatprep.subr.mxu0 0.0
    %8351 = vmatpush1.msra.mxu0 %v8273
    %8352 = vmatprep.subr.mxu0 0.0
    %8353 = vmatpush1.msra.mxu0 %v8272
    %8354 = vmatprep.subr.mxu0 0.0
    %8355 = vmatpush1.msra.mxu0 %v8271
    %8356 = vmatprep.subr.mxu0 0.0
    %8357 = vmatpush1.msra.mxu0 %v8270
    %8358 = vmatprep.subr.mxu0 0.0
    %8359 = vmatpush1.msra.mxu0 %v8269
    %8360 = vmatprep.subr.mxu0 0.0
    %8361 = vmatpush1.msra.mxu0 %v8268
    %8362 = vmatprep.subr.mxu0 0.0
    %8363 = vmatpush1.msra.mxu0 %v8267
    %8364 = vmatprep.subr.mxu0 0.0
    %8365 = vmatpush2.msra.mxu0 %v8298
    %8366 = vmatprep.subr.mxu0 0.0
    %8367 = vmatpush2.msra.mxu0 %v8297
    %8368 = vmatprep.subr.mxu0 0.0
    %8369 = vmatpush2.msra.mxu0 %v8296
    %8370 = vmatprep.subr.mxu0 0.0
    %8371 = vmatpush2.msra.mxu0 %v8295
    %8372 = vmatprep.subr.mxu0 0.0
    %8373 = vmatpush2.msra.mxu0 %v8294
    %8374 = vmatprep.subr.mxu0 0.0
    %8375 = vmatpush2.msra.mxu0 %v8293
    %8376 = vmatprep.subr.mxu0 0.0
    %8377 = vmatpush2.msra.mxu0 %v8292
    %8378 = vmatprep.subr.mxu0 0.0
    %8379 = vmatpush2.msra.mxu0 %v8291
    %8380 = vmatprep.subr.mxu0 0.0
    %8381 = vmatpush2.msra.mxu0 %v8290
    %8382 = vmatprep.subr.mxu0 0.0
    %8383 = vmatpush2.msra.mxu0 %v8289
    %8384 = vmatprep.subr.mxu0 0.0
    %8385 = vmatpush2.msra.mxu0 %v8288
    %8386 = vmatprep.subr.mxu0 0.0
    %8387 = vmatpush2.msra.mxu0 %v8287
    %8388 = vmatprep.subr.mxu0 0.0
    %8389 = vmatpush2.msra.mxu0 %v8286
    %8390 = vmatprep.subr.mxu0 0.0
    %8391 = vmatpush2.msra.mxu0 %v8285
    %8392 = vmatprep.subr.mxu0 0.0
    %8393 = vmatpush2.msra.mxu0 %v8284
    %8394 = vmatprep.subr.mxu0 0.0
    %8395 = vmatpush2.msra.mxu0 %v8283
    %8396 = vmatprep.mubr.f32.mxu0 %v8264
    %8397 = vmatmul.mubr.f32.gmra.mxu0 %v8263
    %v8398 = vpop.f32.mrf.mxu0
    %v8399 = vadd.f32 %v8331, %v8398
    %v8400 = vpop.f32.mrf.mxu0
    %8401 = vdwg.mxu0
    %8402 = vmatprep.subr.mxu0 0.0
    %8403 = vmatpush1.msra.mxu0 %v8314
    %8404 = vmatprep.subr.mxu0 0.0
    %8405 = vmatpush1.msra.mxu0 %v8313
    %8406 = vmatprep.subr.mxu0 0.0
    %8407 = vmatpush1.msra.mxu0 %v8312
    %8408 = vmatprep.subr.mxu0 0.0
    %8409 = vmatpush1.msra.mxu0 %v8311
    %8410 = vmatprep.subr.mxu0 0.0
    %8411 = vmatpush1.msra.mxu0 %v8310
    %8412 = vmatprep.subr.mxu0 0.0
    %8413 = vmatpush1.msra.mxu0 %v8309
    %8414 = vmatprep.subr.mxu0 0.0
    %8415 = vmatpush1.msra.mxu0 %v8308
    %8416 = vmatprep.subr.mxu0 0.0
    %8417 = vmatpush1.msra.mxu0 %v8307
    %8418 = vmatprep.subr.mxu0 0.0
    %8419 = vmatpush1.msra.mxu0 %v8306
    %8420 = vmatprep.subr.mxu0 0.0
    %8421 = vmatpush1.msra.mxu0 %v8305
    %8422 = vmatprep.subr.mxu0 0.0
    %8423 = vmatpush1.msra.mxu0 %v8304
    %8424 = vmatprep.subr.mxu0 0.0
    %8425 = vmatpush1.msra.mxu0 %v8303
    %8426 = vmatprep.subr.mxu0 0.0
    %8427 = vmatpush1.msra.mxu0 %v8302
    %8428 = vmatprep.subr.mxu0 0.0
    %8429 = vmatpush1.msra.mxu0 %v8301
    %8430 = vmatprep.subr.mxu0 0.0
    %8431 = vmatpush1.msra.mxu0 %v8300
    %8432 = vmatprep.subr.mxu0 0.0
    %8433 = vmatpush1.msra.mxu0 %v8299
    %8434 = vmatprep.subr.mxu0 0.0
    %8435 = vmatpush2.msra.mxu0 %v8330
    %8436 = vmatprep.subr.mxu0 0.0
    %8437 = vmatpush2.msra.mxu0 %v8329
    %8438 = vmatprep.subr.mxu0 0.0
    %8439 = vmatpush2.msra.mxu0 %v8328
    %8440 = vmatprep.subr.mxu0 0.0
    %8441 = vmatpush2.msra.mxu0 %v8327
    %8442 = vmatprep.subr.mxu0 0.0
    %8443 = vmatpush2.msra.mxu0 %v8326
    %8444 = vmatprep.subr.mxu0 0.0
    %8445 = vmatpush2.msra.mxu0 %v8325
    %8446 = vmatprep.subr.mxu0 0.0
    %8447 = vmatpush2.msra.mxu0 %v8324
    %8448 = vmatprep.subr.mxu0 0.0
    %8449 = vmatpush2.msra.mxu0 %v8323
    %8450 = vmatprep.subr.mxu0 0.0
    %8451 = vmatpush2.msra.mxu0 %v8322
    %8452 = vmatprep.subr.mxu0 0.0
    %8453 = vmatpush2.msra.mxu0 %v8321
    %8454 = vmatprep.subr.mxu0 0.0
    %8455 = vmatpush2.msra.mxu0 %v8320
    %8456 = vmatprep.subr.mxu0 0.0
    %8457 = vmatpush2.msra.mxu0 %v8319
    %8458 = vmatprep.subr.mxu0 0.0
    %8459 = vmatpush2.msra.mxu0 %v8318
    %8460 = vmatprep.subr.mxu0 0.0
    %8461 = vmatpush2.msra.mxu0 %v8317
    %8462 = vmatprep.subr.mxu0 0.0
    %8463 = vmatpush2.msra.mxu0 %v8316
    %8464 = vmatprep.subr.mxu0 0.0
    %8465 = vmatpush2.msra.mxu0 %v8315
    %8466 = vmatprep.mubr.f32.mxu0 %v8266
    %8467 = vmatmul.mubr.f32.gmra.mxu0 %v8265
    %v8468 = vpop.f32.mrf.mxu0
    %v8469 = vadd.f32 %v8399, %v8468
    %v8470 = vpop.f32.mrf.mxu0
    %8471 = vdwg.mxu0
    %8472 = vst [vmem:[#allocation22] sm:$0x1] %v8469
    // Predicated region
    $region82: #{dqn2048_pallas.1} parent=1 // pred_check
      _
    $region83: #{dqn2048_pallas.1} parent=1 // pred_check_branch
      %8474 = sbr.rel (0) target = $region85
    $region84: #{dqn2048_pallas.1} parent=1 // pred_region
      %s8476 = ssub.s32 16, 16
      %8477 = vsyncadd [#allocation9], %s8476
      %s8479 = sshll.u32 [#allocation22], 4
      %s8480 = int_to_ptr.vmem [resolvable:$true] %s8479
      %8482 = dma.vmem_to_hbm [thread:$0]  %s8480, 16, %s11, [#allocation9]
    $region85: #{dqn2048_pallas.1} parent=1 // pred_fallthru
      _
    // Predicated region
    $region86: #{dqn2048_pallas.1} parent=1 // pred_check
      _
    $region87: #{dqn2048_pallas.1} parent=1 // pred_check_branch
      %8484 = sbr.rel (0) target = $region89
    $region88: #{dqn2048_pallas.1} parent=1 // pred_region
      %8485 = dma.done [#allocation9], 16
    $region89: #{dqn2048_pallas.1} parent=1 // pred_fallthru
      _
    %8486 = vsyncpa [#allocation8], 1
    %8487 = vsyncpa [#allocation11], 1
    %8488 = vsyncpa [#allocation14], 1
    %8489 = vsyncpa [#allocation17], 1
    %8490 = vsyncpa [#allocation20], 1
    %8491 = vsyncpa [#allocation9], 1
  %8492 = vsyncmov [#allocation6]
  %s8493 = vpop.sfrf %8492
  %p8494 = scmp.eq.s32.totalorder %s8493, 0
  %p8495 = pneg %p8494
  %8497 = shalt.err (%p8495)

</llo_original>
